<compile_context>
chip_gen: v7x
topology: tpu7x:2x2x1
jax: 0.10.0
libtpu: 0.0.40
codegen_flags: <defaults>
</compile_context>

<pallas_src>
import functools

import numpy as np

import jax
import jax.numpy as jnp
from jax import lax
from jax.experimental import pallas as pl
from jax.experimental.pallas import tpu as pltpu


# ------------------------------- Pallas kernel ------------------------------ #

def _silu(x):
    # x * sigmoid(x); the reciprocal goes to the EUP slot.
    return x * pl.reciprocal(1.0 + jnp.exp(-x), approx=True)


def fused_mnist_kernel(x_ref, b1_ref, b2_ref, s1_ref, t1_ref, s2_ref, t2_ref,
                       w1r_ref, fb1_ref, w2_ref, fb2_ref, o_ref, *, bt):
    """Whole MNISTModel forward for one batch tile of `bt` images (all in VMEM).

    x_ref : (1, 4, 6*bt, 96) bf16  plane t0, row (u'*bt + b) = 3 lane-concatenated image rows
                                   4*u'+t0+{0,1,2} (conv1's kh folded into the K dim)
    b1_ref: (96, 1024)       bf16  K-stacked banded conv1 weights, lanes = (pool_col_phase, m, c1)
    b2_ref: (3, 512, 768)    bf16  banded conv2 weights, lanes = (pool_col_phase, v, c2)
    s*/t* : folded BatchNorm scale/shift broadcast over the lane layouts (f32)
    w1r   : (5, 384, 32)     bf16  fc1 weights re-permuted to the (u, v, c2) lane layout
    o_ref : (bt, 10) f32
    """
    # ---- block1: Conv2d(1->32,3x3) -> MaxPool2d(2) -> BN -> SiLU ------------
    b1m = b1_ref[...]
    s1 = s1_ref[...]
    t1 = t1_ref[...]
    h1 = []                                   # pooled rows split by parity r; rows = (u', batch)
    for r in range(2):                        # pooled row n = 2*u' + r, u' = 0..5
        best = None
        for ph in range(2):                   # pool row phase: conv row = 2n + ph
            a = x_ref[0, 2 * r + ph, :, :]    # (6*bt, 96) — one dot covers all 3 kernel rows
            d = jnp.dot(a, b1m, preferred_element_type=jnp.float32)      # (6*bt, 1024)
            best = d if best is None else jnp.maximum(best, d)           # row pool
        pooled = jnp.maximum(best[:, :512], best[:, 512:])               # col pool
        h1.append(_silu(pooled * s1 + t1).astype(jnp.bfloat16))          # (6*bt, 512) bf16

    # ---- block2: Conv2d(32->64,3x3) -> MaxPool2d(2) -> BN -> SiLU -----------
    b2m = [b2_ref[kh] for kh in range(3)]
    best2 = None
    for ph in range(2):                       # pool row phase
        acc = None
        for kh in range(3):
            s = ph + kh                       # h1 row n = 2*u + s, u = 0..4
            a = h1[s % 2][(s // 2) * bt:(s // 2 + 5) * bt, :]            # (5*bt, 512) bf16
            d = jnp.dot(a, b2m[kh], preferred_element_type=jnp.float32)
            acc = d if acc is None else acc + d                          # (5*bt, 768)
        best2 = acc if best2 is None else jnp.maximum(best2, acc)        # row pool
    pooled2 = jnp.maximum(best2[:, :384], best2[:, 384:])                # col pool
    h2 = _silu(pooled2 * s2_ref[...] + t2_ref[...]).astype(jnp.bfloat16) # (5*bt, 384) bf16

    # ---- MLP: Linear(1600->32) -> SiLU -> Linear(32->10) --------------------
    acc3 = None
    for u in range(5):                        # contract the pooled-row dim blockwise
        d = jnp.dot(h2[u * bt:(u + 1) * bt, :], w1r_ref[u],
                    preferred_element_type=jnp.float32)
        acc3 = d if acc3 is None else acc3 + d                           # (bt, 32)
    h3 = _silu(acc3 + fb1_ref[...])
    out = jnp.dot(h3.astype(jnp.bfloat16), w2_ref[...],
                  preferred_element_type=jnp.float32) + fb2_ref[...]
    o_ref[...] = out.astype(o_ref.dtype)


# ------------------------------ parameter prep ------------------------------ #

def fold_bn(gamma, beta, mean, var, eps=1e-5):
    s = gamma / jnp.sqrt(var + eps)
    return s, beta - mean * s


def prepare_params(params):
    """One-time repacking of the PyTorch-style parameters for the fused kernel."""
    w1 = params["conv1_w"]                # (3,3,1,32)  HWIO
    w2 = params["conv2_w"]                # (3,3,32,64) HWIO

    # K-stacked banded conv1 matrix:
    # b1[kh*28 + q, pw*512 + m*32 + c] = w1[kh, kw, 0, c] at q = 2m + pw + kw; K padded 84->96.
    e1 = np.zeros((3, 28, 2, 16), np.float32)
    for kw in range(3):
        for pw in range(2):
            for m in range(13):
                e1[kw, 2 * m + pw + kw, pw, m] = 1.0
    b1 = jnp.einsum("kqpm,hkc->hqpmc", jnp.asarray(e1), w1[:, :, 0, :]).reshape(3 * 28, 1024)
    b1 = jnp.pad(b1, ((0, 12), (0, 0)))                                   # (96, 1024)

    # Banded conv2 matrices: b2[kh][m*32 + c, pw*384 + v*64 + d] = w2[kh, kw, c, d] at m = 2v+pw+kw.
    e2 = np.zeros((3, 16, 2, 6), np.float32)
    for kw in range(3):
        for pw in range(2):
            for v in range(5):
                e2[kw, 2 * v + pw + kw, pw, v] = 1.0
    b2 = jnp.einsum("kmpv,hkcd->hmcpvd", jnp.asarray(e2), w2).reshape(3, 512, 768)

    s1, t1 = fold_bn(params["bn1_gamma"], params["bn1_beta"], params["bn1_mean"], params["bn1_var"])
    s2, t2 = fold_bn(params["bn2_gamma"], params["bn2_beta"], params["bn2_mean"], params["bn2_var"])

    # fc1 rows permuted to the kernel's (u, v, c2) layout (lane block v=5 is zero padding).
    w1r = params["fc1_w"].reshape(64, 5, 5, 32).transpose(1, 2, 0, 3)     # (u, v, c2, out)
    w1r = jnp.pad(w1r, ((0, 0), (0, 1), (0, 0), (0, 0))).reshape(5, 384, 32)

    return {
        "b1": b1.astype(jnp.bfloat16),
        "b2": b2.astype(jnp.bfloat16),
        "s1": jnp.tile(s1, 16)[None, :].astype(jnp.float32),   # (1, 512) lanes = (m, c)
        "t1": jnp.tile(t1, 16)[None, :].astype(jnp.float32),
        "s2": jnp.tile(s2, 6)[None, :].astype(jnp.float32),    # (1, 384) lanes = (v, c2)
        "t2": jnp.tile(t2, 6)[None, :].astype(jnp.float32),
        "w1r": w1r.astype(jnp.bfloat16),
        "fb1": params["fc1_b"][None, :].astype(jnp.float32),
        "w2f": params["fc2_w"].astype(jnp.bfloat16),
        "fb2": params["fc2_b"][None, :].astype(jnp.float32),
    }


# --------------------------------- forward ---------------------------------- #

def _pick_bt(batch):
    """Batch tile: multiple of 8 in [16, 32]; batches > 16 get >= 2 grid tiles so the
    "parallel" grid axis can be sharded across both v7x TensorCores."""
    half = -(-batch // 2)               # ceil(B/2)
    bt = -(-half // 8) * 8              # round up to a multiple of 8
    return int(max(16, min(32, bt)))


def mnist_forward(x_nchw, prep):
    B = x_nchw.shape[0]
    BT = _pick_bt(B)
    g = -(-B // BT)                     # number of batch tiles
    bp = g * BT

    # Pre-pack the images: for base-row plane t0 (= 2*r+ph in the kernel) and row group
    # u' (=0..5), lane-concatenate the three conv rows 4*u'+t0+{0,1,2}:
    #   plane[t0, u'*BT + b, kh*28 + col] = x[b, 4*u'+t0+kh, col]   (K lanes padded 84 -> 96)
    x = x_nchw[:, 0, :, :]                                             # (B, 28, 28)
    x = jnp.pad(x, ((0, bp - B), (0, 0), (0, 0)))                      # (bp, 28, 28)
    r_idx = (np.arange(4)[:, None, None] + 4 * np.arange(6)[None, :, None]
             + np.arange(3)[None, None, :])                            # (4, 6, 3), rows 0..25
    planes = x[:, r_idx, :]                                            # (bp, 4, 6, 3, 28)
    planes = planes.reshape(g, BT, 4, 6, 3, 28).transpose(0, 2, 3, 1, 4, 5)
    planes = planes.reshape(g, 4, 6 * BT, 84)
    planes = jnp.pad(planes, ((0, 0), (0, 0), (0, 0), (0, 12)))        # (g, 4, 6*BT, 96)
    x_arr = planes.astype(jnp.bfloat16)

    kernel = functools.partial(fused_mnist_kernel, bt=BT)
    out = pl.pallas_call(
        kernel,
        out_shape=jax.ShapeDtypeStruct((bp, 10), jnp.float32),
        grid=(g,),
        in_specs=[
            pl.BlockSpec((1, 4, 6 * BT, 96), lambda i: (i, 0, 0, 0)),
            pl.BlockSpec((96, 1024), lambda i: (0, 0)),
            pl.BlockSpec((3, 512, 768), lambda i: (0, 0, 0)),
            pl.BlockSpec((1, 512), lambda i: (0, 0)),
            pl.BlockSpec((1, 512), lambda i: (0, 0)),
            pl.BlockSpec((1, 384), lambda i: (0, 0)),
            pl.BlockSpec((1, 384), lambda i: (0, 0)),
            pl.BlockSpec((5, 384, 32), lambda i: (0, 0, 0)),
            pl.BlockSpec((1, 32), lambda i: (0, 0)),
            pl.BlockSpec((32, 10), lambda i: (0, 0)),
            pl.BlockSpec((1, 10), lambda i: (0, 0)),
        ],
        out_specs=pl.BlockSpec((BT, 10), lambda i: (i, 0)),
        compiler_params=pltpu.CompilerParams(
            dimension_semantics=("parallel",),
            vmem_limit_bytes=32 * 1024 * 1024,
        ),
    )(x_arr, prep["b1"], prep["b2"], prep["s1"], prep["t1"], prep["s2"],
      prep["t2"], prep["w1r"], prep["fb1"], prep["w2f"], prep["fb2"])
    return out[:B]


# ---------------------------- reference (plain JAX) ------------------------- #

def reference_forward(x_nchw, params):
    def block(x, w_hwio, gamma, beta, mean, var):
        w_oihw = jnp.transpose(w_hwio, (3, 2, 0, 1))
        y = lax.conv_general_dilated(x, w_oihw, (1, 1), "VALID",
                                     dimension_numbers=("NCHW", "OIHW", "NCHW"),
                                     precision=lax.Precision.HIGHEST)
        y = lax.reduce_window(y, -jnp.inf, lax.max, (1, 1, 2, 2), (1, 1, 2, 2), "VALID")
        s, t = fold_bn(gamma, beta, mean, var)
        y = y * s[None, :, None, None] + t[None, :, None, None]
        return y * (1.0 / (1.0 + jnp.exp(-y)))

    y = block(x_nchw, params["conv1_w"], params["bn1_gamma"], params["bn1_beta"],
              params["bn1_mean"], params["bn1_var"])
    y = block(y, params["conv2_w"], params["bn2_gamma"], params["bn2_beta"],
              params["bn2_mean"], params["bn2_var"])
    flat = y.reshape(y.shape[0], -1)
    h = flat @ params["fc1_w"] + params["fc1_b"]
    h = h * (1.0 / (1.0 + jnp.exp(-h)))
    return h @ params["fc2_w"] + params["fc2_b"]


# ----------------------------- params & main -------------------------------- #

def init_params(key):
    ks = jax.random.split(key, 16)
    return {
        "conv1_w":   0.2 * jax.random.normal(ks[0], (3, 3, 1, 32), jnp.float32),   # HWIO
        "bn1_gamma": 1.0 + 0.1 * jax.random.normal(ks[1], (32,), jnp.float32),
        "bn1_beta":  0.1 * jax.random.normal(ks[2], (32,), jnp.float32),
        "bn1_mean":  0.1 * jax.random.normal(ks[3], (32,), jnp.float32),
        "bn1_var":   jnp.abs(1.0 + 0.1 * jax.random.normal(ks[4], (32,), jnp.float32)),
        "conv2_w":   0.1 * jax.random.normal(ks[5], (3, 3, 32, 64), jnp.float32),   # HWIO
        "bn2_gamma": 1.0 + 0.1 * jax.random.normal(ks[6], (64,), jnp.float32),
        "bn2_beta":  0.1 * jax.random.normal(ks[7], (64,), jnp.float32),
        "bn2_mean":  0.1 * jax.random.normal(ks[8], (64,), jnp.float32),
        "bn2_var":   jnp.abs(1.0 + 0.1 * jax.random.normal(ks[9], (64,), jnp.float32)),
        "fc1_w":     0.05 * jax.random.normal(ks[10], (1600, 32), jnp.float32),
        "fc1_b":     0.05 * jax.random.normal(ks[11], (32,), jnp.float32),
        "fc2_w":     0.1 * jax.random.normal(ks[12], (32, 10), jnp.float32),
        "fc2_b":     0.1 * jax.random.normal(ks[13], (10,), jnp.float32),
    }


if __name__ == "__main__":
    key = jax.random.PRNGKey(0)
    pkey, xkey = jax.random.split(key)
    params = init_params(pkey)
    # MNIST-shaped input: the MLP's 1600 input features imply 28x28 spatial, 1 channel.
    x = jax.random.normal(xkey, (2, 1, 28, 28), jnp.float32)

    prep = prepare_params(params)          # one-time weight repacking (outside the jit)
    out = jax.jit(mnist_forward)(x, prep)
    out = jax.block_until_ready(out)

    ref = reference_forward(x, params)
    assert out.shape == (2, 10), out.shape
    assert jnp.allclose(out, ref, atol=5e-2, rtol=5e-2), (out, ref)
    print("KERNEL_OK")
</pallas_src>

<mosaic_0001>
module attributes {stable_mosaic.version = 11 : i64} {
  func.func @fused_mnist_kernel(%arg0: i32, %arg1: memref<1x4x96x96xbf16, #tpu.memory_space<vmem>>, %arg2: memref<96x1024xbf16, #tpu.memory_space<vmem>>, %arg3: memref<3x512x768xbf16, #tpu.memory_space<vmem>>, %arg4: memref<1x512xf32, #tpu.memory_space<vmem>>, %arg5: memref<1x512xf32, #tpu.memory_space<vmem>>, %arg6: memref<1x384xf32, #tpu.memory_space<vmem>>, %arg7: memref<1x384xf32, #tpu.memory_space<vmem>>, %arg8: memref<5x384x32xbf16, #tpu.memory_space<vmem>>, %arg9: memref<1x32xf32, #tpu.memory_space<vmem>>, %arg10: memref<32x10xbf16, #tpu.memory_space<vmem>>, %arg11: memref<1x10xf32, #tpu.memory_space<vmem>>, %arg12: memref<16x10xf32, #tpu.memory_space<vmem>>) attributes {dimension_semantics = [#tpu.dimension_semantics<parallel>], iteration_bounds = array<i64: 1>, scalar_prefetch = 0 : i64, scratch_operands = 0 : i64, tpu.core_type = #tpu.core_type<tc>, window_params = [{transform_indices = @transform_0, window_bounds = array<i64: 1, 4, 96, 96>}, {pipeline_mode = #tpu.pipeline_mode<synchronous>, transform_indices = @transform_1, window_bounds = array<i64: 96, 1024>}, {pipeline_mode = #tpu.pipeline_mode<synchronous>, transform_indices = @transform_2, window_bounds = array<i64: 3, 512, 768>}, {pipeline_mode = #tpu.pipeline_mode<synchronous>, transform_indices = @transform_3, window_bounds = array<i64: 1, 512>}, {pipeline_mode = #tpu.pipeline_mode<synchronous>, transform_indices = @transform_4, window_bounds = array<i64: 1, 512>}, {pipeline_mode = #tpu.pipeline_mode<synchronous>, transform_indices = @transform_5, window_bounds = array<i64: 1, 384>}, {pipeline_mode = #tpu.pipeline_mode<synchronous>, transform_indices = @transform_6, window_bounds = array<i64: 1, 384>}, {pipeline_mode = #tpu.pipeline_mode<synchronous>, transform_indices = @transform_7, window_bounds = array<i64: 5, 384, 32>}, {pipeline_mode = #tpu.pipeline_mode<synchronous>, transform_indices = @transform_8, window_bounds = array<i64: 1, 32>}, {pipeline_mode = #tpu.pipeline_mode<synchronous>, transform_indices = @transform_9, window_bounds = array<i64: 32, 10>}, {pipeline_mode = #tpu.pipeline_mode<synchronous>, transform_indices = @transform_10, window_bounds = array<i64: 1, 10>}, {transform_indices = @transform_11, window_bounds = array<i64: 16, 10>}]} {
    %c0 = arith.constant 0 : index
    %c0_0 = arith.constant 0 : index
    %0 = vector.load %arg2[%c0, %c0_0] : memref<96x1024xbf16, #tpu.memory_space<vmem>>, vector<96x1024xbf16>
    %c0_1 = arith.constant 0 : index
    %c0_2 = arith.constant 0 : index
    %1 = vector.load %arg4[%c0_1, %c0_2] : memref<1x512xf32, #tpu.memory_space<vmem>>, vector<1x512xf32>
    %c0_3 = arith.constant 0 : index
    %c0_4 = arith.constant 0 : index
    %2 = vector.load %arg5[%c0_3, %c0_4] : memref<1x512xf32, #tpu.memory_space<vmem>>, vector<1x512xf32>
    %c0_5 = arith.constant 0 : index
    %c0_6 = arith.constant 0 : index
    %c0_7 = arith.constant 0 : index
    %c0_8 = arith.constant 0 : index
    %3 = vector.load %arg1[%c0_5, %c0_6, %c0_7, %c0_8] : memref<1x4x96x96xbf16, #tpu.memory_space<vmem>>, vector<1x1x96x96xbf16>
    %4 = vector.shape_cast %3 : vector<1x1x96x96xbf16> to vector<96x96xbf16>
    %cst = arith.constant dense<0.000000e+00> : vector<96x1024xf32>
    %5 = tpu.matmul %4, %0, %cst {dimension_numbers = #tpu.dot_dimension_numbers<[1], [0], [0], [1], [0, 0, 1, 1], [], []>} : vector<96x96xbf16>, vector<96x1024xbf16>, vector<96x1024xf32> -> vector<96x1024xf32>
    %c0_9 = arith.constant 0 : index
    %c1 = arith.constant 1 : index
    %c0_10 = arith.constant 0 : index
    %c0_11 = arith.constant 0 : index
    %6 = vector.load %arg1[%c0_9, %c1, %c0_10, %c0_11] : memref<1x4x96x96xbf16, #tpu.memory_space<vmem>>, vector<1x1x96x96xbf16>
    %7 = vector.shape_cast %6 : vector<1x1x96x96xbf16> to vector<96x96xbf16>
    %cst_12 = arith.constant dense<0.000000e+00> : vector<96x1024xf32>
    %8 = tpu.matmul %7, %0, %cst_12 {dimension_numbers = #tpu.dot_dimension_numbers<[1], [0], [0], [1], [0, 0, 1, 1], [], []>} : vector<96x96xbf16>, vector<96x1024xbf16>, vector<96x1024xf32> -> vector<96x1024xf32>
    %9 = arith.maximumf %5, %8 : vector<96x1024xf32>
    %10 = vector.extract_strided_slice %9 {offsets = [0, 0], sizes = [96, 512], strides = [1, 1]} : vector<96x1024xf32> to vector<96x512xf32>
    %11 = vector.extract_strided_slice %9 {offsets = [0, 512], sizes = [96, 512], strides = [1, 1]} : vector<96x1024xf32> to vector<96x512xf32>
    %12 = arith.maximumf %10, %11 : vector<96x512xf32>
    %13 = vector.broadcast %1 : vector<1x512xf32> to vector<96x512xf32>
    %14 = arith.mulf %12, %13 : vector<96x512xf32>
    %15 = vector.broadcast %2 : vector<1x512xf32> to vector<96x512xf32>
    %16 = arith.addf %14, %15 : vector<96x512xf32>
    %cst_13 = arith.constant 0.000000e+00 : f32
    %17 = vector.broadcast %cst_13 : f32 to vector<96x512xf32>
    %18 = arith.subf %17, %16 : vector<96x512xf32>
    %19 = math.exp %18 : vector<96x512xf32>
    %cst_14 = arith.constant 1.000000e+00 : f32
    %20 = vector.broadcast %cst_14 : f32 to vector<96x512xf32>
    %21 = arith.addf %20, %19 : vector<96x512xf32>
    %22 = tpu.reciprocal %21 {approx = true} : vector<96x512xf32> -> vector<96x512xf32>
    %23 = arith.mulf %16, %22 : vector<96x512xf32>
    %24 = arith.truncf %23 : vector<96x512xf32> to vector<96x512xbf16>
    %c0_15 = arith.constant 0 : index
    %c2 = arith.constant 2 : index
    %c0_16 = arith.constant 0 : index
    %c0_17 = arith.constant 0 : index
    %25 = vector.load %arg1[%c0_15, %c2, %c0_16, %c0_17] : memref<1x4x96x96xbf16, #tpu.memory_space<vmem>>, vector<1x1x96x96xbf16>
    %26 = vector.shape_cast %25 : vector<1x1x96x96xbf16> to vector<96x96xbf16>
    %cst_18 = arith.constant dense<0.000000e+00> : vector<96x1024xf32>
    %27 = tpu.matmul %26, %0, %cst_18 {dimension_numbers = #tpu.dot_dimension_numbers<[1], [0], [0], [1], [0, 0, 1, 1], [], []>} : vector<96x96xbf16>, vector<96x1024xbf16>, vector<96x1024xf32> -> vector<96x1024xf32>
    %c0_19 = arith.constant 0 : index
    %c3 = arith.constant 3 : index
    %c0_20 = arith.constant 0 : index
    %c0_21 = arith.constant 0 : index
    %28 = vector.load %arg1[%c0_19, %c3, %c0_20, %c0_21] : memref<1x4x96x96xbf16, #tpu.memory_space<vmem>>, vector<1x1x96x96xbf16>
    %29 = vector.shape_cast %28 : vector<1x1x96x96xbf16> to vector<96x96xbf16>
    %cst_22 = arith.constant dense<0.000000e+00> : vector<96x1024xf32>
    %30 = tpu.matmul %29, %0, %cst_22 {dimension_numbers = #tpu.dot_dimension_numbers<[1], [0], [0], [1], [0, 0, 1, 1], [], []>} : vector<96x96xbf16>, vector<96x1024xbf16>, vector<96x1024xf32> -> vector<96x1024xf32>
    %31 = arith.maximumf %27, %30 : vector<96x1024xf32>
    %32 = vector.extract_strided_slice %31 {offsets = [0, 0], sizes = [96, 512], strides = [1, 1]} : vector<96x1024xf32> to vector<96x512xf32>
    %33 = vector.extract_strided_slice %31 {offsets = [0, 512], sizes = [96, 512], strides = [1, 1]} : vector<96x1024xf32> to vector<96x512xf32>
    %34 = arith.maximumf %32, %33 : vector<96x512xf32>
    %35 = vector.broadcast %1 : vector<1x512xf32> to vector<96x512xf32>
    %36 = arith.mulf %34, %35 : vector<96x512xf32>
    %37 = vector.broadcast %2 : vector<1x512xf32> to vector<96x512xf32>
    %38 = arith.addf %36, %37 : vector<96x512xf32>
    %cst_23 = arith.constant 0.000000e+00 : f32
    %39 = vector.broadcast %cst_23 : f32 to vector<96x512xf32>
    %40 = arith.subf %39, %38 : vector<96x512xf32>
    %41 = math.exp %40 : vector<96x512xf32>
    %cst_24 = arith.constant 1.000000e+00 : f32
    %42 = vector.broadcast %cst_24 : f32 to vector<96x512xf32>
    %43 = arith.addf %42, %41 : vector<96x512xf32>
    %44 = tpu.reciprocal %43 {approx = true} : vector<96x512xf32> -> vector<96x512xf32>
    %45 = arith.mulf %38, %44 : vector<96x512xf32>
    %46 = arith.truncf %45 : vector<96x512xf32> to vector<96x512xbf16>
    %c0_25 = arith.constant 0 : index
    %c0_26 = arith.constant 0 : index
    %c0_27 = arith.constant 0 : index
    %47 = vector.load %arg3[%c0_25, %c0_26, %c0_27] : memref<3x512x768xbf16, #tpu.memory_space<vmem>>, vector<1x512x768xbf16>
    %48 = vector.shape_cast %47 : vector<1x512x768xbf16> to vector<512x768xbf16>
    %c1_28 = arith.constant 1 : index
    %c0_29 = arith.constant 0 : index
    %c0_30 = arith.constant 0 : index
    %49 = vector.load %arg3[%c1_28, %c0_29, %c0_30] : memref<3x512x768xbf16, #tpu.memory_space<vmem>>, vector<1x512x768xbf16>
    %50 = vector.shape_cast %49 : vector<1x512x768xbf16> to vector<512x768xbf16>
    %c2_31 = arith.constant 2 : index
    %c0_32 = arith.constant 0 : index
    %c0_33 = arith.constant 0 : index
    %51 = vector.load %arg3[%c2_31, %c0_32, %c0_33] : memref<3x512x768xbf16, #tpu.memory_space<vmem>>, vector<1x512x768xbf16>
    %52 = vector.shape_cast %51 : vector<1x512x768xbf16> to vector<512x768xbf16>
    %53 = vector.extract_strided_slice %24 {offsets = [0, 0], sizes = [80, 512], strides = [1, 1]} : vector<96x512xbf16> to vector<80x512xbf16>
    %cst_34 = arith.constant dense<0.000000e+00> : vector<80x768xf32>
    %54 = tpu.matmul %53, %48, %cst_34 {dimension_numbers = #tpu.dot_dimension_numbers<[1], [0], [0], [1], [0, 0, 1, 1], [], []>} : vector<80x512xbf16>, vector<512x768xbf16>, vector<80x768xf32> -> vector<80x768xf32>
    %55 = vector.extract_strided_slice %46 {offsets = [0, 0], sizes = [80, 512], strides = [1, 1]} : vector<96x512xbf16> to vector<80x512xbf16>
    %cst_35 = arith.constant dense<0.000000e+00> : vector<80x768xf32>
    %56 = tpu.matmul %55, %50, %cst_35 {dimension_numbers = #tpu.dot_dimension_numbers<[1], [0], [0], [1], [0, 0, 1, 1], [], []>} : vector<80x512xbf16>, vector<512x768xbf16>, vector<80x768xf32> -> vector<80x768xf32>
    %57 = arith.addf %54, %56 : vector<80x768xf32>
    %58 = vector.extract_strided_slice %24 {offsets = [16, 0], sizes = [80, 512], strides = [1, 1]} : vector<96x512xbf16> to vector<80x512xbf16>
    %cst_36 = arith.constant dense<0.000000e+00> : vector<80x768xf32>
    %59 = tpu.matmul %58, %52, %cst_36 {dimension_numbers = #tpu.dot_dimension_numbers<[1], [0], [0], [1], [0, 0, 1, 1], [], []>} : vector<80x512xbf16>, vector<512x768xbf16>, vector<80x768xf32> -> vector<80x768xf32>
    %60 = arith.addf %57, %59 : vector<80x768xf32>
    %61 = vector.extract_strided_slice %46 {offsets = [0, 0], sizes = [80, 512], strides = [1, 1]} : vector<96x512xbf16> to vector<80x512xbf16>
    %cst_37 = arith.constant dense<0.000000e+00> : vector<80x768xf32>
    %62 = tpu.matmul %61, %48, %cst_37 {dimension_numbers = #tpu.dot_dimension_numbers<[1], [0], [0], [1], [0, 0, 1, 1], [], []>} : vector<80x512xbf16>, vector<512x768xbf16>, vector<80x768xf32> -> vector<80x768xf32>
    %63 = vector.extract_strided_slice %24 {offsets = [16, 0], sizes = [80, 512], strides = [1, 1]} : vector<96x512xbf16> to vector<80x512xbf16>
    %cst_38 = arith.constant dense<0.000000e+00> : vector<80x768xf32>
    %64 = tpu.matmul %63, %50, %cst_38 {dimension_numbers = #tpu.dot_dimension_numbers<[1], [0], [0], [1], [0, 0, 1, 1], [], []>} : vector<80x512xbf16>, vector<512x768xbf16>, vector<80x768xf32> -> vector<80x768xf32>
    %65 = arith.addf %62, %64 : vector<80x768xf32>
    %66 = vector.extract_strided_slice %46 {offsets = [16, 0], sizes = [80, 512], strides = [1, 1]} : vector<96x512xbf16> to vector<80x512xbf16>
    %cst_39 = arith.constant dense<0.000000e+00> : vector<80x768xf32>
    %67 = tpu.matmul %66, %52, %cst_39 {dimension_numbers = #tpu.dot_dimension_numbers<[1], [0], [0], [1], [0, 0, 1, 1], [], []>} : vector<80x512xbf16>, vector<512x768xbf16>, vector<80x768xf32> -> vector<80x768xf32>
    %68 = arith.addf %65, %67 : vector<80x768xf32>
    %69 = arith.maximumf %60, %68 : vector<80x768xf32>
    %70 = vector.extract_strided_slice %69 {offsets = [0, 0], sizes = [80, 384], strides = [1, 1]} : vector<80x768xf32> to vector<80x384xf32>
    %71 = vector.extract_strided_slice %69 {offsets = [0, 384], sizes = [80, 384], strides = [1, 1]} : vector<80x768xf32> to vector<80x384xf32>
    %72 = arith.maximumf %70, %71 : vector<80x384xf32>
    %c0_40 = arith.constant 0 : index
    %c0_41 = arith.constant 0 : index
    %73 = vector.load %arg6[%c0_40, %c0_41] : memref<1x384xf32, #tpu.memory_space<vmem>>, vector<1x384xf32>
    %74 = vector.broadcast %73 : vector<1x384xf32> to vector<80x384xf32>
    %75 = arith.mulf %72, %74 : vector<80x384xf32>
    %c0_42 = arith.constant 0 : index
    %c0_43 = arith.constant 0 : index
    %76 = vector.load %arg7[%c0_42, %c0_43] : memref<1x384xf32, #tpu.memory_space<vmem>>, vector<1x384xf32>
    %77 = vector.broadcast %76 : vector<1x384xf32> to vector<80x384xf32>
    %78 = arith.addf %75, %77 : vector<80x384xf32>
    %cst_44 = arith.constant 0.000000e+00 : f32
    %79 = vector.broadcast %cst_44 : f32 to vector<80x384xf32>
    %80 = arith.subf %79, %78 : vector<80x384xf32>
    %81 = math.exp %80 : vector<80x384xf32>
    %cst_45 = arith.constant 1.000000e+00 : f32
    %82 = vector.broadcast %cst_45 : f32 to vector<80x384xf32>
    %83 = arith.addf %82, %81 : vector<80x384xf32>
    %84 = tpu.reciprocal %83 {approx = true} : vector<80x384xf32> -> vector<80x384xf32>
    %85 = arith.mulf %78, %84 : vector<80x384xf32>
    %86 = arith.truncf %85 : vector<80x384xf32> to vector<80x384xbf16>
    %87 = vector.extract_strided_slice %86 {offsets = [0, 0], sizes = [16, 384], strides = [1, 1]} : vector<80x384xbf16> to vector<16x384xbf16>
    %c0_46 = arith.constant 0 : index
    %c0_47 = arith.constant 0 : index
    %c0_48 = arith.constant 0 : index
    %88 = vector.load %arg8[%c0_46, %c0_47, %c0_48] : memref<5x384x32xbf16, #tpu.memory_space<vmem>>, vector<1x384x32xbf16>
    %89 = vector.shape_cast %88 : vector<1x384x32xbf16> to vector<384x32xbf16>
    %cst_49 = arith.constant dense<0.000000e+00> : vector<16x32xf32>
    %90 = tpu.matmul %87, %89, %cst_49 {dimension_numbers = #tpu.dot_dimension_numbers<[1], [0], [0], [1], [0, 0, 1, 1], [], []>} : vector<16x384xbf16>, vector<384x32xbf16>, vector<16x32xf32> -> vector<16x32xf32>
    %91 = vector.extract_strided_slice %86 {offsets = [16, 0], sizes = [16, 384], strides = [1, 1]} : vector<80x384xbf16> to vector<16x384xbf16>
    %c1_50 = arith.constant 1 : index
    %c0_51 = arith.constant 0 : index
    %c0_52 = arith.constant 0 : index
    %92 = vector.load %arg8[%c1_50, %c0_51, %c0_52] : memref<5x384x32xbf16, #tpu.memory_space<vmem>>, vector<1x384x32xbf16>
    %93 = vector.shape_cast %92 : vector<1x384x32xbf16> to vector<384x32xbf16>
    %cst_53 = arith.constant dense<0.000000e+00> : vector<16x32xf32>
    %94 = tpu.matmul %91, %93, %cst_53 {dimension_numbers = #tpu.dot_dimension_numbers<[1], [0], [0], [1], [0, 0, 1, 1], [], []>} : vector<16x384xbf16>, vector<384x32xbf16>, vector<16x32xf32> -> vector<16x32xf32>
    %95 = arith.addf %90, %94 : vector<16x32xf32>
    %96 = vector.extract_strided_slice %86 {offsets = [32, 0], sizes = [16, 384], strides = [1, 1]} : vector<80x384xbf16> to vector<16x384xbf16>
    %c2_54 = arith.constant 2 : index
    %c0_55 = arith.constant 0 : index
    %c0_56 = arith.constant 0 : index
    %97 = vector.load %arg8[%c2_54, %c0_55, %c0_56] : memref<5x384x32xbf16, #tpu.memory_space<vmem>>, vector<1x384x32xbf16>
    %98 = vector.shape_cast %97 : vector<1x384x32xbf16> to vector<384x32xbf16>
    %cst_57 = arith.constant dense<0.000000e+00> : vector<16x32xf32>
    %99 = tpu.matmul %96, %98, %cst_57 {dimension_numbers = #tpu.dot_dimension_numbers<[1], [0], [0], [1], [0, 0, 1, 1], [], []>} : vector<16x384xbf16>, vector<384x32xbf16>, vector<16x32xf32> -> vector<16x32xf32>
    %100 = arith.addf %95, %99 : vector<16x32xf32>
    %101 = vector.extract_strided_slice %86 {offsets = [48, 0], sizes = [16, 384], strides = [1, 1]} : vector<80x384xbf16> to vector<16x384xbf16>
    %c3_58 = arith.constant 3 : index
    %c0_59 = arith.constant 0 : index
    %c0_60 = arith.constant 0 : index
    %102 = vector.load %arg8[%c3_58, %c0_59, %c0_60] : memref<5x384x32xbf16, #tpu.memory_space<vmem>>, vector<1x384x32xbf16>
    %103 = vector.shape_cast %102 : vector<1x384x32xbf16> to vector<384x32xbf16>
    %cst_61 = arith.constant dense<0.000000e+00> : vector<16x32xf32>
    %104 = tpu.matmul %101, %103, %cst_61 {dimension_numbers = #tpu.dot_dimension_numbers<[1], [0], [0], [1], [0, 0, 1, 1], [], []>} : vector<16x384xbf16>, vector<384x32xbf16>, vector<16x32xf32> -> vector<16x32xf32>
    %105 = arith.addf %100, %104 : vector<16x32xf32>
    %106 = vector.extract_strided_slice %86 {offsets = [64, 0], sizes = [16, 384], strides = [1, 1]} : vector<80x384xbf16> to vector<16x384xbf16>
    %c4 = arith.constant 4 : index
    %c0_62 = arith.constant 0 : index
    %c0_63 = arith.constant 0 : index
    %107 = vector.load %arg8[%c4, %c0_62, %c0_63] : memref<5x384x32xbf16, #tpu.memory_space<vmem>>, vector<1x384x32xbf16>
    %108 = vector.shape_cast %107 : vector<1x384x32xbf16> to vector<384x32xbf16>
    %cst_64 = arith.constant dense<0.000000e+00> : vector<16x32xf32>
    %109 = tpu.matmul %106, %108, %cst_64 {dimension_numbers = #tpu.dot_dimension_numbers<[1], [0], [0], [1], [0, 0, 1, 1], [], []>} : vector<16x384xbf16>, vector<384x32xbf16>, vector<16x32xf32> -> vector<16x32xf32>
    %110 = arith.addf %105, %109 : vector<16x32xf32>
    %c0_65 = arith.constant 0 : index
    %c0_66 = arith.constant 0 : index
    %111 = vector.load %arg9[%c0_65, %c0_66] : memref<1x32xf32, #tpu.memory_space<vmem>>, vector<1x32xf32>
    %112 = vector.broadcast %111 : vector<1x32xf32> to vector<16x32xf32>
    %113 = arith.addf %110, %112 : vector<16x32xf32>
    %cst_67 = arith.constant 0.000000e+00 : f32
    %114 = vector.broadcast %cst_67 : f32 to vector<16x32xf32>
    %115 = arith.subf %114, %113 : vector<16x32xf32>
    %116 = math.exp %115 : vector<16x32xf32>
    %cst_68 = arith.constant 1.000000e+00 : f32
    %117 = vector.broadcast %cst_68 : f32 to vector<16x32xf32>
    %118 = arith.addf %117, %116 : vector<16x32xf32>
    %119 = tpu.reciprocal %118 {approx = true} : vector<16x32xf32> -> vector<16x32xf32>
    %120 = arith.mulf %113, %119 : vector<16x32xf32>
    %121 = arith.truncf %120 : vector<16x32xf32> to vector<16x32xbf16>
    %c0_69 = arith.constant 0 : index
    %c0_70 = arith.constant 0 : index
    %122 = vector.load %arg10[%c0_69, %c0_70] : memref<32x10xbf16, #tpu.memory_space<vmem>>, vector<32x10xbf16>
    %cst_71 = arith.constant dense<0.000000e+00> : vector<16x10xf32>
    %123 = tpu.matmul %121, %122, %cst_71 {dimension_numbers = #tpu.dot_dimension_numbers<[1], [0], [0], [1], [0, 0, 1, 1], [], []>} : vector<16x32xbf16>, vector<32x10xbf16>, vector<16x10xf32> -> vector<16x10xf32>
    %c0_72 = arith.constant 0 : index
    %c0_73 = arith.constant 0 : index
    %124 = vector.load %arg11[%c0_72, %c0_73] : memref<1x10xf32, #tpu.memory_space<vmem>>, vector<1x10xf32>
    %125 = vector.broadcast %124 : vector<1x10xf32> to vector<16x10xf32>
    %126 = arith.addf %123, %125 : vector<16x10xf32>
    %c0_74 = arith.constant 0 : index
    %c0_75 = arith.constant 0 : index
    %127 = vector.load %arg12[%c0_74, %c0_75] : memref<16x10xf32, #tpu.memory_space<vmem>>, vector<16x10xf32>
    tpu.vector_store %arg12[%c0_74, %c0_75], %126 {strides = array<i32>} : memref<16x10xf32, #tpu.memory_space<vmem>>, vector<16x10xf32>,
    return
  }
  func.func @transform_0(%arg0: i32) -> (i32, i32, i32, i32) {
    %c0_i32 = arith.constant 0 : i32
    %c0_i32_0 = arith.constant 0 : i32
    %c0_i32_1 = arith.constant 0 : i32
    %c0_i32_2 = arith.constant 0 : i32
    return %arg0, %c0_i32, %c0_i32_0, %c0_i32_1 : i32, i32, i32, i32
  }
  func.func @transform_1(%arg0: i32) -> (i32, i32) {
    %c0_i32 = arith.constant 0 : i32
    %c0_i32_0 = arith.constant 0 : i32
    %c0_i32_1 = arith.constant 0 : i32
    return %c0_i32, %c0_i32_0 : i32, i32
  }
  func.func @transform_2(%arg0: i32) -> (i32, i32, i32) {
    %c0_i32 = arith.constant 0 : i32
    %c0_i32_0 = arith.constant 0 : i32
    %c0_i32_1 = arith.constant 0 : i32
    %c0_i32_2 = arith.constant 0 : i32
    return %c0_i32, %c0_i32_0, %c0_i32_1 : i32, i32, i32
  }
  func.func @transform_3(%arg0: i32) -> (i32, i32) {
    %c0_i32 = arith.constant 0 : i32
    %c0_i32_0 = arith.constant 0 : i32
    %c0_i32_1 = arith.constant 0 : i32
    return %c0_i32, %c0_i32_0 : i32, i32
  }
  func.func @transform_4(%arg0: i32) -> (i32, i32) {
    %c0_i32 = arith.constant 0 : i32
    %c0_i32_0 = arith.constant 0 : i32
    %c0_i32_1 = arith.constant 0 : i32
    return %c0_i32, %c0_i32_0 : i32, i32
  }
  func.func @transform_5(%arg0: i32) -> (i32, i32) {
    %c0_i32 = arith.constant 0 : i32
    %c0_i32_0 = arith.constant 0 : i32
    %c0_i32_1 = arith.constant 0 : i32
    return %c0_i32, %c0_i32_0 : i32, i32
  }
  func.func @transform_6(%arg0: i32) -> (i32, i32) {
    %c0_i32 = arith.constant 0 : i32
    %c0_i32_0 = arith.constant 0 : i32
    %c0_i32_1 = arith.constant 0 : i32
    return %c0_i32, %c0_i32_0 : i32, i32
  }
  func.func @transform_7(%arg0: i32) -> (i32, i32, i32) {
    %c0_i32 = arith.constant 0 : i32
    %c0_i32_0 = arith.constant 0 : i32
    %c0_i32_1 = arith.constant 0 : i32
    %c0_i32_2 = arith.constant 0 : i32
    return %c0_i32, %c0_i32_0, %c0_i32_1 : i32, i32, i32
  }
  func.func @transform_8(%arg0: i32) -> (i32, i32) {
    %c0_i32 = arith.constant 0 : i32
    %c0_i32_0 = arith.constant 0 : i32
    %c0_i32_1 = arith.constant 0 : i32
    return %c0_i32, %c0_i32_0 : i32, i32
  }
  func.func @transform_9(%arg0: i32) -> (i32, i32) {
    %c0_i32 = arith.constant 0 : i32
    %c0_i32_0 = arith.constant 0 : i32
    %c0_i32_1 = arith.constant 0 : i32
    return %c0_i32, %c0_i32_0 : i32, i32
  }
  func.func @transform_10(%arg0: i32) -> (i32, i32) {
    %c0_i32 = arith.constant 0 : i32
    %c0_i32_0 = arith.constant 0 : i32
    %c0_i32_1 = arith.constant 0 : i32
    return %c0_i32, %c0_i32_0 : i32, i32
  }
  func.func @transform_11(%arg0: i32) -> (i32, i32) {
    %c0_i32 = arith.constant 0 : i32
    %c0_i32_0 = arith.constant 0 : i32
    return %arg0, %c0_i32 : i32, i32
  }
}

</mosaic_0001>

<llo_original>
// kernel: mnist_forward.1
$region0: #{mnist_forward.1}
  #allocation0 [shape = 'u32[]', space=smem, size = 0x4, offset = 0x4, fixed_abs, tag = 'smem constant byte address 0x4 - core index']
  #allocation1 [shape = 'u32[144,128]{1,0:T(1,128)}', space=vmem, size = 0x12000, scoped, tag = 'internal scratch']
  %s0 = inlined_call_operand.vmem [shape: bf16[1,4,96,96], index: 0, kind: input, shape index: {}]
  %s1 = inlined_call_operand.hbm [shape: bf16[96,1024], index: 1, kind: input, shape index: {}]
  %s2 = inlined_call_operand.vmem [shape: bf16[3,512,768], index: 2, kind: input, shape index: {}]
  %s3 = inlined_call_operand.vmem [shape: f32[1,512], index: 3, kind: input, shape index: {}]
  %s4 = inlined_call_operand.vmem [shape: f32[1,512], index: 4, kind: input, shape index: {}]
  %s5 = inlined_call_operand.vmem [shape: f32[1,384], index: 5, kind: input, shape index: {}]
  %s6 = inlined_call_operand.vmem [shape: f32[1,384], index: 6, kind: input, shape index: {}]
  %s7 = inlined_call_operand.vmem [shape: bf16[5,384,32], index: 7, kind: input, shape index: {}]
  %s8 = inlined_call_operand.vmem [shape: f32[1,32], index: 8, kind: input, shape index: {}]
  %s9 = inlined_call_operand.vmem [shape: bf16[32,10], index: 9, kind: input, shape index: {}]
  %s10 = inlined_call_operand.vmem [shape: f32[1,10], index: 10, kind: input, shape index: {}]
  %s11 = inlined_call_operand.vmem [shape: f32[16,10], index: 11, kind: output, shape index: {}]
  %s12 = sld [smem:[#allocation0]]
  $region58: #{mnist_forward.1} parent=0
    _
  %s14 = ssub.s32 1, %s12
  %s15 = scalar_select 0, %s14, %s12
  $region1: #{mnist_forward.1} parent=0
    #allocation2 [shape = 'u8[196608]{0}', space=vmem, size = 0x30000, scoped, tag = 'input window, operand 1, single buffered']
    #allocation3 [shape = 's32[1]{0}', space=sflag, size = 0x4, scoped, tag = 'scoped memory for mnist_forward.1']
    %16 = vsyncpa [#allocation3], 0
    // Predicated region
    $region2: #{mnist_forward.1} parent=1 // pred_check
      _
    $region3: #{mnist_forward.1} parent=1 // pred_check_branch
      %18 = sbr.rel (0) target = $region5
    $region4: #{mnist_forward.1} parent=1 // pred_region
      _
    $region5: #{mnist_forward.1} parent=1 // pred_fallthru
      _
    // Predicated region
    $region6: #{mnist_forward.1} parent=1 // pred_check
      _
    $region7: #{mnist_forward.1} parent=1 // pred_check_branch
      %20 = sbr.rel (0) target = $region9
    $region8: #{mnist_forward.1} parent=1 // pred_region
      %s22 = ssub.s32 6144, 6144
      %23 = vsyncadd [#allocation3], %s22
      %s24 = sshll.u32 [#allocation2], 4
      %s25 = int_to_ptr.vmem [resolvable:$true] %s24
      %30 = dma.hbm_to_vmem [thread:$0]  %s1, 6144, %s25, [#allocation3], 512, 512, 32
    $region9: #{mnist_forward.1} parent=1 // pred_fallthru
      _
    // Predicated region
    $region10: #{mnist_forward.1} parent=1 // pred_check
      _
    $region11: #{mnist_forward.1} parent=1 // pred_check_branch
      %32 = sbr.rel (0) target = $region13
    $region12: #{mnist_forward.1} parent=1 // pred_region
      _
    $region13: #{mnist_forward.1} parent=1 // pred_fallthru
      _
    // Predicated region
    $region14: #{mnist_forward.1} parent=1 // pred_check
      _
    $region15: #{mnist_forward.1} parent=1 // pred_check_branch
      %34 = sbr.rel (0) target = $region17
    $region16: #{mnist_forward.1} parent=1 // pred_region
      _
    $region17: #{mnist_forward.1} parent=1 // pred_fallthru
      _
    // Predicated region
    $region18: #{mnist_forward.1} parent=1 // pred_check
      _
    $region19: #{mnist_forward.1} parent=1 // pred_check_branch
      %36 = sbr.rel (0) target = $region21
    $region20: #{mnist_forward.1} parent=1 // pred_region
      _
    $region21: #{mnist_forward.1} parent=1 // pred_fallthru
      _
    // Predicated region
    $region22: #{mnist_forward.1} parent=1 // pred_check
      _
    $region23: #{mnist_forward.1} parent=1 // pred_check_branch
      %38 = sbr.rel (0) target = $region25
    $region24: #{mnist_forward.1} parent=1 // pred_region
      _
    $region25: #{mnist_forward.1} parent=1 // pred_fallthru
      _
    // Predicated region
    $region26: #{mnist_forward.1} parent=1 // pred_check
      _
    $region27: #{mnist_forward.1} parent=1 // pred_check_branch
      %40 = sbr.rel (0) target = $region29
    $region28: #{mnist_forward.1} parent=1 // pred_region
      _
    $region29: #{mnist_forward.1} parent=1 // pred_fallthru
      _
    // Predicated region
    $region30: #{mnist_forward.1} parent=1 // pred_check
      _
    $region31: #{mnist_forward.1} parent=1 // pred_check_branch
      %42 = sbr.rel (0) target = $region33
    $region32: #{mnist_forward.1} parent=1 // pred_region
      _
    $region33: #{mnist_forward.1} parent=1 // pred_fallthru
      _
    // Predicated region
    $region34: #{mnist_forward.1} parent=1 // pred_check
      _
    $region35: #{mnist_forward.1} parent=1 // pred_check_branch
      %44 = sbr.rel (0) target = $region37
    $region36: #{mnist_forward.1} parent=1 // pred_region
      _
    $region37: #{mnist_forward.1} parent=1 // pred_fallthru
      _
    // Predicated region
    $region38: #{mnist_forward.1} parent=1 // pred_check
      _
    $region39: #{mnist_forward.1} parent=1 // pred_check_branch
      %46 = sbr.rel (0) target = $region41
    $region40: #{mnist_forward.1} parent=1 // pred_region
      _
    $region41: #{mnist_forward.1} parent=1 // pred_fallthru
      _
    // Predicated region
    $region42: #{mnist_forward.1} parent=1 // pred_check
      _
    $region43: #{mnist_forward.1} parent=1 // pred_check_branch
      %48 = sbr.rel (0) target = $region45
    $region44: #{mnist_forward.1} parent=1 // pred_region
      _
    $region45: #{mnist_forward.1} parent=1 // pred_fallthru
      _
    // Predicated region
    $region46: #{mnist_forward.1} parent=1 // pred_check
      _
    $region47: #{mnist_forward.1} parent=1 // pred_check_branch
      %50 = sbr.rel (0) target = $region49
    $region48: #{mnist_forward.1} parent=1 // pred_region
      %51 = dma.done [#allocation3], 6144
    $region49: #{mnist_forward.1} parent=1 // pred_fallthru
      _
    %v53 = vld [vmem:[#allocation2] sm:$0xff]
    %v54 = vld [vmem:[#allocation2 + $0x8] sm:$0xff]
    %v55 = vld [vmem:[#allocation2 + $0x10] sm:$0xff]
    %v56 = vld [vmem:[#allocation2 + $0x18] sm:$0xff]
    %v57 = vld [vmem:[#allocation2 + $0x20] sm:$0xff]
    %v58 = vld [vmem:[#allocation2 + $0x28] sm:$0xff]
    %v59 = vld [vmem:[#allocation2 + $0x30] sm:$0xff]
    %v60 = vld [vmem:[#allocation2 + $0x38] sm:$0xff]
    %v61 = vld [vmem:[#allocation2 + $0x40] sm:$0xff]
    %v62 = vld [vmem:[#allocation2 + $0x48] sm:$0xff]
    %v63 = vld [vmem:[#allocation2 + $0x50] sm:$0xff]
    %v64 = vld [vmem:[#allocation2 + $0x58] sm:$0xff]
    %v65 = vld [vmem:[#allocation2 + $0x60] sm:$0xff]
    %v66 = vld [vmem:[#allocation2 + $0x68] sm:$0xff]
    %v67 = vld [vmem:[#allocation2 + $0x70] sm:$0xff]
    %v68 = vld [vmem:[#allocation2 + $0x78] sm:$0xff]
    %v69 = vld [vmem:[#allocation2 + $0x80] sm:$0xff]
    %v70 = vld [vmem:[#allocation2 + $0x88] sm:$0xff]
    %v71 = vld [vmem:[#allocation2 + $0x90] sm:$0xff]
    %v72 = vld [vmem:[#allocation2 + $0x98] sm:$0xff]
    %v73 = vld [vmem:[#allocation2 + $0xa0] sm:$0xff]
    %v74 = vld [vmem:[#allocation2 + $0xa8] sm:$0xff]
    %v75 = vld [vmem:[#allocation2 + $0xb0] sm:$0xff]
    %v76 = vld [vmem:[#allocation2 + $0xb8] sm:$0xff]
    %v77 = vld [vmem:[#allocation2 + $0xc0] sm:$0xff]
    %v78 = vld [vmem:[#allocation2 + $0xc8] sm:$0xff]
    %v79 = vld [vmem:[#allocation2 + $0xd0] sm:$0xff]
    %v80 = vld [vmem:[#allocation2 + $0xd8] sm:$0xff]
    %v81 = vld [vmem:[#allocation2 + $0xe0] sm:$0xff]
    %v82 = vld [vmem:[#allocation2 + $0xe8] sm:$0xff]
    %v83 = vld [vmem:[#allocation2 + $0xf0] sm:$0xff]
    %v84 = vld [vmem:[#allocation2 + $0xf8] sm:$0xff]
    %v85 = vld [vmem:[#allocation2 + $0x100] sm:$0xff]
    %v86 = vld [vmem:[#allocation2 + $0x108] sm:$0xff]
    %v87 = vld [vmem:[#allocation2 + $0x110] sm:$0xff]
    %v88 = vld [vmem:[#allocation2 + $0x118] sm:$0xff]
    %v89 = vld [vmem:[#allocation2 + $0x120] sm:$0xff]
    %v90 = vld [vmem:[#allocation2 + $0x128] sm:$0xff]
    %v91 = vld [vmem:[#allocation2 + $0x130] sm:$0xff]
    %v92 = vld [vmem:[#allocation2 + $0x138] sm:$0xff]
    %v93 = vld [vmem:[#allocation2 + $0x140] sm:$0xff]
    %v94 = vld [vmem:[#allocation2 + $0x148] sm:$0xff]
    %v95 = vld [vmem:[#allocation2 + $0x150] sm:$0xff]
    %v96 = vld [vmem:[#allocation2 + $0x158] sm:$0xff]
    %v97 = vld [vmem:[#allocation2 + $0x160] sm:$0xff]
    %v98 = vld [vmem:[#allocation2 + $0x168] sm:$0xff]
    %v99 = vld [vmem:[#allocation2 + $0x170] sm:$0xff]
    %v100 = vld [vmem:[#allocation2 + $0x178] sm:$0xff]
    %v101 = vld [vmem:[%s3] sm:$0xf]
    %v102 = vld [vmem:[%s4] sm:$0xf]
    %v103 = vld [vmem:[%s0] sm:$0xf]
    %v104 = vld [vmem:[%s0 + $0x4] sm:$0xf]
    %v105 = vld [vmem:[%s0 + $0x8] sm:$0xf]
    %v106 = vld [vmem:[%s0 + $0xc] sm:$0xf]
    %v107 = vld [vmem:[%s0 + $0x10] sm:$0xf]
    %v108 = vld [vmem:[%s0 + $0x14] sm:$0xf]
    %v109 = vld [vmem:[%s0 + $0x18] sm:$0xf]
    %v110 = vld [vmem:[%s0 + $0x1c] sm:$0xf]
    %v111 = vld [vmem:[%s0 + $0x20] sm:$0xf]
    %v112 = vld [vmem:[%s0 + $0x24] sm:$0xf]
    %v113 = vld [vmem:[%s0 + $0x28] sm:$0xf]
    %v114 = vld [vmem:[%s0 + $0x2c] sm:$0xf]
    %v127 = vunpack.c.l.b16 %v103
    %v128 = vunpack.c.l.b16 %v104
    %v129 = vunpack.c.l.b16 %v105
    %v130 = vunpack.c.l.b16 %v106
    %v131 = vunpack.c.l.b16 %v107
    %v132 = vunpack.c.l.b16 %v108
    %v133 = vunpack.c.l.b16 %v109
    %v134 = vunpack.c.l.b16 %v110
    %v135 = vunpack.c.l.b16 %v111
    %v136 = vunpack.c.l.b16 %v112
    %v137 = vunpack.c.l.b16 %v113
    %v138 = vunpack.c.l.b16 %v114
    %v139 = vpack.c.b16 %v128, %v127
    %v140 = vpack.c.b16 %v130, %v129
    %v141 = vpack.c.b16 %v132, %v131
    %v142 = vpack.c.b16 %v134, %v133
    %v143 = vpack.c.b16 %v136, %v135
    %v144 = vpack.c.b16 %v138, %v137
    %v193 = vunpack.c.l.b16 %v53
    %v194 = vunpack.c.h.b16 %v53
    %v195 = vunpack.c.l.b16 %v54
    %v196 = vunpack.c.h.b16 %v54
    %v197 = vunpack.c.l.b16 %v55
    %v198 = vunpack.c.h.b16 %v55
    %v199 = vunpack.c.l.b16 %v56
    %v200 = vunpack.c.h.b16 %v56
    %v201 = vunpack.c.l.b16 %v57
    %v202 = vunpack.c.h.b16 %v57
    %v203 = vunpack.c.l.b16 %v58
    %v204 = vunpack.c.h.b16 %v58
    %v205 = vunpack.c.l.b16 %v59
    %v206 = vunpack.c.h.b16 %v59
    %v207 = vunpack.c.l.b16 %v60
    %v208 = vunpack.c.h.b16 %v60
    %v209 = vunpack.c.l.b16 %v61
    %v210 = vunpack.c.h.b16 %v61
    %v211 = vunpack.c.l.b16 %v62
    %v212 = vunpack.c.h.b16 %v62
    %v213 = vunpack.c.l.b16 %v63
    %v214 = vunpack.c.h.b16 %v63
    %v215 = vunpack.c.l.b16 %v64
    %v216 = vunpack.c.h.b16 %v64
    %v217 = vunpack.c.l.b16 %v65
    %v218 = vunpack.c.h.b16 %v65
    %v219 = vunpack.c.l.b16 %v66
    %v220 = vunpack.c.h.b16 %v66
    %v221 = vunpack.c.l.b16 %v67
    %v222 = vunpack.c.h.b16 %v67
    %v223 = vunpack.c.l.b16 %v68
    %v224 = vunpack.c.h.b16 %v68
    %v225 = vunpack.c.l.b16 %v69
    %v226 = vunpack.c.h.b16 %v69
    %v227 = vunpack.c.l.b16 %v70
    %v228 = vunpack.c.h.b16 %v70
    %v229 = vunpack.c.l.b16 %v71
    %v230 = vunpack.c.h.b16 %v71
    %v231 = vunpack.c.l.b16 %v72
    %v232 = vunpack.c.h.b16 %v72
    %v233 = vunpack.c.l.b16 %v73
    %v234 = vunpack.c.h.b16 %v73
    %v235 = vunpack.c.l.b16 %v74
    %v236 = vunpack.c.h.b16 %v74
    %v237 = vunpack.c.l.b16 %v75
    %v238 = vunpack.c.h.b16 %v75
    %v239 = vunpack.c.l.b16 %v76
    %v240 = vunpack.c.h.b16 %v76
    %v241 = vunpack.c.l.b16 %v77
    %v242 = vunpack.c.h.b16 %v77
    %v243 = vunpack.c.l.b16 %v78
    %v244 = vunpack.c.h.b16 %v78
    %v245 = vunpack.c.l.b16 %v79
    %v246 = vunpack.c.h.b16 %v79
    %v247 = vunpack.c.l.b16 %v80
    %v248 = vunpack.c.h.b16 %v80
    %v249 = vunpack.c.l.b16 %v81
    %v250 = vunpack.c.h.b16 %v81
    %v251 = vunpack.c.l.b16 %v82
    %v252 = vunpack.c.h.b16 %v82
    %v253 = vunpack.c.l.b16 %v83
    %v254 = vunpack.c.h.b16 %v83
    %v255 = vunpack.c.l.b16 %v84
    %v256 = vunpack.c.h.b16 %v84
    %v257 = vunpack.c.l.b16 %v85
    %v258 = vunpack.c.h.b16 %v85
    %v259 = vunpack.c.l.b16 %v86
    %v260 = vunpack.c.h.b16 %v86
    %v261 = vunpack.c.l.b16 %v87
    %v262 = vunpack.c.h.b16 %v87
    %v263 = vunpack.c.l.b16 %v88
    %v264 = vunpack.c.h.b16 %v88
    %v265 = vunpack.c.l.b16 %v89
    %v266 = vunpack.c.h.b16 %v89
    %v267 = vunpack.c.l.b16 %v90
    %v268 = vunpack.c.h.b16 %v90
    %v269 = vunpack.c.l.b16 %v91
    %v270 = vunpack.c.h.b16 %v91
    %v271 = vunpack.c.l.b16 %v92
    %v272 = vunpack.c.h.b16 %v92
    %v273 = vunpack.c.l.b16 %v93
    %v274 = vunpack.c.h.b16 %v93
    %v275 = vunpack.c.l.b16 %v94
    %v276 = vunpack.c.h.b16 %v94
    %v277 = vunpack.c.l.b16 %v95
    %v278 = vunpack.c.h.b16 %v95
    %v279 = vunpack.c.l.b16 %v96
    %v280 = vunpack.c.h.b16 %v96
    %v281 = vunpack.c.l.b16 %v97
    %v282 = vunpack.c.h.b16 %v97
    %v283 = vunpack.c.l.b16 %v98
    %v284 = vunpack.c.h.b16 %v98
    %v285 = vunpack.c.l.b16 %v99
    %v286 = vunpack.c.h.b16 %v99
    %v287 = vunpack.c.l.b16 %v100
    %v288 = vunpack.c.h.b16 %v100
    %v289 = vpack.c.b16 %v201, %v193
    %v290 = vpack.c.b16 %v202, %v194
    %v291 = vpack.c.b16 %v203, %v195
    %v292 = vpack.c.b16 %v204, %v196
    %v293 = vpack.c.b16 %v205, %v197
    %v294 = vpack.c.b16 %v206, %v198
    %v295 = vpack.c.b16 %v207, %v199
    %v296 = vpack.c.b16 %v208, %v200
    %v297 = vpack.c.b16 %v217, %v209
    %v298 = vpack.c.b16 %v218, %v210
    %v299 = vpack.c.b16 %v219, %v211
    %v300 = vpack.c.b16 %v220, %v212
    %v301 = vpack.c.b16 %v221, %v213
    %v302 = vpack.c.b16 %v222, %v214
    %v303 = vpack.c.b16 %v223, %v215
    %v304 = vpack.c.b16 %v224, %v216
    %v305 = vpack.c.b16 %v233, %v225
    %v306 = vpack.c.b16 %v234, %v226
    %v307 = vpack.c.b16 %v235, %v227
    %v308 = vpack.c.b16 %v236, %v228
    %v309 = vpack.c.b16 %v237, %v229
    %v310 = vpack.c.b16 %v238, %v230
    %v311 = vpack.c.b16 %v239, %v231
    %v312 = vpack.c.b16 %v240, %v232
    %v313 = vpack.c.b16 %v249, %v241
    %v314 = vpack.c.b16 %v250, %v242
    %v315 = vpack.c.b16 %v251, %v243
    %v316 = vpack.c.b16 %v252, %v244
    %v317 = vpack.c.b16 %v253, %v245
    %v318 = vpack.c.b16 %v254, %v246
    %v319 = vpack.c.b16 %v255, %v247
    %v320 = vpack.c.b16 %v256, %v248
    %v321 = vpack.c.b16 %v265, %v257
    %v322 = vpack.c.b16 %v266, %v258
    %v323 = vpack.c.b16 %v267, %v259
    %v324 = vpack.c.b16 %v268, %v260
    %v325 = vpack.c.b16 %v269, %v261
    %v326 = vpack.c.b16 %v270, %v262
    %v327 = vpack.c.b16 %v271, %v263
    %v328 = vpack.c.b16 %v272, %v264
    %v329 = vpack.c.b16 %v281, %v273
    %v330 = vpack.c.b16 %v282, %v274
    %v331 = vpack.c.b16 %v283, %v275
    %v332 = vpack.c.b16 %v284, %v276
    %v333 = vpack.c.b16 %v285, %v277
    %v334 = vpack.c.b16 %v286, %v278
    %v335 = vpack.c.b16 %v287, %v279
    %v336 = vpack.c.b16 %v288, %v280
    %vm385 = vcmask 785408
    %v387 = vsel %vm385, %v139, 0
    %v390 = vsel %vm385, %v140, 0
    %v393 = vsel %vm385, %v141, 0
    %v396 = vsel %vm385, %v142, 0
    %v399 = vsel %vm385, %v143, 0
    %v402 = vsel %vm385, %v144, 0
    %404 = vmatprep.subr.bf16.mxu0 %v290
    %405 = vmatpush1.bf16.msra.mxu0 %v289
    %406 = vmatprep.subr.bf16.mxu0 %v298
    %407 = vmatpush1.bf16.msra.mxu0 %v297
    %408 = vmatprep.subr.bf16.mxu0 %v306
    %409 = vmatpush1.bf16.msra.mxu0 %v305
    %410 = vmatprep.subr.bf16.mxu0 %v314
    %411 = vmatpush1.bf16.msra.mxu0 %v313
    %412 = vmatprep.subr.bf16.mxu0 %v322
    %413 = vmatpush1.bf16.msra.mxu0 %v321
    %414 = vmatprep.subr.bf16.mxu0 %v330
    %415 = vmatpush1.bf16.msra.mxu0 %v329
    %416 = vmatprep.subr.bf16.mxu0 0
    %417 = vmatpush1.bf16.msra.mxu0 0
    %418 = vmatprep.subr.bf16.mxu0 0
    %419 = vmatpush1.bf16.msra.mxu0 0
    %420 = vmatprep.subr.bf16.mxu0 0
    %421 = vmatpush1.bf16.msra.mxu0 0
    %422 = vmatprep.subr.bf16.mxu0 0
    %423 = vmatpush1.bf16.msra.mxu0 0
    %424 = vmatprep.subr.bf16.mxu0 0
    %425 = vmatpush1.bf16.msra.mxu0 0
    %426 = vmatprep.subr.bf16.mxu0 0
    %427 = vmatpush1.bf16.msra.mxu0 0
    %428 = vmatprep.subr.bf16.mxu0 0
    %429 = vmatpush1.bf16.msra.mxu0 0
    %430 = vmatprep.subr.bf16.mxu0 0
    %431 = vmatpush1.bf16.msra.mxu0 0
    %432 = vmatprep.subr.bf16.mxu0 0
    %433 = vmatpush1.bf16.msra.mxu0 0
    %434 = vmatprep.subr.bf16.mxu0 0
    %435 = vmatpush1.bf16.msra.mxu0 0
    %436 = vmatprep.mubr.bf16.mxu0 0
    %437 = vmatmul.mubr.bf16.gmra.mrb[0].mxu0 %v387
    %v438 = vpop.f32.mrb[0].mxu0
    %v439 = vadd.f32 0.0, %v438
    %v440 = vpop.f32.mrb[0].mxu0
    %v441 = vadd.f32 0.0, %v440
    %v442 = vpop.f32.mrb[0].mxu0
    %v443 = vadd.f32 0.0, %v442
    %v444 = vpop.f32.mrb[0].mxu0
    %v445 = vadd.f32 0.0, %v444
    %446 = vmatprep.mubr.bf16.mxu0 0
    %447 = vmatmul.mubr.bf16.gmra.mrb[0].mxu0 %v390
    %v448 = vpop.f32.mrb[0].mxu0
    %v449 = vadd.f32 0.0, %v448
    %v450 = vpop.f32.mrb[0].mxu0
    %v451 = vadd.f32 0.0, %v450
    %v452 = vpop.f32.mrb[0].mxu0
    %v453 = vadd.f32 0.0, %v452
    %v454 = vpop.f32.mrb[0].mxu0
    %v455 = vadd.f32 0.0, %v454
    %456 = vmatprep.mubr.bf16.mxu0 0
    %457 = vmatmul.mubr.bf16.gmra.mrb[0].mxu0 %v393
    %v458 = vpop.f32.mrb[0].mxu0
    %v459 = vadd.f32 0.0, %v458
    %v460 = vpop.f32.mrb[0].mxu0
    %v461 = vadd.f32 0.0, %v460
    %v462 = vpop.f32.mrb[0].mxu0
    %v463 = vadd.f32 0.0, %v462
    %v464 = vpop.f32.mrb[0].mxu0
    %v465 = vadd.f32 0.0, %v464
    %466 = vmatprep.mubr.bf16.mxu0 0
    %467 = vmatmul.mubr.bf16.gmra.mrb[0].mxu0 %v396
    %v468 = vpop.f32.mrb[0].mxu0
    %v469 = vadd.f32 0.0, %v468
    %v470 = vpop.f32.mrb[0].mxu0
    %v471 = vadd.f32 0.0, %v470
    %v472 = vpop.f32.mrb[0].mxu0
    %v473 = vadd.f32 0.0, %v472
    %v474 = vpop.f32.mrb[0].mxu0
    %v475 = vadd.f32 0.0, %v474
    %476 = vmatprep.mubr.bf16.mxu0 0
    %477 = vmatmul.mubr.bf16.gmra.mrb[0].mxu0 %v399
    %v478 = vpop.f32.mrb[0].mxu0
    %v479 = vadd.f32 0.0, %v478
    %v480 = vpop.f32.mrb[0].mxu0
    %v481 = vadd.f32 0.0, %v480
    %v482 = vpop.f32.mrb[0].mxu0
    %v483 = vadd.f32 0.0, %v482
    %v484 = vpop.f32.mrb[0].mxu0
    %v485 = vadd.f32 0.0, %v484
    %486 = vmatprep.mubr.bf16.mxu0 0
    %487 = vmatmul.mubr.bf16.gmra.mrb[0].mxu0 %v402
    %v488 = vpop.f32.mrb[0].mxu0
    %v489 = vadd.f32 0.0, %v488
    %v490 = vpop.f32.mrb[0].mxu0
    %v491 = vadd.f32 0.0, %v490
    %v492 = vpop.f32.mrb[0].mxu0
    %v493 = vadd.f32 0.0, %v492
    %v494 = vpop.f32.mrb[0].mxu0
    %v495 = vadd.f32 0.0, %v494
    %496 = vdwg.mxu0
    %497 = vmatprep.subr.bf16.mxu0 %v292
    %498 = vmatpush1.bf16.msra.mxu0 %v291
    %499 = vmatprep.subr.bf16.mxu0 %v300
    %500 = vmatpush1.bf16.msra.mxu0 %v299
    %501 = vmatprep.subr.bf16.mxu0 %v308
    %502 = vmatpush1.bf16.msra.mxu0 %v307
    %503 = vmatprep.subr.bf16.mxu0 %v316
    %504 = vmatpush1.bf16.msra.mxu0 %v315
    %505 = vmatprep.subr.bf16.mxu0 %v324
    %506 = vmatpush1.bf16.msra.mxu0 %v323
    %507 = vmatprep.subr.bf16.mxu0 %v332
    %508 = vmatpush1.bf16.msra.mxu0 %v331
    %509 = vmatprep.subr.bf16.mxu0 0
    %510 = vmatpush1.bf16.msra.mxu0 0
    %511 = vmatprep.subr.bf16.mxu0 0
    %512 = vmatpush1.bf16.msra.mxu0 0
    %513 = vmatprep.subr.bf16.mxu0 0
    %514 = vmatpush1.bf16.msra.mxu0 0
    %515 = vmatprep.subr.bf16.mxu0 0
    %516 = vmatpush1.bf16.msra.mxu0 0
    %517 = vmatprep.subr.bf16.mxu0 0
    %518 = vmatpush1.bf16.msra.mxu0 0
    %519 = vmatprep.subr.bf16.mxu0 0
    %520 = vmatpush1.bf16.msra.mxu0 0
    %521 = vmatprep.subr.bf16.mxu0 0
    %522 = vmatpush1.bf16.msra.mxu0 0
    %523 = vmatprep.subr.bf16.mxu0 0
    %524 = vmatpush1.bf16.msra.mxu0 0
    %525 = vmatprep.subr.bf16.mxu0 0
    %526 = vmatpush1.bf16.msra.mxu0 0
    %527 = vmatprep.subr.bf16.mxu0 0
    %528 = vmatpush1.bf16.msra.mxu0 0
    %529 = vmatprep.mubr.bf16.mxu0 0
    %530 = vmatmul.mubr.bf16.gmra.mrb[0].mxu0 %v387
    %v531 = vpop.f32.mrb[0].mxu0
    %v532 = vadd.f32 0.0, %v531
    %v533 = vpop.f32.mrb[0].mxu0
    %v534 = vadd.f32 0.0, %v533
    %v535 = vpop.f32.mrb[0].mxu0
    %v536 = vadd.f32 0.0, %v535
    %v537 = vpop.f32.mrb[0].mxu0
    %v538 = vadd.f32 0.0, %v537
    %539 = vmatprep.mubr.bf16.mxu0 0
    %540 = vmatmul.mubr.bf16.gmra.mrb[0].mxu0 %v390
    %v541 = vpop.f32.mrb[0].mxu0
    %v542 = vadd.f32 0.0, %v541
    %v543 = vpop.f32.mrb[0].mxu0
    %v544 = vadd.f32 0.0, %v543
    %v545 = vpop.f32.mrb[0].mxu0
    %v546 = vadd.f32 0.0, %v545
    %v547 = vpop.f32.mrb[0].mxu0
    %v548 = vadd.f32 0.0, %v547
    %549 = vmatprep.mubr.bf16.mxu0 0
    %550 = vmatmul.mubr.bf16.gmra.mrb[0].mxu0 %v393
    %v551 = vpop.f32.mrb[0].mxu0
    %v552 = vadd.f32 0.0, %v551
    %v553 = vpop.f32.mrb[0].mxu0
    %v554 = vadd.f32 0.0, %v553
    %v555 = vpop.f32.mrb[0].mxu0
    %v556 = vadd.f32 0.0, %v555
    %v557 = vpop.f32.mrb[0].mxu0
    %v558 = vadd.f32 0.0, %v557
    %559 = vmatprep.mubr.bf16.mxu0 0
    %560 = vmatmul.mubr.bf16.gmra.mrb[0].mxu0 %v396
    %v561 = vpop.f32.mrb[0].mxu0
    %v562 = vadd.f32 0.0, %v561
    %v563 = vpop.f32.mrb[0].mxu0
    %v564 = vadd.f32 0.0, %v563
    %v565 = vpop.f32.mrb[0].mxu0
    %v566 = vadd.f32 0.0, %v565
    %v567 = vpop.f32.mrb[0].mxu0
    %v568 = vadd.f32 0.0, %v567
    %569 = vmatprep.mubr.bf16.mxu0 0
    %570 = vmatmul.mubr.bf16.gmra.mrb[0].mxu0 %v399
    %v571 = vpop.f32.mrb[0].mxu0
    %v572 = vadd.f32 0.0, %v571
    %v573 = vpop.f32.mrb[0].mxu0
    %v574 = vadd.f32 0.0, %v573
    %v575 = vpop.f32.mrb[0].mxu0
    %v576 = vadd.f32 0.0, %v575
    %v577 = vpop.f32.mrb[0].mxu0
    %v578 = vadd.f32 0.0, %v577
    %579 = vmatprep.mubr.bf16.mxu0 0
    %580 = vmatmul.mubr.bf16.gmra.mrb[0].mxu0 %v402
    %v581 = vpop.f32.mrb[0].mxu0
    %v582 = vadd.f32 0.0, %v581
    %v583 = vpop.f32.mrb[0].mxu0
    %v584 = vadd.f32 0.0, %v583
    %v585 = vpop.f32.mrb[0].mxu0
    %v586 = vadd.f32 0.0, %v585
    %v587 = vpop.f32.mrb[0].mxu0
    %v588 = vadd.f32 0.0, %v587
    %589 = vdwg.mxu0
    %590 = vmatprep.subr.bf16.mxu0 %v294
    %591 = vmatpush1.bf16.msra.mxu0 %v293
    %592 = vmatprep.subr.bf16.mxu0 %v302
    %593 = vmatpush1.bf16.msra.mxu0 %v301
    %594 = vmatprep.subr.bf16.mxu0 %v310
    %595 = vmatpush1.bf16.msra.mxu0 %v309
    %596 = vmatprep.subr.bf16.mxu0 %v318
    %597 = vmatpush1.bf16.msra.mxu0 %v317
    %598 = vmatprep.subr.bf16.mxu0 %v326
    %599 = vmatpush1.bf16.msra.mxu0 %v325
    %600 = vmatprep.subr.bf16.mxu0 %v334
    %601 = vmatpush1.bf16.msra.mxu0 %v333
    %602 = vmatprep.subr.bf16.mxu0 0
    %603 = vmatpush1.bf16.msra.mxu0 0
    %604 = vmatprep.subr.bf16.mxu0 0
    %605 = vmatpush1.bf16.msra.mxu0 0
    %606 = vmatprep.subr.bf16.mxu0 0
    %607 = vmatpush1.bf16.msra.mxu0 0
    %608 = vmatprep.subr.bf16.mxu0 0
    %609 = vmatpush1.bf16.msra.mxu0 0
    %610 = vmatprep.subr.bf16.mxu0 0
    %611 = vmatpush1.bf16.msra.mxu0 0
    %612 = vmatprep.subr.bf16.mxu0 0
    %613 = vmatpush1.bf16.msra.mxu0 0
    %614 = vmatprep.subr.bf16.mxu0 0
    %615 = vmatpush1.bf16.msra.mxu0 0
    %616 = vmatprep.subr.bf16.mxu0 0
    %617 = vmatpush1.bf16.msra.mxu0 0
    %618 = vmatprep.subr.bf16.mxu0 0
    %619 = vmatpush1.bf16.msra.mxu0 0
    %620 = vmatprep.subr.bf16.mxu0 0
    %621 = vmatpush1.bf16.msra.mxu0 0
    %622 = vmatprep.mubr.bf16.mxu0 0
    %623 = vmatmul.mubr.bf16.gmra.mrb[0].mxu0 %v387
    %v624 = vpop.f32.mrb[0].mxu0
    %v625 = vadd.f32 0.0, %v624
    %v626 = vpop.f32.mrb[0].mxu0
    %v627 = vadd.f32 0.0, %v626
    %v628 = vpop.f32.mrb[0].mxu0
    %v629 = vadd.f32 0.0, %v628
    %v630 = vpop.f32.mrb[0].mxu0
    %v631 = vadd.f32 0.0, %v630
    %632 = vmatprep.mubr.bf16.mxu0 0
    %633 = vmatmul.mubr.bf16.gmra.mrb[0].mxu0 %v390
    %v634 = vpop.f32.mrb[0].mxu0
    %v635 = vadd.f32 0.0, %v634
    %v636 = vpop.f32.mrb[0].mxu0
    %v637 = vadd.f32 0.0, %v636
    %v638 = vpop.f32.mrb[0].mxu0
    %v639 = vadd.f32 0.0, %v638
    %v640 = vpop.f32.mrb[0].mxu0
    %v641 = vadd.f32 0.0, %v640
    %642 = vmatprep.mubr.bf16.mxu0 0
    %643 = vmatmul.mubr.bf16.gmra.mrb[0].mxu0 %v393
    %v644 = vpop.f32.mrb[0].mxu0
    %v645 = vadd.f32 0.0, %v644
    %v646 = vpop.f32.mrb[0].mxu0
    %v647 = vadd.f32 0.0, %v646
    %v648 = vpop.f32.mrb[0].mxu0
    %v649 = vadd.f32 0.0, %v648
    %v650 = vpop.f32.mrb[0].mxu0
    %v651 = vadd.f32 0.0, %v650
    %652 = vmatprep.mubr.bf16.mxu0 0
    %653 = vmatmul.mubr.bf16.gmra.mrb[0].mxu0 %v396
    %v654 = vpop.f32.mrb[0].mxu0
    %v655 = vadd.f32 0.0, %v654
    %v656 = vpop.f32.mrb[0].mxu0
    %v657 = vadd.f32 0.0, %v656
    %v658 = vpop.f32.mrb[0].mxu0
    %v659 = vadd.f32 0.0, %v658
    %v660 = vpop.f32.mrb[0].mxu0
    %v661 = vadd.f32 0.0, %v660
    %662 = vmatprep.mubr.bf16.mxu0 0
    %663 = vmatmul.mubr.bf16.gmra.mrb[0].mxu0 %v399
    %v664 = vpop.f32.mrb[0].mxu0
    %v665 = vadd.f32 0.0, %v664
    %v666 = vpop.f32.mrb[0].mxu0
    %v667 = vadd.f32 0.0, %v666
    %v668 = vpop.f32.mrb[0].mxu0
    %v669 = vadd.f32 0.0, %v668
    %v670 = vpop.f32.mrb[0].mxu0
    %v671 = vadd.f32 0.0, %v670
    %672 = vmatprep.mubr.bf16.mxu0 0
    %673 = vmatmul.mubr.bf16.gmra.mrb[0].mxu0 %v402
    %v674 = vpop.f32.mrb[0].mxu0
    %v675 = vadd.f32 0.0, %v674
    %v676 = vpop.f32.mrb[0].mxu0
    %v677 = vadd.f32 0.0, %v676
    %v678 = vpop.f32.mrb[0].mxu0
    %v679 = vadd.f32 0.0, %v678
    %v680 = vpop.f32.mrb[0].mxu0
    %v681 = vadd.f32 0.0, %v680
    %682 = vdwg.mxu0
    %683 = vmatprep.subr.bf16.mxu0 %v296
    %684 = vmatpush1.bf16.msra.mxu0 %v295
    %685 = vmatprep.subr.bf16.mxu0 %v304
    %686 = vmatpush1.bf16.msra.mxu0 %v303
    %687 = vmatprep.subr.bf16.mxu0 %v312
    %688 = vmatpush1.bf16.msra.mxu0 %v311
    %689 = vmatprep.subr.bf16.mxu0 %v320
    %690 = vmatpush1.bf16.msra.mxu0 %v319
    %691 = vmatprep.subr.bf16.mxu0 %v328
    %692 = vmatpush1.bf16.msra.mxu0 %v327
    %693 = vmatprep.subr.bf16.mxu0 %v336
    %694 = vmatpush1.bf16.msra.mxu0 %v335
    %695 = vmatprep.subr.bf16.mxu0 0
    %696 = vmatpush1.bf16.msra.mxu0 0
    %697 = vmatprep.subr.bf16.mxu0 0
    %698 = vmatpush1.bf16.msra.mxu0 0
    %699 = vmatprep.subr.bf16.mxu0 0
    %700 = vmatpush1.bf16.msra.mxu0 0
    %701 = vmatprep.subr.bf16.mxu0 0
    %702 = vmatpush1.bf16.msra.mxu0 0
    %703 = vmatprep.subr.bf16.mxu0 0
    %704 = vmatpush1.bf16.msra.mxu0 0
    %705 = vmatprep.subr.bf16.mxu0 0
    %706 = vmatpush1.bf16.msra.mxu0 0
    %707 = vmatprep.subr.bf16.mxu0 0
    %708 = vmatpush1.bf16.msra.mxu0 0
    %709 = vmatprep.subr.bf16.mxu0 0
    %710 = vmatpush1.bf16.msra.mxu0 0
    %711 = vmatprep.subr.bf16.mxu0 0
    %712 = vmatpush1.bf16.msra.mxu0 0
    %713 = vmatprep.subr.bf16.mxu0 0
    %714 = vmatpush1.bf16.msra.mxu0 0
    %715 = vmatprep.mubr.bf16.mxu0 0
    %716 = vmatmul.mubr.bf16.gmra.mrb[0].mxu0 %v387
    %v717 = vpop.f32.mrb[0].mxu0
    %v718 = vadd.f32 0.0, %v717
    %v719 = vpop.f32.mrb[0].mxu0
    %v720 = vadd.f32 0.0, %v719
    %v721 = vpop.f32.mrb[0].mxu0
    %v722 = vadd.f32 0.0, %v721
    %v723 = vpop.f32.mrb[0].mxu0
    %v724 = vadd.f32 0.0, %v723
    %725 = vmatprep.mubr.bf16.mxu0 0
    %726 = vmatmul.mubr.bf16.gmra.mrb[0].mxu0 %v390
    %v727 = vpop.f32.mrb[0].mxu0
    %v728 = vadd.f32 0.0, %v727
    %v729 = vpop.f32.mrb[0].mxu0
    %v730 = vadd.f32 0.0, %v729
    %v731 = vpop.f32.mrb[0].mxu0
    %v732 = vadd.f32 0.0, %v731
    %v733 = vpop.f32.mrb[0].mxu0
    %v734 = vadd.f32 0.0, %v733
    %735 = vmatprep.mubr.bf16.mxu0 0
    %736 = vmatmul.mubr.bf16.gmra.mrb[0].mxu0 %v393
    %v737 = vpop.f32.mrb[0].mxu0
    %v738 = vadd.f32 0.0, %v737
    %v739 = vpop.f32.mrb[0].mxu0
    %v740 = vadd.f32 0.0, %v739
    %v741 = vpop.f32.mrb[0].mxu0
    %v742 = vadd.f32 0.0, %v741
    %v743 = vpop.f32.mrb[0].mxu0
    %v744 = vadd.f32 0.0, %v743
    %745 = vmatprep.mubr.bf16.mxu0 0
    %746 = vmatmul.mubr.bf16.gmra.mrb[0].mxu0 %v396
    %v747 = vpop.f32.mrb[0].mxu0
    %v748 = vadd.f32 0.0, %v747
    %v749 = vpop.f32.mrb[0].mxu0
    %v750 = vadd.f32 0.0, %v749
    %v751 = vpop.f32.mrb[0].mxu0
    %v752 = vadd.f32 0.0, %v751
    %v753 = vpop.f32.mrb[0].mxu0
    %v754 = vadd.f32 0.0, %v753
    %755 = vmatprep.mubr.bf16.mxu0 0
    %756 = vmatmul.mubr.bf16.gmra.mrb[0].mxu0 %v399
    %v757 = vpop.f32.mrb[0].mxu0
    %v758 = vadd.f32 0.0, %v757
    %v759 = vpop.f32.mrb[0].mxu0
    %v760 = vadd.f32 0.0, %v759
    %v761 = vpop.f32.mrb[0].mxu0
    %v762 = vadd.f32 0.0, %v761
    %v763 = vpop.f32.mrb[0].mxu0
    %v764 = vadd.f32 0.0, %v763
    %765 = vmatprep.mubr.bf16.mxu0 0
    %766 = vmatmul.mubr.bf16.gmra.mrb[0].mxu0 %v402
    %v767 = vpop.f32.mrb[0].mxu0
    %v768 = vadd.f32 0.0, %v767
    %v769 = vpop.f32.mrb[0].mxu0
    %v770 = vadd.f32 0.0, %v769
    %v771 = vpop.f32.mrb[0].mxu0
    %v772 = vadd.f32 0.0, %v771
    %v773 = vpop.f32.mrb[0].mxu0
    %v774 = vadd.f32 0.0, %v773
    %775 = vdwg.mxu0
    %s776 = scalar_lea.vmem %s0, 48
    %v777 = vld [vmem:[%s776] sm:$0xf]
    %v778 = vld [vmem:[%s776 + $0x4] sm:$0xf]
    %v779 = vld [vmem:[%s776 + $0x8] sm:$0xf]
    %v780 = vld [vmem:[%s776 + $0xc] sm:$0xf]
    %v781 = vld [vmem:[%s776 + $0x10] sm:$0xf]
    %v782 = vld [vmem:[%s776 + $0x14] sm:$0xf]
    %v783 = vld [vmem:[%s776 + $0x18] sm:$0xf]
    %v784 = vld [vmem:[%s776 + $0x1c] sm:$0xf]
    %v785 = vld [vmem:[%s776 + $0x20] sm:$0xf]
    %v786 = vld [vmem:[%s776 + $0x24] sm:$0xf]
    %v787 = vld [vmem:[%s776 + $0x28] sm:$0xf]
    %v788 = vld [vmem:[%s776 + $0x2c] sm:$0xf]
    %v801 = vunpack.c.l.b16 %v777
    %v802 = vunpack.c.l.b16 %v778
    %v803 = vunpack.c.l.b16 %v779
    %v804 = vunpack.c.l.b16 %v780
    %v805 = vunpack.c.l.b16 %v781
    %v806 = vunpack.c.l.b16 %v782
    %v807 = vunpack.c.l.b16 %v783
    %v808 = vunpack.c.l.b16 %v784
    %v809 = vunpack.c.l.b16 %v785
    %v810 = vunpack.c.l.b16 %v786
    %v811 = vunpack.c.l.b16 %v787
    %v812 = vunpack.c.l.b16 %v788
    %v813 = vpack.c.b16 %v802, %v801
    %v814 = vpack.c.b16 %v804, %v803
    %v815 = vpack.c.b16 %v806, %v805
    %v816 = vpack.c.b16 %v808, %v807
    %v817 = vpack.c.b16 %v810, %v809
    %v818 = vpack.c.b16 %v812, %v811
    %v820 = vsel %vm385, %v813, 0
    %v823 = vsel %vm385, %v814, 0
    %v826 = vsel %vm385, %v815, 0
    %v829 = vsel %vm385, %v816, 0
    %v832 = vsel %vm385, %v817, 0
    %v835 = vsel %vm385, %v818, 0
    %837 = vmatprep.subr.bf16.mxu0 %v290
    %838 = vmatpush1.bf16.msra.mxu0 %v289
    %839 = vmatprep.subr.bf16.mxu0 %v298
    %840 = vmatpush1.bf16.msra.mxu0 %v297
    %841 = vmatprep.subr.bf16.mxu0 %v306
    %842 = vmatpush1.bf16.msra.mxu0 %v305
    %843 = vmatprep.subr.bf16.mxu0 %v314
    %844 = vmatpush1.bf16.msra.mxu0 %v313
    %845 = vmatprep.subr.bf16.mxu0 %v322
    %846 = vmatpush1.bf16.msra.mxu0 %v321
    %847 = vmatprep.subr.bf16.mxu0 %v330
    %848 = vmatpush1.bf16.msra.mxu0 %v329
    %849 = vmatprep.subr.bf16.mxu0 0
    %850 = vmatpush1.bf16.msra.mxu0 0
    %851 = vmatprep.subr.bf16.mxu0 0
    %852 = vmatpush1.bf16.msra.mxu0 0
    %853 = vmatprep.subr.bf16.mxu0 0
    %854 = vmatpush1.bf16.msra.mxu0 0
    %855 = vmatprep.subr.bf16.mxu0 0
    %856 = vmatpush1.bf16.msra.mxu0 0
    %857 = vmatprep.subr.bf16.mxu0 0
    %858 = vmatpush1.bf16.msra.mxu0 0
    %859 = vmatprep.subr.bf16.mxu0 0
    %860 = vmatpush1.bf16.msra.mxu0 0
    %861 = vmatprep.subr.bf16.mxu0 0
    %862 = vmatpush1.bf16.msra.mxu0 0
    %863 = vmatprep.subr.bf16.mxu0 0
    %864 = vmatpush1.bf16.msra.mxu0 0
    %865 = vmatprep.subr.bf16.mxu0 0
    %866 = vmatpush1.bf16.msra.mxu0 0
    %867 = vmatprep.subr.bf16.mxu0 0
    %868 = vmatpush1.bf16.msra.mxu0 0
    %869 = vmatprep.mubr.bf16.mxu0 0
    %870 = vmatmul.mubr.bf16.gmra.mrb[0].mxu0 %v820
    %v871 = vpop.f32.mrb[0].mxu0
    %v872 = vadd.f32 0.0, %v871
    %v873 = vpop.f32.mrb[0].mxu0
    %v874 = vadd.f32 0.0, %v873
    %v875 = vpop.f32.mrb[0].mxu0
    %v876 = vadd.f32 0.0, %v875
    %v877 = vpop.f32.mrb[0].mxu0
    %v878 = vadd.f32 0.0, %v877
    %879 = vmatprep.mubr.bf16.mxu0 0
    %880 = vmatmul.mubr.bf16.gmra.mrb[0].mxu0 %v823
    %v881 = vpop.f32.mrb[0].mxu0
    %v882 = vadd.f32 0.0, %v881
    %v883 = vpop.f32.mrb[0].mxu0
    %v884 = vadd.f32 0.0, %v883
    %v885 = vpop.f32.mrb[0].mxu0
    %v886 = vadd.f32 0.0, %v885
    %v887 = vpop.f32.mrb[0].mxu0
    %v888 = vadd.f32 0.0, %v887
    %889 = vmatprep.mubr.bf16.mxu0 0
    %890 = vmatmul.mubr.bf16.gmra.mrb[0].mxu0 %v826
    %v891 = vpop.f32.mrb[0].mxu0
    %v892 = vadd.f32 0.0, %v891
    %v893 = vpop.f32.mrb[0].mxu0
    %v894 = vadd.f32 0.0, %v893
    %v895 = vpop.f32.mrb[0].mxu0
    %v896 = vadd.f32 0.0, %v895
    %v897 = vpop.f32.mrb[0].mxu0
    %v898 = vadd.f32 0.0, %v897
    %899 = vmatprep.mubr.bf16.mxu0 0
    %900 = vmatmul.mubr.bf16.gmra.mrb[0].mxu0 %v829
    %v901 = vpop.f32.mrb[0].mxu0
    %v902 = vadd.f32 0.0, %v901
    %v903 = vpop.f32.mrb[0].mxu0
    %v904 = vadd.f32 0.0, %v903
    %v905 = vpop.f32.mrb[0].mxu0
    %v906 = vadd.f32 0.0, %v905
    %v907 = vpop.f32.mrb[0].mxu0
    %v908 = vadd.f32 0.0, %v907
    %909 = vmatprep.mubr.bf16.mxu0 0
    %910 = vmatmul.mubr.bf16.gmra.mrb[0].mxu0 %v832
    %v911 = vpop.f32.mrb[0].mxu0
    %v912 = vadd.f32 0.0, %v911
    %v913 = vpop.f32.mrb[0].mxu0
    %v914 = vadd.f32 0.0, %v913
    %v915 = vpop.f32.mrb[0].mxu0
    %v916 = vadd.f32 0.0, %v915
    %v917 = vpop.f32.mrb[0].mxu0
    %v918 = vadd.f32 0.0, %v917
    %919 = vmatprep.mubr.bf16.mxu0 0
    %920 = vmatmul.mubr.bf16.gmra.mrb[0].mxu0 %v835
    %v921 = vpop.f32.mrb[0].mxu0
    %v922 = vadd.f32 0.0, %v921
    %v923 = vpop.f32.mrb[0].mxu0
    %v924 = vadd.f32 0.0, %v923
    %v925 = vpop.f32.mrb[0].mxu0
    %v926 = vadd.f32 0.0, %v925
    %v927 = vpop.f32.mrb[0].mxu0
    %v928 = vadd.f32 0.0, %v927
    %929 = vdwg.mxu0
    %930 = vmatprep.subr.bf16.mxu0 %v292
    %931 = vmatpush1.bf16.msra.mxu0 %v291
    %932 = vmatprep.subr.bf16.mxu0 %v300
    %933 = vmatpush1.bf16.msra.mxu0 %v299
    %934 = vmatprep.subr.bf16.mxu0 %v308
    %935 = vmatpush1.bf16.msra.mxu0 %v307
    %936 = vmatprep.subr.bf16.mxu0 %v316
    %937 = vmatpush1.bf16.msra.mxu0 %v315
    %938 = vmatprep.subr.bf16.mxu0 %v324
    %939 = vmatpush1.bf16.msra.mxu0 %v323
    %940 = vmatprep.subr.bf16.mxu0 %v332
    %941 = vmatpush1.bf16.msra.mxu0 %v331
    %942 = vmatprep.subr.bf16.mxu0 0
    %943 = vmatpush1.bf16.msra.mxu0 0
    %944 = vmatprep.subr.bf16.mxu0 0
    %945 = vmatpush1.bf16.msra.mxu0 0
    %946 = vmatprep.subr.bf16.mxu0 0
    %947 = vmatpush1.bf16.msra.mxu0 0
    %948 = vmatprep.subr.bf16.mxu0 0
    %949 = vmatpush1.bf16.msra.mxu0 0
    %950 = vmatprep.subr.bf16.mxu0 0
    %951 = vmatpush1.bf16.msra.mxu0 0
    %952 = vmatprep.subr.bf16.mxu0 0
    %953 = vmatpush1.bf16.msra.mxu0 0
    %954 = vmatprep.subr.bf16.mxu0 0
    %955 = vmatpush1.bf16.msra.mxu0 0
    %956 = vmatprep.subr.bf16.mxu0 0
    %957 = vmatpush1.bf16.msra.mxu0 0
    %958 = vmatprep.subr.bf16.mxu0 0
    %959 = vmatpush1.bf16.msra.mxu0 0
    %960 = vmatprep.subr.bf16.mxu0 0
    %961 = vmatpush1.bf16.msra.mxu0 0
    %962 = vmatprep.mubr.bf16.mxu0 0
    %963 = vmatmul.mubr.bf16.gmra.mrb[0].mxu0 %v820
    %v964 = vpop.f32.mrb[0].mxu0
    %v965 = vadd.f32 0.0, %v964
    %v966 = vpop.f32.mrb[0].mxu0
    %v967 = vadd.f32 0.0, %v966
    %v968 = vpop.f32.mrb[0].mxu0
    %v969 = vadd.f32 0.0, %v968
    %v970 = vpop.f32.mrb[0].mxu0
    %v971 = vadd.f32 0.0, %v970
    %972 = vmatprep.mubr.bf16.mxu0 0
    %973 = vmatmul.mubr.bf16.gmra.mrb[0].mxu0 %v823
    %v974 = vpop.f32.mrb[0].mxu0
    %v975 = vadd.f32 0.0, %v974
    %v976 = vpop.f32.mrb[0].mxu0
    %v977 = vadd.f32 0.0, %v976
    %v978 = vpop.f32.mrb[0].mxu0
    %v979 = vadd.f32 0.0, %v978
    %v980 = vpop.f32.mrb[0].mxu0
    %v981 = vadd.f32 0.0, %v980
    %982 = vmatprep.mubr.bf16.mxu0 0
    %983 = vmatmul.mubr.bf16.gmra.mrb[0].mxu0 %v826
    %v984 = vpop.f32.mrb[0].mxu0
    %v985 = vadd.f32 0.0, %v984
    %v986 = vpop.f32.mrb[0].mxu0
    %v987 = vadd.f32 0.0, %v986
    %v988 = vpop.f32.mrb[0].mxu0
    %v989 = vadd.f32 0.0, %v988
    %v990 = vpop.f32.mrb[0].mxu0
    %v991 = vadd.f32 0.0, %v990
    %992 = vmatprep.mubr.bf16.mxu0 0
    %993 = vmatmul.mubr.bf16.gmra.mrb[0].mxu0 %v829
    %v994 = vpop.f32.mrb[0].mxu0
    %v995 = vadd.f32 0.0, %v994
    %v996 = vpop.f32.mrb[0].mxu0
    %v997 = vadd.f32 0.0, %v996
    %v998 = vpop.f32.mrb[0].mxu0
    %v999 = vadd.f32 0.0, %v998
    %v1000 = vpop.f32.mrb[0].mxu0
    %v1001 = vadd.f32 0.0, %v1000
    %1002 = vmatprep.mubr.bf16.mxu0 0
    %1003 = vmatmul.mubr.bf16.gmra.mrb[0].mxu0 %v832
    %v1004 = vpop.f32.mrb[0].mxu0
    %v1005 = vadd.f32 0.0, %v1004
    %v1006 = vpop.f32.mrb[0].mxu0
    %v1007 = vadd.f32 0.0, %v1006
    %v1008 = vpop.f32.mrb[0].mxu0
    %v1009 = vadd.f32 0.0, %v1008
    %v1010 = vpop.f32.mrb[0].mxu0
    %v1011 = vadd.f32 0.0, %v1010
    %1012 = vmatprep.mubr.bf16.mxu0 0
    %1013 = vmatmul.mubr.bf16.gmra.mrb[0].mxu0 %v835
    %v1014 = vpop.f32.mrb[0].mxu0
    %v1015 = vadd.f32 0.0, %v1014
    %v1016 = vpop.f32.mrb[0].mxu0
    %v1017 = vadd.f32 0.0, %v1016
    %v1018 = vpop.f32.mrb[0].mxu0
    %v1019 = vadd.f32 0.0, %v1018
    %v1020 = vpop.f32.mrb[0].mxu0
    %v1021 = vadd.f32 0.0, %v1020
    %1022 = vdwg.mxu0
    %1023 = vmatprep.subr.bf16.mxu0 %v294
    %1024 = vmatpush1.bf16.msra.mxu0 %v293
    %1025 = vmatprep.subr.bf16.mxu0 %v302
    %1026 = vmatpush1.bf16.msra.mxu0 %v301
    %1027 = vmatprep.subr.bf16.mxu0 %v310
    %1028 = vmatpush1.bf16.msra.mxu0 %v309
    %1029 = vmatprep.subr.bf16.mxu0 %v318
    %1030 = vmatpush1.bf16.msra.mxu0 %v317
    %1031 = vmatprep.subr.bf16.mxu0 %v326
    %1032 = vmatpush1.bf16.msra.mxu0 %v325
    %1033 = vmatprep.subr.bf16.mxu0 %v334
    %1034 = vmatpush1.bf16.msra.mxu0 %v333
    %1035 = vmatprep.subr.bf16.mxu0 0
    %1036 = vmatpush1.bf16.msra.mxu0 0
    %1037 = vmatprep.subr.bf16.mxu0 0
    %1038 = vmatpush1.bf16.msra.mxu0 0
    %1039 = vmatprep.subr.bf16.mxu0 0
    %1040 = vmatpush1.bf16.msra.mxu0 0
    %1041 = vmatprep.subr.bf16.mxu0 0
    %1042 = vmatpush1.bf16.msra.mxu0 0
    %1043 = vmatprep.subr.bf16.mxu0 0
    %1044 = vmatpush1.bf16.msra.mxu0 0
    %1045 = vmatprep.subr.bf16.mxu0 0
    %1046 = vmatpush1.bf16.msra.mxu0 0
    %1047 = vmatprep.subr.bf16.mxu0 0
    %1048 = vmatpush1.bf16.msra.mxu0 0
    %1049 = vmatprep.subr.bf16.mxu0 0
    %1050 = vmatpush1.bf16.msra.mxu0 0
    %1051 = vmatprep.subr.bf16.mxu0 0
    %1052 = vmatpush1.bf16.msra.mxu0 0
    %1053 = vmatprep.subr.bf16.mxu0 0
    %1054 = vmatpush1.bf16.msra.mxu0 0
    %1055 = vmatprep.mubr.bf16.mxu0 0
    %1056 = vmatmul.mubr.bf16.gmra.mrb[0].mxu0 %v820
    %v1057 = vpop.f32.mrb[0].mxu0
    %v1058 = vadd.f32 0.0, %v1057
    %v1059 = vpop.f32.mrb[0].mxu0
    %v1060 = vadd.f32 0.0, %v1059
    %v1061 = vpop.f32.mrb[0].mxu0
    %v1062 = vadd.f32 0.0, %v1061
    %v1063 = vpop.f32.mrb[0].mxu0
    %v1064 = vadd.f32 0.0, %v1063
    %1065 = vmatprep.mubr.bf16.mxu0 0
    %1066 = vmatmul.mubr.bf16.gmra.mrb[0].mxu0 %v823
    %v1067 = vpop.f32.mrb[0].mxu0
    %v1068 = vadd.f32 0.0, %v1067
    %v1069 = vpop.f32.mrb[0].mxu0
    %v1070 = vadd.f32 0.0, %v1069
    %v1071 = vpop.f32.mrb[0].mxu0
    %v1072 = vadd.f32 0.0, %v1071
    %v1073 = vpop.f32.mrb[0].mxu0
    %v1074 = vadd.f32 0.0, %v1073
    %1075 = vmatprep.mubr.bf16.mxu0 0
    %1076 = vmatmul.mubr.bf16.gmra.mrb[0].mxu0 %v826
    %v1077 = vpop.f32.mrb[0].mxu0
    %v1078 = vadd.f32 0.0, %v1077
    %v1079 = vpop.f32.mrb[0].mxu0
    %v1080 = vadd.f32 0.0, %v1079
    %v1081 = vpop.f32.mrb[0].mxu0
    %v1082 = vadd.f32 0.0, %v1081
    %v1083 = vpop.f32.mrb[0].mxu0
    %v1084 = vadd.f32 0.0, %v1083
    %1085 = vmatprep.mubr.bf16.mxu0 0
    %1086 = vmatmul.mubr.bf16.gmra.mrb[0].mxu0 %v829
    %v1087 = vpop.f32.mrb[0].mxu0
    %v1088 = vadd.f32 0.0, %v1087
    %v1089 = vpop.f32.mrb[0].mxu0
    %v1090 = vadd.f32 0.0, %v1089
    %v1091 = vpop.f32.mrb[0].mxu0
    %v1092 = vadd.f32 0.0, %v1091
    %v1093 = vpop.f32.mrb[0].mxu0
    %v1094 = vadd.f32 0.0, %v1093
    %1095 = vmatprep.mubr.bf16.mxu0 0
    %1096 = vmatmul.mubr.bf16.gmra.mrb[0].mxu0 %v832
    %v1097 = vpop.f32.mrb[0].mxu0
    %v1098 = vadd.f32 0.0, %v1097
    %v1099 = vpop.f32.mrb[0].mxu0
    %v1100 = vadd.f32 0.0, %v1099
    %v1101 = vpop.f32.mrb[0].mxu0
    %v1102 = vadd.f32 0.0, %v1101
    %v1103 = vpop.f32.mrb[0].mxu0
    %v1104 = vadd.f32 0.0, %v1103
    %1105 = vmatprep.mubr.bf16.mxu0 0
    %1106 = vmatmul.mubr.bf16.gmra.mrb[0].mxu0 %v835
    %v1107 = vpop.f32.mrb[0].mxu0
    %v1108 = vadd.f32 0.0, %v1107
    %v1109 = vpop.f32.mrb[0].mxu0
    %v1110 = vadd.f32 0.0, %v1109
    %v1111 = vpop.f32.mrb[0].mxu0
    %v1112 = vadd.f32 0.0, %v1111
    %v1113 = vpop.f32.mrb[0].mxu0
    %v1114 = vadd.f32 0.0, %v1113
    %1115 = vdwg.mxu0
    %1116 = vmatprep.subr.bf16.mxu0 %v296
    %1117 = vmatpush1.bf16.msra.mxu0 %v295
    %1118 = vmatprep.subr.bf16.mxu0 %v304
    %1119 = vmatpush1.bf16.msra.mxu0 %v303
    %1120 = vmatprep.subr.bf16.mxu0 %v312
    %1121 = vmatpush1.bf16.msra.mxu0 %v311
    %1122 = vmatprep.subr.bf16.mxu0 %v320
    %1123 = vmatpush1.bf16.msra.mxu0 %v319
    %1124 = vmatprep.subr.bf16.mxu0 %v328
    %1125 = vmatpush1.bf16.msra.mxu0 %v327
    %1126 = vmatprep.subr.bf16.mxu0 %v336
    %1127 = vmatpush1.bf16.msra.mxu0 %v335
    %1128 = vmatprep.subr.bf16.mxu0 0
    %1129 = vmatpush1.bf16.msra.mxu0 0
    %1130 = vmatprep.subr.bf16.mxu0 0
    %1131 = vmatpush1.bf16.msra.mxu0 0
    %1132 = vmatprep.subr.bf16.mxu0 0
    %1133 = vmatpush1.bf16.msra.mxu0 0
    %1134 = vmatprep.subr.bf16.mxu0 0
    %1135 = vmatpush1.bf16.msra.mxu0 0
    %1136 = vmatprep.subr.bf16.mxu0 0
    %1137 = vmatpush1.bf16.msra.mxu0 0
    %1138 = vmatprep.subr.bf16.mxu0 0
    %1139 = vmatpush1.bf16.msra.mxu0 0
    %1140 = vmatprep.subr.bf16.mxu0 0
    %1141 = vmatpush1.bf16.msra.mxu0 0
    %1142 = vmatprep.subr.bf16.mxu0 0
    %1143 = vmatpush1.bf16.msra.mxu0 0
    %1144 = vmatprep.subr.bf16.mxu0 0
    %1145 = vmatpush1.bf16.msra.mxu0 0
    %1146 = vmatprep.subr.bf16.mxu0 0
    %1147 = vmatpush1.bf16.msra.mxu0 0
    %1148 = vmatprep.mubr.bf16.mxu0 0
    %1149 = vmatmul.mubr.bf16.gmra.mrb[0].mxu0 %v820
    %v1150 = vpop.f32.mrb[0].mxu0
    %v1151 = vadd.f32 0.0, %v1150
    %v1152 = vpop.f32.mrb[0].mxu0
    %v1153 = vadd.f32 0.0, %v1152
    %v1154 = vpop.f32.mrb[0].mxu0
    %v1155 = vadd.f32 0.0, %v1154
    %v1156 = vpop.f32.mrb[0].mxu0
    %v1157 = vadd.f32 0.0, %v1156
    %1158 = vmatprep.mubr.bf16.mxu0 0
    %1159 = vmatmul.mubr.bf16.gmra.mrb[0].mxu0 %v823
    %v1160 = vpop.f32.mrb[0].mxu0
    %v1161 = vadd.f32 0.0, %v1160
    %v1162 = vpop.f32.mrb[0].mxu0
    %v1163 = vadd.f32 0.0, %v1162
    %v1164 = vpop.f32.mrb[0].mxu0
    %v1165 = vadd.f32 0.0, %v1164
    %v1166 = vpop.f32.mrb[0].mxu0
    %v1167 = vadd.f32 0.0, %v1166
    %1168 = vmatprep.mubr.bf16.mxu0 0
    %1169 = vmatmul.mubr.bf16.gmra.mrb[0].mxu0 %v826
    %v1170 = vpop.f32.mrb[0].mxu0
    %v1171 = vadd.f32 0.0, %v1170
    %v1172 = vpop.f32.mrb[0].mxu0
    %v1173 = vadd.f32 0.0, %v1172
    %v1174 = vpop.f32.mrb[0].mxu0
    %v1175 = vadd.f32 0.0, %v1174
    %v1176 = vpop.f32.mrb[0].mxu0
    %v1177 = vadd.f32 0.0, %v1176
    %1178 = vmatprep.mubr.bf16.mxu0 0
    %1179 = vmatmul.mubr.bf16.gmra.mrb[0].mxu0 %v829
    %v1180 = vpop.f32.mrb[0].mxu0
    %v1181 = vadd.f32 0.0, %v1180
    %v1182 = vpop.f32.mrb[0].mxu0
    %v1183 = vadd.f32 0.0, %v1182
    %v1184 = vpop.f32.mrb[0].mxu0
    %v1185 = vadd.f32 0.0, %v1184
    %v1186 = vpop.f32.mrb[0].mxu0
    %v1187 = vadd.f32 0.0, %v1186
    %1188 = vmatprep.mubr.bf16.mxu0 0
    %1189 = vmatmul.mubr.bf16.gmra.mrb[0].mxu0 %v832
    %v1190 = vpop.f32.mrb[0].mxu0
    %v1191 = vadd.f32 0.0, %v1190
    %v1192 = vpop.f32.mrb[0].mxu0
    %v1193 = vadd.f32 0.0, %v1192
    %v1194 = vpop.f32.mrb[0].mxu0
    %v1195 = vadd.f32 0.0, %v1194
    %v1196 = vpop.f32.mrb[0].mxu0
    %v1197 = vadd.f32 0.0, %v1196
    %1198 = vmatprep.mubr.bf16.mxu0 0
    %1199 = vmatmul.mubr.bf16.gmra.mrb[0].mxu0 %v835
    %v1200 = vpop.f32.mrb[0].mxu0
    %v1201 = vadd.f32 0.0, %v1200
    %v1202 = vpop.f32.mrb[0].mxu0
    %v1203 = vadd.f32 0.0, %v1202
    %v1204 = vpop.f32.mrb[0].mxu0
    %v1205 = vadd.f32 0.0, %v1204
    %v1206 = vpop.f32.mrb[0].mxu0
    %v1207 = vadd.f32 0.0, %v1206
    %1208 = vdwg.mxu0
    %v1209 = vmax.f32 %v439, %v872
    %v1210 = vmax.f32 %v441, %v874
    %v1211 = vmax.f32 %v532, %v965
    %v1212 = vmax.f32 %v534, %v967
    %v1213 = vmax.f32 %v625, %v1058
    %v1214 = vmax.f32 %v627, %v1060
    %v1215 = vmax.f32 %v718, %v1151
    %v1216 = vmax.f32 %v720, %v1153
    %v1217 = vmax.f32 %v443, %v876
    %v1218 = vmax.f32 %v445, %v878
    %v1219 = vmax.f32 %v536, %v969
    %v1220 = vmax.f32 %v538, %v971
    %v1221 = vmax.f32 %v629, %v1062
    %v1222 = vmax.f32 %v631, %v1064
    %v1223 = vmax.f32 %v722, %v1155
    %v1224 = vmax.f32 %v724, %v1157
    %v1225 = vmax.f32 %v449, %v882
    %v1226 = vmax.f32 %v451, %v884
    %v1227 = vmax.f32 %v542, %v975
    %v1228 = vmax.f32 %v544, %v977
    %v1229 = vmax.f32 %v635, %v1068
    %v1230 = vmax.f32 %v637, %v1070
    %v1231 = vmax.f32 %v728, %v1161
    %v1232 = vmax.f32 %v730, %v1163
    %v1233 = vmax.f32 %v453, %v886
    %v1234 = vmax.f32 %v455, %v888
    %v1235 = vmax.f32 %v546, %v979
    %v1236 = vmax.f32 %v548, %v981
    %v1237 = vmax.f32 %v639, %v1072
    %v1238 = vmax.f32 %v641, %v1074
    %v1239 = vmax.f32 %v732, %v1165
    %v1240 = vmax.f32 %v734, %v1167
    %v1241 = vmax.f32 %v459, %v892
    %v1242 = vmax.f32 %v461, %v894
    %v1243 = vmax.f32 %v552, %v985
    %v1244 = vmax.f32 %v554, %v987
    %v1245 = vmax.f32 %v645, %v1078
    %v1246 = vmax.f32 %v647, %v1080
    %v1247 = vmax.f32 %v738, %v1171
    %v1248 = vmax.f32 %v740, %v1173
    %v1249 = vmax.f32 %v463, %v896
    %v1250 = vmax.f32 %v465, %v898
    %v1251 = vmax.f32 %v556, %v989
    %v1252 = vmax.f32 %v558, %v991
    %v1253 = vmax.f32 %v649, %v1082
    %v1254 = vmax.f32 %v651, %v1084
    %v1255 = vmax.f32 %v742, %v1175
    %v1256 = vmax.f32 %v744, %v1177
    %v1257 = vmax.f32 %v469, %v902
    %v1258 = vmax.f32 %v471, %v904
    %v1259 = vmax.f32 %v562, %v995
    %v1260 = vmax.f32 %v564, %v997
    %v1261 = vmax.f32 %v655, %v1088
    %v1262 = vmax.f32 %v657, %v1090
    %v1263 = vmax.f32 %v748, %v1181
    %v1264 = vmax.f32 %v750, %v1183
    %v1265 = vmax.f32 %v473, %v906
    %v1266 = vmax.f32 %v475, %v908
    %v1267 = vmax.f32 %v566, %v999
    %v1268 = vmax.f32 %v568, %v1001
    %v1269 = vmax.f32 %v659, %v1092
    %v1270 = vmax.f32 %v661, %v1094
    %v1271 = vmax.f32 %v752, %v1185
    %v1272 = vmax.f32 %v754, %v1187
    %v1273 = vmax.f32 %v479, %v912
    %v1274 = vmax.f32 %v481, %v914
    %v1275 = vmax.f32 %v572, %v1005
    %v1276 = vmax.f32 %v574, %v1007
    %v1277 = vmax.f32 %v665, %v1098
    %v1278 = vmax.f32 %v667, %v1100
    %v1279 = vmax.f32 %v758, %v1191
    %v1280 = vmax.f32 %v760, %v1193
    %v1281 = vmax.f32 %v483, %v916
    %v1282 = vmax.f32 %v485, %v918
    %v1283 = vmax.f32 %v576, %v1009
    %v1284 = vmax.f32 %v578, %v1011
    %v1285 = vmax.f32 %v669, %v1102
    %v1286 = vmax.f32 %v671, %v1104
    %v1287 = vmax.f32 %v762, %v1195
    %v1288 = vmax.f32 %v764, %v1197
    %v1289 = vmax.f32 %v489, %v922
    %v1290 = vmax.f32 %v491, %v924
    %v1291 = vmax.f32 %v582, %v1015
    %v1292 = vmax.f32 %v584, %v1017
    %v1293 = vmax.f32 %v675, %v1108
    %v1294 = vmax.f32 %v677, %v1110
    %v1295 = vmax.f32 %v768, %v1201
    %v1296 = vmax.f32 %v770, %v1203
    %v1297 = vmax.f32 %v493, %v926
    %v1298 = vmax.f32 %v495, %v928
    %v1299 = vmax.f32 %v586, %v1019
    %v1300 = vmax.f32 %v588, %v1021
    %v1301 = vmax.f32 %v679, %v1112
    %v1302 = vmax.f32 %v681, %v1114
    %v1303 = vmax.f32 %v772, %v1205
    %v1304 = vmax.f32 %v774, %v1207
    %v1305 = vmax.f32 %v1209, %v1213
    %v1306 = vmax.f32 %v1210, %v1214
    %v1307 = vmax.f32 %v1211, %v1215
    %v1308 = vmax.f32 %v1212, %v1216
    %v1309 = vmax.f32 %v1217, %v1221
    %v1310 = vmax.f32 %v1218, %v1222
    %v1311 = vmax.f32 %v1219, %v1223
    %v1312 = vmax.f32 %v1220, %v1224
    %v1313 = vmax.f32 %v1225, %v1229
    %v1314 = vmax.f32 %v1226, %v1230
    %v1315 = vmax.f32 %v1227, %v1231
    %v1316 = vmax.f32 %v1228, %v1232
    %v1317 = vmax.f32 %v1233, %v1237
    %v1318 = vmax.f32 %v1234, %v1238
    %v1319 = vmax.f32 %v1235, %v1239
    %v1320 = vmax.f32 %v1236, %v1240
    %v1321 = vmax.f32 %v1241, %v1245
    %v1322 = vmax.f32 %v1242, %v1246
    %v1323 = vmax.f32 %v1243, %v1247
    %v1324 = vmax.f32 %v1244, %v1248
    %v1325 = vmax.f32 %v1249, %v1253
    %v1326 = vmax.f32 %v1250, %v1254
    %v1327 = vmax.f32 %v1251, %v1255
    %v1328 = vmax.f32 %v1252, %v1256
    %v1329 = vmax.f32 %v1257, %v1261
    %v1330 = vmax.f32 %v1258, %v1262
    %v1331 = vmax.f32 %v1259, %v1263
    %v1332 = vmax.f32 %v1260, %v1264
    %v1333 = vmax.f32 %v1265, %v1269
    %v1334 = vmax.f32 %v1266, %v1270
    %v1335 = vmax.f32 %v1267, %v1271
    %v1336 = vmax.f32 %v1268, %v1272
    %v1337 = vmax.f32 %v1273, %v1277
    %v1338 = vmax.f32 %v1274, %v1278
    %v1339 = vmax.f32 %v1275, %v1279
    %v1340 = vmax.f32 %v1276, %v1280
    %v1341 = vmax.f32 %v1281, %v1285
    %v1342 = vmax.f32 %v1282, %v1286
    %v1343 = vmax.f32 %v1283, %v1287
    %v1344 = vmax.f32 %v1284, %v1288
    %v1345 = vmax.f32 %v1289, %v1293
    %v1346 = vmax.f32 %v1290, %v1294
    %v1347 = vmax.f32 %v1291, %v1295
    %v1348 = vmax.f32 %v1292, %v1296
    %v1349 = vmax.f32 %v1297, %v1301
    %v1350 = vmax.f32 %v1298, %v1302
    %v1351 = vmax.f32 %v1299, %v1303
    %v1352 = vmax.f32 %v1300, %v1304
    %v1354 = vlaneseq
    %v1355 = vshrl.u32 %v1354, 7
    %v1356 = vsub.s32 0, %v1355
    %v1357 = vrot.slane %v101, %v1356
    %v1358 = vlaneseq
    %v1359 = vshrl.u32 %v1358, 7
    %v1360 = vsub.s32 1, %v1359
    %v1361 = vrot.slane %v101, %v1360
    %v1362 = vlaneseq
    %v1363 = vshrl.u32 %v1362, 7
    %v1364 = vsub.s32 2, %v1363
    %v1365 = vrot.slane %v101, %v1364
    %v1366 = vlaneseq
    %v1367 = vshrl.u32 %v1366, 7
    %v1368 = vsub.s32 3, %v1367
    %v1369 = vrot.slane %v101, %v1368
    %v1374 = vmul.f32 %v1305, %v1357
    %v1375 = vmul.f32 %v1306, %v1361
    %v1376 = vmul.f32 %v1307, %v1365
    %v1377 = vmul.f32 %v1308, %v1369
    %v1378 = vmul.f32 %v1309, %v1357
    %v1379 = vmul.f32 %v1310, %v1361
    %v1380 = vmul.f32 %v1311, %v1365
    %v1381 = vmul.f32 %v1312, %v1369
    %v1382 = vmul.f32 %v1313, %v1357
    %v1383 = vmul.f32 %v1314, %v1361
    %v1384 = vmul.f32 %v1315, %v1365
    %v1385 = vmul.f32 %v1316, %v1369
    %v1386 = vmul.f32 %v1317, %v1357
    %v1387 = vmul.f32 %v1318, %v1361
    %v1388 = vmul.f32 %v1319, %v1365
    %v1389 = vmul.f32 %v1320, %v1369
    %v1390 = vmul.f32 %v1321, %v1357
    %v1391 = vmul.f32 %v1322, %v1361
    %v1392 = vmul.f32 %v1323, %v1365
    %v1393 = vmul.f32 %v1324, %v1369
    %v1394 = vmul.f32 %v1325, %v1357
    %v1395 = vmul.f32 %v1326, %v1361
    %v1396 = vmul.f32 %v1327, %v1365
    %v1397 = vmul.f32 %v1328, %v1369
    %v1398 = vmul.f32 %v1329, %v1357
    %v1399 = vmul.f32 %v1330, %v1361
    %v1400 = vmul.f32 %v1331, %v1365
    %v1401 = vmul.f32 %v1332, %v1369
    %v1402 = vmul.f32 %v1333, %v1357
    %v1403 = vmul.f32 %v1334, %v1361
    %v1404 = vmul.f32 %v1335, %v1365
    %v1405 = vmul.f32 %v1336, %v1369
    %v1406 = vmul.f32 %v1337, %v1357
    %v1407 = vmul.f32 %v1338, %v1361
    %v1408 = vmul.f32 %v1339, %v1365
    %v1409 = vmul.f32 %v1340, %v1369
    %v1410 = vmul.f32 %v1341, %v1357
    %v1411 = vmul.f32 %v1342, %v1361
    %v1412 = vmul.f32 %v1343, %v1365
    %v1413 = vmul.f32 %v1344, %v1369
    %v1414 = vmul.f32 %v1345, %v1357
    %v1415 = vmul.f32 %v1346, %v1361
    %v1416 = vmul.f32 %v1347, %v1365
    %v1417 = vmul.f32 %v1348, %v1369
    %v1418 = vmul.f32 %v1349, %v1357
    %v1419 = vmul.f32 %v1350, %v1361
    %v1420 = vmul.f32 %v1351, %v1365
    %v1421 = vmul.f32 %v1352, %v1369
    %v1423 = vlaneseq
    %v1424 = vshrl.u32 %v1423, 7
    %v1425 = vsub.s32 0, %v1424
    %v1426 = vrot.slane %v102, %v1425
    %v1427 = vlaneseq
    %v1428 = vshrl.u32 %v1427, 7
    %v1429 = vsub.s32 1, %v1428
    %v1430 = vrot.slane %v102, %v1429
    %v1431 = vlaneseq
    %v1432 = vshrl.u32 %v1431, 7
    %v1433 = vsub.s32 2, %v1432
    %v1434 = vrot.slane %v102, %v1433
    %v1435 = vlaneseq
    %v1436 = vshrl.u32 %v1435, 7
    %v1437 = vsub.s32 3, %v1436
    %v1438 = vrot.slane %v102, %v1437
    %v1443 = vadd.f32 %v1374, %v1426
    %v1444 = vadd.f32 %v1375, %v1430
    %v1445 = vadd.f32 %v1376, %v1434
    %v1446 = vadd.f32 %v1377, %v1438
    %v1447 = vadd.f32 %v1378, %v1426
    %v1448 = vadd.f32 %v1379, %v1430
    %v1449 = vadd.f32 %v1380, %v1434
    %v1450 = vadd.f32 %v1381, %v1438
    %v1451 = vadd.f32 %v1382, %v1426
    %v1452 = vadd.f32 %v1383, %v1430
    %v1453 = vadd.f32 %v1384, %v1434
    %v1454 = vadd.f32 %v1385, %v1438
    %v1455 = vadd.f32 %v1386, %v1426
    %v1456 = vadd.f32 %v1387, %v1430
    %v1457 = vadd.f32 %v1388, %v1434
    %v1458 = vadd.f32 %v1389, %v1438
    %v1459 = vadd.f32 %v1390, %v1426
    %v1460 = vadd.f32 %v1391, %v1430
    %v1461 = vadd.f32 %v1392, %v1434
    %v1462 = vadd.f32 %v1393, %v1438
    %v1463 = vadd.f32 %v1394, %v1426
    %v1464 = vadd.f32 %v1395, %v1430
    %v1465 = vadd.f32 %v1396, %v1434
    %v1466 = vadd.f32 %v1397, %v1438
    %v1467 = vadd.f32 %v1398, %v1426
    %v1468 = vadd.f32 %v1399, %v1430
    %v1469 = vadd.f32 %v1400, %v1434
    %v1470 = vadd.f32 %v1401, %v1438
    %v1471 = vadd.f32 %v1402, %v1426
    %v1472 = vadd.f32 %v1403, %v1430
    %v1473 = vadd.f32 %v1404, %v1434
    %v1474 = vadd.f32 %v1405, %v1438
    %v1475 = vadd.f32 %v1406, %v1426
    %v1476 = vadd.f32 %v1407, %v1430
    %v1477 = vadd.f32 %v1408, %v1434
    %v1478 = vadd.f32 %v1409, %v1438
    %v1479 = vadd.f32 %v1410, %v1426
    %v1480 = vadd.f32 %v1411, %v1430
    %v1481 = vadd.f32 %v1412, %v1434
    %v1482 = vadd.f32 %v1413, %v1438
    %v1483 = vadd.f32 %v1414, %v1426
    %v1484 = vadd.f32 %v1415, %v1430
    %v1485 = vadd.f32 %v1416, %v1434
    %v1486 = vadd.f32 %v1417, %v1438
    %v1487 = vadd.f32 %v1418, %v1426
    %v1488 = vadd.f32 %v1419, %v1430
    %v1489 = vadd.f32 %v1420, %v1434
    %v1490 = vadd.f32 %v1421, %v1438
    %v1491 = vsub.f32 0.0, %v1443
    %v1492 = vsub.f32 0.0, %v1444
    %v1493 = vsub.f32 0.0, %v1445
    %v1494 = vsub.f32 0.0, %v1446
    %v1495 = vsub.f32 0.0, %v1447
    %v1496 = vsub.f32 0.0, %v1448
    %v1497 = vsub.f32 0.0, %v1449
    %v1498 = vsub.f32 0.0, %v1450
    %v1499 = vsub.f32 0.0, %v1451
    %v1500 = vsub.f32 0.0, %v1452
    %v1501 = vsub.f32 0.0, %v1453
    %v1502 = vsub.f32 0.0, %v1454
    %v1503 = vsub.f32 0.0, %v1455
    %v1504 = vsub.f32 0.0, %v1456
    %v1505 = vsub.f32 0.0, %v1457
    %v1506 = vsub.f32 0.0, %v1458
    %v1507 = vsub.f32 0.0, %v1459
    %v1508 = vsub.f32 0.0, %v1460
    %v1509 = vsub.f32 0.0, %v1461
    %v1510 = vsub.f32 0.0, %v1462
    %v1511 = vsub.f32 0.0, %v1463
    %v1512 = vsub.f32 0.0, %v1464
    %v1513 = vsub.f32 0.0, %v1465
    %v1514 = vsub.f32 0.0, %v1466
    %v1515 = vsub.f32 0.0, %v1467
    %v1516 = vsub.f32 0.0, %v1468
    %v1517 = vsub.f32 0.0, %v1469
    %v1518 = vsub.f32 0.0, %v1470
    %v1519 = vsub.f32 0.0, %v1471
    %v1520 = vsub.f32 0.0, %v1472
    %v1521 = vsub.f32 0.0, %v1473
    %v1522 = vsub.f32 0.0, %v1474
    %v1523 = vsub.f32 0.0, %v1475
    %v1524 = vsub.f32 0.0, %v1476
    %v1525 = vsub.f32 0.0, %v1477
    %v1526 = vsub.f32 0.0, %v1478
    %v1527 = vsub.f32 0.0, %v1479
    %v1528 = vsub.f32 0.0, %v1480
    %v1529 = vsub.f32 0.0, %v1481
    %v1530 = vsub.f32 0.0, %v1482
    %v1531 = vsub.f32 0.0, %v1483
    %v1532 = vsub.f32 0.0, %v1484
    %v1533 = vsub.f32 0.0, %v1485
    %v1534 = vsub.f32 0.0, %v1486
    %v1535 = vsub.f32 0.0, %v1487
    %v1536 = vsub.f32 0.0, %v1488
    %v1537 = vsub.f32 0.0, %v1489
    %v1538 = vsub.f32 0.0, %v1490
    %v1539 = vmul.f32 %v1491, 1.442695
    %v1540 = vpow.pop %v1539
    %v1541 = vmul.f32 %v1492, 1.442695
    %v1542 = vpow.pop %v1541
    %v1543 = vmul.f32 %v1493, 1.442695
    %v1544 = vpow.pop %v1543
    %v1545 = vmul.f32 %v1494, 1.442695
    %v1546 = vpow.pop %v1545
    %v1547 = vmul.f32 %v1495, 1.442695
    %v1548 = vpow.pop %v1547
    %v1549 = vmul.f32 %v1496, 1.442695
    %v1550 = vpow.pop %v1549
    %v1551 = vmul.f32 %v1497, 1.442695
    %v1552 = vpow.pop %v1551
    %v1553 = vmul.f32 %v1498, 1.442695
    %v1554 = vpow.pop %v1553
    %v1555 = vmul.f32 %v1499, 1.442695
    %v1556 = vpow.pop %v1555
    %v1557 = vmul.f32 %v1500, 1.442695
    %v1558 = vpow.pop %v1557
    %v1559 = vmul.f32 %v1501, 1.442695
    %v1560 = vpow.pop %v1559
    %v1561 = vmul.f32 %v1502, 1.442695
    %v1562 = vpow.pop %v1561
    %v1563 = vmul.f32 %v1503, 1.442695
    %v1564 = vpow.pop %v1563
    %v1565 = vmul.f32 %v1504, 1.442695
    %v1566 = vpow.pop %v1565
    %v1567 = vmul.f32 %v1505, 1.442695
    %v1568 = vpow.pop %v1567
    %v1569 = vmul.f32 %v1506, 1.442695
    %v1570 = vpow.pop %v1569
    %v1571 = vmul.f32 %v1507, 1.442695
    %v1572 = vpow.pop %v1571
    %v1573 = vmul.f32 %v1508, 1.442695
    %v1574 = vpow.pop %v1573
    %v1575 = vmul.f32 %v1509, 1.442695
    %v1576 = vpow.pop %v1575
    %v1577 = vmul.f32 %v1510, 1.442695
    %v1578 = vpow.pop %v1577
    %v1579 = vmul.f32 %v1511, 1.442695
    %v1580 = vpow.pop %v1579
    %v1581 = vmul.f32 %v1512, 1.442695
    %v1582 = vpow.pop %v1581
    %v1583 = vmul.f32 %v1513, 1.442695
    %v1584 = vpow.pop %v1583
    %v1585 = vmul.f32 %v1514, 1.442695
    %v1586 = vpow.pop %v1585
    %v1587 = vmul.f32 %v1515, 1.442695
    %v1588 = vpow.pop %v1587
    %v1589 = vmul.f32 %v1516, 1.442695
    %v1590 = vpow.pop %v1589
    %v1591 = vmul.f32 %v1517, 1.442695
    %v1592 = vpow.pop %v1591
    %v1593 = vmul.f32 %v1518, 1.442695
    %v1594 = vpow.pop %v1593
    %v1595 = vmul.f32 %v1519, 1.442695
    %v1596 = vpow.pop %v1595
    %v1597 = vmul.f32 %v1520, 1.442695
    %v1598 = vpow.pop %v1597
    %v1599 = vmul.f32 %v1521, 1.442695
    %v1600 = vpow.pop %v1599
    %v1601 = vmul.f32 %v1522, 1.442695
    %v1602 = vpow.pop %v1601
    %v1603 = vmul.f32 %v1523, 1.442695
    %v1604 = vpow.pop %v1603
    %v1605 = vmul.f32 %v1524, 1.442695
    %v1606 = vpow.pop %v1605
    %v1607 = vmul.f32 %v1525, 1.442695
    %v1608 = vpow.pop %v1607
    %v1609 = vmul.f32 %v1526, 1.442695
    %v1610 = vpow.pop %v1609
    %v1611 = vmul.f32 %v1527, 1.442695
    %v1612 = vpow.pop %v1611
    %v1613 = vmul.f32 %v1528, 1.442695
    %v1614 = vpow.pop %v1613
    %v1615 = vmul.f32 %v1529, 1.442695
    %v1616 = vpow.pop %v1615
    %v1617 = vmul.f32 %v1530, 1.442695
    %v1618 = vpow.pop %v1617
    %v1619 = vmul.f32 %v1531, 1.442695
    %v1620 = vpow.pop %v1619
    %v1621 = vmul.f32 %v1532, 1.442695
    %v1622 = vpow.pop %v1621
    %v1623 = vmul.f32 %v1533, 1.442695
    %v1624 = vpow.pop %v1623
    %v1625 = vmul.f32 %v1534, 1.442695
    %v1626 = vpow.pop %v1625
    %v1627 = vmul.f32 %v1535, 1.442695
    %v1628 = vpow.pop %v1627
    %v1629 = vmul.f32 %v1536, 1.442695
    %v1630 = vpow.pop %v1629
    %v1631 = vmul.f32 %v1537, 1.442695
    %v1632 = vpow.pop %v1631
    %v1633 = vmul.f32 %v1538, 1.442695
    %v1634 = vpow.pop %v1633
    %v1635 = vadd.f32 %v1540, 1.0
    %v1636 = vadd.f32 %v1542, 1.0
    %v1637 = vadd.f32 %v1544, 1.0
    %v1638 = vadd.f32 %v1546, 1.0
    %v1639 = vadd.f32 %v1548, 1.0
    %v1640 = vadd.f32 %v1550, 1.0
    %v1641 = vadd.f32 %v1552, 1.0
    %v1642 = vadd.f32 %v1554, 1.0
    %v1643 = vadd.f32 %v1556, 1.0
    %v1644 = vadd.f32 %v1558, 1.0
    %v1645 = vadd.f32 %v1560, 1.0
    %v1646 = vadd.f32 %v1562, 1.0
    %v1647 = vadd.f32 %v1564, 1.0
    %v1648 = vadd.f32 %v1566, 1.0
    %v1649 = vadd.f32 %v1568, 1.0
    %v1650 = vadd.f32 %v1570, 1.0
    %v1651 = vadd.f32 %v1572, 1.0
    %v1652 = vadd.f32 %v1574, 1.0
    %v1653 = vadd.f32 %v1576, 1.0
    %v1654 = vadd.f32 %v1578, 1.0
    %v1655 = vadd.f32 %v1580, 1.0
    %v1656 = vadd.f32 %v1582, 1.0
    %v1657 = vadd.f32 %v1584, 1.0
    %v1658 = vadd.f32 %v1586, 1.0
    %v1659 = vadd.f32 %v1588, 1.0
    %v1660 = vadd.f32 %v1590, 1.0
    %v1661 = vadd.f32 %v1592, 1.0
    %v1662 = vadd.f32 %v1594, 1.0
    %v1663 = vadd.f32 %v1596, 1.0
    %v1664 = vadd.f32 %v1598, 1.0
    %v1665 = vadd.f32 %v1600, 1.0
    %v1666 = vadd.f32 %v1602, 1.0
    %v1667 = vadd.f32 %v1604, 1.0
    %v1668 = vadd.f32 %v1606, 1.0
    %v1669 = vadd.f32 %v1608, 1.0
    %v1670 = vadd.f32 %v1610, 1.0
    %v1671 = vadd.f32 %v1612, 1.0
    %v1672 = vadd.f32 %v1614, 1.0
    %v1673 = vadd.f32 %v1616, 1.0
    %v1674 = vadd.f32 %v1618, 1.0
    %v1675 = vadd.f32 %v1620, 1.0
    %v1676 = vadd.f32 %v1622, 1.0
    %v1677 = vadd.f32 %v1624, 1.0
    %v1678 = vadd.f32 %v1626, 1.0
    %v1679 = vadd.f32 %v1628, 1.0
    %v1680 = vadd.f32 %v1630, 1.0
    %v1681 = vadd.f32 %v1632, 1.0
    %v1682 = vadd.f32 %v1634, 1.0
    %v1683 = vrcp.pop %v1635
    %v1684 = vrcp.pop %v1636
    %v1685 = vrcp.pop %v1637
    %v1686 = vrcp.pop %v1638
    %v1687 = vrcp.pop %v1639
    %v1688 = vrcp.pop %v1640
    %v1689 = vrcp.pop %v1641
    %v1690 = vrcp.pop %v1642
    %v1691 = vrcp.pop %v1643
    %v1692 = vrcp.pop %v1644
    %v1693 = vrcp.pop %v1645
    %v1694 = vrcp.pop %v1646
    %v1695 = vrcp.pop %v1647
    %v1696 = vrcp.pop %v1648
    %v1697 = vrcp.pop %v1649
    %v1698 = vrcp.pop %v1650
    %v1699 = vrcp.pop %v1651
    %v1700 = vrcp.pop %v1652
    %v1701 = vrcp.pop %v1653
    %v1702 = vrcp.pop %v1654
    %v1703 = vrcp.pop %v1655
    %v1704 = vrcp.pop %v1656
    %v1705 = vrcp.pop %v1657
    %v1706 = vrcp.pop %v1658
    %v1707 = vrcp.pop %v1659
    %v1708 = vrcp.pop %v1660
    %v1709 = vrcp.pop %v1661
    %v1710 = vrcp.pop %v1662
    %v1711 = vrcp.pop %v1663
    %v1712 = vrcp.pop %v1664
    %v1713 = vrcp.pop %v1665
    %v1714 = vrcp.pop %v1666
    %v1715 = vrcp.pop %v1667
    %v1716 = vrcp.pop %v1668
    %v1717 = vrcp.pop %v1669
    %v1718 = vrcp.pop %v1670
    %v1719 = vrcp.pop %v1671
    %v1720 = vrcp.pop %v1672
    %v1721 = vrcp.pop %v1673
    %v1722 = vrcp.pop %v1674
    %v1723 = vrcp.pop %v1675
    %v1724 = vrcp.pop %v1676
    %v1725 = vrcp.pop %v1677
    %v1726 = vrcp.pop %v1678
    %v1727 = vrcp.pop %v1679
    %v1728 = vrcp.pop %v1680
    %v1729 = vrcp.pop %v1681
    %v1730 = vrcp.pop %v1682
    %v1731 = vmul.f32 %v1443, %v1683
    %v1732 = vmul.f32 %v1444, %v1684
    %v1733 = vmul.f32 %v1445, %v1685
    %v1734 = vmul.f32 %v1446, %v1686
    %v1735 = vmul.f32 %v1447, %v1687
    %v1736 = vmul.f32 %v1448, %v1688
    %v1737 = vmul.f32 %v1449, %v1689
    %v1738 = vmul.f32 %v1450, %v1690
    %v1739 = vmul.f32 %v1451, %v1691
    %v1740 = vmul.f32 %v1452, %v1692
    %v1741 = vmul.f32 %v1453, %v1693
    %v1742 = vmul.f32 %v1454, %v1694
    %v1743 = vmul.f32 %v1455, %v1695
    %v1744 = vmul.f32 %v1456, %v1696
    %v1745 = vmul.f32 %v1457, %v1697
    %v1746 = vmul.f32 %v1458, %v1698
    %v1747 = vmul.f32 %v1459, %v1699
    %v1748 = vmul.f32 %v1460, %v1700
    %v1749 = vmul.f32 %v1461, %v1701
    %v1750 = vmul.f32 %v1462, %v1702
    %v1751 = vmul.f32 %v1463, %v1703
    %v1752 = vmul.f32 %v1464, %v1704
    %v1753 = vmul.f32 %v1465, %v1705
    %v1754 = vmul.f32 %v1466, %v1706
    %v1755 = vmul.f32 %v1467, %v1707
    %v1756 = vmul.f32 %v1468, %v1708
    %v1757 = vmul.f32 %v1469, %v1709
    %v1758 = vmul.f32 %v1470, %v1710
    %v1759 = vmul.f32 %v1471, %v1711
    %v1760 = vmul.f32 %v1472, %v1712
    %v1761 = vmul.f32 %v1473, %v1713
    %v1762 = vmul.f32 %v1474, %v1714
    %v1763 = vmul.f32 %v1475, %v1715
    %v1764 = vmul.f32 %v1476, %v1716
    %v1765 = vmul.f32 %v1477, %v1717
    %v1766 = vmul.f32 %v1478, %v1718
    %v1767 = vmul.f32 %v1479, %v1719
    %v1768 = vmul.f32 %v1480, %v1720
    %v1769 = vmul.f32 %v1481, %v1721
    %v1770 = vmul.f32 %v1482, %v1722
    %v1771 = vmul.f32 %v1483, %v1723
    %v1772 = vmul.f32 %v1484, %v1724
    %v1773 = vmul.f32 %v1485, %v1725
    %v1774 = vmul.f32 %v1486, %v1726
    %v1775 = vmul.f32 %v1487, %v1727
    %v1776 = vmul.f32 %v1488, %v1728
    %v1777 = vmul.f32 %v1489, %v1729
    %v1778 = vmul.f32 %v1490, %v1730
    %v1779 = vpack.c.bf16 %v1735, %v1731
    %v1780 = vpack.c.bf16 %v1736, %v1732
    %v1781 = vpack.c.bf16 %v1737, %v1733
    %v1782 = vpack.c.bf16 %v1738, %v1734
    %v1783 = vpack.c.bf16 %v1743, %v1739
    %v1784 = vpack.c.bf16 %v1744, %v1740
    %v1785 = vpack.c.bf16 %v1745, %v1741
    %v1786 = vpack.c.bf16 %v1746, %v1742
    %v1787 = vpack.c.bf16 %v1751, %v1747
    %v1788 = vpack.c.bf16 %v1752, %v1748
    %v1789 = vpack.c.bf16 %v1753, %v1749
    %v1790 = vpack.c.bf16 %v1754, %v1750
    %v1791 = vpack.c.bf16 %v1759, %v1755
    %v1792 = vpack.c.bf16 %v1760, %v1756
    %v1793 = vpack.c.bf16 %v1761, %v1757
    %v1794 = vpack.c.bf16 %v1762, %v1758
    %v1795 = vpack.c.bf16 %v1767, %v1763
    %v1796 = vpack.c.bf16 %v1768, %v1764
    %v1797 = vpack.c.bf16 %v1769, %v1765
    %v1798 = vpack.c.bf16 %v1770, %v1766
    %v1799 = vpack.c.bf16 %v1775, %v1771
    %v1800 = vpack.c.bf16 %v1776, %v1772
    %v1801 = vpack.c.bf16 %v1777, %v1773
    %v1802 = vpack.c.bf16 %v1778, %v1774
    %s1803 = scalar_lea.vmem %s0, 96
    %v1804 = vld [vmem:[%s1803] sm:$0xf]
    %v1805 = vld [vmem:[%s1803 + $0x4] sm:$0xf]
    %v1806 = vld [vmem:[%s1803 + $0x8] sm:$0xf]
    %v1807 = vld [vmem:[%s1803 + $0xc] sm:$0xf]
    %v1808 = vld [vmem:[%s1803 + $0x10] sm:$0xf]
    %v1809 = vld [vmem:[%s1803 + $0x14] sm:$0xf]
    %v1810 = vld [vmem:[%s1803 + $0x18] sm:$0xf]
    %v1811 = vld [vmem:[%s1803 + $0x1c] sm:$0xf]
    %v1812 = vld [vmem:[%s1803 + $0x20] sm:$0xf]
    %v1813 = vld [vmem:[%s1803 + $0x24] sm:$0xf]
    %v1814 = vld [vmem:[%s1803 + $0x28] sm:$0xf]
    %v1815 = vld [vmem:[%s1803 + $0x2c] sm:$0xf]
    %v1828 = vunpack.c.l.b16 %v1804
    %v1829 = vunpack.c.l.b16 %v1805
    %v1830 = vunpack.c.l.b16 %v1806
    %v1831 = vunpack.c.l.b16 %v1807
    %v1832 = vunpack.c.l.b16 %v1808
    %v1833 = vunpack.c.l.b16 %v1809
    %v1834 = vunpack.c.l.b16 %v1810
    %v1835 = vunpack.c.l.b16 %v1811
    %v1836 = vunpack.c.l.b16 %v1812
    %v1837 = vunpack.c.l.b16 %v1813
    %v1838 = vunpack.c.l.b16 %v1814
    %v1839 = vunpack.c.l.b16 %v1815
    %v1840 = vpack.c.b16 %v1829, %v1828
    %v1841 = vpack.c.b16 %v1831, %v1830
    %v1842 = vpack.c.b16 %v1833, %v1832
    %v1843 = vpack.c.b16 %v1835, %v1834
    %v1844 = vpack.c.b16 %v1837, %v1836
    %v1845 = vpack.c.b16 %v1839, %v1838
    %v1847 = vsel %vm385, %v1840, 0
    %v1850 = vsel %vm385, %v1841, 0
    %v1853 = vsel %vm385, %v1842, 0
    %v1856 = vsel %vm385, %v1843, 0
    %v1859 = vsel %vm385, %v1844, 0
    %v1862 = vsel %vm385, %v1845, 0
    %1864 = vmatprep.subr.bf16.mxu0 %v290
    %1865 = vmatpush1.bf16.msra.mxu0 %v289
    %1866 = vmatprep.subr.bf16.mxu0 %v298
    %1867 = vmatpush1.bf16.msra.mxu0 %v297
    %1868 = vmatprep.subr.bf16.mxu0 %v306
    %1869 = vmatpush1.bf16.msra.mxu0 %v305
    %1870 = vmatprep.subr.bf16.mxu0 %v314
    %1871 = vmatpush1.bf16.msra.mxu0 %v313
    %1872 = vmatprep.subr.bf16.mxu0 %v322
    %1873 = vmatpush1.bf16.msra.mxu0 %v321
    %1874 = vmatprep.subr.bf16.mxu0 %v330
    %1875 = vmatpush1.bf16.msra.mxu0 %v329
    %1876 = vmatprep.subr.bf16.mxu0 0
    %1877 = vmatpush1.bf16.msra.mxu0 0
    %1878 = vmatprep.subr.bf16.mxu0 0
    %1879 = vmatpush1.bf16.msra.mxu0 0
    %1880 = vmatprep.subr.bf16.mxu0 0
    %1881 = vmatpush1.bf16.msra.mxu0 0
    %1882 = vmatprep.subr.bf16.mxu0 0
    %1883 = vmatpush1.bf16.msra.mxu0 0
    %1884 = vmatprep.subr.bf16.mxu0 0
    %1885 = vmatpush1.bf16.msra.mxu0 0
    %1886 = vmatprep.subr.bf16.mxu0 0
    %1887 = vmatpush1.bf16.msra.mxu0 0
    %1888 = vmatprep.subr.bf16.mxu0 0
    %1889 = vmatpush1.bf16.msra.mxu0 0
    %1890 = vmatprep.subr.bf16.mxu0 0
    %1891 = vmatpush1.bf16.msra.mxu0 0
    %1892 = vmatprep.subr.bf16.mxu0 0
    %1893 = vmatpush1.bf16.msra.mxu0 0
    %1894 = vmatprep.subr.bf16.mxu0 0
    %1895 = vmatpush1.bf16.msra.mxu0 0
    %1896 = vmatprep.mubr.bf16.mxu0 0
    %1897 = vmatmul.mubr.bf16.gmra.mrb[0].mxu0 %v1847
    %v1898 = vpop.f32.mrb[0].mxu0
    %v1899 = vadd.f32 0.0, %v1898
    %v1900 = vpop.f32.mrb[0].mxu0
    %v1901 = vadd.f32 0.0, %v1900
    %v1902 = vpop.f32.mrb[0].mxu0
    %v1903 = vadd.f32 0.0, %v1902
    %v1904 = vpop.f32.mrb[0].mxu0
    %v1905 = vadd.f32 0.0, %v1904
    %1906 = vmatprep.mubr.bf16.mxu0 0
    %1907 = vmatmul.mubr.bf16.gmra.mrb[0].mxu0 %v1850
    %v1908 = vpop.f32.mrb[0].mxu0
    %v1909 = vadd.f32 0.0, %v1908
    %v1910 = vpop.f32.mrb[0].mxu0
    %v1911 = vadd.f32 0.0, %v1910
    %v1912 = vpop.f32.mrb[0].mxu0
    %v1913 = vadd.f32 0.0, %v1912
    %v1914 = vpop.f32.mrb[0].mxu0
    %v1915 = vadd.f32 0.0, %v1914
    %1916 = vmatprep.mubr.bf16.mxu0 0
    %1917 = vmatmul.mubr.bf16.gmra.mrb[0].mxu0 %v1853
    %v1918 = vpop.f32.mrb[0].mxu0
    %v1919 = vadd.f32 0.0, %v1918
    %v1920 = vpop.f32.mrb[0].mxu0
    %v1921 = vadd.f32 0.0, %v1920
    %v1922 = vpop.f32.mrb[0].mxu0
    %v1923 = vadd.f32 0.0, %v1922
    %v1924 = vpop.f32.mrb[0].mxu0
    %v1925 = vadd.f32 0.0, %v1924
    %1926 = vmatprep.mubr.bf16.mxu0 0
    %1927 = vmatmul.mubr.bf16.gmra.mrb[0].mxu0 %v1856
    %v1928 = vpop.f32.mrb[0].mxu0
    %v1929 = vadd.f32 0.0, %v1928
    %v1930 = vpop.f32.mrb[0].mxu0
    %v1931 = vadd.f32 0.0, %v1930
    %v1932 = vpop.f32.mrb[0].mxu0
    %v1933 = vadd.f32 0.0, %v1932
    %v1934 = vpop.f32.mrb[0].mxu0
    %v1935 = vadd.f32 0.0, %v1934
    %1936 = vmatprep.mubr.bf16.mxu0 0
    %1937 = vmatmul.mubr.bf16.gmra.mrb[0].mxu0 %v1859
    %v1938 = vpop.f32.mrb[0].mxu0
    %v1939 = vadd.f32 0.0, %v1938
    %v1940 = vpop.f32.mrb[0].mxu0
    %v1941 = vadd.f32 0.0, %v1940
    %v1942 = vpop.f32.mrb[0].mxu0
    %v1943 = vadd.f32 0.0, %v1942
    %v1944 = vpop.f32.mrb[0].mxu0
    %v1945 = vadd.f32 0.0, %v1944
    %1946 = vmatprep.mubr.bf16.mxu0 0
    %1947 = vmatmul.mubr.bf16.gmra.mrb[0].mxu0 %v1862
    %v1948 = vpop.f32.mrb[0].mxu0
    %v1949 = vadd.f32 0.0, %v1948
    %v1950 = vpop.f32.mrb[0].mxu0
    %v1951 = vadd.f32 0.0, %v1950
    %v1952 = vpop.f32.mrb[0].mxu0
    %v1953 = vadd.f32 0.0, %v1952
    %v1954 = vpop.f32.mrb[0].mxu0
    %v1955 = vadd.f32 0.0, %v1954
    %1956 = vdwg.mxu0
    %1957 = vmatprep.subr.bf16.mxu0 %v292
    %1958 = vmatpush1.bf16.msra.mxu0 %v291
    %1959 = vmatprep.subr.bf16.mxu0 %v300
    %1960 = vmatpush1.bf16.msra.mxu0 %v299
    %1961 = vmatprep.subr.bf16.mxu0 %v308
    %1962 = vmatpush1.bf16.msra.mxu0 %v307
    %1963 = vmatprep.subr.bf16.mxu0 %v316
    %1964 = vmatpush1.bf16.msra.mxu0 %v315
    %1965 = vmatprep.subr.bf16.mxu0 %v324
    %1966 = vmatpush1.bf16.msra.mxu0 %v323
    %1967 = vmatprep.subr.bf16.mxu0 %v332
    %1968 = vmatpush1.bf16.msra.mxu0 %v331
    %1969 = vmatprep.subr.bf16.mxu0 0
    %1970 = vmatpush1.bf16.msra.mxu0 0
    %1971 = vmatprep.subr.bf16.mxu0 0
    %1972 = vmatpush1.bf16.msra.mxu0 0
    %1973 = vmatprep.subr.bf16.mxu0 0
    %1974 = vmatpush1.bf16.msra.mxu0 0
    %1975 = vmatprep.subr.bf16.mxu0 0
    %1976 = vmatpush1.bf16.msra.mxu0 0
    %1977 = vmatprep.subr.bf16.mxu0 0
    %1978 = vmatpush1.bf16.msra.mxu0 0
    %1979 = vmatprep.subr.bf16.mxu0 0
    %1980 = vmatpush1.bf16.msra.mxu0 0
    %1981 = vmatprep.subr.bf16.mxu0 0
    %1982 = vmatpush1.bf16.msra.mxu0 0
    %1983 = vmatprep.subr.bf16.mxu0 0
    %1984 = vmatpush1.bf16.msra.mxu0 0
    %1985 = vmatprep.subr.bf16.mxu0 0
    %1986 = vmatpush1.bf16.msra.mxu0 0
    %1987 = vmatprep.subr.bf16.mxu0 0
    %1988 = vmatpush1.bf16.msra.mxu0 0
    %1989 = vmatprep.mubr.bf16.mxu0 0
    %1990 = vmatmul.mubr.bf16.gmra.mrb[0].mxu0 %v1847
    %v1991 = vpop.f32.mrb[0].mxu0
    %v1992 = vadd.f32 0.0, %v1991
    %v1993 = vpop.f32.mrb[0].mxu0
    %v1994 = vadd.f32 0.0, %v1993
    %v1995 = vpop.f32.mrb[0].mxu0
    %v1996 = vadd.f32 0.0, %v1995
    %v1997 = vpop.f32.mrb[0].mxu0
    %v1998 = vadd.f32 0.0, %v1997
    %1999 = vmatprep.mubr.bf16.mxu0 0
    %2000 = vmatmul.mubr.bf16.gmra.mrb[0].mxu0 %v1850
    %v2001 = vpop.f32.mrb[0].mxu0
    %v2002 = vadd.f32 0.0, %v2001
    %v2003 = vpop.f32.mrb[0].mxu0
    %v2004 = vadd.f32 0.0, %v2003
    %v2005 = vpop.f32.mrb[0].mxu0
    %v2006 = vadd.f32 0.0, %v2005
    %v2007 = vpop.f32.mrb[0].mxu0
    %v2008 = vadd.f32 0.0, %v2007
    %2009 = vmatprep.mubr.bf16.mxu0 0
    %2010 = vmatmul.mubr.bf16.gmra.mrb[0].mxu0 %v1853
    %v2011 = vpop.f32.mrb[0].mxu0
    %v2012 = vadd.f32 0.0, %v2011
    %v2013 = vpop.f32.mrb[0].mxu0
    %v2014 = vadd.f32 0.0, %v2013
    %v2015 = vpop.f32.mrb[0].mxu0
    %v2016 = vadd.f32 0.0, %v2015
    %v2017 = vpop.f32.mrb[0].mxu0
    %v2018 = vadd.f32 0.0, %v2017
    %2019 = vmatprep.mubr.bf16.mxu0 0
    %2020 = vmatmul.mubr.bf16.gmra.mrb[0].mxu0 %v1856
    %v2021 = vpop.f32.mrb[0].mxu0
    %v2022 = vadd.f32 0.0, %v2021
    %v2023 = vpop.f32.mrb[0].mxu0
    %v2024 = vadd.f32 0.0, %v2023
    %v2025 = vpop.f32.mrb[0].mxu0
    %v2026 = vadd.f32 0.0, %v2025
    %v2027 = vpop.f32.mrb[0].mxu0
    %v2028 = vadd.f32 0.0, %v2027
    %2029 = vmatprep.mubr.bf16.mxu0 0
    %2030 = vmatmul.mubr.bf16.gmra.mrb[0].mxu0 %v1859
    %v2031 = vpop.f32.mrb[0].mxu0
    %v2032 = vadd.f32 0.0, %v2031
    %v2033 = vpop.f32.mrb[0].mxu0
    %v2034 = vadd.f32 0.0, %v2033
    %v2035 = vpop.f32.mrb[0].mxu0
    %v2036 = vadd.f32 0.0, %v2035
    %v2037 = vpop.f32.mrb[0].mxu0
    %v2038 = vadd.f32 0.0, %v2037
    %2039 = vmatprep.mubr.bf16.mxu0 0
    %2040 = vmatmul.mubr.bf16.gmra.mrb[0].mxu0 %v1862
    %v2041 = vpop.f32.mrb[0].mxu0
    %v2042 = vadd.f32 0.0, %v2041
    %v2043 = vpop.f32.mrb[0].mxu0
    %v2044 = vadd.f32 0.0, %v2043
    %v2045 = vpop.f32.mrb[0].mxu0
    %v2046 = vadd.f32 0.0, %v2045
    %v2047 = vpop.f32.mrb[0].mxu0
    %v2048 = vadd.f32 0.0, %v2047
    %2049 = vdwg.mxu0
    %2050 = vmatprep.subr.bf16.mxu0 %v294
    %2051 = vmatpush1.bf16.msra.mxu0 %v293
    %2052 = vmatprep.subr.bf16.mxu0 %v302
    %2053 = vmatpush1.bf16.msra.mxu0 %v301
    %2054 = vmatprep.subr.bf16.mxu0 %v310
    %2055 = vmatpush1.bf16.msra.mxu0 %v309
    %2056 = vmatprep.subr.bf16.mxu0 %v318
    %2057 = vmatpush1.bf16.msra.mxu0 %v317
    %2058 = vmatprep.subr.bf16.mxu0 %v326
    %2059 = vmatpush1.bf16.msra.mxu0 %v325
    %2060 = vmatprep.subr.bf16.mxu0 %v334
    %2061 = vmatpush1.bf16.msra.mxu0 %v333
    %2062 = vmatprep.subr.bf16.mxu0 0
    %2063 = vmatpush1.bf16.msra.mxu0 0
    %2064 = vmatprep.subr.bf16.mxu0 0
    %2065 = vmatpush1.bf16.msra.mxu0 0
    %2066 = vmatprep.subr.bf16.mxu0 0
    %2067 = vmatpush1.bf16.msra.mxu0 0
    %2068 = vmatprep.subr.bf16.mxu0 0
    %2069 = vmatpush1.bf16.msra.mxu0 0
    %2070 = vmatprep.subr.bf16.mxu0 0
    %2071 = vmatpush1.bf16.msra.mxu0 0
    %2072 = vmatprep.subr.bf16.mxu0 0
    %2073 = vmatpush1.bf16.msra.mxu0 0
    %2074 = vmatprep.subr.bf16.mxu0 0
    %2075 = vmatpush1.bf16.msra.mxu0 0
    %2076 = vmatprep.subr.bf16.mxu0 0
    %2077 = vmatpush1.bf16.msra.mxu0 0
    %2078 = vmatprep.subr.bf16.mxu0 0
    %2079 = vmatpush1.bf16.msra.mxu0 0
    %2080 = vmatprep.subr.bf16.mxu0 0
    %2081 = vmatpush1.bf16.msra.mxu0 0
    %2082 = vmatprep.mubr.bf16.mxu0 0
    %2083 = vmatmul.mubr.bf16.gmra.mrb[0].mxu0 %v1847
    %v2084 = vpop.f32.mrb[0].mxu0
    %v2085 = vadd.f32 0.0, %v2084
    %v2086 = vpop.f32.mrb[0].mxu0
    %v2087 = vadd.f32 0.0, %v2086
    %v2088 = vpop.f32.mrb[0].mxu0
    %v2089 = vadd.f32 0.0, %v2088
    %v2090 = vpop.f32.mrb[0].mxu0
    %v2091 = vadd.f32 0.0, %v2090
    %2092 = vmatprep.mubr.bf16.mxu0 0
    %2093 = vmatmul.mubr.bf16.gmra.mrb[0].mxu0 %v1850
    %v2094 = vpop.f32.mrb[0].mxu0
    %v2095 = vadd.f32 0.0, %v2094
    %v2096 = vpop.f32.mrb[0].mxu0
    %v2097 = vadd.f32 0.0, %v2096
    %v2098 = vpop.f32.mrb[0].mxu0
    %v2099 = vadd.f32 0.0, %v2098
    %v2100 = vpop.f32.mrb[0].mxu0
    %v2101 = vadd.f32 0.0, %v2100
    %2102 = vmatprep.mubr.bf16.mxu0 0
    %2103 = vmatmul.mubr.bf16.gmra.mrb[0].mxu0 %v1853
    %v2104 = vpop.f32.mrb[0].mxu0
    %v2105 = vadd.f32 0.0, %v2104
    %v2106 = vpop.f32.mrb[0].mxu0
    %v2107 = vadd.f32 0.0, %v2106
    %v2108 = vpop.f32.mrb[0].mxu0
    %v2109 = vadd.f32 0.0, %v2108
    %v2110 = vpop.f32.mrb[0].mxu0
    %v2111 = vadd.f32 0.0, %v2110
    %2112 = vmatprep.mubr.bf16.mxu0 0
    %2113 = vmatmul.mubr.bf16.gmra.mrb[0].mxu0 %v1856
    %v2114 = vpop.f32.mrb[0].mxu0
    %v2115 = vadd.f32 0.0, %v2114
    %v2116 = vpop.f32.mrb[0].mxu0
    %v2117 = vadd.f32 0.0, %v2116
    %v2118 = vpop.f32.mrb[0].mxu0
    %v2119 = vadd.f32 0.0, %v2118
    %v2120 = vpop.f32.mrb[0].mxu0
    %v2121 = vadd.f32 0.0, %v2120
    %2122 = vmatprep.mubr.bf16.mxu0 0
    %2123 = vmatmul.mubr.bf16.gmra.mrb[0].mxu0 %v1859
    %v2124 = vpop.f32.mrb[0].mxu0
    %v2125 = vadd.f32 0.0, %v2124
    %v2126 = vpop.f32.mrb[0].mxu0
    %v2127 = vadd.f32 0.0, %v2126
    %v2128 = vpop.f32.mrb[0].mxu0
    %v2129 = vadd.f32 0.0, %v2128
    %v2130 = vpop.f32.mrb[0].mxu0
    %v2131 = vadd.f32 0.0, %v2130
    %2132 = vmatprep.mubr.bf16.mxu0 0
    %2133 = vmatmul.mubr.bf16.gmra.mrb[0].mxu0 %v1862
    %v2134 = vpop.f32.mrb[0].mxu0
    %v2135 = vadd.f32 0.0, %v2134
    %v2136 = vpop.f32.mrb[0].mxu0
    %v2137 = vadd.f32 0.0, %v2136
    %v2138 = vpop.f32.mrb[0].mxu0
    %v2139 = vadd.f32 0.0, %v2138
    %v2140 = vpop.f32.mrb[0].mxu0
    %v2141 = vadd.f32 0.0, %v2140
    %2142 = vdwg.mxu0
    %2143 = vmatprep.subr.bf16.mxu0 %v296
    %2144 = vmatpush1.bf16.msra.mxu0 %v295
    %2145 = vmatprep.subr.bf16.mxu0 %v304
    %2146 = vmatpush1.bf16.msra.mxu0 %v303
    %2147 = vmatprep.subr.bf16.mxu0 %v312
    %2148 = vmatpush1.bf16.msra.mxu0 %v311
    %2149 = vmatprep.subr.bf16.mxu0 %v320
    %2150 = vmatpush1.bf16.msra.mxu0 %v319
    %2151 = vmatprep.subr.bf16.mxu0 %v328
    %2152 = vmatpush1.bf16.msra.mxu0 %v327
    %2153 = vmatprep.subr.bf16.mxu0 %v336
    %2154 = vmatpush1.bf16.msra.mxu0 %v335
    %2155 = vmatprep.subr.bf16.mxu0 0
    %2156 = vmatpush1.bf16.msra.mxu0 0
    %2157 = vmatprep.subr.bf16.mxu0 0
    %2158 = vmatpush1.bf16.msra.mxu0 0
    %2159 = vmatprep.subr.bf16.mxu0 0
    %2160 = vmatpush1.bf16.msra.mxu0 0
    %2161 = vmatprep.subr.bf16.mxu0 0
    %2162 = vmatpush1.bf16.msra.mxu0 0
    %2163 = vmatprep.subr.bf16.mxu0 0
    %2164 = vmatpush1.bf16.msra.mxu0 0
    %2165 = vmatprep.subr.bf16.mxu0 0
    %2166 = vmatpush1.bf16.msra.mxu0 0
    %2167 = vmatprep.subr.bf16.mxu0 0
    %2168 = vmatpush1.bf16.msra.mxu0 0
    %2169 = vmatprep.subr.bf16.mxu0 0
    %2170 = vmatpush1.bf16.msra.mxu0 0
    %2171 = vmatprep.subr.bf16.mxu0 0
    %2172 = vmatpush1.bf16.msra.mxu0 0
    %2173 = vmatprep.subr.bf16.mxu0 0
    %2174 = vmatpush1.bf16.msra.mxu0 0
    %2175 = vmatprep.mubr.bf16.mxu0 0
    %2176 = vmatmul.mubr.bf16.gmra.mrb[0].mxu0 %v1847
    %v2177 = vpop.f32.mrb[0].mxu0
    %v2178 = vadd.f32 0.0, %v2177
    %v2179 = vpop.f32.mrb[0].mxu0
    %v2180 = vadd.f32 0.0, %v2179
    %v2181 = vpop.f32.mrb[0].mxu0
    %v2182 = vadd.f32 0.0, %v2181
    %v2183 = vpop.f32.mrb[0].mxu0
    %v2184 = vadd.f32 0.0, %v2183
    %2185 = vmatprep.mubr.bf16.mxu0 0
    %2186 = vmatmul.mubr.bf16.gmra.mrb[0].mxu0 %v1850
    %v2187 = vpop.f32.mrb[0].mxu0
    %v2188 = vadd.f32 0.0, %v2187
    %v2189 = vpop.f32.mrb[0].mxu0
    %v2190 = vadd.f32 0.0, %v2189
    %v2191 = vpop.f32.mrb[0].mxu0
    %v2192 = vadd.f32 0.0, %v2191
    %v2193 = vpop.f32.mrb[0].mxu0
    %v2194 = vadd.f32 0.0, %v2193
    %2195 = vmatprep.mubr.bf16.mxu0 0
    %2196 = vmatmul.mubr.bf16.gmra.mrb[0].mxu0 %v1853
    %v2197 = vpop.f32.mrb[0].mxu0
    %v2198 = vadd.f32 0.0, %v2197
    %v2199 = vpop.f32.mrb[0].mxu0
    %v2200 = vadd.f32 0.0, %v2199
    %v2201 = vpop.f32.mrb[0].mxu0
    %v2202 = vadd.f32 0.0, %v2201
    %v2203 = vpop.f32.mrb[0].mxu0
    %v2204 = vadd.f32 0.0, %v2203
    %2205 = vmatprep.mubr.bf16.mxu0 0
    %2206 = vmatmul.mubr.bf16.gmra.mrb[0].mxu0 %v1856
    %v2207 = vpop.f32.mrb[0].mxu0
    %v2208 = vadd.f32 0.0, %v2207
    %v2209 = vpop.f32.mrb[0].mxu0
    %v2210 = vadd.f32 0.0, %v2209
    %v2211 = vpop.f32.mrb[0].mxu0
    %v2212 = vadd.f32 0.0, %v2211
    %v2213 = vpop.f32.mrb[0].mxu0
    %v2214 = vadd.f32 0.0, %v2213
    %2215 = vmatprep.mubr.bf16.mxu0 0
    %2216 = vmatmul.mubr.bf16.gmra.mrb[0].mxu0 %v1859
    %v2217 = vpop.f32.mrb[0].mxu0
    %v2218 = vadd.f32 0.0, %v2217
    %v2219 = vpop.f32.mrb[0].mxu0
    %v2220 = vadd.f32 0.0, %v2219
    %v2221 = vpop.f32.mrb[0].mxu0
    %v2222 = vadd.f32 0.0, %v2221
    %v2223 = vpop.f32.mrb[0].mxu0
    %v2224 = vadd.f32 0.0, %v2223
    %2225 = vmatprep.mubr.bf16.mxu0 0
    %2226 = vmatmul.mubr.bf16.gmra.mrb[0].mxu0 %v1862
    %v2227 = vpop.f32.mrb[0].mxu0
    %v2228 = vadd.f32 0.0, %v2227
    %v2229 = vpop.f32.mrb[0].mxu0
    %v2230 = vadd.f32 0.0, %v2229
    %v2231 = vpop.f32.mrb[0].mxu0
    %v2232 = vadd.f32 0.0, %v2231
    %v2233 = vpop.f32.mrb[0].mxu0
    %v2234 = vadd.f32 0.0, %v2233
    %2235 = vdwg.mxu0
    %s2236 = scalar_lea.vmem %s0, 144
    %v2237 = vld [vmem:[%s2236] sm:$0xf]
    %v2238 = vld [vmem:[%s2236 + $0x4] sm:$0xf]
    %v2239 = vld [vmem:[%s2236 + $0x8] sm:$0xf]
    %v2240 = vld [vmem:[%s2236 + $0xc] sm:$0xf]
    %v2241 = vld [vmem:[%s2236 + $0x10] sm:$0xf]
    %v2242 = vld [vmem:[%s2236 + $0x14] sm:$0xf]
    %v2243 = vld [vmem:[%s2236 + $0x18] sm:$0xf]
    %v2244 = vld [vmem:[%s2236 + $0x1c] sm:$0xf]
    %v2245 = vld [vmem:[%s2236 + $0x20] sm:$0xf]
    %v2246 = vld [vmem:[%s2236 + $0x24] sm:$0xf]
    %v2247 = vld [vmem:[%s2236 + $0x28] sm:$0xf]
    %v2248 = vld [vmem:[%s2236 + $0x2c] sm:$0xf]
    %v2261 = vunpack.c.l.b16 %v2237
    %v2262 = vunpack.c.l.b16 %v2238
    %v2263 = vunpack.c.l.b16 %v2239
    %v2264 = vunpack.c.l.b16 %v2240
    %v2265 = vunpack.c.l.b16 %v2241
    %v2266 = vunpack.c.l.b16 %v2242
    %v2267 = vunpack.c.l.b16 %v2243
    %v2268 = vunpack.c.l.b16 %v2244
    %v2269 = vunpack.c.l.b16 %v2245
    %v2270 = vunpack.c.l.b16 %v2246
    %v2271 = vunpack.c.l.b16 %v2247
    %v2272 = vunpack.c.l.b16 %v2248
    %v2273 = vpack.c.b16 %v2262, %v2261
    %v2274 = vpack.c.b16 %v2264, %v2263
    %v2275 = vpack.c.b16 %v2266, %v2265
    %v2276 = vpack.c.b16 %v2268, %v2267
    %v2277 = vpack.c.b16 %v2270, %v2269
    %v2278 = vpack.c.b16 %v2272, %v2271
    %v2280 = vsel %vm385, %v2273, 0
    %v2283 = vsel %vm385, %v2274, 0
    %v2286 = vsel %vm385, %v2275, 0
    %v2289 = vsel %vm385, %v2276, 0
    %v2292 = vsel %vm385, %v2277, 0
    %v2295 = vsel %vm385, %v2278, 0
    %2297 = vmatprep.subr.bf16.mxu0 %v290
    %2298 = vmatpush1.bf16.msra.mxu0 %v289
    %2299 = vmatprep.subr.bf16.mxu0 %v298
    %2300 = vmatpush1.bf16.msra.mxu0 %v297
    %2301 = vmatprep.subr.bf16.mxu0 %v306
    %2302 = vmatpush1.bf16.msra.mxu0 %v305
    %2303 = vmatprep.subr.bf16.mxu0 %v314
    %2304 = vmatpush1.bf16.msra.mxu0 %v313
    %2305 = vmatprep.subr.bf16.mxu0 %v322
    %2306 = vmatpush1.bf16.msra.mxu0 %v321
    %2307 = vmatprep.subr.bf16.mxu0 %v330
    %2308 = vmatpush1.bf16.msra.mxu0 %v329
    %2309 = vmatprep.subr.bf16.mxu0 0
    %2310 = vmatpush1.bf16.msra.mxu0 0
    %2311 = vmatprep.subr.bf16.mxu0 0
    %2312 = vmatpush1.bf16.msra.mxu0 0
    %2313 = vmatprep.subr.bf16.mxu0 0
    %2314 = vmatpush1.bf16.msra.mxu0 0
    %2315 = vmatprep.subr.bf16.mxu0 0
    %2316 = vmatpush1.bf16.msra.mxu0 0
    %2317 = vmatprep.subr.bf16.mxu0 0
    %2318 = vmatpush1.bf16.msra.mxu0 0
    %2319 = vmatprep.subr.bf16.mxu0 0
    %2320 = vmatpush1.bf16.msra.mxu0 0
    %2321 = vmatprep.subr.bf16.mxu0 0
    %2322 = vmatpush1.bf16.msra.mxu0 0
    %2323 = vmatprep.subr.bf16.mxu0 0
    %2324 = vmatpush1.bf16.msra.mxu0 0
    %2325 = vmatprep.subr.bf16.mxu0 0
    %2326 = vmatpush1.bf16.msra.mxu0 0
    %2327 = vmatprep.subr.bf16.mxu0 0
    %2328 = vmatpush1.bf16.msra.mxu0 0
    %2329 = vmatprep.mubr.bf16.mxu0 0
    %2330 = vmatmul.mubr.bf16.gmra.mrb[0].mxu0 %v2280
    %v2331 = vpop.f32.mrb[0].mxu0
    %v2332 = vadd.f32 0.0, %v2331
    %v2333 = vpop.f32.mrb[0].mxu0
    %v2334 = vadd.f32 0.0, %v2333
    %v2335 = vpop.f32.mrb[0].mxu0
    %v2336 = vadd.f32 0.0, %v2335
    %v2337 = vpop.f32.mrb[0].mxu0
    %v2338 = vadd.f32 0.0, %v2337
    %2339 = vmatprep.mubr.bf16.mxu0 0
    %2340 = vmatmul.mubr.bf16.gmra.mrb[0].mxu0 %v2283
    %v2341 = vpop.f32.mrb[0].mxu0
    %v2342 = vadd.f32 0.0, %v2341
    %v2343 = vpop.f32.mrb[0].mxu0
    %v2344 = vadd.f32 0.0, %v2343
    %v2345 = vpop.f32.mrb[0].mxu0
    %v2346 = vadd.f32 0.0, %v2345
    %v2347 = vpop.f32.mrb[0].mxu0
    %v2348 = vadd.f32 0.0, %v2347
    %2349 = vmatprep.mubr.bf16.mxu0 0
    %2350 = vmatmul.mubr.bf16.gmra.mrb[0].mxu0 %v2286
    %v2351 = vpop.f32.mrb[0].mxu0
    %v2352 = vadd.f32 0.0, %v2351
    %v2353 = vpop.f32.mrb[0].mxu0
    %v2354 = vadd.f32 0.0, %v2353
    %v2355 = vpop.f32.mrb[0].mxu0
    %v2356 = vadd.f32 0.0, %v2355
    %v2357 = vpop.f32.mrb[0].mxu0
    %v2358 = vadd.f32 0.0, %v2357
    %2359 = vmatprep.mubr.bf16.mxu0 0
    %2360 = vmatmul.mubr.bf16.gmra.mrb[0].mxu0 %v2289
    %v2361 = vpop.f32.mrb[0].mxu0
    %v2362 = vadd.f32 0.0, %v2361
    %v2363 = vpop.f32.mrb[0].mxu0
    %v2364 = vadd.f32 0.0, %v2363
    %v2365 = vpop.f32.mrb[0].mxu0
    %v2366 = vadd.f32 0.0, %v2365
    %v2367 = vpop.f32.mrb[0].mxu0
    %v2368 = vadd.f32 0.0, %v2367
    %2369 = vmatprep.mubr.bf16.mxu0 0
    %2370 = vmatmul.mubr.bf16.gmra.mrb[0].mxu0 %v2292
    %v2371 = vpop.f32.mrb[0].mxu0
    %v2372 = vadd.f32 0.0, %v2371
    %v2373 = vpop.f32.mrb[0].mxu0
    %v2374 = vadd.f32 0.0, %v2373
    %v2375 = vpop.f32.mrb[0].mxu0
    %v2376 = vadd.f32 0.0, %v2375
    %v2377 = vpop.f32.mrb[0].mxu0
    %v2378 = vadd.f32 0.0, %v2377
    %2379 = vmatprep.mubr.bf16.mxu0 0
    %2380 = vmatmul.mubr.bf16.gmra.mrb[0].mxu0 %v2295
    %v2381 = vpop.f32.mrb[0].mxu0
    %v2382 = vadd.f32 0.0, %v2381
    %v2383 = vpop.f32.mrb[0].mxu0
    %v2384 = vadd.f32 0.0, %v2383
    %v2385 = vpop.f32.mrb[0].mxu0
    %v2386 = vadd.f32 0.0, %v2385
    %v2387 = vpop.f32.mrb[0].mxu0
    %v2388 = vadd.f32 0.0, %v2387
    %2389 = vdwg.mxu0
    %2390 = vmatprep.subr.bf16.mxu0 %v292
    %2391 = vmatpush1.bf16.msra.mxu0 %v291
    %2392 = vmatprep.subr.bf16.mxu0 %v300
    %2393 = vmatpush1.bf16.msra.mxu0 %v299
    %2394 = vmatprep.subr.bf16.mxu0 %v308
    %2395 = vmatpush1.bf16.msra.mxu0 %v307
    %2396 = vmatprep.subr.bf16.mxu0 %v316
    %2397 = vmatpush1.bf16.msra.mxu0 %v315
    %2398 = vmatprep.subr.bf16.mxu0 %v324
    %2399 = vmatpush1.bf16.msra.mxu0 %v323
    %2400 = vmatprep.subr.bf16.mxu0 %v332
    %2401 = vmatpush1.bf16.msra.mxu0 %v331
    %2402 = vmatprep.subr.bf16.mxu0 0
    %2403 = vmatpush1.bf16.msra.mxu0 0
    %2404 = vmatprep.subr.bf16.mxu0 0
    %2405 = vmatpush1.bf16.msra.mxu0 0
    %2406 = vmatprep.subr.bf16.mxu0 0
    %2407 = vmatpush1.bf16.msra.mxu0 0
    %2408 = vmatprep.subr.bf16.mxu0 0
    %2409 = vmatpush1.bf16.msra.mxu0 0
    %2410 = vmatprep.subr.bf16.mxu0 0
    %2411 = vmatpush1.bf16.msra.mxu0 0
    %2412 = vmatprep.subr.bf16.mxu0 0
    %2413 = vmatpush1.bf16.msra.mxu0 0
    %2414 = vmatprep.subr.bf16.mxu0 0
    %2415 = vmatpush1.bf16.msra.mxu0 0
    %2416 = vmatprep.subr.bf16.mxu0 0
    %2417 = vmatpush1.bf16.msra.mxu0 0
    %2418 = vmatprep.subr.bf16.mxu0 0
    %2419 = vmatpush1.bf16.msra.mxu0 0
    %2420 = vmatprep.subr.bf16.mxu0 0
    %2421 = vmatpush1.bf16.msra.mxu0 0
    %2422 = vmatprep.mubr.bf16.mxu0 0
    %2423 = vmatmul.mubr.bf16.gmra.mrb[0].mxu0 %v2280
    %v2424 = vpop.f32.mrb[0].mxu0
    %v2425 = vadd.f32 0.0, %v2424
    %v2426 = vpop.f32.mrb[0].mxu0
    %v2427 = vadd.f32 0.0, %v2426
    %v2428 = vpop.f32.mrb[0].mxu0
    %v2429 = vadd.f32 0.0, %v2428
    %v2430 = vpop.f32.mrb[0].mxu0
    %v2431 = vadd.f32 0.0, %v2430
    %2432 = vmatprep.mubr.bf16.mxu0 0
    %2433 = vmatmul.mubr.bf16.gmra.mrb[0].mxu0 %v2283
    %v2434 = vpop.f32.mrb[0].mxu0
    %v2435 = vadd.f32 0.0, %v2434
    %v2436 = vpop.f32.mrb[0].mxu0
    %v2437 = vadd.f32 0.0, %v2436
    %v2438 = vpop.f32.mrb[0].mxu0
    %v2439 = vadd.f32 0.0, %v2438
    %v2440 = vpop.f32.mrb[0].mxu0
    %v2441 = vadd.f32 0.0, %v2440
    %2442 = vmatprep.mubr.bf16.mxu0 0
    %2443 = vmatmul.mubr.bf16.gmra.mrb[0].mxu0 %v2286
    %v2444 = vpop.f32.mrb[0].mxu0
    %v2445 = vadd.f32 0.0, %v2444
    %v2446 = vpop.f32.mrb[0].mxu0
    %v2447 = vadd.f32 0.0, %v2446
    %v2448 = vpop.f32.mrb[0].mxu0
    %v2449 = vadd.f32 0.0, %v2448
    %v2450 = vpop.f32.mrb[0].mxu0
    %v2451 = vadd.f32 0.0, %v2450
    %2452 = vmatprep.mubr.bf16.mxu0 0
    %2453 = vmatmul.mubr.bf16.gmra.mrb[0].mxu0 %v2289
    %v2454 = vpop.f32.mrb[0].mxu0
    %v2455 = vadd.f32 0.0, %v2454
    %v2456 = vpop.f32.mrb[0].mxu0
    %v2457 = vadd.f32 0.0, %v2456
    %v2458 = vpop.f32.mrb[0].mxu0
    %v2459 = vadd.f32 0.0, %v2458
    %v2460 = vpop.f32.mrb[0].mxu0
    %v2461 = vadd.f32 0.0, %v2460
    %2462 = vmatprep.mubr.bf16.mxu0 0
    %2463 = vmatmul.mubr.bf16.gmra.mrb[0].mxu0 %v2292
    %v2464 = vpop.f32.mrb[0].mxu0
    %v2465 = vadd.f32 0.0, %v2464
    %v2466 = vpop.f32.mrb[0].mxu0
    %v2467 = vadd.f32 0.0, %v2466
    %v2468 = vpop.f32.mrb[0].mxu0
    %v2469 = vadd.f32 0.0, %v2468
    %v2470 = vpop.f32.mrb[0].mxu0
    %v2471 = vadd.f32 0.0, %v2470
    %2472 = vmatprep.mubr.bf16.mxu0 0
    %2473 = vmatmul.mubr.bf16.gmra.mrb[0].mxu0 %v2295
    %v2474 = vpop.f32.mrb[0].mxu0
    %v2475 = vadd.f32 0.0, %v2474
    %v2476 = vpop.f32.mrb[0].mxu0
    %v2477 = vadd.f32 0.0, %v2476
    %v2478 = vpop.f32.mrb[0].mxu0
    %v2479 = vadd.f32 0.0, %v2478
    %v2480 = vpop.f32.mrb[0].mxu0
    %v2481 = vadd.f32 0.0, %v2480
    %2482 = vdwg.mxu0
    %2483 = vmatprep.subr.bf16.mxu0 %v294
    %2484 = vmatpush1.bf16.msra.mxu0 %v293
    %2485 = vmatprep.subr.bf16.mxu0 %v302
    %2486 = vmatpush1.bf16.msra.mxu0 %v301
    %2487 = vmatprep.subr.bf16.mxu0 %v310
    %2488 = vmatpush1.bf16.msra.mxu0 %v309
    %2489 = vmatprep.subr.bf16.mxu0 %v318
    %2490 = vmatpush1.bf16.msra.mxu0 %v317
    %2491 = vmatprep.subr.bf16.mxu0 %v326
    %2492 = vmatpush1.bf16.msra.mxu0 %v325
    %2493 = vmatprep.subr.bf16.mxu0 %v334
    %2494 = vmatpush1.bf16.msra.mxu0 %v333
    %2495 = vmatprep.subr.bf16.mxu0 0
    %2496 = vmatpush1.bf16.msra.mxu0 0
    %2497 = vmatprep.subr.bf16.mxu0 0
    %2498 = vmatpush1.bf16.msra.mxu0 0
    %2499 = vmatprep.subr.bf16.mxu0 0
    %2500 = vmatpush1.bf16.msra.mxu0 0
    %2501 = vmatprep.subr.bf16.mxu0 0
    %2502 = vmatpush1.bf16.msra.mxu0 0
    %2503 = vmatprep.subr.bf16.mxu0 0
    %2504 = vmatpush1.bf16.msra.mxu0 0
    %2505 = vmatprep.subr.bf16.mxu0 0
    %2506 = vmatpush1.bf16.msra.mxu0 0
    %2507 = vmatprep.subr.bf16.mxu0 0
    %2508 = vmatpush1.bf16.msra.mxu0 0
    %2509 = vmatprep.subr.bf16.mxu0 0
    %2510 = vmatpush1.bf16.msra.mxu0 0
    %2511 = vmatprep.subr.bf16.mxu0 0
    %2512 = vmatpush1.bf16.msra.mxu0 0
    %2513 = vmatprep.subr.bf16.mxu0 0
    %2514 = vmatpush1.bf16.msra.mxu0 0
    %2515 = vmatprep.mubr.bf16.mxu0 0
    %2516 = vmatmul.mubr.bf16.gmra.mrb[0].mxu0 %v2280
    %v2517 = vpop.f32.mrb[0].mxu0
    %v2518 = vadd.f32 0.0, %v2517
    %v2519 = vpop.f32.mrb[0].mxu0
    %v2520 = vadd.f32 0.0, %v2519
    %v2521 = vpop.f32.mrb[0].mxu0
    %v2522 = vadd.f32 0.0, %v2521
    %v2523 = vpop.f32.mrb[0].mxu0
    %v2524 = vadd.f32 0.0, %v2523
    %2525 = vmatprep.mubr.bf16.mxu0 0
    %2526 = vmatmul.mubr.bf16.gmra.mrb[0].mxu0 %v2283
    %v2527 = vpop.f32.mrb[0].mxu0
    %v2528 = vadd.f32 0.0, %v2527
    %v2529 = vpop.f32.mrb[0].mxu0
    %v2530 = vadd.f32 0.0, %v2529
    %v2531 = vpop.f32.mrb[0].mxu0
    %v2532 = vadd.f32 0.0, %v2531
    %v2533 = vpop.f32.mrb[0].mxu0
    %v2534 = vadd.f32 0.0, %v2533
    %2535 = vmatprep.mubr.bf16.mxu0 0
    %2536 = vmatmul.mubr.bf16.gmra.mrb[0].mxu0 %v2286
    %v2537 = vpop.f32.mrb[0].mxu0
    %v2538 = vadd.f32 0.0, %v2537
    %v2539 = vpop.f32.mrb[0].mxu0
    %v2540 = vadd.f32 0.0, %v2539
    %v2541 = vpop.f32.mrb[0].mxu0
    %v2542 = vadd.f32 0.0, %v2541
    %v2543 = vpop.f32.mrb[0].mxu0
    %v2544 = vadd.f32 0.0, %v2543
    %2545 = vmatprep.mubr.bf16.mxu0 0
    %2546 = vmatmul.mubr.bf16.gmra.mrb[0].mxu0 %v2289
    %v2547 = vpop.f32.mrb[0].mxu0
    %v2548 = vadd.f32 0.0, %v2547
    %v2549 = vpop.f32.mrb[0].mxu0
    %v2550 = vadd.f32 0.0, %v2549
    %v2551 = vpop.f32.mrb[0].mxu0
    %v2552 = vadd.f32 0.0, %v2551
    %v2553 = vpop.f32.mrb[0].mxu0
    %v2554 = vadd.f32 0.0, %v2553
    %2555 = vmatprep.mubr.bf16.mxu0 0
    %2556 = vmatmul.mubr.bf16.gmra.mrb[0].mxu0 %v2292
    %v2557 = vpop.f32.mrb[0].mxu0
    %v2558 = vadd.f32 0.0, %v2557
    %v2559 = vpop.f32.mrb[0].mxu0
    %v2560 = vadd.f32 0.0, %v2559
    %v2561 = vpop.f32.mrb[0].mxu0
    %v2562 = vadd.f32 0.0, %v2561
    %v2563 = vpop.f32.mrb[0].mxu0
    %v2564 = vadd.f32 0.0, %v2563
    %2565 = vmatprep.mubr.bf16.mxu0 0
    %2566 = vmatmul.mubr.bf16.gmra.mrb[0].mxu0 %v2295
    %v2567 = vpop.f32.mrb[0].mxu0
    %v2568 = vadd.f32 0.0, %v2567
    %v2569 = vpop.f32.mrb[0].mxu0
    %v2570 = vadd.f32 0.0, %v2569
    %v2571 = vpop.f32.mrb[0].mxu0
    %v2572 = vadd.f32 0.0, %v2571
    %v2573 = vpop.f32.mrb[0].mxu0
    %v2574 = vadd.f32 0.0, %v2573
    %2575 = vdwg.mxu0
    %2576 = vmatprep.subr.bf16.mxu0 %v296
    %2577 = vmatpush1.bf16.msra.mxu0 %v295
    %2578 = vmatprep.subr.bf16.mxu0 %v304
    %2579 = vmatpush1.bf16.msra.mxu0 %v303
    %2580 = vmatprep.subr.bf16.mxu0 %v312
    %2581 = vmatpush1.bf16.msra.mxu0 %v311
    %2582 = vmatprep.subr.bf16.mxu0 %v320
    %2583 = vmatpush1.bf16.msra.mxu0 %v319
    %2584 = vmatprep.subr.bf16.mxu0 %v328
    %2585 = vmatpush1.bf16.msra.mxu0 %v327
    %2586 = vmatprep.subr.bf16.mxu0 %v336
    %2587 = vmatpush1.bf16.msra.mxu0 %v335
    %2588 = vmatprep.subr.bf16.mxu0 0
    %2589 = vmatpush1.bf16.msra.mxu0 0
    %2590 = vmatprep.subr.bf16.mxu0 0
    %2591 = vmatpush1.bf16.msra.mxu0 0
    %2592 = vmatprep.subr.bf16.mxu0 0
    %2593 = vmatpush1.bf16.msra.mxu0 0
    %2594 = vmatprep.subr.bf16.mxu0 0
    %2595 = vmatpush1.bf16.msra.mxu0 0
    %2596 = vmatprep.subr.bf16.mxu0 0
    %2597 = vmatpush1.bf16.msra.mxu0 0
    %2598 = vmatprep.subr.bf16.mxu0 0
    %2599 = vmatpush1.bf16.msra.mxu0 0
    %2600 = vmatprep.subr.bf16.mxu0 0
    %2601 = vmatpush1.bf16.msra.mxu0 0
    %2602 = vmatprep.subr.bf16.mxu0 0
    %2603 = vmatpush1.bf16.msra.mxu0 0
    %2604 = vmatprep.subr.bf16.mxu0 0
    %2605 = vmatpush1.bf16.msra.mxu0 0
    %2606 = vmatprep.subr.bf16.mxu0 0
    %2607 = vmatpush1.bf16.msra.mxu0 0
    %2608 = vmatprep.mubr.bf16.mxu0 0
    %2609 = vmatmul.mubr.bf16.gmra.mrb[0].mxu0 %v2280
    %v2610 = vpop.f32.mrb[0].mxu0
    %v2611 = vadd.f32 0.0, %v2610
    %v2612 = vpop.f32.mrb[0].mxu0
    %v2613 = vadd.f32 0.0, %v2612
    %v2614 = vpop.f32.mrb[0].mxu0
    %v2615 = vadd.f32 0.0, %v2614
    %v2616 = vpop.f32.mrb[0].mxu0
    %v2617 = vadd.f32 0.0, %v2616
    %2618 = vmatprep.mubr.bf16.mxu0 0
    %2619 = vmatmul.mubr.bf16.gmra.mrb[0].mxu0 %v2283
    %v2620 = vpop.f32.mrb[0].mxu0
    %v2621 = vadd.f32 0.0, %v2620
    %v2622 = vpop.f32.mrb[0].mxu0
    %v2623 = vadd.f32 0.0, %v2622
    %v2624 = vpop.f32.mrb[0].mxu0
    %v2625 = vadd.f32 0.0, %v2624
    %v2626 = vpop.f32.mrb[0].mxu0
    %v2627 = vadd.f32 0.0, %v2626
    %2628 = vmatprep.mubr.bf16.mxu0 0
    %2629 = vmatmul.mubr.bf16.gmra.mrb[0].mxu0 %v2286
    %v2630 = vpop.f32.mrb[0].mxu0
    %v2631 = vadd.f32 0.0, %v2630
    %v2632 = vpop.f32.mrb[0].mxu0
    %v2633 = vadd.f32 0.0, %v2632
    %v2634 = vpop.f32.mrb[0].mxu0
    %v2635 = vadd.f32 0.0, %v2634
    %v2636 = vpop.f32.mrb[0].mxu0
    %v2637 = vadd.f32 0.0, %v2636
    %2638 = vmatprep.mubr.bf16.mxu0 0
    %2639 = vmatmul.mubr.bf16.gmra.mrb[0].mxu0 %v2289
    %v2640 = vpop.f32.mrb[0].mxu0
    %v2641 = vadd.f32 0.0, %v2640
    %v2642 = vpop.f32.mrb[0].mxu0
    %v2643 = vadd.f32 0.0, %v2642
    %v2644 = vpop.f32.mrb[0].mxu0
    %v2645 = vadd.f32 0.0, %v2644
    %v2646 = vpop.f32.mrb[0].mxu0
    %v2647 = vadd.f32 0.0, %v2646
    %2648 = vmatprep.mubr.bf16.mxu0 0
    %2649 = vmatmul.mubr.bf16.gmra.mrb[0].mxu0 %v2292
    %v2650 = vpop.f32.mrb[0].mxu0
    %v2651 = vadd.f32 0.0, %v2650
    %v2652 = vpop.f32.mrb[0].mxu0
    %v2653 = vadd.f32 0.0, %v2652
    %v2654 = vpop.f32.mrb[0].mxu0
    %v2655 = vadd.f32 0.0, %v2654
    %v2656 = vpop.f32.mrb[0].mxu0
    %v2657 = vadd.f32 0.0, %v2656
    %2658 = vmatprep.mubr.bf16.mxu0 0
    %2659 = vmatmul.mubr.bf16.gmra.mrb[0].mxu0 %v2295
    %v2660 = vpop.f32.mrb[0].mxu0
    %v2661 = vadd.f32 0.0, %v2660
    %v2662 = vpop.f32.mrb[0].mxu0
    %v2663 = vadd.f32 0.0, %v2662
    %v2664 = vpop.f32.mrb[0].mxu0
    %v2665 = vadd.f32 0.0, %v2664
    %v2666 = vpop.f32.mrb[0].mxu0
    %v2667 = vadd.f32 0.0, %v2666
    %2668 = vdwg.mxu0
    %v2669 = vmax.f32 %v1899, %v2332
    %v2670 = vmax.f32 %v1901, %v2334
    %v2671 = vmax.f32 %v1992, %v2425
    %v2672 = vmax.f32 %v1994, %v2427
    %v2673 = vmax.f32 %v2085, %v2518
    %v2674 = vmax.f32 %v2087, %v2520
    %v2675 = vmax.f32 %v2178, %v2611
    %v2676 = vmax.f32 %v2180, %v2613
    %v2677 = vmax.f32 %v1903, %v2336
    %v2678 = vmax.f32 %v1905, %v2338
    %v2679 = vmax.f32 %v1996, %v2429
    %v2680 = vmax.f32 %v1998, %v2431
    %v2681 = vmax.f32 %v2089, %v2522
    %v2682 = vmax.f32 %v2091, %v2524
    %v2683 = vmax.f32 %v2182, %v2615
    %v2684 = vmax.f32 %v2184, %v2617
    %v2685 = vmax.f32 %v1909, %v2342
    %v2686 = vmax.f32 %v1911, %v2344
    %v2687 = vmax.f32 %v2002, %v2435
    %v2688 = vmax.f32 %v2004, %v2437
    %v2689 = vmax.f32 %v2095, %v2528
    %v2690 = vmax.f32 %v2097, %v2530
    %v2691 = vmax.f32 %v2188, %v2621
    %v2692 = vmax.f32 %v2190, %v2623
    %v2693 = vmax.f32 %v1913, %v2346
    %v2694 = vmax.f32 %v1915, %v2348
    %v2695 = vmax.f32 %v2006, %v2439
    %v2696 = vmax.f32 %v2008, %v2441
    %v2697 = vmax.f32 %v2099, %v2532
    %v2698 = vmax.f32 %v2101, %v2534
    %v2699 = vmax.f32 %v2192, %v2625
    %v2700 = vmax.f32 %v2194, %v2627
    %v2701 = vmax.f32 %v1919, %v2352
    %v2702 = vmax.f32 %v1921, %v2354
    %v2703 = vmax.f32 %v2012, %v2445
    %v2704 = vmax.f32 %v2014, %v2447
    %v2705 = vmax.f32 %v2105, %v2538
    %v2706 = vmax.f32 %v2107, %v2540
    %v2707 = vmax.f32 %v2198, %v2631
    %v2708 = vmax.f32 %v2200, %v2633
    %v2709 = vmax.f32 %v1923, %v2356
    %v2710 = vmax.f32 %v1925, %v2358
    %v2711 = vmax.f32 %v2016, %v2449
    %v2712 = vmax.f32 %v2018, %v2451
    %v2713 = vmax.f32 %v2109, %v2542
    %v2714 = vmax.f32 %v2111, %v2544
    %v2715 = vmax.f32 %v2202, %v2635
    %v2716 = vmax.f32 %v2204, %v2637
    %v2717 = vmax.f32 %v1929, %v2362
    %v2718 = vmax.f32 %v1931, %v2364
    %v2719 = vmax.f32 %v2022, %v2455
    %v2720 = vmax.f32 %v2024, %v2457
    %v2721 = vmax.f32 %v2115, %v2548
    %v2722 = vmax.f32 %v2117, %v2550
    %v2723 = vmax.f32 %v2208, %v2641
    %v2724 = vmax.f32 %v2210, %v2643
    %v2725 = vmax.f32 %v1933, %v2366
    %v2726 = vmax.f32 %v1935, %v2368
    %v2727 = vmax.f32 %v2026, %v2459
    %v2728 = vmax.f32 %v2028, %v2461
    %v2729 = vmax.f32 %v2119, %v2552
    %v2730 = vmax.f32 %v2121, %v2554
    %v2731 = vmax.f32 %v2212, %v2645
    %v2732 = vmax.f32 %v2214, %v2647
    %v2733 = vmax.f32 %v1939, %v2372
    %v2734 = vmax.f32 %v1941, %v2374
    %v2735 = vmax.f32 %v2032, %v2465
    %v2736 = vmax.f32 %v2034, %v2467
    %v2737 = vmax.f32 %v2125, %v2558
    %v2738 = vmax.f32 %v2127, %v2560
    %v2739 = vmax.f32 %v2218, %v2651
    %v2740 = vmax.f32 %v2220, %v2653
    %v2741 = vmax.f32 %v1943, %v2376
    %v2742 = vmax.f32 %v1945, %v2378
    %v2743 = vmax.f32 %v2036, %v2469
    %v2744 = vmax.f32 %v2038, %v2471
    %v2745 = vmax.f32 %v2129, %v2562
    %v2746 = vmax.f32 %v2131, %v2564
    %v2747 = vmax.f32 %v2222, %v2655
    %v2748 = vmax.f32 %v2224, %v2657
    %v2749 = vmax.f32 %v1949, %v2382
    %v2750 = vmax.f32 %v1951, %v2384
    %v2751 = vmax.f32 %v2042, %v2475
    %v2752 = vmax.f32 %v2044, %v2477
    %v2753 = vmax.f32 %v2135, %v2568
    %v2754 = vmax.f32 %v2137, %v2570
    %v2755 = vmax.f32 %v2228, %v2661
    %v2756 = vmax.f32 %v2230, %v2663
    %v2757 = vmax.f32 %v1953, %v2386
    %v2758 = vmax.f32 %v1955, %v2388
    %v2759 = vmax.f32 %v2046, %v2479
    %v2760 = vmax.f32 %v2048, %v2481
    %v2761 = vmax.f32 %v2139, %v2572
    %v2762 = vmax.f32 %v2141, %v2574
    %v2763 = vmax.f32 %v2232, %v2665
    %v2764 = vmax.f32 %v2234, %v2667
    %v2765 = vmax.f32 %v2669, %v2673
    %v2766 = vmax.f32 %v2670, %v2674
    %v2767 = vmax.f32 %v2671, %v2675
    %v2768 = vmax.f32 %v2672, %v2676
    %v2769 = vmax.f32 %v2677, %v2681
    %v2770 = vmax.f32 %v2678, %v2682
    %v2771 = vmax.f32 %v2679, %v2683
    %v2772 = vmax.f32 %v2680, %v2684
    %v2773 = vmax.f32 %v2685, %v2689
    %v2774 = vmax.f32 %v2686, %v2690
    %v2775 = vmax.f32 %v2687, %v2691
    %v2776 = vmax.f32 %v2688, %v2692
    %v2777 = vmax.f32 %v2693, %v2697
    %v2778 = vmax.f32 %v2694, %v2698
    %v2779 = vmax.f32 %v2695, %v2699
    %v2780 = vmax.f32 %v2696, %v2700
    %v2781 = vmax.f32 %v2701, %v2705
    %v2782 = vmax.f32 %v2702, %v2706
    %v2783 = vmax.f32 %v2703, %v2707
    %v2784 = vmax.f32 %v2704, %v2708
    %v2785 = vmax.f32 %v2709, %v2713
    %v2786 = vmax.f32 %v2710, %v2714
    %v2787 = vmax.f32 %v2711, %v2715
    %v2788 = vmax.f32 %v2712, %v2716
    %v2789 = vmax.f32 %v2717, %v2721
    %v2790 = vmax.f32 %v2718, %v2722
    %v2791 = vmax.f32 %v2719, %v2723
    %v2792 = vmax.f32 %v2720, %v2724
    %v2793 = vmax.f32 %v2725, %v2729
    %v2794 = vmax.f32 %v2726, %v2730
    %v2795 = vmax.f32 %v2727, %v2731
    %v2796 = vmax.f32 %v2728, %v2732
    %v2797 = vmax.f32 %v2733, %v2737
    %v2798 = vmax.f32 %v2734, %v2738
    %v2799 = vmax.f32 %v2735, %v2739
    %v2800 = vmax.f32 %v2736, %v2740
    %v2801 = vmax.f32 %v2741, %v2745
    %v2802 = vmax.f32 %v2742, %v2746
    %v2803 = vmax.f32 %v2743, %v2747
    %v2804 = vmax.f32 %v2744, %v2748
    %v2805 = vmax.f32 %v2749, %v2753
    %v2806 = vmax.f32 %v2750, %v2754
    %v2807 = vmax.f32 %v2751, %v2755
    %v2808 = vmax.f32 %v2752, %v2756
    %v2809 = vmax.f32 %v2757, %v2761
    %v2810 = vmax.f32 %v2758, %v2762
    %v2811 = vmax.f32 %v2759, %v2763
    %v2812 = vmax.f32 %v2760, %v2764
    %v2813 = vmul.f32 %v2765, %v1357
    %v2814 = vmul.f32 %v2766, %v1361
    %v2815 = vmul.f32 %v2767, %v1365
    %v2816 = vmul.f32 %v2768, %v1369
    %v2817 = vmul.f32 %v2769, %v1357
    %v2818 = vmul.f32 %v2770, %v1361
    %v2819 = vmul.f32 %v2771, %v1365
    %v2820 = vmul.f32 %v2772, %v1369
    %v2821 = vmul.f32 %v2773, %v1357
    %v2822 = vmul.f32 %v2774, %v1361
    %v2823 = vmul.f32 %v2775, %v1365
    %v2824 = vmul.f32 %v2776, %v1369
    %v2825 = vmul.f32 %v2777, %v1357
    %v2826 = vmul.f32 %v2778, %v1361
    %v2827 = vmul.f32 %v2779, %v1365
    %v2828 = vmul.f32 %v2780, %v1369
    %v2829 = vmul.f32 %v2781, %v1357
    %v2830 = vmul.f32 %v2782, %v1361
    %v2831 = vmul.f32 %v2783, %v1365
    %v2832 = vmul.f32 %v2784, %v1369
    %v2833 = vmul.f32 %v2785, %v1357
    %v2834 = vmul.f32 %v2786, %v1361
    %v2835 = vmul.f32 %v2787, %v1365
    %v2836 = vmul.f32 %v2788, %v1369
    %v2837 = vmul.f32 %v2789, %v1357
    %v2838 = vmul.f32 %v2790, %v1361
    %v2839 = vmul.f32 %v2791, %v1365
    %v2840 = vmul.f32 %v2792, %v1369
    %v2841 = vmul.f32 %v2793, %v1357
    %v2842 = vmul.f32 %v2794, %v1361
    %v2843 = vmul.f32 %v2795, %v1365
    %v2844 = vmul.f32 %v2796, %v1369
    %v2845 = vmul.f32 %v2797, %v1357
    %v2846 = vmul.f32 %v2798, %v1361
    %v2847 = vmul.f32 %v2799, %v1365
    %v2848 = vmul.f32 %v2800, %v1369
    %v2849 = vmul.f32 %v2801, %v1357
    %v2850 = vmul.f32 %v2802, %v1361
    %v2851 = vmul.f32 %v2803, %v1365
    %v2852 = vmul.f32 %v2804, %v1369
    %v2853 = vmul.f32 %v2805, %v1357
    %v2854 = vmul.f32 %v2806, %v1361
    %v2855 = vmul.f32 %v2807, %v1365
    %v2856 = vmul.f32 %v2808, %v1369
    %v2857 = vmul.f32 %v2809, %v1357
    %v2858 = vmul.f32 %v2810, %v1361
    %v2859 = vmul.f32 %v2811, %v1365
    %v2860 = vmul.f32 %v2812, %v1369
    %v2861 = vadd.f32 %v2813, %v1426
    %v2862 = vadd.f32 %v2814, %v1430
    %v2863 = vadd.f32 %v2815, %v1434
    %v2864 = vadd.f32 %v2816, %v1438
    %v2865 = vadd.f32 %v2817, %v1426
    %v2866 = vadd.f32 %v2818, %v1430
    %v2867 = vadd.f32 %v2819, %v1434
    %v2868 = vadd.f32 %v2820, %v1438
    %v2869 = vadd.f32 %v2821, %v1426
    %v2870 = vadd.f32 %v2822, %v1430
    %v2871 = vadd.f32 %v2823, %v1434
    %v2872 = vadd.f32 %v2824, %v1438
    %v2873 = vadd.f32 %v2825, %v1426
    %v2874 = vadd.f32 %v2826, %v1430
    %v2875 = vadd.f32 %v2827, %v1434
    %v2876 = vadd.f32 %v2828, %v1438
    %v2877 = vadd.f32 %v2829, %v1426
    %v2878 = vadd.f32 %v2830, %v1430
    %v2879 = vadd.f32 %v2831, %v1434
    %v2880 = vadd.f32 %v2832, %v1438
    %v2881 = vadd.f32 %v2833, %v1426
    %v2882 = vadd.f32 %v2834, %v1430
    %v2883 = vadd.f32 %v2835, %v1434
    %v2884 = vadd.f32 %v2836, %v1438
    %v2885 = vadd.f32 %v2837, %v1426
    %v2886 = vadd.f32 %v2838, %v1430
    %v2887 = vadd.f32 %v2839, %v1434
    %v2888 = vadd.f32 %v2840, %v1438
    %v2889 = vadd.f32 %v2841, %v1426
    %v2890 = vadd.f32 %v2842, %v1430
    %v2891 = vadd.f32 %v2843, %v1434
    %v2892 = vadd.f32 %v2844, %v1438
    %v2893 = vadd.f32 %v2845, %v1426
    %v2894 = vadd.f32 %v2846, %v1430
    %v2895 = vadd.f32 %v2847, %v1434
    %v2896 = vadd.f32 %v2848, %v1438
    %v2897 = vadd.f32 %v2849, %v1426
    %v2898 = vadd.f32 %v2850, %v1430
    %v2899 = vadd.f32 %v2851, %v1434
    %v2900 = vadd.f32 %v2852, %v1438
    %v2901 = vadd.f32 %v2853, %v1426
    %v2902 = vadd.f32 %v2854, %v1430
    %v2903 = vadd.f32 %v2855, %v1434
    %v2904 = vadd.f32 %v2856, %v1438
    %v2905 = vadd.f32 %v2857, %v1426
    %v2906 = vadd.f32 %v2858, %v1430
    %v2907 = vadd.f32 %v2859, %v1434
    %v2908 = vadd.f32 %v2860, %v1438
    %v2909 = vsub.f32 0.0, %v2861
    %v2910 = vsub.f32 0.0, %v2862
    %v2911 = vsub.f32 0.0, %v2863
    %v2912 = vsub.f32 0.0, %v2864
    %v2913 = vsub.f32 0.0, %v2865
    %v2914 = vsub.f32 0.0, %v2866
    %v2915 = vsub.f32 0.0, %v2867
    %v2916 = vsub.f32 0.0, %v2868
    %v2917 = vsub.f32 0.0, %v2869
    %v2918 = vsub.f32 0.0, %v2870
    %v2919 = vsub.f32 0.0, %v2871
    %v2920 = vsub.f32 0.0, %v2872
    %v2921 = vsub.f32 0.0, %v2873
    %v2922 = vsub.f32 0.0, %v2874
    %v2923 = vsub.f32 0.0, %v2875
    %v2924 = vsub.f32 0.0, %v2876
    %v2925 = vsub.f32 0.0, %v2877
    %v2926 = vsub.f32 0.0, %v2878
    %v2927 = vsub.f32 0.0, %v2879
    %v2928 = vsub.f32 0.0, %v2880
    %v2929 = vsub.f32 0.0, %v2881
    %v2930 = vsub.f32 0.0, %v2882
    %v2931 = vsub.f32 0.0, %v2883
    %v2932 = vsub.f32 0.0, %v2884
    %v2933 = vsub.f32 0.0, %v2885
    %v2934 = vsub.f32 0.0, %v2886
    %v2935 = vsub.f32 0.0, %v2887
    %v2936 = vsub.f32 0.0, %v2888
    %v2937 = vsub.f32 0.0, %v2889
    %v2938 = vsub.f32 0.0, %v2890
    %v2939 = vsub.f32 0.0, %v2891
    %v2940 = vsub.f32 0.0, %v2892
    %v2941 = vsub.f32 0.0, %v2893
    %v2942 = vsub.f32 0.0, %v2894
    %v2943 = vsub.f32 0.0, %v2895
    %v2944 = vsub.f32 0.0, %v2896
    %v2945 = vsub.f32 0.0, %v2897
    %v2946 = vsub.f32 0.0, %v2898
    %v2947 = vsub.f32 0.0, %v2899
    %v2948 = vsub.f32 0.0, %v2900
    %v2949 = vsub.f32 0.0, %v2901
    %v2950 = vsub.f32 0.0, %v2902
    %v2951 = vsub.f32 0.0, %v2903
    %v2952 = vsub.f32 0.0, %v2904
    %v2953 = vsub.f32 0.0, %v2905
    %v2954 = vsub.f32 0.0, %v2906
    %v2955 = vsub.f32 0.0, %v2907
    %v2956 = vsub.f32 0.0, %v2908
    %v2957 = vmul.f32 %v2909, 1.442695
    %v2958 = vpow.pop %v2957
    %v2959 = vmul.f32 %v2910, 1.442695
    %v2960 = vpow.pop %v2959
    %v2961 = vmul.f32 %v2911, 1.442695
    %v2962 = vpow.pop %v2961
    %v2963 = vmul.f32 %v2912, 1.442695
    %v2964 = vpow.pop %v2963
    %v2965 = vmul.f32 %v2913, 1.442695
    %v2966 = vpow.pop %v2965
    %v2967 = vmul.f32 %v2914, 1.442695
    %v2968 = vpow.pop %v2967
    %v2969 = vmul.f32 %v2915, 1.442695
    %v2970 = vpow.pop %v2969
    %v2971 = vmul.f32 %v2916, 1.442695
    %v2972 = vpow.pop %v2971
    %v2973 = vmul.f32 %v2917, 1.442695
    %v2974 = vpow.pop %v2973
    %v2975 = vmul.f32 %v2918, 1.442695
    %v2976 = vpow.pop %v2975
    %v2977 = vmul.f32 %v2919, 1.442695
    %v2978 = vpow.pop %v2977
    %v2979 = vmul.f32 %v2920, 1.442695
    %v2980 = vpow.pop %v2979
    %v2981 = vmul.f32 %v2921, 1.442695
    %v2982 = vpow.pop %v2981
    %v2983 = vmul.f32 %v2922, 1.442695
    %v2984 = vpow.pop %v2983
    %v2985 = vmul.f32 %v2923, 1.442695
    %v2986 = vpow.pop %v2985
    %v2987 = vmul.f32 %v2924, 1.442695
    %v2988 = vpow.pop %v2987
    %v2989 = vmul.f32 %v2925, 1.442695
    %v2990 = vpow.pop %v2989
    %v2991 = vmul.f32 %v2926, 1.442695
    %v2992 = vpow.pop %v2991
    %v2993 = vmul.f32 %v2927, 1.442695
    %v2994 = vpow.pop %v2993
    %v2995 = vmul.f32 %v2928, 1.442695
    %v2996 = vpow.pop %v2995
    %v2997 = vmul.f32 %v2929, 1.442695
    %v2998 = vpow.pop %v2997
    %v2999 = vmul.f32 %v2930, 1.442695
    %v3000 = vpow.pop %v2999
    %v3001 = vmul.f32 %v2931, 1.442695
    %v3002 = vpow.pop %v3001
    %v3003 = vmul.f32 %v2932, 1.442695
    %v3004 = vpow.pop %v3003
    %v3005 = vmul.f32 %v2933, 1.442695
    %v3006 = vpow.pop %v3005
    %v3007 = vmul.f32 %v2934, 1.442695
    %v3008 = vpow.pop %v3007
    %v3009 = vmul.f32 %v2935, 1.442695
    %v3010 = vpow.pop %v3009
    %v3011 = vmul.f32 %v2936, 1.442695
    %v3012 = vpow.pop %v3011
    %v3013 = vmul.f32 %v2937, 1.442695
    %v3014 = vpow.pop %v3013
    %v3015 = vmul.f32 %v2938, 1.442695
    %v3016 = vpow.pop %v3015
    %v3017 = vmul.f32 %v2939, 1.442695
    %v3018 = vpow.pop %v3017
    %v3019 = vmul.f32 %v2940, 1.442695
    %v3020 = vpow.pop %v3019
    %v3021 = vmul.f32 %v2941, 1.442695
    %v3022 = vpow.pop %v3021
    %v3023 = vmul.f32 %v2942, 1.442695
    %v3024 = vpow.pop %v3023
    %v3025 = vmul.f32 %v2943, 1.442695
    %v3026 = vpow.pop %v3025
    %v3027 = vmul.f32 %v2944, 1.442695
    %v3028 = vpow.pop %v3027
    %v3029 = vmul.f32 %v2945, 1.442695
    %v3030 = vpow.pop %v3029
    %v3031 = vmul.f32 %v2946, 1.442695
    %v3032 = vpow.pop %v3031
    %v3033 = vmul.f32 %v2947, 1.442695
    %v3034 = vpow.pop %v3033
    %v3035 = vmul.f32 %v2948, 1.442695
    %v3036 = vpow.pop %v3035
    %v3037 = vmul.f32 %v2949, 1.442695
    %v3038 = vpow.pop %v3037
    %v3039 = vmul.f32 %v2950, 1.442695
    %v3040 = vpow.pop %v3039
    %v3041 = vmul.f32 %v2951, 1.442695
    %v3042 = vpow.pop %v3041
    %v3043 = vmul.f32 %v2952, 1.442695
    %v3044 = vpow.pop %v3043
    %v3045 = vmul.f32 %v2953, 1.442695
    %v3046 = vpow.pop %v3045
    %v3047 = vmul.f32 %v2954, 1.442695
    %v3048 = vpow.pop %v3047
    %v3049 = vmul.f32 %v2955, 1.442695
    %v3050 = vpow.pop %v3049
    %v3051 = vmul.f32 %v2956, 1.442695
    %v3052 = vpow.pop %v3051
    %v3053 = vadd.f32 %v2958, 1.0
    %v3054 = vadd.f32 %v2960, 1.0
    %v3055 = vadd.f32 %v2962, 1.0
    %v3056 = vadd.f32 %v2964, 1.0
    %v3057 = vadd.f32 %v2966, 1.0
    %v3058 = vadd.f32 %v2968, 1.0
    %v3059 = vadd.f32 %v2970, 1.0
    %v3060 = vadd.f32 %v2972, 1.0
    %v3061 = vadd.f32 %v2974, 1.0
    %v3062 = vadd.f32 %v2976, 1.0
    %v3063 = vadd.f32 %v2978, 1.0
    %v3064 = vadd.f32 %v2980, 1.0
    %v3065 = vadd.f32 %v2982, 1.0
    %v3066 = vadd.f32 %v2984, 1.0
    %v3067 = vadd.f32 %v2986, 1.0
    %v3068 = vadd.f32 %v2988, 1.0
    %v3069 = vadd.f32 %v2990, 1.0
    %v3070 = vadd.f32 %v2992, 1.0
    %v3071 = vadd.f32 %v2994, 1.0
    %v3072 = vadd.f32 %v2996, 1.0
    %v3073 = vadd.f32 %v2998, 1.0
    %v3074 = vadd.f32 %v3000, 1.0
    %v3075 = vadd.f32 %v3002, 1.0
    %v3076 = vadd.f32 %v3004, 1.0
    %v3077 = vadd.f32 %v3006, 1.0
    %v3078 = vadd.f32 %v3008, 1.0
    %v3079 = vadd.f32 %v3010, 1.0
    %v3080 = vadd.f32 %v3012, 1.0
    %v3081 = vadd.f32 %v3014, 1.0
    %v3082 = vadd.f32 %v3016, 1.0
    %v3083 = vadd.f32 %v3018, 1.0
    %v3084 = vadd.f32 %v3020, 1.0
    %v3085 = vadd.f32 %v3022, 1.0
    %v3086 = vadd.f32 %v3024, 1.0
    %v3087 = vadd.f32 %v3026, 1.0
    %v3088 = vadd.f32 %v3028, 1.0
    %v3089 = vadd.f32 %v3030, 1.0
    %v3090 = vadd.f32 %v3032, 1.0
    %v3091 = vadd.f32 %v3034, 1.0
    %v3092 = vadd.f32 %v3036, 1.0
    %v3093 = vadd.f32 %v3038, 1.0
    %v3094 = vadd.f32 %v3040, 1.0
    %v3095 = vadd.f32 %v3042, 1.0
    %v3096 = vadd.f32 %v3044, 1.0
    %v3097 = vadd.f32 %v3046, 1.0
    %v3098 = vadd.f32 %v3048, 1.0
    %v3099 = vadd.f32 %v3050, 1.0
    %v3100 = vadd.f32 %v3052, 1.0
    %v3101 = vrcp.pop %v3053
    %v3102 = vrcp.pop %v3054
    %v3103 = vrcp.pop %v3055
    %v3104 = vrcp.pop %v3056
    %v3105 = vrcp.pop %v3057
    %v3106 = vrcp.pop %v3058
    %v3107 = vrcp.pop %v3059
    %v3108 = vrcp.pop %v3060
    %v3109 = vrcp.pop %v3061
    %v3110 = vrcp.pop %v3062
    %v3111 = vrcp.pop %v3063
    %v3112 = vrcp.pop %v3064
    %v3113 = vrcp.pop %v3065
    %v3114 = vrcp.pop %v3066
    %v3115 = vrcp.pop %v3067
    %v3116 = vrcp.pop %v3068
    %v3117 = vrcp.pop %v3069
    %v3118 = vrcp.pop %v3070
    %v3119 = vrcp.pop %v3071
    %v3120 = vrcp.pop %v3072
    %v3121 = vrcp.pop %v3073
    %v3122 = vrcp.pop %v3074
    %v3123 = vrcp.pop %v3075
    %v3124 = vrcp.pop %v3076
    %v3125 = vrcp.pop %v3077
    %v3126 = vrcp.pop %v3078
    %v3127 = vrcp.pop %v3079
    %v3128 = vrcp.pop %v3080
    %v3129 = vrcp.pop %v3081
    %v3130 = vrcp.pop %v3082
    %v3131 = vrcp.pop %v3083
    %v3132 = vrcp.pop %v3084
    %v3133 = vrcp.pop %v3085
    %v3134 = vrcp.pop %v3086
    %v3135 = vrcp.pop %v3087
    %v3136 = vrcp.pop %v3088
    %v3137 = vrcp.pop %v3089
    %v3138 = vrcp.pop %v3090
    %v3139 = vrcp.pop %v3091
    %v3140 = vrcp.pop %v3092
    %v3141 = vrcp.pop %v3093
    %v3142 = vrcp.pop %v3094
    %v3143 = vrcp.pop %v3095
    %v3144 = vrcp.pop %v3096
    %v3145 = vrcp.pop %v3097
    %v3146 = vrcp.pop %v3098
    %v3147 = vrcp.pop %v3099
    %v3148 = vrcp.pop %v3100
    %v3149 = vmul.f32 %v2861, %v3101
    %v3150 = vmul.f32 %v2862, %v3102
    %v3151 = vmul.f32 %v2863, %v3103
    %v3152 = vmul.f32 %v2864, %v3104
    %v3153 = vmul.f32 %v2865, %v3105
    %v3154 = vmul.f32 %v2866, %v3106
    %v3155 = vmul.f32 %v2867, %v3107
    %v3156 = vmul.f32 %v2868, %v3108
    %v3157 = vmul.f32 %v2869, %v3109
    %v3158 = vmul.f32 %v2870, %v3110
    %v3159 = vmul.f32 %v2871, %v3111
    %v3160 = vmul.f32 %v2872, %v3112
    %v3161 = vmul.f32 %v2873, %v3113
    %v3162 = vmul.f32 %v2874, %v3114
    %v3163 = vmul.f32 %v2875, %v3115
    %v3164 = vmul.f32 %v2876, %v3116
    %v3165 = vmul.f32 %v2877, %v3117
    %v3166 = vmul.f32 %v2878, %v3118
    %v3167 = vmul.f32 %v2879, %v3119
    %v3168 = vmul.f32 %v2880, %v3120
    %v3169 = vmul.f32 %v2881, %v3121
    %v3170 = vmul.f32 %v2882, %v3122
    %v3171 = vmul.f32 %v2883, %v3123
    %v3172 = vmul.f32 %v2884, %v3124
    %v3173 = vmul.f32 %v2885, %v3125
    %v3174 = vmul.f32 %v2886, %v3126
    %v3175 = vmul.f32 %v2887, %v3127
    %v3176 = vmul.f32 %v2888, %v3128
    %v3177 = vmul.f32 %v2889, %v3129
    %v3178 = vmul.f32 %v2890, %v3130
    %v3179 = vmul.f32 %v2891, %v3131
    %v3180 = vmul.f32 %v2892, %v3132
    %v3181 = vmul.f32 %v2893, %v3133
    %v3182 = vmul.f32 %v2894, %v3134
    %v3183 = vmul.f32 %v2895, %v3135
    %v3184 = vmul.f32 %v2896, %v3136
    %v3185 = vmul.f32 %v2897, %v3137
    %v3186 = vmul.f32 %v2898, %v3138
    %v3187 = vmul.f32 %v2899, %v3139
    %v3188 = vmul.f32 %v2900, %v3140
    %v3189 = vmul.f32 %v2901, %v3141
    %v3190 = vmul.f32 %v2902, %v3142
    %v3191 = vmul.f32 %v2903, %v3143
    %v3192 = vmul.f32 %v2904, %v3144
    %v3193 = vmul.f32 %v2905, %v3145
    %v3194 = vmul.f32 %v2906, %v3146
    %v3195 = vmul.f32 %v2907, %v3147
    %v3196 = vmul.f32 %v2908, %v3148
    %v3197 = vpack.c.bf16 %v3153, %v3149
    %v3198 = vpack.c.bf16 %v3154, %v3150
    %v3199 = vpack.c.bf16 %v3155, %v3151
    %v3200 = vpack.c.bf16 %v3156, %v3152
    %v3201 = vpack.c.bf16 %v3161, %v3157
    %v3202 = vpack.c.bf16 %v3162, %v3158
    %v3203 = vpack.c.bf16 %v3163, %v3159
    %v3204 = vpack.c.bf16 %v3164, %v3160
    %v3205 = vpack.c.bf16 %v3169, %v3165
    %v3206 = vpack.c.bf16 %v3170, %v3166
    %v3207 = vpack.c.bf16 %v3171, %v3167
    %v3208 = vpack.c.bf16 %v3172, %v3168
    %v3209 = vpack.c.bf16 %v3177, %v3173
    %v3210 = vpack.c.bf16 %v3178, %v3174
    %v3211 = vpack.c.bf16 %v3179, %v3175
    %v3212 = vpack.c.bf16 %v3180, %v3176
    %v3213 = vpack.c.bf16 %v3185, %v3181
    %v3214 = vpack.c.bf16 %v3186, %v3182
    %v3215 = vpack.c.bf16 %v3187, %v3183
    %v3216 = vpack.c.bf16 %v3188, %v3184
    %v3217 = vpack.c.bf16 %v3193, %v3189
    %v3218 = vpack.c.bf16 %v3194, %v3190
    %v3219 = vpack.c.bf16 %v3195, %v3191
    %v3220 = vpack.c.bf16 %v3196, %v3192
    %v3221 = vld [vmem:[%s2] sm:$0xff]
    %v3222 = vld [vmem:[%s2 + $0x8] sm:$0xff]
    %v3223 = vld [vmem:[%s2 + $0x10] sm:$0xff]
    %v3224 = vld [vmem:[%s2 + $0x18] sm:$0xff]
    %v3225 = vld [vmem:[%s2 + $0x20] sm:$0xff]
    %v3226 = vld [vmem:[%s2 + $0x28] sm:$0xff]
    %v3227 = vld [vmem:[%s2 + $0x30] sm:$0xff]
    %v3228 = vld [vmem:[%s2 + $0x38] sm:$0xff]
    %v3229 = vld [vmem:[%s2 + $0x40] sm:$0xff]
    %v3230 = vld [vmem:[%s2 + $0x48] sm:$0xff]
    %v3231 = vld [vmem:[%s2 + $0x50] sm:$0xff]
    %v3232 = vld [vmem:[%s2 + $0x58] sm:$0xff]
    %v3233 = vld [vmem:[%s2 + $0x60] sm:$0xff]
    %v3234 = vld [vmem:[%s2 + $0x68] sm:$0xff]
    %v3235 = vld [vmem:[%s2 + $0x70] sm:$0xff]
    %v3236 = vld [vmem:[%s2 + $0x78] sm:$0xff]
    %v3237 = vld [vmem:[%s2 + $0x80] sm:$0xff]
    %v3238 = vld [vmem:[%s2 + $0x88] sm:$0xff]
    %v3239 = vld [vmem:[%s2 + $0x90] sm:$0xff]
    %v3240 = vld [vmem:[%s2 + $0x98] sm:$0xff]
    %v3241 = vld [vmem:[%s2 + $0xa0] sm:$0xff]
    %v3242 = vld [vmem:[%s2 + $0xa8] sm:$0xff]
    %v3243 = vld [vmem:[%s2 + $0xb0] sm:$0xff]
    %v3244 = vld [vmem:[%s2 + $0xb8] sm:$0xff]
    %v3245 = vld [vmem:[%s2 + $0xc0] sm:$0xff]
    %v3246 = vld [vmem:[%s2 + $0xc8] sm:$0xff]
    %v3247 = vld [vmem:[%s2 + $0xd0] sm:$0xff]
    %v3248 = vld [vmem:[%s2 + $0xd8] sm:$0xff]
    %v3249 = vld [vmem:[%s2 + $0xe0] sm:$0xff]
    %v3250 = vld [vmem:[%s2 + $0xe8] sm:$0xff]
    %v3251 = vld [vmem:[%s2 + $0xf0] sm:$0xff]
    %v3252 = vld [vmem:[%s2 + $0xf8] sm:$0xff]
    %v3253 = vld [vmem:[%s2 + $0x100] sm:$0xff]
    %v3254 = vld [vmem:[%s2 + $0x108] sm:$0xff]
    %v3255 = vld [vmem:[%s2 + $0x110] sm:$0xff]
    %v3256 = vld [vmem:[%s2 + $0x118] sm:$0xff]
    %v3257 = vld [vmem:[%s2 + $0x120] sm:$0xff]
    %v3258 = vld [vmem:[%s2 + $0x128] sm:$0xff]
    %v3259 = vld [vmem:[%s2 + $0x130] sm:$0xff]
    %v3260 = vld [vmem:[%s2 + $0x138] sm:$0xff]
    %v3261 = vld [vmem:[%s2 + $0x140] sm:$0xff]
    %v3262 = vld [vmem:[%s2 + $0x148] sm:$0xff]
    %v3263 = vld [vmem:[%s2 + $0x150] sm:$0xff]
    %v3264 = vld [vmem:[%s2 + $0x158] sm:$0xff]
    %v3265 = vld [vmem:[%s2 + $0x160] sm:$0xff]
    %v3266 = vld [vmem:[%s2 + $0x168] sm:$0xff]
    %v3267 = vld [vmem:[%s2 + $0x170] sm:$0xff]
    %v3268 = vld [vmem:[%s2 + $0x178] sm:$0xff]
    %v3269 = vld [vmem:[%s2 + $0x180] sm:$0xff]
    %v3270 = vld [vmem:[%s2 + $0x188] sm:$0xff]
    %v3271 = vld [vmem:[%s2 + $0x190] sm:$0xff]
    %v3272 = vld [vmem:[%s2 + $0x198] sm:$0xff]
    %v3273 = vld [vmem:[%s2 + $0x1a0] sm:$0xff]
    %v3274 = vld [vmem:[%s2 + $0x1a8] sm:$0xff]
    %v3275 = vld [vmem:[%s2 + $0x1b0] sm:$0xff]
    %v3276 = vld [vmem:[%s2 + $0x1b8] sm:$0xff]
    %v3277 = vld [vmem:[%s2 + $0x1c0] sm:$0xff]
    %v3278 = vld [vmem:[%s2 + $0x1c8] sm:$0xff]
    %v3279 = vld [vmem:[%s2 + $0x1d0] sm:$0xff]
    %v3280 = vld [vmem:[%s2 + $0x1d8] sm:$0xff]
    %v3281 = vld [vmem:[%s2 + $0x1e0] sm:$0xff]
    %v3282 = vld [vmem:[%s2 + $0x1e8] sm:$0xff]
    %v3283 = vld [vmem:[%s2 + $0x1f0] sm:$0xff]
    %v3284 = vld [vmem:[%s2 + $0x1f8] sm:$0xff]
    %v3285 = vld [vmem:[%s2 + $0x200] sm:$0xff]
    %v3286 = vld [vmem:[%s2 + $0x208] sm:$0xff]
    %v3287 = vld [vmem:[%s2 + $0x210] sm:$0xff]
    %v3288 = vld [vmem:[%s2 + $0x218] sm:$0xff]
    %v3289 = vld [vmem:[%s2 + $0x220] sm:$0xff]
    %v3290 = vld [vmem:[%s2 + $0x228] sm:$0xff]
    %v3291 = vld [vmem:[%s2 + $0x230] sm:$0xff]
    %v3292 = vld [vmem:[%s2 + $0x238] sm:$0xff]
    %v3293 = vld [vmem:[%s2 + $0x240] sm:$0xff]
    %v3294 = vld [vmem:[%s2 + $0x248] sm:$0xff]
    %v3295 = vld [vmem:[%s2 + $0x250] sm:$0xff]
    %v3296 = vld [vmem:[%s2 + $0x258] sm:$0xff]
    %v3297 = vld [vmem:[%s2 + $0x260] sm:$0xff]
    %v3298 = vld [vmem:[%s2 + $0x268] sm:$0xff]
    %v3299 = vld [vmem:[%s2 + $0x270] sm:$0xff]
    %v3300 = vld [vmem:[%s2 + $0x278] sm:$0xff]
    %v3301 = vld [vmem:[%s2 + $0x280] sm:$0xff]
    %v3302 = vld [vmem:[%s2 + $0x288] sm:$0xff]
    %v3303 = vld [vmem:[%s2 + $0x290] sm:$0xff]
    %v3304 = vld [vmem:[%s2 + $0x298] sm:$0xff]
    %v3305 = vld [vmem:[%s2 + $0x2a0] sm:$0xff]
    %v3306 = vld [vmem:[%s2 + $0x2a8] sm:$0xff]
    %v3307 = vld [vmem:[%s2 + $0x2b0] sm:$0xff]
    %v3308 = vld [vmem:[%s2 + $0x2b8] sm:$0xff]
    %v3309 = vld [vmem:[%s2 + $0x2c0] sm:$0xff]
    %v3310 = vld [vmem:[%s2 + $0x2c8] sm:$0xff]
    %v3311 = vld [vmem:[%s2 + $0x2d0] sm:$0xff]
    %v3312 = vld [vmem:[%s2 + $0x2d8] sm:$0xff]
    %v3313 = vld [vmem:[%s2 + $0x2e0] sm:$0xff]
    %v3314 = vld [vmem:[%s2 + $0x2e8] sm:$0xff]
    %v3315 = vld [vmem:[%s2 + $0x2f0] sm:$0xff]
    %v3316 = vld [vmem:[%s2 + $0x2f8] sm:$0xff]
    %v3317 = vld [vmem:[%s2 + $0x300] sm:$0xff]
    %v3318 = vld [vmem:[%s2 + $0x308] sm:$0xff]
    %v3319 = vld [vmem:[%s2 + $0x310] sm:$0xff]
    %v3320 = vld [vmem:[%s2 + $0x318] sm:$0xff]
    %v3321 = vld [vmem:[%s2 + $0x320] sm:$0xff]
    %v3322 = vld [vmem:[%s2 + $0x328] sm:$0xff]
    %v3323 = vld [vmem:[%s2 + $0x330] sm:$0xff]
    %v3324 = vld [vmem:[%s2 + $0x338] sm:$0xff]
    %v3325 = vld [vmem:[%s2 + $0x340] sm:$0xff]
    %v3326 = vld [vmem:[%s2 + $0x348] sm:$0xff]
    %v3327 = vld [vmem:[%s2 + $0x350] sm:$0xff]
    %v3328 = vld [vmem:[%s2 + $0x358] sm:$0xff]
    %v3329 = vld [vmem:[%s2 + $0x360] sm:$0xff]
    %v3330 = vld [vmem:[%s2 + $0x368] sm:$0xff]
    %v3331 = vld [vmem:[%s2 + $0x370] sm:$0xff]
    %v3332 = vld [vmem:[%s2 + $0x378] sm:$0xff]
    %v3333 = vld [vmem:[%s2 + $0x380] sm:$0xff]
    %v3334 = vld [vmem:[%s2 + $0x388] sm:$0xff]
    %v3335 = vld [vmem:[%s2 + $0x390] sm:$0xff]
    %v3336 = vld [vmem:[%s2 + $0x398] sm:$0xff]
    %v3337 = vld [vmem:[%s2 + $0x3a0] sm:$0xff]
    %v3338 = vld [vmem:[%s2 + $0x3a8] sm:$0xff]
    %v3339 = vld [vmem:[%s2 + $0x3b0] sm:$0xff]
    %v3340 = vld [vmem:[%s2 + $0x3b8] sm:$0xff]
    %v3341 = vld [vmem:[%s2 + $0x3c0] sm:$0xff]
    %v3342 = vld [vmem:[%s2 + $0x3c8] sm:$0xff]
    %v3343 = vld [vmem:[%s2 + $0x3d0] sm:$0xff]
    %v3344 = vld [vmem:[%s2 + $0x3d8] sm:$0xff]
    %v3345 = vld [vmem:[%s2 + $0x3e0] sm:$0xff]
    %v3346 = vld [vmem:[%s2 + $0x3e8] sm:$0xff]
    %v3347 = vld [vmem:[%s2 + $0x3f0] sm:$0xff]
    %v3348 = vld [vmem:[%s2 + $0x3f8] sm:$0xff]
    %v3349 = vld [vmem:[%s2 + $0x400] sm:$0xff]
    %v3350 = vld [vmem:[%s2 + $0x408] sm:$0xff]
    %v3351 = vld [vmem:[%s2 + $0x410] sm:$0xff]
    %v3352 = vld [vmem:[%s2 + $0x418] sm:$0xff]
    %v3353 = vld [vmem:[%s2 + $0x420] sm:$0xff]
    %v3354 = vld [vmem:[%s2 + $0x428] sm:$0xff]
    %v3355 = vld [vmem:[%s2 + $0x430] sm:$0xff]
    %v3356 = vld [vmem:[%s2 + $0x438] sm:$0xff]
    %v3357 = vld [vmem:[%s2 + $0x440] sm:$0xff]
    %v3358 = vld [vmem:[%s2 + $0x448] sm:$0xff]
    %v3359 = vld [vmem:[%s2 + $0x450] sm:$0xff]
    %v3360 = vld [vmem:[%s2 + $0x458] sm:$0xff]
    %v3361 = vld [vmem:[%s2 + $0x460] sm:$0xff]
    %v3362 = vld [vmem:[%s2 + $0x468] sm:$0xff]
    %v3363 = vld [vmem:[%s2 + $0x470] sm:$0xff]
    %v3364 = vld [vmem:[%s2 + $0x478] sm:$0xff]
    %v3365 = vld [vmem:[%s2 + $0x480] sm:$0xff]
    %v3366 = vld [vmem:[%s2 + $0x488] sm:$0xff]
    %v3367 = vld [vmem:[%s2 + $0x490] sm:$0xff]
    %v3368 = vld [vmem:[%s2 + $0x498] sm:$0xff]
    %v3369 = vld [vmem:[%s2 + $0x4a0] sm:$0xff]
    %v3370 = vld [vmem:[%s2 + $0x4a8] sm:$0xff]
    %v3371 = vld [vmem:[%s2 + $0x4b0] sm:$0xff]
    %v3372 = vld [vmem:[%s2 + $0x4b8] sm:$0xff]
    %v3373 = vld [vmem:[%s2 + $0x4c0] sm:$0xff]
    %v3374 = vld [vmem:[%s2 + $0x4c8] sm:$0xff]
    %v3375 = vld [vmem:[%s2 + $0x4d0] sm:$0xff]
    %v3376 = vld [vmem:[%s2 + $0x4d8] sm:$0xff]
    %v3377 = vld [vmem:[%s2 + $0x4e0] sm:$0xff]
    %v3378 = vld [vmem:[%s2 + $0x4e8] sm:$0xff]
    %v3379 = vld [vmem:[%s2 + $0x4f0] sm:$0xff]
    %v3380 = vld [vmem:[%s2 + $0x4f8] sm:$0xff]
    %v3381 = vld [vmem:[%s2 + $0x500] sm:$0xff]
    %v3382 = vld [vmem:[%s2 + $0x508] sm:$0xff]
    %v3383 = vld [vmem:[%s2 + $0x510] sm:$0xff]
    %v3384 = vld [vmem:[%s2 + $0x518] sm:$0xff]
    %v3385 = vld [vmem:[%s2 + $0x520] sm:$0xff]
    %v3386 = vld [vmem:[%s2 + $0x528] sm:$0xff]
    %v3387 = vld [vmem:[%s2 + $0x530] sm:$0xff]
    %v3388 = vld [vmem:[%s2 + $0x538] sm:$0xff]
    %v3389 = vld [vmem:[%s2 + $0x540] sm:$0xff]
    %v3390 = vld [vmem:[%s2 + $0x548] sm:$0xff]
    %v3391 = vld [vmem:[%s2 + $0x550] sm:$0xff]
    %v3392 = vld [vmem:[%s2 + $0x558] sm:$0xff]
    %v3393 = vld [vmem:[%s2 + $0x560] sm:$0xff]
    %v3394 = vld [vmem:[%s2 + $0x568] sm:$0xff]
    %v3395 = vld [vmem:[%s2 + $0x570] sm:$0xff]
    %v3396 = vld [vmem:[%s2 + $0x578] sm:$0xff]
    %v3397 = vld [vmem:[%s2 + $0x580] sm:$0xff]
    %v3398 = vld [vmem:[%s2 + $0x588] sm:$0xff]
    %v3399 = vld [vmem:[%s2 + $0x590] sm:$0xff]
    %v3400 = vld [vmem:[%s2 + $0x598] sm:$0xff]
    %v3401 = vld [vmem:[%s2 + $0x5a0] sm:$0xff]
    %v3402 = vld [vmem:[%s2 + $0x5a8] sm:$0xff]
    %v3403 = vld [vmem:[%s2 + $0x5b0] sm:$0xff]
    %v3404 = vld [vmem:[%s2 + $0x5b8] sm:$0xff]
    %v3405 = vld [vmem:[%s2 + $0x5c0] sm:$0xff]
    %v3406 = vld [vmem:[%s2 + $0x5c8] sm:$0xff]
    %v3407 = vld [vmem:[%s2 + $0x5d0] sm:$0xff]
    %v3408 = vld [vmem:[%s2 + $0x5d8] sm:$0xff]
    %v3409 = vld [vmem:[%s2 + $0x5e0] sm:$0xff]
    %v3410 = vld [vmem:[%s2 + $0x5e8] sm:$0xff]
    %v3411 = vld [vmem:[%s2 + $0x5f0] sm:$0xff]
    %v3412 = vld [vmem:[%s2 + $0x5f8] sm:$0xff]
    %s3413 = scalar_lea.vmem %s2, 1536
    %v3414 = vld [vmem:[%s3413] sm:$0xff]
    %v3415 = vld [vmem:[%s3413 + $0x8] sm:$0xff]
    %v3416 = vld [vmem:[%s3413 + $0x10] sm:$0xff]
    %v3417 = vld [vmem:[%s3413 + $0x18] sm:$0xff]
    %v3418 = vld [vmem:[%s3413 + $0x20] sm:$0xff]
    %v3419 = vld [vmem:[%s3413 + $0x28] sm:$0xff]
    %v3420 = vld [vmem:[%s3413 + $0x30] sm:$0xff]
    %v3421 = vld [vmem:[%s3413 + $0x38] sm:$0xff]
    %v3422 = vld [vmem:[%s3413 + $0x40] sm:$0xff]
    %v3423 = vld [vmem:[%s3413 + $0x48] sm:$0xff]
    %v3424 = vld [vmem:[%s3413 + $0x50] sm:$0xff]
    %v3425 = vld [vmem:[%s3413 + $0x58] sm:$0xff]
    %v3426 = vld [vmem:[%s3413 + $0x60] sm:$0xff]
    %v3427 = vld [vmem:[%s3413 + $0x68] sm:$0xff]
    %v3428 = vld [vmem:[%s3413 + $0x70] sm:$0xff]
    %v3429 = vld [vmem:[%s3413 + $0x78] sm:$0xff]
    %v3430 = vld [vmem:[%s3413 + $0x80] sm:$0xff]
    %v3431 = vld [vmem:[%s3413 + $0x88] sm:$0xff]
    %v3432 = vld [vmem:[%s3413 + $0x90] sm:$0xff]
    %v3433 = vld [vmem:[%s3413 + $0x98] sm:$0xff]
    %v3434 = vld [vmem:[%s3413 + $0xa0] sm:$0xff]
    %v3435 = vld [vmem:[%s3413 + $0xa8] sm:$0xff]
    %v3436 = vld [vmem:[%s3413 + $0xb0] sm:$0xff]
    %v3437 = vld [vmem:[%s3413 + $0xb8] sm:$0xff]
    %v3438 = vld [vmem:[%s3413 + $0xc0] sm:$0xff]
    %v3439 = vld [vmem:[%s3413 + $0xc8] sm:$0xff]
    %v3440 = vld [vmem:[%s3413 + $0xd0] sm:$0xff]
    %v3441 = vld [vmem:[%s3413 + $0xd8] sm:$0xff]
    %v3442 = vld [vmem:[%s3413 + $0xe0] sm:$0xff]
    %v3443 = vld [vmem:[%s3413 + $0xe8] sm:$0xff]
    %v3444 = vld [vmem:[%s3413 + $0xf0] sm:$0xff]
    %v3445 = vld [vmem:[%s3413 + $0xf8] sm:$0xff]
    %v3446 = vld [vmem:[%s3413 + $0x100] sm:$0xff]
    %v3447 = vld [vmem:[%s3413 + $0x108] sm:$0xff]
    %v3448 = vld [vmem:[%s3413 + $0x110] sm:$0xff]
    %v3449 = vld [vmem:[%s3413 + $0x118] sm:$0xff]
    %v3450 = vld [vmem:[%s3413 + $0x120] sm:$0xff]
    %v3451 = vld [vmem:[%s3413 + $0x128] sm:$0xff]
    %v3452 = vld [vmem:[%s3413 + $0x130] sm:$0xff]
    %v3453 = vld [vmem:[%s3413 + $0x138] sm:$0xff]
    %v3454 = vld [vmem:[%s3413 + $0x140] sm:$0xff]
    %v3455 = vld [vmem:[%s3413 + $0x148] sm:$0xff]
    %v3456 = vld [vmem:[%s3413 + $0x150] sm:$0xff]
    %v3457 = vld [vmem:[%s3413 + $0x158] sm:$0xff]
    %v3458 = vld [vmem:[%s3413 + $0x160] sm:$0xff]
    %v3459 = vld [vmem:[%s3413 + $0x168] sm:$0xff]
    %v3460 = vld [vmem:[%s3413 + $0x170] sm:$0xff]
    %v3461 = vld [vmem:[%s3413 + $0x178] sm:$0xff]
    %v3462 = vld [vmem:[%s3413 + $0x180] sm:$0xff]
    %v3463 = vld [vmem:[%s3413 + $0x188] sm:$0xff]
    %v3464 = vld [vmem:[%s3413 + $0x190] sm:$0xff]
    %v3465 = vld [vmem:[%s3413 + $0x198] sm:$0xff]
    %v3466 = vld [vmem:[%s3413 + $0x1a0] sm:$0xff]
    %v3467 = vld [vmem:[%s3413 + $0x1a8] sm:$0xff]
    %v3468 = vld [vmem:[%s3413 + $0x1b0] sm:$0xff]
    %v3469 = vld [vmem:[%s3413 + $0x1b8] sm:$0xff]
    %v3470 = vld [vmem:[%s3413 + $0x1c0] sm:$0xff]
    %v3471 = vld [vmem:[%s3413 + $0x1c8] sm:$0xff]
    %v3472 = vld [vmem:[%s3413 + $0x1d0] sm:$0xff]
    %v3473 = vld [vmem:[%s3413 + $0x1d8] sm:$0xff]
    %v3474 = vld [vmem:[%s3413 + $0x1e0] sm:$0xff]
    %v3475 = vld [vmem:[%s3413 + $0x1e8] sm:$0xff]
    %v3476 = vld [vmem:[%s3413 + $0x1f0] sm:$0xff]
    %v3477 = vld [vmem:[%s3413 + $0x1f8] sm:$0xff]
    %v3478 = vld [vmem:[%s3413 + $0x200] sm:$0xff]
    %v3479 = vld [vmem:[%s3413 + $0x208] sm:$0xff]
    %v3480 = vld [vmem:[%s3413 + $0x210] sm:$0xff]
    %v3481 = vld [vmem:[%s3413 + $0x218] sm:$0xff]
    %v3482 = vld [vmem:[%s3413 + $0x220] sm:$0xff]
    %v3483 = vld [vmem:[%s3413 + $0x228] sm:$0xff]
    %v3484 = vld [vmem:[%s3413 + $0x230] sm:$0xff]
    %v3485 = vld [vmem:[%s3413 + $0x238] sm:$0xff]
    %v3486 = vld [vmem:[%s3413 + $0x240] sm:$0xff]
    %v3487 = vld [vmem:[%s3413 + $0x248] sm:$0xff]
    %v3488 = vld [vmem:[%s3413 + $0x250] sm:$0xff]
    %v3489 = vld [vmem:[%s3413 + $0x258] sm:$0xff]
    %v3490 = vld [vmem:[%s3413 + $0x260] sm:$0xff]
    %v3491 = vld [vmem:[%s3413 + $0x268] sm:$0xff]
    %v3492 = vld [vmem:[%s3413 + $0x270] sm:$0xff]
    %v3493 = vld [vmem:[%s3413 + $0x278] sm:$0xff]
    %v3494 = vld [vmem:[%s3413 + $0x280] sm:$0xff]
    %v3495 = vld [vmem:[%s3413 + $0x288] sm:$0xff]
    %v3496 = vld [vmem:[%s3413 + $0x290] sm:$0xff]
    %v3497 = vld [vmem:[%s3413 + $0x298] sm:$0xff]
    %v3498 = vld [vmem:[%s3413 + $0x2a0] sm:$0xff]
    %v3499 = vld [vmem:[%s3413 + $0x2a8] sm:$0xff]
    %v3500 = vld [vmem:[%s3413 + $0x2b0] sm:$0xff]
    %v3501 = vld [vmem:[%s3413 + $0x2b8] sm:$0xff]
    %v3502 = vld [vmem:[%s3413 + $0x2c0] sm:$0xff]
    %v3503 = vld [vmem:[%s3413 + $0x2c8] sm:$0xff]
    %v3504 = vld [vmem:[%s3413 + $0x2d0] sm:$0xff]
    %v3505 = vld [vmem:[%s3413 + $0x2d8] sm:$0xff]
    %v3506 = vld [vmem:[%s3413 + $0x2e0] sm:$0xff]
    %v3507 = vld [vmem:[%s3413 + $0x2e8] sm:$0xff]
    %v3508 = vld [vmem:[%s3413 + $0x2f0] sm:$0xff]
    %v3509 = vld [vmem:[%s3413 + $0x2f8] sm:$0xff]
    %v3510 = vld [vmem:[%s3413 + $0x300] sm:$0xff]
    %v3511 = vld [vmem:[%s3413 + $0x308] sm:$0xff]
    %v3512 = vld [vmem:[%s3413 + $0x310] sm:$0xff]
    %v3513 = vld [vmem:[%s3413 + $0x318] sm:$0xff]
    %v3514 = vld [vmem:[%s3413 + $0x320] sm:$0xff]
    %v3515 = vld [vmem:[%s3413 + $0x328] sm:$0xff]
    %v3516 = vld [vmem:[%s3413 + $0x330] sm:$0xff]
    %v3517 = vld [vmem:[%s3413 + $0x338] sm:$0xff]
    %v3518 = vld [vmem:[%s3413 + $0x340] sm:$0xff]
    %v3519 = vld [vmem:[%s3413 + $0x348] sm:$0xff]
    %v3520 = vld [vmem:[%s3413 + $0x350] sm:$0xff]
    %v3521 = vld [vmem:[%s3413 + $0x358] sm:$0xff]
    %v3522 = vld [vmem:[%s3413 + $0x360] sm:$0xff]
    %v3523 = vld [vmem:[%s3413 + $0x368] sm:$0xff]
    %v3524 = vld [vmem:[%s3413 + $0x370] sm:$0xff]
    %v3525 = vld [vmem:[%s3413 + $0x378] sm:$0xff]
    %v3526 = vld [vmem:[%s3413 + $0x380] sm:$0xff]
    %v3527 = vld [vmem:[%s3413 + $0x388] sm:$0xff]
    %v3528 = vld [vmem:[%s3413 + $0x390] sm:$0xff]
    %v3529 = vld [vmem:[%s3413 + $0x398] sm:$0xff]
    %v3530 = vld [vmem:[%s3413 + $0x3a0] sm:$0xff]
    %v3531 = vld [vmem:[%s3413 + $0x3a8] sm:$0xff]
    %v3532 = vld [vmem:[%s3413 + $0x3b0] sm:$0xff]
    %v3533 = vld [vmem:[%s3413 + $0x3b8] sm:$0xff]
    %v3534 = vld [vmem:[%s3413 + $0x3c0] sm:$0xff]
    %v3535 = vld [vmem:[%s3413 + $0x3c8] sm:$0xff]
    %v3536 = vld [vmem:[%s3413 + $0x3d0] sm:$0xff]
    %v3537 = vld [vmem:[%s3413 + $0x3d8] sm:$0xff]
    %v3538 = vld [vmem:[%s3413 + $0x3e0] sm:$0xff]
    %v3539 = vld [vmem:[%s3413 + $0x3e8] sm:$0xff]
    %v3540 = vld [vmem:[%s3413 + $0x3f0] sm:$0xff]
    %v3541 = vld [vmem:[%s3413 + $0x3f8] sm:$0xff]
    %v3542 = vld [vmem:[%s3413 + $0x400] sm:$0xff]
    %v3543 = vld [vmem:[%s3413 + $0x408] sm:$0xff]
    %v3544 = vld [vmem:[%s3413 + $0x410] sm:$0xff]
    %v3545 = vld [vmem:[%s3413 + $0x418] sm:$0xff]
    %v3546 = vld [vmem:[%s3413 + $0x420] sm:$0xff]
    %v3547 = vld [vmem:[%s3413 + $0x428] sm:$0xff]
    %v3548 = vld [vmem:[%s3413 + $0x430] sm:$0xff]
    %v3549 = vld [vmem:[%s3413 + $0x438] sm:$0xff]
    %v3550 = vld [vmem:[%s3413 + $0x440] sm:$0xff]
    %v3551 = vld [vmem:[%s3413 + $0x448] sm:$0xff]
    %v3552 = vld [vmem:[%s3413 + $0x450] sm:$0xff]
    %v3553 = vld [vmem:[%s3413 + $0x458] sm:$0xff]
    %v3554 = vld [vmem:[%s3413 + $0x460] sm:$0xff]
    %v3555 = vld [vmem:[%s3413 + $0x468] sm:$0xff]
    %v3556 = vld [vmem:[%s3413 + $0x470] sm:$0xff]
    %v3557 = vld [vmem:[%s3413 + $0x478] sm:$0xff]
    %v3558 = vld [vmem:[%s3413 + $0x480] sm:$0xff]
    %v3559 = vld [vmem:[%s3413 + $0x488] sm:$0xff]
    %v3560 = vld [vmem:[%s3413 + $0x490] sm:$0xff]
    %v3561 = vld [vmem:[%s3413 + $0x498] sm:$0xff]
    %v3562 = vld [vmem:[%s3413 + $0x4a0] sm:$0xff]
    %v3563 = vld [vmem:[%s3413 + $0x4a8] sm:$0xff]
    %v3564 = vld [vmem:[%s3413 + $0x4b0] sm:$0xff]
    %v3565 = vld [vmem:[%s3413 + $0x4b8] sm:$0xff]
    %v3566 = vld [vmem:[%s3413 + $0x4c0] sm:$0xff]
    %v3567 = vld [vmem:[%s3413 + $0x4c8] sm:$0xff]
    %v3568 = vld [vmem:[%s3413 + $0x4d0] sm:$0xff]
    %v3569 = vld [vmem:[%s3413 + $0x4d8] sm:$0xff]
    %v3570 = vld [vmem:[%s3413 + $0x4e0] sm:$0xff]
    %v3571 = vld [vmem:[%s3413 + $0x4e8] sm:$0xff]
    %v3572 = vld [vmem:[%s3413 + $0x4f0] sm:$0xff]
    %v3573 = vld [vmem:[%s3413 + $0x4f8] sm:$0xff]
    %v3574 = vld [vmem:[%s3413 + $0x500] sm:$0xff]
    %v3575 = vld [vmem:[%s3413 + $0x508] sm:$0xff]
    %v3576 = vld [vmem:[%s3413 + $0x510] sm:$0xff]
    %v3577 = vld [vmem:[%s3413 + $0x518] sm:$0xff]
    %v3578 = vld [vmem:[%s3413 + $0x520] sm:$0xff]
    %v3579 = vld [vmem:[%s3413 + $0x528] sm:$0xff]
    %v3580 = vld [vmem:[%s3413 + $0x530] sm:$0xff]
    %v3581 = vld [vmem:[%s3413 + $0x538] sm:$0xff]
    %v3582 = vld [vmem:[%s3413 + $0x540] sm:$0xff]
    %v3583 = vld [vmem:[%s3413 + $0x548] sm:$0xff]
    %v3584 = vld [vmem:[%s3413 + $0x550] sm:$0xff]
    %v3585 = vld [vmem:[%s3413 + $0x558] sm:$0xff]
    %v3586 = vld [vmem:[%s3413 + $0x560] sm:$0xff]
    %v3587 = vld [vmem:[%s3413 + $0x568] sm:$0xff]
    %v3588 = vld [vmem:[%s3413 + $0x570] sm:$0xff]
    %v3589 = vld [vmem:[%s3413 + $0x578] sm:$0xff]
    %v3590 = vld [vmem:[%s3413 + $0x580] sm:$0xff]
    %v3591 = vld [vmem:[%s3413 + $0x588] sm:$0xff]
    %v3592 = vld [vmem:[%s3413 + $0x590] sm:$0xff]
    %v3593 = vld [vmem:[%s3413 + $0x598] sm:$0xff]
    %v3594 = vld [vmem:[%s3413 + $0x5a0] sm:$0xff]
    %v3595 = vld [vmem:[%s3413 + $0x5a8] sm:$0xff]
    %v3596 = vld [vmem:[%s3413 + $0x5b0] sm:$0xff]
    %v3597 = vld [vmem:[%s3413 + $0x5b8] sm:$0xff]
    %v3598 = vld [vmem:[%s3413 + $0x5c0] sm:$0xff]
    %v3599 = vld [vmem:[%s3413 + $0x5c8] sm:$0xff]
    %v3600 = vld [vmem:[%s3413 + $0x5d0] sm:$0xff]
    %v3601 = vld [vmem:[%s3413 + $0x5d8] sm:$0xff]
    %v3602 = vld [vmem:[%s3413 + $0x5e0] sm:$0xff]
    %v3603 = vld [vmem:[%s3413 + $0x5e8] sm:$0xff]
    %v3604 = vld [vmem:[%s3413 + $0x5f0] sm:$0xff]
    %v3605 = vld [vmem:[%s3413 + $0x5f8] sm:$0xff]
    %s3606 = scalar_lea.vmem %s2, 3072
    %v3607 = vld [vmem:[%s3606] sm:$0xff]
    %v3608 = vld [vmem:[%s3606 + $0x8] sm:$0xff]
    %v3609 = vld [vmem:[%s3606 + $0x10] sm:$0xff]
    %v3610 = vld [vmem:[%s3606 + $0x18] sm:$0xff]
    %v3611 = vld [vmem:[%s3606 + $0x20] sm:$0xff]
    %v3612 = vld [vmem:[%s3606 + $0x28] sm:$0xff]
    %v3613 = vld [vmem:[%s3606 + $0x30] sm:$0xff]
    %v3614 = vld [vmem:[%s3606 + $0x38] sm:$0xff]
    %v3615 = vld [vmem:[%s3606 + $0x40] sm:$0xff]
    %v3616 = vld [vmem:[%s3606 + $0x48] sm:$0xff]
    %v3617 = vld [vmem:[%s3606 + $0x50] sm:$0xff]
    %v3618 = vld [vmem:[%s3606 + $0x58] sm:$0xff]
    %v3619 = vld [vmem:[%s3606 + $0x60] sm:$0xff]
    %v3620 = vld [vmem:[%s3606 + $0x68] sm:$0xff]
    %v3621 = vld [vmem:[%s3606 + $0x70] sm:$0xff]
    %v3622 = vld [vmem:[%s3606 + $0x78] sm:$0xff]
    %v3623 = vld [vmem:[%s3606 + $0x80] sm:$0xff]
    %v3624 = vld [vmem:[%s3606 + $0x88] sm:$0xff]
    %v3625 = vld [vmem:[%s3606 + $0x90] sm:$0xff]
    %v3626 = vld [vmem:[%s3606 + $0x98] sm:$0xff]
    %v3627 = vld [vmem:[%s3606 + $0xa0] sm:$0xff]
    %v3628 = vld [vmem:[%s3606 + $0xa8] sm:$0xff]
    %v3629 = vld [vmem:[%s3606 + $0xb0] sm:$0xff]
    %v3630 = vld [vmem:[%s3606 + $0xb8] sm:$0xff]
    %v3631 = vld [vmem:[%s3606 + $0xc0] sm:$0xff]
    %v3632 = vld [vmem:[%s3606 + $0xc8] sm:$0xff]
    %v3633 = vld [vmem:[%s3606 + $0xd0] sm:$0xff]
    %v3634 = vld [vmem:[%s3606 + $0xd8] sm:$0xff]
    %v3635 = vld [vmem:[%s3606 + $0xe0] sm:$0xff]
    %v3636 = vld [vmem:[%s3606 + $0xe8] sm:$0xff]
    %v3637 = vld [vmem:[%s3606 + $0xf0] sm:$0xff]
    %v3638 = vld [vmem:[%s3606 + $0xf8] sm:$0xff]
    %v3639 = vld [vmem:[%s3606 + $0x100] sm:$0xff]
    %v3640 = vld [vmem:[%s3606 + $0x108] sm:$0xff]
    %v3641 = vld [vmem:[%s3606 + $0x110] sm:$0xff]
    %v3642 = vld [vmem:[%s3606 + $0x118] sm:$0xff]
    %v3643 = vld [vmem:[%s3606 + $0x120] sm:$0xff]
    %v3644 = vld [vmem:[%s3606 + $0x128] sm:$0xff]
    %v3645 = vld [vmem:[%s3606 + $0x130] sm:$0xff]
    %v3646 = vld [vmem:[%s3606 + $0x138] sm:$0xff]
    %v3647 = vld [vmem:[%s3606 + $0x140] sm:$0xff]
    %v3648 = vld [vmem:[%s3606 + $0x148] sm:$0xff]
    %v3649 = vld [vmem:[%s3606 + $0x150] sm:$0xff]
    %v3650 = vld [vmem:[%s3606 + $0x158] sm:$0xff]
    %v3651 = vld [vmem:[%s3606 + $0x160] sm:$0xff]
    %v3652 = vld [vmem:[%s3606 + $0x168] sm:$0xff]
    %v3653 = vld [vmem:[%s3606 + $0x170] sm:$0xff]
    %v3654 = vld [vmem:[%s3606 + $0x178] sm:$0xff]
    %v3655 = vld [vmem:[%s3606 + $0x180] sm:$0xff]
    %v3656 = vld [vmem:[%s3606 + $0x188] sm:$0xff]
    %v3657 = vld [vmem:[%s3606 + $0x190] sm:$0xff]
    %v3658 = vld [vmem:[%s3606 + $0x198] sm:$0xff]
    %v3659 = vld [vmem:[%s3606 + $0x1a0] sm:$0xff]
    %v3660 = vld [vmem:[%s3606 + $0x1a8] sm:$0xff]
    %v3661 = vld [vmem:[%s3606 + $0x1b0] sm:$0xff]
    %v3662 = vld [vmem:[%s3606 + $0x1b8] sm:$0xff]
    %v3663 = vld [vmem:[%s3606 + $0x1c0] sm:$0xff]
    %v3664 = vld [vmem:[%s3606 + $0x1c8] sm:$0xff]
    %v3665 = vld [vmem:[%s3606 + $0x1d0] sm:$0xff]
    %v3666 = vld [vmem:[%s3606 + $0x1d8] sm:$0xff]
    %v3667 = vld [vmem:[%s3606 + $0x1e0] sm:$0xff]
    %v3668 = vld [vmem:[%s3606 + $0x1e8] sm:$0xff]
    %v3669 = vld [vmem:[%s3606 + $0x1f0] sm:$0xff]
    %v3670 = vld [vmem:[%s3606 + $0x1f8] sm:$0xff]
    %v3671 = vld [vmem:[%s3606 + $0x200] sm:$0xff]
    %v3672 = vld [vmem:[%s3606 + $0x208] sm:$0xff]
    %v3673 = vld [vmem:[%s3606 + $0x210] sm:$0xff]
    %v3674 = vld [vmem:[%s3606 + $0x218] sm:$0xff]
    %v3675 = vld [vmem:[%s3606 + $0x220] sm:$0xff]
    %v3676 = vld [vmem:[%s3606 + $0x228] sm:$0xff]
    %v3677 = vld [vmem:[%s3606 + $0x230] sm:$0xff]
    %v3678 = vld [vmem:[%s3606 + $0x238] sm:$0xff]
    %v3679 = vld [vmem:[%s3606 + $0x240] sm:$0xff]
    %v3680 = vld [vmem:[%s3606 + $0x248] sm:$0xff]
    %v3681 = vld [vmem:[%s3606 + $0x250] sm:$0xff]
    %v3682 = vld [vmem:[%s3606 + $0x258] sm:$0xff]
    %v3683 = vld [vmem:[%s3606 + $0x260] sm:$0xff]
    %v3684 = vld [vmem:[%s3606 + $0x268] sm:$0xff]
    %v3685 = vld [vmem:[%s3606 + $0x270] sm:$0xff]
    %v3686 = vld [vmem:[%s3606 + $0x278] sm:$0xff]
    %v3687 = vld [vmem:[%s3606 + $0x280] sm:$0xff]
    %v3688 = vld [vmem:[%s3606 + $0x288] sm:$0xff]
    %v3689 = vld [vmem:[%s3606 + $0x290] sm:$0xff]
    %v3690 = vld [vmem:[%s3606 + $0x298] sm:$0xff]
    %v3691 = vld [vmem:[%s3606 + $0x2a0] sm:$0xff]
    %v3692 = vld [vmem:[%s3606 + $0x2a8] sm:$0xff]
    %v3693 = vld [vmem:[%s3606 + $0x2b0] sm:$0xff]
    %v3694 = vld [vmem:[%s3606 + $0x2b8] sm:$0xff]
    %v3695 = vld [vmem:[%s3606 + $0x2c0] sm:$0xff]
    %v3696 = vld [vmem:[%s3606 + $0x2c8] sm:$0xff]
    %v3697 = vld [vmem:[%s3606 + $0x2d0] sm:$0xff]
    %v3698 = vld [vmem:[%s3606 + $0x2d8] sm:$0xff]
    %v3699 = vld [vmem:[%s3606 + $0x2e0] sm:$0xff]
    %v3700 = vld [vmem:[%s3606 + $0x2e8] sm:$0xff]
    %v3701 = vld [vmem:[%s3606 + $0x2f0] sm:$0xff]
    %v3702 = vld [vmem:[%s3606 + $0x2f8] sm:$0xff]
    %v3703 = vld [vmem:[%s3606 + $0x300] sm:$0xff]
    %v3704 = vld [vmem:[%s3606 + $0x308] sm:$0xff]
    %v3705 = vld [vmem:[%s3606 + $0x310] sm:$0xff]
    %v3706 = vld [vmem:[%s3606 + $0x318] sm:$0xff]
    %v3707 = vld [vmem:[%s3606 + $0x320] sm:$0xff]
    %v3708 = vld [vmem:[%s3606 + $0x328] sm:$0xff]
    %v3709 = vld [vmem:[%s3606 + $0x330] sm:$0xff]
    %v3710 = vld [vmem:[%s3606 + $0x338] sm:$0xff]
    %v3711 = vld [vmem:[%s3606 + $0x340] sm:$0xff]
    %v3712 = vld [vmem:[%s3606 + $0x348] sm:$0xff]
    %v3713 = vld [vmem:[%s3606 + $0x350] sm:$0xff]
    %v3714 = vld [vmem:[%s3606 + $0x358] sm:$0xff]
    %v3715 = vld [vmem:[%s3606 + $0x360] sm:$0xff]
    %v3716 = vld [vmem:[%s3606 + $0x368] sm:$0xff]
    %v3717 = vld [vmem:[%s3606 + $0x370] sm:$0xff]
    %v3718 = vld [vmem:[%s3606 + $0x378] sm:$0xff]
    %v3719 = vld [vmem:[%s3606 + $0x380] sm:$0xff]
    %v3720 = vld [vmem:[%s3606 + $0x388] sm:$0xff]
    %v3721 = vld [vmem:[%s3606 + $0x390] sm:$0xff]
    %v3722 = vld [vmem:[%s3606 + $0x398] sm:$0xff]
    %v3723 = vld [vmem:[%s3606 + $0x3a0] sm:$0xff]
    %v3724 = vld [vmem:[%s3606 + $0x3a8] sm:$0xff]
    %v3725 = vld [vmem:[%s3606 + $0x3b0] sm:$0xff]
    %v3726 = vld [vmem:[%s3606 + $0x3b8] sm:$0xff]
    %v3727 = vld [vmem:[%s3606 + $0x3c0] sm:$0xff]
    %v3728 = vld [vmem:[%s3606 + $0x3c8] sm:$0xff]
    %v3729 = vld [vmem:[%s3606 + $0x3d0] sm:$0xff]
    %v3730 = vld [vmem:[%s3606 + $0x3d8] sm:$0xff]
    %v3731 = vld [vmem:[%s3606 + $0x3e0] sm:$0xff]
    %v3732 = vld [vmem:[%s3606 + $0x3e8] sm:$0xff]
    %v3733 = vld [vmem:[%s3606 + $0x3f0] sm:$0xff]
    %v3734 = vld [vmem:[%s3606 + $0x3f8] sm:$0xff]
    %v3735 = vld [vmem:[%s3606 + $0x400] sm:$0xff]
    %v3736 = vld [vmem:[%s3606 + $0x408] sm:$0xff]
    %v3737 = vld [vmem:[%s3606 + $0x410] sm:$0xff]
    %v3738 = vld [vmem:[%s3606 + $0x418] sm:$0xff]
    %v3739 = vld [vmem:[%s3606 + $0x420] sm:$0xff]
    %v3740 = vld [vmem:[%s3606 + $0x428] sm:$0xff]
    %v3741 = vld [vmem:[%s3606 + $0x430] sm:$0xff]
    %v3742 = vld [vmem:[%s3606 + $0x438] sm:$0xff]
    %v3743 = vld [vmem:[%s3606 + $0x440] sm:$0xff]
    %v3744 = vld [vmem:[%s3606 + $0x448] sm:$0xff]
    %v3745 = vld [vmem:[%s3606 + $0x450] sm:$0xff]
    %v3746 = vld [vmem:[%s3606 + $0x458] sm:$0xff]
    %v3747 = vld [vmem:[%s3606 + $0x460] sm:$0xff]
    %v3748 = vld [vmem:[%s3606 + $0x468] sm:$0xff]
    %v3749 = vld [vmem:[%s3606 + $0x470] sm:$0xff]
    %v3750 = vld [vmem:[%s3606 + $0x478] sm:$0xff]
    %v3751 = vld [vmem:[%s3606 + $0x480] sm:$0xff]
    %v3752 = vld [vmem:[%s3606 + $0x488] sm:$0xff]
    %v3753 = vld [vmem:[%s3606 + $0x490] sm:$0xff]
    %v3754 = vld [vmem:[%s3606 + $0x498] sm:$0xff]
    %v3755 = vld [vmem:[%s3606 + $0x4a0] sm:$0xff]
    %v3756 = vld [vmem:[%s3606 + $0x4a8] sm:$0xff]
    %v3757 = vld [vmem:[%s3606 + $0x4b0] sm:$0xff]
    %v3758 = vld [vmem:[%s3606 + $0x4b8] sm:$0xff]
    %v3759 = vld [vmem:[%s3606 + $0x4c0] sm:$0xff]
    %v3760 = vld [vmem:[%s3606 + $0x4c8] sm:$0xff]
    %v3761 = vld [vmem:[%s3606 + $0x4d0] sm:$0xff]
    %v3762 = vld [vmem:[%s3606 + $0x4d8] sm:$0xff]
    %v3763 = vld [vmem:[%s3606 + $0x4e0] sm:$0xff]
    %v3764 = vld [vmem:[%s3606 + $0x4e8] sm:$0xff]
    %v3765 = vld [vmem:[%s3606 + $0x4f0] sm:$0xff]
    %v3766 = vld [vmem:[%s3606 + $0x4f8] sm:$0xff]
    %v3767 = vld [vmem:[%s3606 + $0x500] sm:$0xff]
    %v3768 = vld [vmem:[%s3606 + $0x508] sm:$0xff]
    %v3769 = vld [vmem:[%s3606 + $0x510] sm:$0xff]
    %v3770 = vld [vmem:[%s3606 + $0x518] sm:$0xff]
    %v3771 = vld [vmem:[%s3606 + $0x520] sm:$0xff]
    %v3772 = vld [vmem:[%s3606 + $0x528] sm:$0xff]
    %v3773 = vld [vmem:[%s3606 + $0x530] sm:$0xff]
    %v3774 = vld [vmem:[%s3606 + $0x538] sm:$0xff]
    %v3775 = vld [vmem:[%s3606 + $0x540] sm:$0xff]
    %v3776 = vld [vmem:[%s3606 + $0x548] sm:$0xff]
    %v3777 = vld [vmem:[%s3606 + $0x550] sm:$0xff]
    %v3778 = vld [vmem:[%s3606 + $0x558] sm:$0xff]
    %v3779 = vld [vmem:[%s3606 + $0x560] sm:$0xff]
    %v3780 = vld [vmem:[%s3606 + $0x568] sm:$0xff]
    %v3781 = vld [vmem:[%s3606 + $0x570] sm:$0xff]
    %v3782 = vld [vmem:[%s3606 + $0x578] sm:$0xff]
    %v3783 = vld [vmem:[%s3606 + $0x580] sm:$0xff]
    %v3784 = vld [vmem:[%s3606 + $0x588] sm:$0xff]
    %v3785 = vld [vmem:[%s3606 + $0x590] sm:$0xff]
    %v3786 = vld [vmem:[%s3606 + $0x598] sm:$0xff]
    %v3787 = vld [vmem:[%s3606 + $0x5a0] sm:$0xff]
    %v3788 = vld [vmem:[%s3606 + $0x5a8] sm:$0xff]
    %v3789 = vld [vmem:[%s3606 + $0x5b0] sm:$0xff]
    %v3790 = vld [vmem:[%s3606 + $0x5b8] sm:$0xff]
    %v3791 = vld [vmem:[%s3606 + $0x5c0] sm:$0xff]
    %v3792 = vld [vmem:[%s3606 + $0x5c8] sm:$0xff]
    %v3793 = vld [vmem:[%s3606 + $0x5d0] sm:$0xff]
    %v3794 = vld [vmem:[%s3606 + $0x5d8] sm:$0xff]
    %v3795 = vld [vmem:[%s3606 + $0x5e0] sm:$0xff]
    %v3796 = vld [vmem:[%s3606 + $0x5e8] sm:$0xff]
    %v3797 = vld [vmem:[%s3606 + $0x5f0] sm:$0xff]
    %v3798 = vld [vmem:[%s3606 + $0x5f8] sm:$0xff]
    %v3991 = vunpack.c.l.b16 %v3414
    %v3992 = vunpack.c.h.b16 %v3414
    %v3993 = vunpack.c.l.b16 %v3415
    %v3994 = vunpack.c.h.b16 %v3415
    %v3995 = vunpack.c.l.b16 %v3416
    %v3996 = vunpack.c.h.b16 %v3416
    %v3997 = vunpack.c.l.b16 %v3417
    %v3998 = vunpack.c.h.b16 %v3417
    %v3999 = vunpack.c.l.b16 %v3418
    %v4000 = vunpack.c.h.b16 %v3418
    %v4001 = vunpack.c.l.b16 %v3419
    %v4002 = vunpack.c.h.b16 %v3419
    %v4003 = vunpack.c.l.b16 %v3420
    %v4004 = vunpack.c.h.b16 %v3420
    %v4005 = vunpack.c.l.b16 %v3421
    %v4006 = vunpack.c.h.b16 %v3421
    %v4007 = vunpack.c.l.b16 %v3422
    %v4008 = vunpack.c.h.b16 %v3422
    %v4009 = vunpack.c.l.b16 %v3423
    %v4010 = vunpack.c.h.b16 %v3423
    %v4011 = vunpack.c.l.b16 %v3424
    %v4012 = vunpack.c.h.b16 %v3424
    %v4013 = vunpack.c.l.b16 %v3425
    %v4014 = vunpack.c.h.b16 %v3425
    %v4015 = vunpack.c.l.b16 %v3426
    %v4016 = vunpack.c.h.b16 %v3426
    %v4017 = vunpack.c.l.b16 %v3427
    %v4018 = vunpack.c.h.b16 %v3427
    %v4019 = vunpack.c.l.b16 %v3428
    %v4020 = vunpack.c.h.b16 %v3428
    %v4021 = vunpack.c.l.b16 %v3429
    %v4022 = vunpack.c.h.b16 %v3429
    %v4023 = vunpack.c.l.b16 %v3430
    %v4024 = vunpack.c.h.b16 %v3430
    %v4025 = vunpack.c.l.b16 %v3431
    %v4026 = vunpack.c.h.b16 %v3431
    %v4027 = vunpack.c.l.b16 %v3432
    %v4028 = vunpack.c.h.b16 %v3432
    %v4029 = vunpack.c.l.b16 %v3433
    %v4030 = vunpack.c.h.b16 %v3433
    %v4031 = vunpack.c.l.b16 %v3434
    %v4032 = vunpack.c.h.b16 %v3434
    %v4033 = vunpack.c.l.b16 %v3435
    %v4034 = vunpack.c.h.b16 %v3435
    %v4035 = vunpack.c.l.b16 %v3436
    %v4036 = vunpack.c.h.b16 %v3436
    %v4037 = vunpack.c.l.b16 %v3437
    %v4038 = vunpack.c.h.b16 %v3437
    %v4039 = vunpack.c.l.b16 %v3438
    %v4040 = vunpack.c.h.b16 %v3438
    %v4041 = vunpack.c.l.b16 %v3439
    %v4042 = vunpack.c.h.b16 %v3439
    %v4043 = vunpack.c.l.b16 %v3440
    %v4044 = vunpack.c.h.b16 %v3440
    %v4045 = vunpack.c.l.b16 %v3441
    %v4046 = vunpack.c.h.b16 %v3441
    %v4047 = vunpack.c.l.b16 %v3442
    %v4048 = vunpack.c.h.b16 %v3442
    %v4049 = vunpack.c.l.b16 %v3443
    %v4050 = vunpack.c.h.b16 %v3443
    %v4051 = vunpack.c.l.b16 %v3444
    %v4052 = vunpack.c.h.b16 %v3444
    %v4053 = vunpack.c.l.b16 %v3445
    %v4054 = vunpack.c.h.b16 %v3445
    %v4055 = vunpack.c.l.b16 %v3446
    %v4056 = vunpack.c.h.b16 %v3446
    %v4057 = vunpack.c.l.b16 %v3447
    %v4058 = vunpack.c.h.b16 %v3447
    %v4059 = vunpack.c.l.b16 %v3448
    %v4060 = vunpack.c.h.b16 %v3448
    %v4061 = vunpack.c.l.b16 %v3449
    %v4062 = vunpack.c.h.b16 %v3449
    %v4063 = vunpack.c.l.b16 %v3450
    %v4064 = vunpack.c.h.b16 %v3450
    %v4065 = vunpack.c.l.b16 %v3451
    %v4066 = vunpack.c.h.b16 %v3451
    %v4067 = vunpack.c.l.b16 %v3452
    %v4068 = vunpack.c.h.b16 %v3452
    %v4069 = vunpack.c.l.b16 %v3453
    %v4070 = vunpack.c.h.b16 %v3453
    %v4071 = vunpack.c.l.b16 %v3454
    %v4072 = vunpack.c.h.b16 %v3454
    %v4073 = vunpack.c.l.b16 %v3455
    %v4074 = vunpack.c.h.b16 %v3455
    %v4075 = vunpack.c.l.b16 %v3456
    %v4076 = vunpack.c.h.b16 %v3456
    %v4077 = vunpack.c.l.b16 %v3457
    %v4078 = vunpack.c.h.b16 %v3457
    %v4079 = vunpack.c.l.b16 %v3458
    %v4080 = vunpack.c.h.b16 %v3458
    %v4081 = vunpack.c.l.b16 %v3459
    %v4082 = vunpack.c.h.b16 %v3459
    %v4083 = vunpack.c.l.b16 %v3460
    %v4084 = vunpack.c.h.b16 %v3460
    %v4085 = vunpack.c.l.b16 %v3461
    %v4086 = vunpack.c.h.b16 %v3461
    %v4087 = vunpack.c.l.b16 %v3462
    %v4088 = vunpack.c.h.b16 %v3462
    %v4089 = vunpack.c.l.b16 %v3463
    %v4090 = vunpack.c.h.b16 %v3463
    %v4091 = vunpack.c.l.b16 %v3464
    %v4092 = vunpack.c.h.b16 %v3464
    %v4093 = vunpack.c.l.b16 %v3465
    %v4094 = vunpack.c.h.b16 %v3465
    %v4095 = vunpack.c.l.b16 %v3466
    %v4096 = vunpack.c.h.b16 %v3466
    %v4097 = vunpack.c.l.b16 %v3467
    %v4098 = vunpack.c.h.b16 %v3467
    %v4099 = vunpack.c.l.b16 %v3468
    %v4100 = vunpack.c.h.b16 %v3468
    %v4101 = vunpack.c.l.b16 %v3469
    %v4102 = vunpack.c.h.b16 %v3469
    %v4103 = vunpack.c.l.b16 %v3470
    %v4104 = vunpack.c.h.b16 %v3470
    %v4105 = vunpack.c.l.b16 %v3471
    %v4106 = vunpack.c.h.b16 %v3471
    %v4107 = vunpack.c.l.b16 %v3472
    %v4108 = vunpack.c.h.b16 %v3472
    %v4109 = vunpack.c.l.b16 %v3473
    %v4110 = vunpack.c.h.b16 %v3473
    %v4111 = vunpack.c.l.b16 %v3474
    %v4112 = vunpack.c.h.b16 %v3474
    %v4113 = vunpack.c.l.b16 %v3475
    %v4114 = vunpack.c.h.b16 %v3475
    %v4115 = vunpack.c.l.b16 %v3476
    %v4116 = vunpack.c.h.b16 %v3476
    %v4117 = vunpack.c.l.b16 %v3477
    %v4118 = vunpack.c.h.b16 %v3477
    %v4119 = vunpack.c.l.b16 %v3478
    %v4120 = vunpack.c.h.b16 %v3478
    %v4121 = vunpack.c.l.b16 %v3479
    %v4122 = vunpack.c.h.b16 %v3479
    %v4123 = vunpack.c.l.b16 %v3480
    %v4124 = vunpack.c.h.b16 %v3480
    %v4125 = vunpack.c.l.b16 %v3481
    %v4126 = vunpack.c.h.b16 %v3481
    %v4127 = vunpack.c.l.b16 %v3482
    %v4128 = vunpack.c.h.b16 %v3482
    %v4129 = vunpack.c.l.b16 %v3483
    %v4130 = vunpack.c.h.b16 %v3483
    %v4131 = vunpack.c.l.b16 %v3484
    %v4132 = vunpack.c.h.b16 %v3484
    %v4133 = vunpack.c.l.b16 %v3485
    %v4134 = vunpack.c.h.b16 %v3485
    %v4135 = vunpack.c.l.b16 %v3486
    %v4136 = vunpack.c.h.b16 %v3486
    %v4137 = vunpack.c.l.b16 %v3487
    %v4138 = vunpack.c.h.b16 %v3487
    %v4139 = vunpack.c.l.b16 %v3488
    %v4140 = vunpack.c.h.b16 %v3488
    %v4141 = vunpack.c.l.b16 %v3489
    %v4142 = vunpack.c.h.b16 %v3489
    %v4143 = vunpack.c.l.b16 %v3490
    %v4144 = vunpack.c.h.b16 %v3490
    %v4145 = vunpack.c.l.b16 %v3491
    %v4146 = vunpack.c.h.b16 %v3491
    %v4147 = vunpack.c.l.b16 %v3492
    %v4148 = vunpack.c.h.b16 %v3492
    %v4149 = vunpack.c.l.b16 %v3493
    %v4150 = vunpack.c.h.b16 %v3493
    %v4151 = vunpack.c.l.b16 %v3494
    %v4152 = vunpack.c.h.b16 %v3494
    %v4153 = vunpack.c.l.b16 %v3495
    %v4154 = vunpack.c.h.b16 %v3495
    %v4155 = vunpack.c.l.b16 %v3496
    %v4156 = vunpack.c.h.b16 %v3496
    %v4157 = vunpack.c.l.b16 %v3497
    %v4158 = vunpack.c.h.b16 %v3497
    %v4159 = vunpack.c.l.b16 %v3498
    %v4160 = vunpack.c.h.b16 %v3498
    %v4161 = vunpack.c.l.b16 %v3499
    %v4162 = vunpack.c.h.b16 %v3499
    %v4163 = vunpack.c.l.b16 %v3500
    %v4164 = vunpack.c.h.b16 %v3500
    %v4165 = vunpack.c.l.b16 %v3501
    %v4166 = vunpack.c.h.b16 %v3501
    %v4167 = vunpack.c.l.b16 %v3502
    %v4168 = vunpack.c.h.b16 %v3502
    %v4169 = vunpack.c.l.b16 %v3503
    %v4170 = vunpack.c.h.b16 %v3503
    %v4171 = vunpack.c.l.b16 %v3504
    %v4172 = vunpack.c.h.b16 %v3504
    %v4173 = vunpack.c.l.b16 %v3505
    %v4174 = vunpack.c.h.b16 %v3505
    %v4175 = vunpack.c.l.b16 %v3506
    %v4176 = vunpack.c.h.b16 %v3506
    %v4177 = vunpack.c.l.b16 %v3507
    %v4178 = vunpack.c.h.b16 %v3507
    %v4179 = vunpack.c.l.b16 %v3508
    %v4180 = vunpack.c.h.b16 %v3508
    %v4181 = vunpack.c.l.b16 %v3509
    %v4182 = vunpack.c.h.b16 %v3509
    %v4183 = vunpack.c.l.b16 %v3510
    %v4184 = vunpack.c.h.b16 %v3510
    %v4185 = vunpack.c.l.b16 %v3511
    %v4186 = vunpack.c.h.b16 %v3511
    %v4187 = vunpack.c.l.b16 %v3512
    %v4188 = vunpack.c.h.b16 %v3512
    %v4189 = vunpack.c.l.b16 %v3513
    %v4190 = vunpack.c.h.b16 %v3513
    %v4191 = vunpack.c.l.b16 %v3514
    %v4192 = vunpack.c.h.b16 %v3514
    %v4193 = vunpack.c.l.b16 %v3515
    %v4194 = vunpack.c.h.b16 %v3515
    %v4195 = vunpack.c.l.b16 %v3516
    %v4196 = vunpack.c.h.b16 %v3516
    %v4197 = vunpack.c.l.b16 %v3517
    %v4198 = vunpack.c.h.b16 %v3517
    %v4199 = vunpack.c.l.b16 %v3518
    %v4200 = vunpack.c.h.b16 %v3518
    %v4201 = vunpack.c.l.b16 %v3519
    %v4202 = vunpack.c.h.b16 %v3519
    %v4203 = vunpack.c.l.b16 %v3520
    %v4204 = vunpack.c.h.b16 %v3520
    %v4205 = vunpack.c.l.b16 %v3521
    %v4206 = vunpack.c.h.b16 %v3521
    %v4207 = vunpack.c.l.b16 %v3522
    %v4208 = vunpack.c.h.b16 %v3522
    %v4209 = vunpack.c.l.b16 %v3523
    %v4210 = vunpack.c.h.b16 %v3523
    %v4211 = vunpack.c.l.b16 %v3524
    %v4212 = vunpack.c.h.b16 %v3524
    %v4213 = vunpack.c.l.b16 %v3525
    %v4214 = vunpack.c.h.b16 %v3525
    %v4215 = vunpack.c.l.b16 %v3526
    %v4216 = vunpack.c.h.b16 %v3526
    %v4217 = vunpack.c.l.b16 %v3527
    %v4218 = vunpack.c.h.b16 %v3527
    %v4219 = vunpack.c.l.b16 %v3528
    %v4220 = vunpack.c.h.b16 %v3528
    %v4221 = vunpack.c.l.b16 %v3529
    %v4222 = vunpack.c.h.b16 %v3529
    %v4223 = vunpack.c.l.b16 %v3530
    %v4224 = vunpack.c.h.b16 %v3530
    %v4225 = vunpack.c.l.b16 %v3531
    %v4226 = vunpack.c.h.b16 %v3531
    %v4227 = vunpack.c.l.b16 %v3532
    %v4228 = vunpack.c.h.b16 %v3532
    %v4229 = vunpack.c.l.b16 %v3533
    %v4230 = vunpack.c.h.b16 %v3533
    %v4231 = vunpack.c.l.b16 %v3534
    %v4232 = vunpack.c.h.b16 %v3534
    %v4233 = vunpack.c.l.b16 %v3535
    %v4234 = vunpack.c.h.b16 %v3535
    %v4235 = vunpack.c.l.b16 %v3536
    %v4236 = vunpack.c.h.b16 %v3536
    %v4237 = vunpack.c.l.b16 %v3537
    %v4238 = vunpack.c.h.b16 %v3537
    %v4239 = vunpack.c.l.b16 %v3538
    %v4240 = vunpack.c.h.b16 %v3538
    %v4241 = vunpack.c.l.b16 %v3539
    %v4242 = vunpack.c.h.b16 %v3539
    %v4243 = vunpack.c.l.b16 %v3540
    %v4244 = vunpack.c.h.b16 %v3540
    %v4245 = vunpack.c.l.b16 %v3541
    %v4246 = vunpack.c.h.b16 %v3541
    %v4247 = vunpack.c.l.b16 %v3542
    %v4248 = vunpack.c.h.b16 %v3542
    %v4249 = vunpack.c.l.b16 %v3543
    %v4250 = vunpack.c.h.b16 %v3543
    %v4251 = vunpack.c.l.b16 %v3544
    %v4252 = vunpack.c.h.b16 %v3544
    %v4253 = vunpack.c.l.b16 %v3545
    %v4254 = vunpack.c.h.b16 %v3545
    %v4255 = vunpack.c.l.b16 %v3546
    %v4256 = vunpack.c.h.b16 %v3546
    %v4257 = vunpack.c.l.b16 %v3547
    %v4258 = vunpack.c.h.b16 %v3547
    %v4259 = vunpack.c.l.b16 %v3548
    %v4260 = vunpack.c.h.b16 %v3548
    %v4261 = vunpack.c.l.b16 %v3549
    %v4262 = vunpack.c.h.b16 %v3549
    %v4263 = vunpack.c.l.b16 %v3550
    %v4264 = vunpack.c.h.b16 %v3550
    %v4265 = vunpack.c.l.b16 %v3551
    %v4266 = vunpack.c.h.b16 %v3551
    %v4267 = vunpack.c.l.b16 %v3552
    %v4268 = vunpack.c.h.b16 %v3552
    %v4269 = vunpack.c.l.b16 %v3553
    %v4270 = vunpack.c.h.b16 %v3553
    %v4271 = vunpack.c.l.b16 %v3554
    %v4272 = vunpack.c.h.b16 %v3554
    %v4273 = vunpack.c.l.b16 %v3555
    %v4274 = vunpack.c.h.b16 %v3555
    %v4275 = vunpack.c.l.b16 %v3556
    %v4276 = vunpack.c.h.b16 %v3556
    %v4277 = vunpack.c.l.b16 %v3557
    %v4278 = vunpack.c.h.b16 %v3557
    %v4279 = vunpack.c.l.b16 %v3558
    %v4280 = vunpack.c.h.b16 %v3558
    %v4281 = vunpack.c.l.b16 %v3559
    %v4282 = vunpack.c.h.b16 %v3559
    %v4283 = vunpack.c.l.b16 %v3560
    %v4284 = vunpack.c.h.b16 %v3560
    %v4285 = vunpack.c.l.b16 %v3561
    %v4286 = vunpack.c.h.b16 %v3561
    %v4287 = vunpack.c.l.b16 %v3562
    %v4288 = vunpack.c.h.b16 %v3562
    %v4289 = vunpack.c.l.b16 %v3563
    %v4290 = vunpack.c.h.b16 %v3563
    %v4291 = vunpack.c.l.b16 %v3564
    %v4292 = vunpack.c.h.b16 %v3564
    %v4293 = vunpack.c.l.b16 %v3565
    %v4294 = vunpack.c.h.b16 %v3565
    %v4295 = vunpack.c.l.b16 %v3566
    %v4296 = vunpack.c.h.b16 %v3566
    %v4297 = vunpack.c.l.b16 %v3567
    %v4298 = vunpack.c.h.b16 %v3567
    %v4299 = vunpack.c.l.b16 %v3568
    %v4300 = vunpack.c.h.b16 %v3568
    %v4301 = vunpack.c.l.b16 %v3569
    %v4302 = vunpack.c.h.b16 %v3569
    %v4303 = vunpack.c.l.b16 %v3570
    %v4304 = vunpack.c.h.b16 %v3570
    %v4305 = vunpack.c.l.b16 %v3571
    %v4306 = vunpack.c.h.b16 %v3571
    %v4307 = vunpack.c.l.b16 %v3572
    %v4308 = vunpack.c.h.b16 %v3572
    %v4309 = vunpack.c.l.b16 %v3573
    %v4310 = vunpack.c.h.b16 %v3573
    %v4311 = vunpack.c.l.b16 %v3574
    %v4312 = vunpack.c.h.b16 %v3574
    %v4313 = vunpack.c.l.b16 %v3575
    %v4314 = vunpack.c.h.b16 %v3575
    %v4315 = vunpack.c.l.b16 %v3576
    %v4316 = vunpack.c.h.b16 %v3576
    %v4317 = vunpack.c.l.b16 %v3577
    %v4318 = vunpack.c.h.b16 %v3577
    %v4319 = vunpack.c.l.b16 %v3578
    %v4320 = vunpack.c.h.b16 %v3578
    %v4321 = vunpack.c.l.b16 %v3579
    %v4322 = vunpack.c.h.b16 %v3579
    %v4323 = vunpack.c.l.b16 %v3580
    %v4324 = vunpack.c.h.b16 %v3580
    %v4325 = vunpack.c.l.b16 %v3581
    %v4326 = vunpack.c.h.b16 %v3581
    %v4327 = vunpack.c.l.b16 %v3582
    %v4328 = vunpack.c.h.b16 %v3582
    %v4329 = vunpack.c.l.b16 %v3583
    %v4330 = vunpack.c.h.b16 %v3583
    %v4331 = vunpack.c.l.b16 %v3584
    %v4332 = vunpack.c.h.b16 %v3584
    %v4333 = vunpack.c.l.b16 %v3585
    %v4334 = vunpack.c.h.b16 %v3585
    %v4335 = vunpack.c.l.b16 %v3586
    %v4336 = vunpack.c.h.b16 %v3586
    %v4337 = vunpack.c.l.b16 %v3587
    %v4338 = vunpack.c.h.b16 %v3587
    %v4339 = vunpack.c.l.b16 %v3588
    %v4340 = vunpack.c.h.b16 %v3588
    %v4341 = vunpack.c.l.b16 %v3589
    %v4342 = vunpack.c.h.b16 %v3589
    %v4343 = vunpack.c.l.b16 %v3590
    %v4344 = vunpack.c.h.b16 %v3590
    %v4345 = vunpack.c.l.b16 %v3591
    %v4346 = vunpack.c.h.b16 %v3591
    %v4347 = vunpack.c.l.b16 %v3592
    %v4348 = vunpack.c.h.b16 %v3592
    %v4349 = vunpack.c.l.b16 %v3593
    %v4350 = vunpack.c.h.b16 %v3593
    %v4351 = vunpack.c.l.b16 %v3594
    %v4352 = vunpack.c.h.b16 %v3594
    %v4353 = vunpack.c.l.b16 %v3595
    %v4354 = vunpack.c.h.b16 %v3595
    %v4355 = vunpack.c.l.b16 %v3596
    %v4356 = vunpack.c.h.b16 %v3596
    %v4357 = vunpack.c.l.b16 %v3597
    %v4358 = vunpack.c.h.b16 %v3597
    %v4359 = vunpack.c.l.b16 %v3598
    %v4360 = vunpack.c.h.b16 %v3598
    %v4361 = vunpack.c.l.b16 %v3599
    %v4362 = vunpack.c.h.b16 %v3599
    %v4363 = vunpack.c.l.b16 %v3600
    %v4364 = vunpack.c.h.b16 %v3600
    %v4365 = vunpack.c.l.b16 %v3601
    %v4366 = vunpack.c.h.b16 %v3601
    %v4367 = vunpack.c.l.b16 %v3602
    %v4368 = vunpack.c.h.b16 %v3602
    %v4369 = vunpack.c.l.b16 %v3603
    %v4370 = vunpack.c.h.b16 %v3603
    %v4371 = vunpack.c.l.b16 %v3604
    %v4372 = vunpack.c.h.b16 %v3604
    %v4373 = vunpack.c.l.b16 %v3605
    %v4374 = vunpack.c.h.b16 %v3605
    %v4375 = vpack.c.b16 %v3997, %v3991
    %v4376 = vpack.c.b16 %v3998, %v3992
    %v4377 = vpack.c.b16 %v3999, %v3993
    %v4378 = vpack.c.b16 %v4000, %v3994
    %v4379 = vpack.c.b16 %v4001, %v3995
    %v4380 = vpack.c.b16 %v4002, %v3996
    %v4381 = vpack.c.b16 %v4009, %v4003
    %v4382 = vpack.c.b16 %v4010, %v4004
    %v4383 = vpack.c.b16 %v4011, %v4005
    %v4384 = vpack.c.b16 %v4012, %v4006
    %v4385 = vpack.c.b16 %v4013, %v4007
    %v4386 = vpack.c.b16 %v4014, %v4008
    %v4387 = vpack.c.b16 %v4021, %v4015
    %v4388 = vpack.c.b16 %v4022, %v4016
    %v4389 = vpack.c.b16 %v4023, %v4017
    %v4390 = vpack.c.b16 %v4024, %v4018
    %v4391 = vpack.c.b16 %v4025, %v4019
    %v4392 = vpack.c.b16 %v4026, %v4020
    %v4393 = vpack.c.b16 %v4033, %v4027
    %v4394 = vpack.c.b16 %v4034, %v4028
    %v4395 = vpack.c.b16 %v4035, %v4029
    %v4396 = vpack.c.b16 %v4036, %v4030
    %v4397 = vpack.c.b16 %v4037, %v4031
    %v4398 = vpack.c.b16 %v4038, %v4032
    %v4399 = vpack.c.b16 %v4045, %v4039
    %v4400 = vpack.c.b16 %v4046, %v4040
    %v4401 = vpack.c.b16 %v4047, %v4041
    %v4402 = vpack.c.b16 %v4048, %v4042
    %v4403 = vpack.c.b16 %v4049, %v4043
    %v4404 = vpack.c.b16 %v4050, %v4044
    %v4405 = vpack.c.b16 %v4057, %v4051
    %v4406 = vpack.c.b16 %v4058, %v4052
    %v4407 = vpack.c.b16 %v4059, %v4053
    %v4408 = vpack.c.b16 %v4060, %v4054
    %v4409 = vpack.c.b16 %v4061, %v4055
    %v4410 = vpack.c.b16 %v4062, %v4056
    %v4411 = vpack.c.b16 %v4069, %v4063
    %v4412 = vpack.c.b16 %v4070, %v4064
    %v4413 = vpack.c.b16 %v4071, %v4065
    %v4414 = vpack.c.b16 %v4072, %v4066
    %v4415 = vpack.c.b16 %v4073, %v4067
    %v4416 = vpack.c.b16 %v4074, %v4068
    %v4417 = vpack.c.b16 %v4081, %v4075
    %v4418 = vpack.c.b16 %v4082, %v4076
    %v4419 = vpack.c.b16 %v4083, %v4077
    %v4420 = vpack.c.b16 %v4084, %v4078
    %v4421 = vpack.c.b16 %v4085, %v4079
    %v4422 = vpack.c.b16 %v4086, %v4080
    %v4423 = vpack.c.b16 %v4093, %v4087
    %v4424 = vpack.c.b16 %v4094, %v4088
    %v4425 = vpack.c.b16 %v4095, %v4089
    %v4426 = vpack.c.b16 %v4096, %v4090
    %v4427 = vpack.c.b16 %v4097, %v4091
    %v4428 = vpack.c.b16 %v4098, %v4092
    %v4429 = vpack.c.b16 %v4105, %v4099
    %v4430 = vpack.c.b16 %v4106, %v4100
    %v4431 = vpack.c.b16 %v4107, %v4101
    %v4432 = vpack.c.b16 %v4108, %v4102
    %v4433 = vpack.c.b16 %v4109, %v4103
    %v4434 = vpack.c.b16 %v4110, %v4104
    %v4435 = vpack.c.b16 %v4117, %v4111
    %v4436 = vpack.c.b16 %v4118, %v4112
    %v4437 = vpack.c.b16 %v4119, %v4113
    %v4438 = vpack.c.b16 %v4120, %v4114
    %v4439 = vpack.c.b16 %v4121, %v4115
    %v4440 = vpack.c.b16 %v4122, %v4116
    %v4441 = vpack.c.b16 %v4129, %v4123
    %v4442 = vpack.c.b16 %v4130, %v4124
    %v4443 = vpack.c.b16 %v4131, %v4125
    %v4444 = vpack.c.b16 %v4132, %v4126
    %v4445 = vpack.c.b16 %v4133, %v4127
    %v4446 = vpack.c.b16 %v4134, %v4128
    %v4447 = vpack.c.b16 %v4141, %v4135
    %v4448 = vpack.c.b16 %v4142, %v4136
    %v4449 = vpack.c.b16 %v4143, %v4137
    %v4450 = vpack.c.b16 %v4144, %v4138
    %v4451 = vpack.c.b16 %v4145, %v4139
    %v4452 = vpack.c.b16 %v4146, %v4140
    %v4453 = vpack.c.b16 %v4153, %v4147
    %v4454 = vpack.c.b16 %v4154, %v4148
    %v4455 = vpack.c.b16 %v4155, %v4149
    %v4456 = vpack.c.b16 %v4156, %v4150
    %v4457 = vpack.c.b16 %v4157, %v4151
    %v4458 = vpack.c.b16 %v4158, %v4152
    %v4459 = vpack.c.b16 %v4165, %v4159
    %v4460 = vpack.c.b16 %v4166, %v4160
    %v4461 = vpack.c.b16 %v4167, %v4161
    %v4462 = vpack.c.b16 %v4168, %v4162
    %v4463 = vpack.c.b16 %v4169, %v4163
    %v4464 = vpack.c.b16 %v4170, %v4164
    %v4465 = vpack.c.b16 %v4177, %v4171
    %v4466 = vpack.c.b16 %v4178, %v4172
    %v4467 = vpack.c.b16 %v4179, %v4173
    %v4468 = vpack.c.b16 %v4180, %v4174
    %v4469 = vpack.c.b16 %v4181, %v4175
    %v4470 = vpack.c.b16 %v4182, %v4176
    %v4471 = vpack.c.b16 %v4189, %v4183
    %v4472 = vpack.c.b16 %v4190, %v4184
    %v4473 = vpack.c.b16 %v4191, %v4185
    %v4474 = vpack.c.b16 %v4192, %v4186
    %v4475 = vpack.c.b16 %v4193, %v4187
    %v4476 = vpack.c.b16 %v4194, %v4188
    %v4477 = vpack.c.b16 %v4201, %v4195
    %v4478 = vpack.c.b16 %v4202, %v4196
    %v4479 = vpack.c.b16 %v4203, %v4197
    %v4480 = vpack.c.b16 %v4204, %v4198
    %v4481 = vpack.c.b16 %v4205, %v4199
    %v4482 = vpack.c.b16 %v4206, %v4200
    %v4483 = vpack.c.b16 %v4213, %v4207
    %v4484 = vpack.c.b16 %v4214, %v4208
    %v4485 = vpack.c.b16 %v4215, %v4209
    %v4486 = vpack.c.b16 %v4216, %v4210
    %v4487 = vpack.c.b16 %v4217, %v4211
    %v4488 = vpack.c.b16 %v4218, %v4212
    %v4489 = vpack.c.b16 %v4225, %v4219
    %v4490 = vpack.c.b16 %v4226, %v4220
    %v4491 = vpack.c.b16 %v4227, %v4221
    %v4492 = vpack.c.b16 %v4228, %v4222
    %v4493 = vpack.c.b16 %v4229, %v4223
    %v4494 = vpack.c.b16 %v4230, %v4224
    %v4495 = vpack.c.b16 %v4237, %v4231
    %v4496 = vpack.c.b16 %v4238, %v4232
    %v4497 = vpack.c.b16 %v4239, %v4233
    %v4498 = vpack.c.b16 %v4240, %v4234
    %v4499 = vpack.c.b16 %v4241, %v4235
    %v4500 = vpack.c.b16 %v4242, %v4236
    %v4501 = vpack.c.b16 %v4249, %v4243
    %v4502 = vpack.c.b16 %v4250, %v4244
    %v4503 = vpack.c.b16 %v4251, %v4245
    %v4504 = vpack.c.b16 %v4252, %v4246
    %v4505 = vpack.c.b16 %v4253, %v4247
    %v4506 = vpack.c.b16 %v4254, %v4248
    %v4507 = vpack.c.b16 %v4261, %v4255
    %v4508 = vpack.c.b16 %v4262, %v4256
    %v4509 = vpack.c.b16 %v4263, %v4257
    %v4510 = vpack.c.b16 %v4264, %v4258
    %v4511 = vpack.c.b16 %v4265, %v4259
    %v4512 = vpack.c.b16 %v4266, %v4260
    %v4513 = vpack.c.b16 %v4273, %v4267
    %v4514 = vpack.c.b16 %v4274, %v4268
    %v4515 = vpack.c.b16 %v4275, %v4269
    %v4516 = vpack.c.b16 %v4276, %v4270
    %v4517 = vpack.c.b16 %v4277, %v4271
    %v4518 = vpack.c.b16 %v4278, %v4272
    %v4519 = vpack.c.b16 %v4285, %v4279
    %v4520 = vpack.c.b16 %v4286, %v4280
    %v4521 = vpack.c.b16 %v4287, %v4281
    %v4522 = vpack.c.b16 %v4288, %v4282
    %v4523 = vpack.c.b16 %v4289, %v4283
    %v4524 = vpack.c.b16 %v4290, %v4284
    %v4525 = vpack.c.b16 %v4297, %v4291
    %v4526 = vpack.c.b16 %v4298, %v4292
    %v4527 = vpack.c.b16 %v4299, %v4293
    %v4528 = vpack.c.b16 %v4300, %v4294
    %v4529 = vpack.c.b16 %v4301, %v4295
    %v4530 = vpack.c.b16 %v4302, %v4296
    %v4531 = vpack.c.b16 %v4309, %v4303
    %v4532 = vpack.c.b16 %v4310, %v4304
    %v4533 = vpack.c.b16 %v4311, %v4305
    %v4534 = vpack.c.b16 %v4312, %v4306
    %v4535 = vpack.c.b16 %v4313, %v4307
    %v4536 = vpack.c.b16 %v4314, %v4308
    %v4537 = vpack.c.b16 %v4321, %v4315
    %v4538 = vpack.c.b16 %v4322, %v4316
    %v4539 = vpack.c.b16 %v4323, %v4317
    %v4540 = vpack.c.b16 %v4324, %v4318
    %v4541 = vpack.c.b16 %v4325, %v4319
    %v4542 = vpack.c.b16 %v4326, %v4320
    %v4543 = vpack.c.b16 %v4333, %v4327
    %v4544 = vpack.c.b16 %v4334, %v4328
    %v4545 = vpack.c.b16 %v4335, %v4329
    %v4546 = vpack.c.b16 %v4336, %v4330
    %v4547 = vpack.c.b16 %v4337, %v4331
    %v4548 = vpack.c.b16 %v4338, %v4332
    %v4549 = vpack.c.b16 %v4345, %v4339
    %v4550 = vpack.c.b16 %v4346, %v4340
    %v4551 = vpack.c.b16 %v4347, %v4341
    %v4552 = vpack.c.b16 %v4348, %v4342
    %v4553 = vpack.c.b16 %v4349, %v4343
    %v4554 = vpack.c.b16 %v4350, %v4344
    %v4555 = vpack.c.b16 %v4357, %v4351
    %v4556 = vpack.c.b16 %v4358, %v4352
    %v4557 = vpack.c.b16 %v4359, %v4353
    %v4558 = vpack.c.b16 %v4360, %v4354
    %v4559 = vpack.c.b16 %v4361, %v4355
    %v4560 = vpack.c.b16 %v4362, %v4356
    %v4561 = vpack.c.b16 %v4369, %v4363
    %v4562 = vpack.c.b16 %v4370, %v4364
    %v4563 = vpack.c.b16 %v4371, %v4365
    %v4564 = vpack.c.b16 %v4372, %v4366
    %v4565 = vpack.c.b16 %v4373, %v4367
    %v4566 = vpack.c.b16 %v4374, %v4368
    %4759 = vmatprep.subr.bf16.mxu0 %v4376
    %4760 = vmatpush1.bf16.msra.mxu0 %v4375
    %4761 = vmatprep.subr.bf16.mxu0 %v4382
    %4762 = vmatpush1.bf16.msra.mxu0 %v4381
    %4763 = vmatprep.subr.bf16.mxu0 %v4388
    %4764 = vmatpush1.bf16.msra.mxu0 %v4387
    %4765 = vmatprep.subr.bf16.mxu0 %v4394
    %4766 = vmatpush1.bf16.msra.mxu0 %v4393
    %4767 = vmatprep.subr.bf16.mxu0 %v4400
    %4768 = vmatpush1.bf16.msra.mxu0 %v4399
    %4769 = vmatprep.subr.bf16.mxu0 %v4406
    %4770 = vmatpush1.bf16.msra.mxu0 %v4405
    %4771 = vmatprep.subr.bf16.mxu0 %v4412
    %4772 = vmatpush1.bf16.msra.mxu0 %v4411
    %4773 = vmatprep.subr.bf16.mxu0 %v4418
    %4774 = vmatpush1.bf16.msra.mxu0 %v4417
    %4775 = vmatprep.subr.bf16.mxu0 %v4424
    %4776 = vmatpush1.bf16.msra.mxu0 %v4423
    %4777 = vmatprep.subr.bf16.mxu0 %v4430
    %4778 = vmatpush1.bf16.msra.mxu0 %v4429
    %4779 = vmatprep.subr.bf16.mxu0 %v4436
    %4780 = vmatpush1.bf16.msra.mxu0 %v4435
    %4781 = vmatprep.subr.bf16.mxu0 %v4442
    %4782 = vmatpush1.bf16.msra.mxu0 %v4441
    %4783 = vmatprep.subr.bf16.mxu0 %v4448
    %4784 = vmatpush1.bf16.msra.mxu0 %v4447
    %4785 = vmatprep.subr.bf16.mxu0 %v4454
    %4786 = vmatpush1.bf16.msra.mxu0 %v4453
    %4787 = vmatprep.subr.bf16.mxu0 %v4460
    %4788 = vmatpush1.bf16.msra.mxu0 %v4459
    %4789 = vmatprep.subr.bf16.mxu0 %v4466
    %4790 = vmatpush1.bf16.msra.mxu0 %v4465
    %4791 = vmatprep.mubr.bf16.mxu0 %v3198
    %4792 = vmatmul.mubr.bf16.gmra.mrb[0].mxu0 %v3197
    %v4793 = vpop.f32.mrb[0].mxu0
    %v4794 = vadd.f32 0.0, %v4793
    %v4795 = vpop.f32.mrb[0].mxu0
    %v4796 = vadd.f32 0.0, %v4795
    %v4797 = vpop.f32.mrb[0].mxu0
    %v4798 = vadd.f32 0.0, %v4797
    %v4799 = vpop.f32.mrb[0].mxu0
    %v4800 = vadd.f32 0.0, %v4799
    %4801 = vmatprep.mubr.bf16.mxu0 %v3202
    %4802 = vmatmul.mubr.bf16.gmra.mrb[0].mxu0 %v3201
    %v4803 = vpop.f32.mrb[0].mxu0
    %v4804 = vadd.f32 0.0, %v4803
    %v4805 = vpop.f32.mrb[0].mxu0
    %v4806 = vadd.f32 0.0, %v4805
    %v4807 = vpop.f32.mrb[0].mxu0
    %v4808 = vadd.f32 0.0, %v4807
    %v4809 = vpop.f32.mrb[0].mxu0
    %v4810 = vadd.f32 0.0, %v4809
    %4811 = vmatprep.mubr.bf16.mxu0 %v3206
    %4812 = vmatmul.mubr.bf16.gmra.mrb[0].mxu0 %v3205
    %v4813 = vpop.f32.mrb[0].mxu0
    %v4814 = vadd.f32 0.0, %v4813
    %v4815 = vpop.f32.mrb[0].mxu0
    %v4816 = vadd.f32 0.0, %v4815
    %v4817 = vpop.f32.mrb[0].mxu0
    %v4818 = vadd.f32 0.0, %v4817
    %v4819 = vpop.f32.mrb[0].mxu0
    %v4820 = vadd.f32 0.0, %v4819
    %4821 = vmatprep.mubr.bf16.mxu0 %v3210
    %4822 = vmatmul.mubr.bf16.gmra.mrb[0].mxu0 %v3209
    %v4823 = vpop.f32.mrb[0].mxu0
    %v4824 = vadd.f32 0.0, %v4823
    %v4825 = vpop.f32.mrb[0].mxu0
    %v4826 = vadd.f32 0.0, %v4825
    %v4827 = vpop.f32.mrb[0].mxu0
    %v4828 = vadd.f32 0.0, %v4827
    %v4829 = vpop.f32.mrb[0].mxu0
    %v4830 = vadd.f32 0.0, %v4829
    %4831 = vmatprep.mubr.bf16.mxu0 %v3214
    %4832 = vmatmul.mubr.bf16.gmra.mrb[0].mxu0 %v3213
    %v4833 = vpop.f32.mrb[0].mxu0
    %v4834 = vadd.f32 0.0, %v4833
    %v4835 = vpop.f32.mrb[0].mxu0
    %v4836 = vadd.f32 0.0, %v4835
    %v4837 = vpop.f32.mrb[0].mxu0
    %v4838 = vadd.f32 0.0, %v4837
    %v4839 = vpop.f32.mrb[0].mxu0
    %v4840 = vadd.f32 0.0, %v4839
    %4841 = vdwg.mxu0
    %4842 = vmatprep.subr.bf16.mxu0 %v4472
    %4843 = vmatpush1.bf16.msra.mxu0 %v4471
    %4844 = vmatprep.subr.bf16.mxu0 %v4478
    %4845 = vmatpush1.bf16.msra.mxu0 %v4477
    %4846 = vmatprep.subr.bf16.mxu0 %v4484
    %4847 = vmatpush1.bf16.msra.mxu0 %v4483
    %4848 = vmatprep.subr.bf16.mxu0 %v4490
    %4849 = vmatpush1.bf16.msra.mxu0 %v4489
    %4850 = vmatprep.subr.bf16.mxu0 %v4496
    %4851 = vmatpush1.bf16.msra.mxu0 %v4495
    %4852 = vmatprep.subr.bf16.mxu0 %v4502
    %4853 = vmatpush1.bf16.msra.mxu0 %v4501
    %4854 = vmatprep.subr.bf16.mxu0 %v4508
    %4855 = vmatpush1.bf16.msra.mxu0 %v4507
    %4856 = vmatprep.subr.bf16.mxu0 %v4514
    %4857 = vmatpush1.bf16.msra.mxu0 %v4513
    %4858 = vmatprep.subr.bf16.mxu0 %v4520
    %4859 = vmatpush1.bf16.msra.mxu0 %v4519
    %4860 = vmatprep.subr.bf16.mxu0 %v4526
    %4861 = vmatpush1.bf16.msra.mxu0 %v4525
    %4862 = vmatprep.subr.bf16.mxu0 %v4532
    %4863 = vmatpush1.bf16.msra.mxu0 %v4531
    %4864 = vmatprep.subr.bf16.mxu0 %v4538
    %4865 = vmatpush1.bf16.msra.mxu0 %v4537
    %4866 = vmatprep.subr.bf16.mxu0 %v4544
    %4867 = vmatpush1.bf16.msra.mxu0 %v4543
    %4868 = vmatprep.subr.bf16.mxu0 %v4550
    %4869 = vmatpush1.bf16.msra.mxu0 %v4549
    %4870 = vmatprep.subr.bf16.mxu0 %v4556
    %4871 = vmatpush1.bf16.msra.mxu0 %v4555
    %4872 = vmatprep.subr.bf16.mxu0 %v4562
    %4873 = vmatpush1.bf16.msra.mxu0 %v4561
    %4874 = vmatprep.mubr.bf16.mxu0 %v3200
    %4875 = vmatmul.mubr.bf16.gmra.mrb[0].mxu0 %v3199
    %v4876 = vpop.f32.mrb[0].mxu0
    %v4877 = vadd.f32 %v4794, %v4876
    %v4878 = vpop.f32.mrb[0].mxu0
    %v4879 = vadd.f32 %v4796, %v4878
    %v4880 = vpop.f32.mrb[0].mxu0
    %v4881 = vadd.f32 %v4798, %v4880
    %v4882 = vpop.f32.mrb[0].mxu0
    %v4883 = vadd.f32 %v4800, %v4882
    %4884 = vmatprep.mubr.bf16.mxu0 %v3204
    %4885 = vmatmul.mubr.bf16.gmra.mrb[0].mxu0 %v3203
    %v4886 = vpop.f32.mrb[0].mxu0
    %v4887 = vadd.f32 %v4804, %v4886
    %v4888 = vpop.f32.mrb[0].mxu0
    %v4889 = vadd.f32 %v4806, %v4888
    %v4890 = vpop.f32.mrb[0].mxu0
    %v4891 = vadd.f32 %v4808, %v4890
    %v4892 = vpop.f32.mrb[0].mxu0
    %v4893 = vadd.f32 %v4810, %v4892
    %4894 = vmatprep.mubr.bf16.mxu0 %v3208
    %4895 = vmatmul.mubr.bf16.gmra.mrb[0].mxu0 %v3207
    %v4896 = vpop.f32.mrb[0].mxu0
    %v4897 = vadd.f32 %v4814, %v4896
    %v4898 = vpop.f32.mrb[0].mxu0
    %v4899 = vadd.f32 %v4816, %v4898
    %v4900 = vpop.f32.mrb[0].mxu0
    %v4901 = vadd.f32 %v4818, %v4900
    %v4902 = vpop.f32.mrb[0].mxu0
    %v4903 = vadd.f32 %v4820, %v4902
    %4904 = vmatprep.mubr.bf16.mxu0 %v3212
    %4905 = vmatmul.mubr.bf16.gmra.mrb[0].mxu0 %v3211
    %v4906 = vpop.f32.mrb[0].mxu0
    %v4907 = vadd.f32 %v4824, %v4906
    %v4908 = vpop.f32.mrb[0].mxu0
    %v4909 = vadd.f32 %v4826, %v4908
    %v4910 = vpop.f32.mrb[0].mxu0
    %v4911 = vadd.f32 %v4828, %v4910
    %v4912 = vpop.f32.mrb[0].mxu0
    %v4913 = vadd.f32 %v4830, %v4912
    %4914 = vmatprep.mubr.bf16.mxu0 %v3216
    %4915 = vmatmul.mubr.bf16.gmra.mrb[0].mxu0 %v3215
    %v4916 = vpop.f32.mrb[0].mxu0
    %v4917 = vadd.f32 %v4834, %v4916
    %v4918 = vpop.f32.mrb[0].mxu0
    %v4919 = vadd.f32 %v4836, %v4918
    %v4920 = vpop.f32.mrb[0].mxu0
    %v4921 = vadd.f32 %v4838, %v4920
    %v4922 = vpop.f32.mrb[0].mxu0
    %v4923 = vadd.f32 %v4840, %v4922
    %4924 = vdwg.mxu0
    %4925 = vmatprep.subr.bf16.mxu0 %v4378
    %4926 = vmatpush1.bf16.msra.mxu0 %v4377
    %4927 = vmatprep.subr.bf16.mxu0 %v4384
    %4928 = vmatpush1.bf16.msra.mxu0 %v4383
    %4929 = vmatprep.subr.bf16.mxu0 %v4390
    %4930 = vmatpush1.bf16.msra.mxu0 %v4389
    %4931 = vmatprep.subr.bf16.mxu0 %v4396
    %4932 = vmatpush1.bf16.msra.mxu0 %v4395
    %4933 = vmatprep.subr.bf16.mxu0 %v4402
    %4934 = vmatpush1.bf16.msra.mxu0 %v4401
    %4935 = vmatprep.subr.bf16.mxu0 %v4408
    %4936 = vmatpush1.bf16.msra.mxu0 %v4407
    %4937 = vmatprep.subr.bf16.mxu0 %v4414
    %4938 = vmatpush1.bf16.msra.mxu0 %v4413
    %4939 = vmatprep.subr.bf16.mxu0 %v4420
    %4940 = vmatpush1.bf16.msra.mxu0 %v4419
    %4941 = vmatprep.subr.bf16.mxu0 %v4426
    %4942 = vmatpush1.bf16.msra.mxu0 %v4425
    %4943 = vmatprep.subr.bf16.mxu0 %v4432
    %4944 = vmatpush1.bf16.msra.mxu0 %v4431
    %4945 = vmatprep.subr.bf16.mxu0 %v4438
    %4946 = vmatpush1.bf16.msra.mxu0 %v4437
    %4947 = vmatprep.subr.bf16.mxu0 %v4444
    %4948 = vmatpush1.bf16.msra.mxu0 %v4443
    %4949 = vmatprep.subr.bf16.mxu0 %v4450
    %4950 = vmatpush1.bf16.msra.mxu0 %v4449
    %4951 = vmatprep.subr.bf16.mxu0 %v4456
    %4952 = vmatpush1.bf16.msra.mxu0 %v4455
    %4953 = vmatprep.subr.bf16.mxu0 %v4462
    %4954 = vmatpush1.bf16.msra.mxu0 %v4461
    %4955 = vmatprep.subr.bf16.mxu0 %v4468
    %4956 = vmatpush1.bf16.msra.mxu0 %v4467
    %4957 = vmatprep.mubr.bf16.mxu0 %v3198
    %4958 = vmatmul.mubr.bf16.gmra.mrb[0].mxu0 %v3197
    %v4959 = vpop.f32.mrb[0].mxu0
    %v4960 = vadd.f32 0.0, %v4959
    %v4961 = vpop.f32.mrb[0].mxu0
    %v4962 = vadd.f32 0.0, %v4961
    %v4963 = vpop.f32.mrb[0].mxu0
    %v4964 = vadd.f32 0.0, %v4963
    %v4965 = vpop.f32.mrb[0].mxu0
    %v4966 = vadd.f32 0.0, %v4965
    %4967 = vmatprep.mubr.bf16.mxu0 %v3202
    %4968 = vmatmul.mubr.bf16.gmra.mrb[0].mxu0 %v3201
    %v4969 = vpop.f32.mrb[0].mxu0
    %v4970 = vadd.f32 0.0, %v4969
    %v4971 = vpop.f32.mrb[0].mxu0
    %v4972 = vadd.f32 0.0, %v4971
    %v4973 = vpop.f32.mrb[0].mxu0
    %v4974 = vadd.f32 0.0, %v4973
    %v4975 = vpop.f32.mrb[0].mxu0
    %v4976 = vadd.f32 0.0, %v4975
    %4977 = vmatprep.mubr.bf16.mxu0 %v3206
    %4978 = vmatmul.mubr.bf16.gmra.mrb[0].mxu0 %v3205
    %v4979 = vpop.f32.mrb[0].mxu0
    %v4980 = vadd.f32 0.0, %v4979
    %v4981 = vpop.f32.mrb[0].mxu0
    %v4982 = vadd.f32 0.0, %v4981
    %v4983 = vpop.f32.mrb[0].mxu0
    %v4984 = vadd.f32 0.0, %v4983
    %v4985 = vpop.f32.mrb[0].mxu0
    %v4986 = vadd.f32 0.0, %v4985
    %4987 = vmatprep.mubr.bf16.mxu0 %v3210
    %4988 = vmatmul.mubr.bf16.gmra.mrb[0].mxu0 %v3209
    %v4989 = vpop.f32.mrb[0].mxu0
    %v4990 = vadd.f32 0.0, %v4989
    %v4991 = vpop.f32.mrb[0].mxu0
    %v4992 = vadd.f32 0.0, %v4991
    %v4993 = vpop.f32.mrb[0].mxu0
    %v4994 = vadd.f32 0.0, %v4993
    %v4995 = vpop.f32.mrb[0].mxu0
    %v4996 = vadd.f32 0.0, %v4995
    %4997 = vmatprep.mubr.bf16.mxu0 %v3214
    %4998 = vmatmul.mubr.bf16.gmra.mrb[0].mxu0 %v3213
    %v4999 = vpop.f32.mrb[0].mxu0
    %v5000 = vadd.f32 0.0, %v4999
    %v5001 = vpop.f32.mrb[0].mxu0
    %v5002 = vadd.f32 0.0, %v5001
    %v5003 = vpop.f32.mrb[0].mxu0
    %v5004 = vadd.f32 0.0, %v5003
    %v5005 = vpop.f32.mrb[0].mxu0
    %v5006 = vadd.f32 0.0, %v5005
    %5007 = vdwg.mxu0
    %5008 = vmatprep.subr.bf16.mxu0 %v4474
    %5009 = vmatpush1.bf16.msra.mxu0 %v4473
    %5010 = vmatprep.subr.bf16.mxu0 %v4480
    %5011 = vmatpush1.bf16.msra.mxu0 %v4479
    %5012 = vmatprep.subr.bf16.mxu0 %v4486
    %5013 = vmatpush1.bf16.msra.mxu0 %v4485
    %5014 = vmatprep.subr.bf16.mxu0 %v4492
    %5015 = vmatpush1.bf16.msra.mxu0 %v4491
    %5016 = vmatprep.subr.bf16.mxu0 %v4498
    %5017 = vmatpush1.bf16.msra.mxu0 %v4497
    %5018 = vmatprep.subr.bf16.mxu0 %v4504
    %5019 = vmatpush1.bf16.msra.mxu0 %v4503
    %5020 = vmatprep.subr.bf16.mxu0 %v4510
    %5021 = vmatpush1.bf16.msra.mxu0 %v4509
    %5022 = vmatprep.subr.bf16.mxu0 %v4516
    %5023 = vmatpush1.bf16.msra.mxu0 %v4515
    %5024 = vmatprep.subr.bf16.mxu0 %v4522
    %5025 = vmatpush1.bf16.msra.mxu0 %v4521
    %5026 = vmatprep.subr.bf16.mxu0 %v4528
    %5027 = vmatpush1.bf16.msra.mxu0 %v4527
    %5028 = vmatprep.subr.bf16.mxu0 %v4534
    %5029 = vmatpush1.bf16.msra.mxu0 %v4533
    %5030 = vmatprep.subr.bf16.mxu0 %v4540
    %5031 = vmatpush1.bf16.msra.mxu0 %v4539
    %5032 = vmatprep.subr.bf16.mxu0 %v4546
    %5033 = vmatpush1.bf16.msra.mxu0 %v4545
    %5034 = vmatprep.subr.bf16.mxu0 %v4552
    %5035 = vmatpush1.bf16.msra.mxu0 %v4551
    %5036 = vmatprep.subr.bf16.mxu0 %v4558
    %5037 = vmatpush1.bf16.msra.mxu0 %v4557
    %5038 = vmatprep.subr.bf16.mxu0 %v4564
    %5039 = vmatpush1.bf16.msra.mxu0 %v4563
    %5040 = vmatprep.mubr.bf16.mxu0 %v3200
    %5041 = vmatmul.mubr.bf16.gmra.mrb[0].mxu0 %v3199
    %v5042 = vpop.f32.mrb[0].mxu0
    %v5043 = vadd.f32 %v4960, %v5042
    %v5044 = vpop.f32.mrb[0].mxu0
    %v5045 = vadd.f32 %v4962, %v5044
    %v5046 = vpop.f32.mrb[0].mxu0
    %v5047 = vadd.f32 %v4964, %v5046
    %v5048 = vpop.f32.mrb[0].mxu0
    %v5049 = vadd.f32 %v4966, %v5048
    %5050 = vmatprep.mubr.bf16.mxu0 %v3204
    %5051 = vmatmul.mubr.bf16.gmra.mrb[0].mxu0 %v3203
    %v5052 = vpop.f32.mrb[0].mxu0
    %v5053 = vadd.f32 %v4970, %v5052
    %v5054 = vpop.f32.mrb[0].mxu0
    %v5055 = vadd.f32 %v4972, %v5054
    %v5056 = vpop.f32.mrb[0].mxu0
    %v5057 = vadd.f32 %v4974, %v5056
    %v5058 = vpop.f32.mrb[0].mxu0
    %v5059 = vadd.f32 %v4976, %v5058
    %5060 = vmatprep.mubr.bf16.mxu0 %v3208
    %5061 = vmatmul.mubr.bf16.gmra.mrb[0].mxu0 %v3207
    %v5062 = vpop.f32.mrb[0].mxu0
    %v5063 = vadd.f32 %v4980, %v5062
    %v5064 = vpop.f32.mrb[0].mxu0
    %v5065 = vadd.f32 %v4982, %v5064
    %v5066 = vpop.f32.mrb[0].mxu0
    %v5067 = vadd.f32 %v4984, %v5066
    %v5068 = vpop.f32.mrb[0].mxu0
    %v5069 = vadd.f32 %v4986, %v5068
    %5070 = vmatprep.mubr.bf16.mxu0 %v3212
    %5071 = vmatmul.mubr.bf16.gmra.mrb[0].mxu0 %v3211
    %v5072 = vpop.f32.mrb[0].mxu0
    %v5073 = vadd.f32 %v4990, %v5072
    %v5074 = vpop.f32.mrb[0].mxu0
    %v5075 = vadd.f32 %v4992, %v5074
    %v5076 = vpop.f32.mrb[0].mxu0
    %v5077 = vadd.f32 %v4994, %v5076
    %v5078 = vpop.f32.mrb[0].mxu0
    %v5079 = vadd.f32 %v4996, %v5078
    %5080 = vmatprep.mubr.bf16.mxu0 %v3216
    %5081 = vmatmul.mubr.bf16.gmra.mrb[0].mxu0 %v3215
    %v5082 = vpop.f32.mrb[0].mxu0
    %v5083 = vadd.f32 %v5000, %v5082
    %v5084 = vpop.f32.mrb[0].mxu0
    %v5085 = vadd.f32 %v5002, %v5084
    %v5086 = vpop.f32.mrb[0].mxu0
    %v5087 = vadd.f32 %v5004, %v5086
    %v5088 = vpop.f32.mrb[0].mxu0
    %v5089 = vadd.f32 %v5006, %v5088
    %5090 = vdwg.mxu0
    %5091 = vmatprep.subr.bf16.mxu0 %v4380
    %5092 = vmatpush1.bf16.msra.mxu0 %v4379
    %5093 = vmatprep.subr.bf16.mxu0 %v4386
    %5094 = vmatpush1.bf16.msra.mxu0 %v4385
    %5095 = vmatprep.subr.bf16.mxu0 %v4392
    %5096 = vmatpush1.bf16.msra.mxu0 %v4391
    %5097 = vmatprep.subr.bf16.mxu0 %v4398
    %5098 = vmatpush1.bf16.msra.mxu0 %v4397
    %5099 = vmatprep.subr.bf16.mxu0 %v4404
    %5100 = vmatpush1.bf16.msra.mxu0 %v4403
    %5101 = vmatprep.subr.bf16.mxu0 %v4410
    %5102 = vmatpush1.bf16.msra.mxu0 %v4409
    %5103 = vmatprep.subr.bf16.mxu0 %v4416
    %5104 = vmatpush1.bf16.msra.mxu0 %v4415
    %5105 = vmatprep.subr.bf16.mxu0 %v4422
    %5106 = vmatpush1.bf16.msra.mxu0 %v4421
    %5107 = vmatprep.subr.bf16.mxu0 %v4428
    %5108 = vmatpush1.bf16.msra.mxu0 %v4427
    %5109 = vmatprep.subr.bf16.mxu0 %v4434
    %5110 = vmatpush1.bf16.msra.mxu0 %v4433
    %5111 = vmatprep.subr.bf16.mxu0 %v4440
    %5112 = vmatpush1.bf16.msra.mxu0 %v4439
    %5113 = vmatprep.subr.bf16.mxu0 %v4446
    %5114 = vmatpush1.bf16.msra.mxu0 %v4445
    %5115 = vmatprep.subr.bf16.mxu0 %v4452
    %5116 = vmatpush1.bf16.msra.mxu0 %v4451
    %5117 = vmatprep.subr.bf16.mxu0 %v4458
    %5118 = vmatpush1.bf16.msra.mxu0 %v4457
    %5119 = vmatprep.subr.bf16.mxu0 %v4464
    %5120 = vmatpush1.bf16.msra.mxu0 %v4463
    %5121 = vmatprep.subr.bf16.mxu0 %v4470
    %5122 = vmatpush1.bf16.msra.mxu0 %v4469
    %5123 = vmatprep.mubr.bf16.mxu0 %v3198
    %5124 = vmatmul.mubr.bf16.gmra.mrb[0].mxu0 %v3197
    %v5125 = vpop.f32.mrb[0].mxu0
    %v5126 = vadd.f32 0.0, %v5125
    %v5127 = vpop.f32.mrb[0].mxu0
    %v5128 = vadd.f32 0.0, %v5127
    %v5129 = vpop.f32.mrb[0].mxu0
    %v5130 = vadd.f32 0.0, %v5129
    %v5131 = vpop.f32.mrb[0].mxu0
    %v5132 = vadd.f32 0.0, %v5131
    %5133 = vmatprep.mubr.bf16.mxu0 %v3202
    %5134 = vmatmul.mubr.bf16.gmra.mrb[0].mxu0 %v3201
    %v5135 = vpop.f32.mrb[0].mxu0
    %v5136 = vadd.f32 0.0, %v5135
    %v5137 = vpop.f32.mrb[0].mxu0
    %v5138 = vadd.f32 0.0, %v5137
    %v5139 = vpop.f32.mrb[0].mxu0
    %v5140 = vadd.f32 0.0, %v5139
    %v5141 = vpop.f32.mrb[0].mxu0
    %v5142 = vadd.f32 0.0, %v5141
    %5143 = vmatprep.mubr.bf16.mxu0 %v3206
    %5144 = vmatmul.mubr.bf16.gmra.mrb[0].mxu0 %v3205
    %v5145 = vpop.f32.mrb[0].mxu0
    %v5146 = vadd.f32 0.0, %v5145
    %v5147 = vpop.f32.mrb[0].mxu0
    %v5148 = vadd.f32 0.0, %v5147
    %v5149 = vpop.f32.mrb[0].mxu0
    %v5150 = vadd.f32 0.0, %v5149
    %v5151 = vpop.f32.mrb[0].mxu0
    %v5152 = vadd.f32 0.0, %v5151
    %5153 = vmatprep.mubr.bf16.mxu0 %v3210
    %5154 = vmatmul.mubr.bf16.gmra.mrb[0].mxu0 %v3209
    %v5155 = vpop.f32.mrb[0].mxu0
    %v5156 = vadd.f32 0.0, %v5155
    %v5157 = vpop.f32.mrb[0].mxu0
    %v5158 = vadd.f32 0.0, %v5157
    %v5159 = vpop.f32.mrb[0].mxu0
    %v5160 = vadd.f32 0.0, %v5159
    %v5161 = vpop.f32.mrb[0].mxu0
    %v5162 = vadd.f32 0.0, %v5161
    %5163 = vmatprep.mubr.bf16.mxu0 %v3214
    %5164 = vmatmul.mubr.bf16.gmra.mrb[0].mxu0 %v3213
    %v5165 = vpop.f32.mrb[0].mxu0
    %v5166 = vadd.f32 0.0, %v5165
    %v5167 = vpop.f32.mrb[0].mxu0
    %v5168 = vadd.f32 0.0, %v5167
    %v5169 = vpop.f32.mrb[0].mxu0
    %v5170 = vadd.f32 0.0, %v5169
    %v5171 = vpop.f32.mrb[0].mxu0
    %v5172 = vadd.f32 0.0, %v5171
    %5173 = vdwg.mxu0
    %5174 = vmatprep.subr.bf16.mxu0 %v4476
    %5175 = vmatpush1.bf16.msra.mxu0 %v4475
    %5176 = vmatprep.subr.bf16.mxu0 %v4482
    %5177 = vmatpush1.bf16.msra.mxu0 %v4481
    %5178 = vmatprep.subr.bf16.mxu0 %v4488
    %5179 = vmatpush1.bf16.msra.mxu0 %v4487
    %5180 = vmatprep.subr.bf16.mxu0 %v4494
    %5181 = vmatpush1.bf16.msra.mxu0 %v4493
    %5182 = vmatprep.subr.bf16.mxu0 %v4500
    %5183 = vmatpush1.bf16.msra.mxu0 %v4499
    %5184 = vmatprep.subr.bf16.mxu0 %v4506
    %5185 = vmatpush1.bf16.msra.mxu0 %v4505
    %5186 = vmatprep.subr.bf16.mxu0 %v4512
    %5187 = vmatpush1.bf16.msra.mxu0 %v4511
    %5188 = vmatprep.subr.bf16.mxu0 %v4518
    %5189 = vmatpush1.bf16.msra.mxu0 %v4517
    %5190 = vmatprep.subr.bf16.mxu0 %v4524
    %5191 = vmatpush1.bf16.msra.mxu0 %v4523
    %5192 = vmatprep.subr.bf16.mxu0 %v4530
    %5193 = vmatpush1.bf16.msra.mxu0 %v4529
    %5194 = vmatprep.subr.bf16.mxu0 %v4536
    %5195 = vmatpush1.bf16.msra.mxu0 %v4535
    %5196 = vmatprep.subr.bf16.mxu0 %v4542
    %5197 = vmatpush1.bf16.msra.mxu0 %v4541
    %5198 = vmatprep.subr.bf16.mxu0 %v4548
    %5199 = vmatpush1.bf16.msra.mxu0 %v4547
    %5200 = vmatprep.subr.bf16.mxu0 %v4554
    %5201 = vmatpush1.bf16.msra.mxu0 %v4553
    %5202 = vmatprep.subr.bf16.mxu0 %v4560
    %5203 = vmatpush1.bf16.msra.mxu0 %v4559
    %5204 = vmatprep.subr.bf16.mxu0 %v4566
    %5205 = vmatpush1.bf16.msra.mxu0 %v4565
    %5206 = vmatprep.mubr.bf16.mxu0 %v3200
    %5207 = vmatmul.mubr.bf16.gmra.mrb[0].mxu0 %v3199
    %v5208 = vpop.f32.mrb[0].mxu0
    %v5209 = vadd.f32 %v5126, %v5208
    %v5210 = vpop.f32.mrb[0].mxu0
    %v5211 = vadd.f32 %v5128, %v5210
    %v5212 = vpop.f32.mrb[0].mxu0
    %v5213 = vadd.f32 %v5130, %v5212
    %v5214 = vpop.f32.mrb[0].mxu0
    %v5215 = vadd.f32 %v5132, %v5214
    %5216 = vmatprep.mubr.bf16.mxu0 %v3204
    %5217 = vmatmul.mubr.bf16.gmra.mrb[0].mxu0 %v3203
    %v5218 = vpop.f32.mrb[0].mxu0
    %v5219 = vadd.f32 %v5136, %v5218
    %v5220 = vpop.f32.mrb[0].mxu0
    %v5221 = vadd.f32 %v5138, %v5220
    %v5222 = vpop.f32.mrb[0].mxu0
    %v5223 = vadd.f32 %v5140, %v5222
    %v5224 = vpop.f32.mrb[0].mxu0
    %v5225 = vadd.f32 %v5142, %v5224
    %5226 = vmatprep.mubr.bf16.mxu0 %v3208
    %5227 = vmatmul.mubr.bf16.gmra.mrb[0].mxu0 %v3207
    %v5228 = vpop.f32.mrb[0].mxu0
    %v5229 = vadd.f32 %v5146, %v5228
    %v5230 = vpop.f32.mrb[0].mxu0
    %v5231 = vadd.f32 %v5148, %v5230
    %v5232 = vpop.f32.mrb[0].mxu0
    %v5233 = vadd.f32 %v5150, %v5232
    %v5234 = vpop.f32.mrb[0].mxu0
    %v5235 = vadd.f32 %v5152, %v5234
    %5236 = vmatprep.mubr.bf16.mxu0 %v3212
    %5237 = vmatmul.mubr.bf16.gmra.mrb[0].mxu0 %v3211
    %v5238 = vpop.f32.mrb[0].mxu0
    %v5239 = vadd.f32 %v5156, %v5238
    %v5240 = vpop.f32.mrb[0].mxu0
    %v5241 = vadd.f32 %v5158, %v5240
    %v5242 = vpop.f32.mrb[0].mxu0
    %v5243 = vadd.f32 %v5160, %v5242
    %v5244 = vpop.f32.mrb[0].mxu0
    %v5245 = vadd.f32 %v5162, %v5244
    %5246 = vmatprep.mubr.bf16.mxu0 %v3216
    %5247 = vmatmul.mubr.bf16.gmra.mrb[0].mxu0 %v3215
    %v5248 = vpop.f32.mrb[0].mxu0
    %v5249 = vadd.f32 %v5166, %v5248
    %v5250 = vpop.f32.mrb[0].mxu0
    %v5251 = vadd.f32 %v5168, %v5250
    %v5252 = vpop.f32.mrb[0].mxu0
    %v5253 = vadd.f32 %v5170, %v5252
    %v5254 = vpop.f32.mrb[0].mxu0
    %v5255 = vadd.f32 %v5172, %v5254
    %5256 = vdwg.mxu0
    %v5449 = vunpack.c.l.b16 %v3221
    %v5450 = vunpack.c.h.b16 %v3221
    %v5451 = vunpack.c.l.b16 %v3222
    %v5452 = vunpack.c.h.b16 %v3222
    %v5453 = vunpack.c.l.b16 %v3223
    %v5454 = vunpack.c.h.b16 %v3223
    %v5455 = vunpack.c.l.b16 %v3224
    %v5456 = vunpack.c.h.b16 %v3224
    %v5457 = vunpack.c.l.b16 %v3225
    %v5458 = vunpack.c.h.b16 %v3225
    %v5459 = vunpack.c.l.b16 %v3226
    %v5460 = vunpack.c.h.b16 %v3226
    %v5461 = vunpack.c.l.b16 %v3227
    %v5462 = vunpack.c.h.b16 %v3227
    %v5463 = vunpack.c.l.b16 %v3228
    %v5464 = vunpack.c.h.b16 %v3228
    %v5465 = vunpack.c.l.b16 %v3229
    %v5466 = vunpack.c.h.b16 %v3229
    %v5467 = vunpack.c.l.b16 %v3230
    %v5468 = vunpack.c.h.b16 %v3230
    %v5469 = vunpack.c.l.b16 %v3231
    %v5470 = vunpack.c.h.b16 %v3231
    %v5471 = vunpack.c.l.b16 %v3232
    %v5472 = vunpack.c.h.b16 %v3232
    %v5473 = vunpack.c.l.b16 %v3233
    %v5474 = vunpack.c.h.b16 %v3233
    %v5475 = vunpack.c.l.b16 %v3234
    %v5476 = vunpack.c.h.b16 %v3234
    %v5477 = vunpack.c.l.b16 %v3235
    %v5478 = vunpack.c.h.b16 %v3235
    %v5479 = vunpack.c.l.b16 %v3236
    %v5480 = vunpack.c.h.b16 %v3236
    %v5481 = vunpack.c.l.b16 %v3237
    %v5482 = vunpack.c.h.b16 %v3237
    %v5483 = vunpack.c.l.b16 %v3238
    %v5484 = vunpack.c.h.b16 %v3238
    %v5485 = vunpack.c.l.b16 %v3239
    %v5486 = vunpack.c.h.b16 %v3239
    %v5487 = vunpack.c.l.b16 %v3240
    %v5488 = vunpack.c.h.b16 %v3240
    %v5489 = vunpack.c.l.b16 %v3241
    %v5490 = vunpack.c.h.b16 %v3241
    %v5491 = vunpack.c.l.b16 %v3242
    %v5492 = vunpack.c.h.b16 %v3242
    %v5493 = vunpack.c.l.b16 %v3243
    %v5494 = vunpack.c.h.b16 %v3243
    %v5495 = vunpack.c.l.b16 %v3244
    %v5496 = vunpack.c.h.b16 %v3244
    %v5497 = vunpack.c.l.b16 %v3245
    %v5498 = vunpack.c.h.b16 %v3245
    %v5499 = vunpack.c.l.b16 %v3246
    %v5500 = vunpack.c.h.b16 %v3246
    %v5501 = vunpack.c.l.b16 %v3247
    %v5502 = vunpack.c.h.b16 %v3247
    %v5503 = vunpack.c.l.b16 %v3248
    %v5504 = vunpack.c.h.b16 %v3248
    %v5505 = vunpack.c.l.b16 %v3249
    %v5506 = vunpack.c.h.b16 %v3249
    %v5507 = vunpack.c.l.b16 %v3250
    %v5508 = vunpack.c.h.b16 %v3250
    %v5509 = vunpack.c.l.b16 %v3251
    %v5510 = vunpack.c.h.b16 %v3251
    %v5511 = vunpack.c.l.b16 %v3252
    %v5512 = vunpack.c.h.b16 %v3252
    %v5513 = vunpack.c.l.b16 %v3253
    %v5514 = vunpack.c.h.b16 %v3253
    %v5515 = vunpack.c.l.b16 %v3254
    %v5516 = vunpack.c.h.b16 %v3254
    %v5517 = vunpack.c.l.b16 %v3255
    %v5518 = vunpack.c.h.b16 %v3255
    %v5519 = vunpack.c.l.b16 %v3256
    %v5520 = vunpack.c.h.b16 %v3256
    %v5521 = vunpack.c.l.b16 %v3257
    %v5522 = vunpack.c.h.b16 %v3257
    %v5523 = vunpack.c.l.b16 %v3258
    %v5524 = vunpack.c.h.b16 %v3258
    %v5525 = vunpack.c.l.b16 %v3259
    %v5526 = vunpack.c.h.b16 %v3259
    %v5527 = vunpack.c.l.b16 %v3260
    %v5528 = vunpack.c.h.b16 %v3260
    %v5529 = vunpack.c.l.b16 %v3261
    %v5530 = vunpack.c.h.b16 %v3261
    %v5531 = vunpack.c.l.b16 %v3262
    %v5532 = vunpack.c.h.b16 %v3262
    %v5533 = vunpack.c.l.b16 %v3263
    %v5534 = vunpack.c.h.b16 %v3263
    %v5535 = vunpack.c.l.b16 %v3264
    %v5536 = vunpack.c.h.b16 %v3264
    %v5537 = vunpack.c.l.b16 %v3265
    %v5538 = vunpack.c.h.b16 %v3265
    %v5539 = vunpack.c.l.b16 %v3266
    %v5540 = vunpack.c.h.b16 %v3266
    %v5541 = vunpack.c.l.b16 %v3267
    %v5542 = vunpack.c.h.b16 %v3267
    %v5543 = vunpack.c.l.b16 %v3268
    %v5544 = vunpack.c.h.b16 %v3268
    %v5545 = vunpack.c.l.b16 %v3269
    %v5546 = vunpack.c.h.b16 %v3269
    %v5547 = vunpack.c.l.b16 %v3270
    %v5548 = vunpack.c.h.b16 %v3270
    %v5549 = vunpack.c.l.b16 %v3271
    %v5550 = vunpack.c.h.b16 %v3271
    %v5551 = vunpack.c.l.b16 %v3272
    %v5552 = vunpack.c.h.b16 %v3272
    %v5553 = vunpack.c.l.b16 %v3273
    %v5554 = vunpack.c.h.b16 %v3273
    %v5555 = vunpack.c.l.b16 %v3274
    %v5556 = vunpack.c.h.b16 %v3274
    %v5557 = vunpack.c.l.b16 %v3275
    %v5558 = vunpack.c.h.b16 %v3275
    %v5559 = vunpack.c.l.b16 %v3276
    %v5560 = vunpack.c.h.b16 %v3276
    %v5561 = vunpack.c.l.b16 %v3277
    %v5562 = vunpack.c.h.b16 %v3277
    %v5563 = vunpack.c.l.b16 %v3278
    %v5564 = vunpack.c.h.b16 %v3278
    %v5565 = vunpack.c.l.b16 %v3279
    %v5566 = vunpack.c.h.b16 %v3279
    %v5567 = vunpack.c.l.b16 %v3280
    %v5568 = vunpack.c.h.b16 %v3280
    %v5569 = vunpack.c.l.b16 %v3281
    %v5570 = vunpack.c.h.b16 %v3281
    %v5571 = vunpack.c.l.b16 %v3282
    %v5572 = vunpack.c.h.b16 %v3282
    %v5573 = vunpack.c.l.b16 %v3283
    %v5574 = vunpack.c.h.b16 %v3283
    %v5575 = vunpack.c.l.b16 %v3284
    %v5576 = vunpack.c.h.b16 %v3284
    %v5577 = vunpack.c.l.b16 %v3285
    %v5578 = vunpack.c.h.b16 %v3285
    %v5579 = vunpack.c.l.b16 %v3286
    %v5580 = vunpack.c.h.b16 %v3286
    %v5581 = vunpack.c.l.b16 %v3287
    %v5582 = vunpack.c.h.b16 %v3287
    %v5583 = vunpack.c.l.b16 %v3288
    %v5584 = vunpack.c.h.b16 %v3288
    %v5585 = vunpack.c.l.b16 %v3289
    %v5586 = vunpack.c.h.b16 %v3289
    %v5587 = vunpack.c.l.b16 %v3290
    %v5588 = vunpack.c.h.b16 %v3290
    %v5589 = vunpack.c.l.b16 %v3291
    %v5590 = vunpack.c.h.b16 %v3291
    %v5591 = vunpack.c.l.b16 %v3292
    %v5592 = vunpack.c.h.b16 %v3292
    %v5593 = vunpack.c.l.b16 %v3293
    %v5594 = vunpack.c.h.b16 %v3293
    %v5595 = vunpack.c.l.b16 %v3294
    %v5596 = vunpack.c.h.b16 %v3294
    %v5597 = vunpack.c.l.b16 %v3295
    %v5598 = vunpack.c.h.b16 %v3295
    %v5599 = vunpack.c.l.b16 %v3296
    %v5600 = vunpack.c.h.b16 %v3296
    %v5601 = vunpack.c.l.b16 %v3297
    %v5602 = vunpack.c.h.b16 %v3297
    %v5603 = vunpack.c.l.b16 %v3298
    %v5604 = vunpack.c.h.b16 %v3298
    %v5605 = vunpack.c.l.b16 %v3299
    %v5606 = vunpack.c.h.b16 %v3299
    %v5607 = vunpack.c.l.b16 %v3300
    %v5608 = vunpack.c.h.b16 %v3300
    %v5609 = vunpack.c.l.b16 %v3301
    %v5610 = vunpack.c.h.b16 %v3301
    %v5611 = vunpack.c.l.b16 %v3302
    %v5612 = vunpack.c.h.b16 %v3302
    %v5613 = vunpack.c.l.b16 %v3303
    %v5614 = vunpack.c.h.b16 %v3303
    %v5615 = vunpack.c.l.b16 %v3304
    %v5616 = vunpack.c.h.b16 %v3304
    %v5617 = vunpack.c.l.b16 %v3305
    %v5618 = vunpack.c.h.b16 %v3305
    %v5619 = vunpack.c.l.b16 %v3306
    %v5620 = vunpack.c.h.b16 %v3306
    %v5621 = vunpack.c.l.b16 %v3307
    %v5622 = vunpack.c.h.b16 %v3307
    %v5623 = vunpack.c.l.b16 %v3308
    %v5624 = vunpack.c.h.b16 %v3308
    %v5625 = vunpack.c.l.b16 %v3309
    %v5626 = vunpack.c.h.b16 %v3309
    %v5627 = vunpack.c.l.b16 %v3310
    %v5628 = vunpack.c.h.b16 %v3310
    %v5629 = vunpack.c.l.b16 %v3311
    %v5630 = vunpack.c.h.b16 %v3311
    %v5631 = vunpack.c.l.b16 %v3312
    %v5632 = vunpack.c.h.b16 %v3312
    %v5633 = vunpack.c.l.b16 %v3313
    %v5634 = vunpack.c.h.b16 %v3313
    %v5635 = vunpack.c.l.b16 %v3314
    %v5636 = vunpack.c.h.b16 %v3314
    %v5637 = vunpack.c.l.b16 %v3315
    %v5638 = vunpack.c.h.b16 %v3315
    %v5639 = vunpack.c.l.b16 %v3316
    %v5640 = vunpack.c.h.b16 %v3316
    %v5641 = vunpack.c.l.b16 %v3317
    %v5642 = vunpack.c.h.b16 %v3317
    %v5643 = vunpack.c.l.b16 %v3318
    %v5644 = vunpack.c.h.b16 %v3318
    %v5645 = vunpack.c.l.b16 %v3319
    %v5646 = vunpack.c.h.b16 %v3319
    %v5647 = vunpack.c.l.b16 %v3320
    %v5648 = vunpack.c.h.b16 %v3320
    %v5649 = vunpack.c.l.b16 %v3321
    %v5650 = vunpack.c.h.b16 %v3321
    %v5651 = vunpack.c.l.b16 %v3322
    %v5652 = vunpack.c.h.b16 %v3322
    %v5653 = vunpack.c.l.b16 %v3323
    %v5654 = vunpack.c.h.b16 %v3323
    %v5655 = vunpack.c.l.b16 %v3324
    %v5656 = vunpack.c.h.b16 %v3324
    %v5657 = vunpack.c.l.b16 %v3325
    %v5658 = vunpack.c.h.b16 %v3325
    %v5659 = vunpack.c.l.b16 %v3326
    %v5660 = vunpack.c.h.b16 %v3326
    %v5661 = vunpack.c.l.b16 %v3327
    %v5662 = vunpack.c.h.b16 %v3327
    %v5663 = vunpack.c.l.b16 %v3328
    %v5664 = vunpack.c.h.b16 %v3328
    %v5665 = vunpack.c.l.b16 %v3329
    %v5666 = vunpack.c.h.b16 %v3329
    %v5667 = vunpack.c.l.b16 %v3330
    %v5668 = vunpack.c.h.b16 %v3330
    %v5669 = vunpack.c.l.b16 %v3331
    %v5670 = vunpack.c.h.b16 %v3331
    %v5671 = vunpack.c.l.b16 %v3332
    %v5672 = vunpack.c.h.b16 %v3332
    %v5673 = vunpack.c.l.b16 %v3333
    %v5674 = vunpack.c.h.b16 %v3333
    %v5675 = vunpack.c.l.b16 %v3334
    %v5676 = vunpack.c.h.b16 %v3334
    %v5677 = vunpack.c.l.b16 %v3335
    %v5678 = vunpack.c.h.b16 %v3335
    %v5679 = vunpack.c.l.b16 %v3336
    %v5680 = vunpack.c.h.b16 %v3336
    %v5681 = vunpack.c.l.b16 %v3337
    %v5682 = vunpack.c.h.b16 %v3337
    %v5683 = vunpack.c.l.b16 %v3338
    %v5684 = vunpack.c.h.b16 %v3338
    %v5685 = vunpack.c.l.b16 %v3339
    %v5686 = vunpack.c.h.b16 %v3339
    %v5687 = vunpack.c.l.b16 %v3340
    %v5688 = vunpack.c.h.b16 %v3340
    %v5689 = vunpack.c.l.b16 %v3341
    %v5690 = vunpack.c.h.b16 %v3341
    %v5691 = vunpack.c.l.b16 %v3342
    %v5692 = vunpack.c.h.b16 %v3342
    %v5693 = vunpack.c.l.b16 %v3343
    %v5694 = vunpack.c.h.b16 %v3343
    %v5695 = vunpack.c.l.b16 %v3344
    %v5696 = vunpack.c.h.b16 %v3344
    %v5697 = vunpack.c.l.b16 %v3345
    %v5698 = vunpack.c.h.b16 %v3345
    %v5699 = vunpack.c.l.b16 %v3346
    %v5700 = vunpack.c.h.b16 %v3346
    %v5701 = vunpack.c.l.b16 %v3347
    %v5702 = vunpack.c.h.b16 %v3347
    %v5703 = vunpack.c.l.b16 %v3348
    %v5704 = vunpack.c.h.b16 %v3348
    %v5705 = vunpack.c.l.b16 %v3349
    %v5706 = vunpack.c.h.b16 %v3349
    %v5707 = vunpack.c.l.b16 %v3350
    %v5708 = vunpack.c.h.b16 %v3350
    %v5709 = vunpack.c.l.b16 %v3351
    %v5710 = vunpack.c.h.b16 %v3351
    %v5711 = vunpack.c.l.b16 %v3352
    %v5712 = vunpack.c.h.b16 %v3352
    %v5713 = vunpack.c.l.b16 %v3353
    %v5714 = vunpack.c.h.b16 %v3353
    %v5715 = vunpack.c.l.b16 %v3354
    %v5716 = vunpack.c.h.b16 %v3354
    %v5717 = vunpack.c.l.b16 %v3355
    %v5718 = vunpack.c.h.b16 %v3355
    %v5719 = vunpack.c.l.b16 %v3356
    %v5720 = vunpack.c.h.b16 %v3356
    %v5721 = vunpack.c.l.b16 %v3357
    %v5722 = vunpack.c.h.b16 %v3357
    %v5723 = vunpack.c.l.b16 %v3358
    %v5724 = vunpack.c.h.b16 %v3358
    %v5725 = vunpack.c.l.b16 %v3359
    %v5726 = vunpack.c.h.b16 %v3359
    %v5727 = vunpack.c.l.b16 %v3360
    %v5728 = vunpack.c.h.b16 %v3360
    %v5729 = vunpack.c.l.b16 %v3361
    %v5730 = vunpack.c.h.b16 %v3361
    %v5731 = vunpack.c.l.b16 %v3362
    %v5732 = vunpack.c.h.b16 %v3362
    %v5733 = vunpack.c.l.b16 %v3363
    %v5734 = vunpack.c.h.b16 %v3363
    %v5735 = vunpack.c.l.b16 %v3364
    %v5736 = vunpack.c.h.b16 %v3364
    %v5737 = vunpack.c.l.b16 %v3365
    %v5738 = vunpack.c.h.b16 %v3365
    %v5739 = vunpack.c.l.b16 %v3366
    %v5740 = vunpack.c.h.b16 %v3366
    %v5741 = vunpack.c.l.b16 %v3367
    %v5742 = vunpack.c.h.b16 %v3367
    %v5743 = vunpack.c.l.b16 %v3368
    %v5744 = vunpack.c.h.b16 %v3368
    %v5745 = vunpack.c.l.b16 %v3369
    %v5746 = vunpack.c.h.b16 %v3369
    %v5747 = vunpack.c.l.b16 %v3370
    %v5748 = vunpack.c.h.b16 %v3370
    %v5749 = vunpack.c.l.b16 %v3371
    %v5750 = vunpack.c.h.b16 %v3371
    %v5751 = vunpack.c.l.b16 %v3372
    %v5752 = vunpack.c.h.b16 %v3372
    %v5753 = vunpack.c.l.b16 %v3373
    %v5754 = vunpack.c.h.b16 %v3373
    %v5755 = vunpack.c.l.b16 %v3374
    %v5756 = vunpack.c.h.b16 %v3374
    %v5757 = vunpack.c.l.b16 %v3375
    %v5758 = vunpack.c.h.b16 %v3375
    %v5759 = vunpack.c.l.b16 %v3376
    %v5760 = vunpack.c.h.b16 %v3376
    %v5761 = vunpack.c.l.b16 %v3377
    %v5762 = vunpack.c.h.b16 %v3377
    %v5763 = vunpack.c.l.b16 %v3378
    %v5764 = vunpack.c.h.b16 %v3378
    %v5765 = vunpack.c.l.b16 %v3379
    %v5766 = vunpack.c.h.b16 %v3379
    %v5767 = vunpack.c.l.b16 %v3380
    %v5768 = vunpack.c.h.b16 %v3380
    %v5769 = vunpack.c.l.b16 %v3381
    %v5770 = vunpack.c.h.b16 %v3381
    %v5771 = vunpack.c.l.b16 %v3382
    %v5772 = vunpack.c.h.b16 %v3382
    %v5773 = vunpack.c.l.b16 %v3383
    %v5774 = vunpack.c.h.b16 %v3383
    %v5775 = vunpack.c.l.b16 %v3384
    %v5776 = vunpack.c.h.b16 %v3384
    %v5777 = vunpack.c.l.b16 %v3385
    %v5778 = vunpack.c.h.b16 %v3385
    %v5779 = vunpack.c.l.b16 %v3386
    %v5780 = vunpack.c.h.b16 %v3386
    %v5781 = vunpack.c.l.b16 %v3387
    %v5782 = vunpack.c.h.b16 %v3387
    %v5783 = vunpack.c.l.b16 %v3388
    %v5784 = vunpack.c.h.b16 %v3388
    %v5785 = vunpack.c.l.b16 %v3389
    %v5786 = vunpack.c.h.b16 %v3389
    %v5787 = vunpack.c.l.b16 %v3390
    %v5788 = vunpack.c.h.b16 %v3390
    %v5789 = vunpack.c.l.b16 %v3391
    %v5790 = vunpack.c.h.b16 %v3391
    %v5791 = vunpack.c.l.b16 %v3392
    %v5792 = vunpack.c.h.b16 %v3392
    %v5793 = vunpack.c.l.b16 %v3393
    %v5794 = vunpack.c.h.b16 %v3393
    %v5795 = vunpack.c.l.b16 %v3394
    %v5796 = vunpack.c.h.b16 %v3394
    %v5797 = vunpack.c.l.b16 %v3395
    %v5798 = vunpack.c.h.b16 %v3395
    %v5799 = vunpack.c.l.b16 %v3396
    %v5800 = vunpack.c.h.b16 %v3396
    %v5801 = vunpack.c.l.b16 %v3397
    %v5802 = vunpack.c.h.b16 %v3397
    %v5803 = vunpack.c.l.b16 %v3398
    %v5804 = vunpack.c.h.b16 %v3398
    %v5805 = vunpack.c.l.b16 %v3399
    %v5806 = vunpack.c.h.b16 %v3399
    %v5807 = vunpack.c.l.b16 %v3400
    %v5808 = vunpack.c.h.b16 %v3400
    %v5809 = vunpack.c.l.b16 %v3401
    %v5810 = vunpack.c.h.b16 %v3401
    %v5811 = vunpack.c.l.b16 %v3402
    %v5812 = vunpack.c.h.b16 %v3402
    %v5813 = vunpack.c.l.b16 %v3403
    %v5814 = vunpack.c.h.b16 %v3403
    %v5815 = vunpack.c.l.b16 %v3404
    %v5816 = vunpack.c.h.b16 %v3404
    %v5817 = vunpack.c.l.b16 %v3405
    %v5818 = vunpack.c.h.b16 %v3405
    %v5819 = vunpack.c.l.b16 %v3406
    %v5820 = vunpack.c.h.b16 %v3406
    %v5821 = vunpack.c.l.b16 %v3407
    %v5822 = vunpack.c.h.b16 %v3407
    %v5823 = vunpack.c.l.b16 %v3408
    %v5824 = vunpack.c.h.b16 %v3408
    %v5825 = vunpack.c.l.b16 %v3409
    %v5826 = vunpack.c.h.b16 %v3409
    %v5827 = vunpack.c.l.b16 %v3410
    %v5828 = vunpack.c.h.b16 %v3410
    %v5829 = vunpack.c.l.b16 %v3411
    %v5830 = vunpack.c.h.b16 %v3411
    %v5831 = vunpack.c.l.b16 %v3412
    %v5832 = vunpack.c.h.b16 %v3412
    %v5833 = vpack.c.b16 %v5455, %v5449
    %v5834 = vpack.c.b16 %v5456, %v5450
    %v5835 = vpack.c.b16 %v5457, %v5451
    %v5836 = vpack.c.b16 %v5458, %v5452
    %v5837 = vpack.c.b16 %v5459, %v5453
    %v5838 = vpack.c.b16 %v5460, %v5454
    %v5839 = vpack.c.b16 %v5467, %v5461
    %v5840 = vpack.c.b16 %v5468, %v5462
    %v5841 = vpack.c.b16 %v5469, %v5463
    %v5842 = vpack.c.b16 %v5470, %v5464
    %v5843 = vpack.c.b16 %v5471, %v5465
    %v5844 = vpack.c.b16 %v5472, %v5466
    %v5845 = vpack.c.b16 %v5479, %v5473
    %v5846 = vpack.c.b16 %v5480, %v5474
    %v5847 = vpack.c.b16 %v5481, %v5475
    %v5848 = vpack.c.b16 %v5482, %v5476
    %v5849 = vpack.c.b16 %v5483, %v5477
    %v5850 = vpack.c.b16 %v5484, %v5478
    %v5851 = vpack.c.b16 %v5491, %v5485
    %v5852 = vpack.c.b16 %v5492, %v5486
    %v5853 = vpack.c.b16 %v5493, %v5487
    %v5854 = vpack.c.b16 %v5494, %v5488
    %v5855 = vpack.c.b16 %v5495, %v5489
    %v5856 = vpack.c.b16 %v5496, %v5490
    %v5857 = vpack.c.b16 %v5503, %v5497
    %v5858 = vpack.c.b16 %v5504, %v5498
    %v5859 = vpack.c.b16 %v5505, %v5499
    %v5860 = vpack.c.b16 %v5506, %v5500
    %v5861 = vpack.c.b16 %v5507, %v5501
    %v5862 = vpack.c.b16 %v5508, %v5502
    %v5863 = vpack.c.b16 %v5515, %v5509
    %v5864 = vpack.c.b16 %v5516, %v5510
    %v5865 = vpack.c.b16 %v5517, %v5511
    %v5866 = vpack.c.b16 %v5518, %v5512
    %v5867 = vpack.c.b16 %v5519, %v5513
    %v5868 = vpack.c.b16 %v5520, %v5514
    %v5869 = vpack.c.b16 %v5527, %v5521
    %v5870 = vpack.c.b16 %v5528, %v5522
    %v5871 = vpack.c.b16 %v5529, %v5523
    %v5872 = vpack.c.b16 %v5530, %v5524
    %v5873 = vpack.c.b16 %v5531, %v5525
    %v5874 = vpack.c.b16 %v5532, %v5526
    %v5875 = vpack.c.b16 %v5539, %v5533
    %v5876 = vpack.c.b16 %v5540, %v5534
    %v5877 = vpack.c.b16 %v5541, %v5535
    %v5878 = vpack.c.b16 %v5542, %v5536
    %v5879 = vpack.c.b16 %v5543, %v5537
    %v5880 = vpack.c.b16 %v5544, %v5538
    %v5881 = vpack.c.b16 %v5551, %v5545
    %v5882 = vpack.c.b16 %v5552, %v5546
    %v5883 = vpack.c.b16 %v5553, %v5547
    %v5884 = vpack.c.b16 %v5554, %v5548
    %v5885 = vpack.c.b16 %v5555, %v5549
    %v5886 = vpack.c.b16 %v5556, %v5550
    %v5887 = vpack.c.b16 %v5563, %v5557
    %v5888 = vpack.c.b16 %v5564, %v5558
    %v5889 = vpack.c.b16 %v5565, %v5559
    %v5890 = vpack.c.b16 %v5566, %v5560
    %v5891 = vpack.c.b16 %v5567, %v5561
    %v5892 = vpack.c.b16 %v5568, %v5562
    %v5893 = vpack.c.b16 %v5575, %v5569
    %v5894 = vpack.c.b16 %v5576, %v5570
    %v5895 = vpack.c.b16 %v5577, %v5571
    %v5896 = vpack.c.b16 %v5578, %v5572
    %v5897 = vpack.c.b16 %v5579, %v5573
    %v5898 = vpack.c.b16 %v5580, %v5574
    %v5899 = vpack.c.b16 %v5587, %v5581
    %v5900 = vpack.c.b16 %v5588, %v5582
    %v5901 = vpack.c.b16 %v5589, %v5583
    %v5902 = vpack.c.b16 %v5590, %v5584
    %v5903 = vpack.c.b16 %v5591, %v5585
    %v5904 = vpack.c.b16 %v5592, %v5586
    %v5905 = vpack.c.b16 %v5599, %v5593
    %v5906 = vpack.c.b16 %v5600, %v5594
    %v5907 = vpack.c.b16 %v5601, %v5595
    %v5908 = vpack.c.b16 %v5602, %v5596
    %v5909 = vpack.c.b16 %v5603, %v5597
    %v5910 = vpack.c.b16 %v5604, %v5598
    %v5911 = vpack.c.b16 %v5611, %v5605
    %v5912 = vpack.c.b16 %v5612, %v5606
    %v5913 = vpack.c.b16 %v5613, %v5607
    %v5914 = vpack.c.b16 %v5614, %v5608
    %v5915 = vpack.c.b16 %v5615, %v5609
    %v5916 = vpack.c.b16 %v5616, %v5610
    %v5917 = vpack.c.b16 %v5623, %v5617
    %v5918 = vpack.c.b16 %v5624, %v5618
    %v5919 = vpack.c.b16 %v5625, %v5619
    %v5920 = vpack.c.b16 %v5626, %v5620
    %v5921 = vpack.c.b16 %v5627, %v5621
    %v5922 = vpack.c.b16 %v5628, %v5622
    %v5923 = vpack.c.b16 %v5635, %v5629
    %v5924 = vpack.c.b16 %v5636, %v5630
    %v5925 = vpack.c.b16 %v5637, %v5631
    %v5926 = vpack.c.b16 %v5638, %v5632
    %v5927 = vpack.c.b16 %v5639, %v5633
    %v5928 = vpack.c.b16 %v5640, %v5634
    %v5929 = vpack.c.b16 %v5647, %v5641
    %v5930 = vpack.c.b16 %v5648, %v5642
    %v5931 = vpack.c.b16 %v5649, %v5643
    %v5932 = vpack.c.b16 %v5650, %v5644
    %v5933 = vpack.c.b16 %v5651, %v5645
    %v5934 = vpack.c.b16 %v5652, %v5646
    %v5935 = vpack.c.b16 %v5659, %v5653
    %v5936 = vpack.c.b16 %v5660, %v5654
    %v5937 = vpack.c.b16 %v5661, %v5655
    %v5938 = vpack.c.b16 %v5662, %v5656
    %v5939 = vpack.c.b16 %v5663, %v5657
    %v5940 = vpack.c.b16 %v5664, %v5658
    %v5941 = vpack.c.b16 %v5671, %v5665
    %v5942 = vpack.c.b16 %v5672, %v5666
    %v5943 = vpack.c.b16 %v5673, %v5667
    %v5944 = vpack.c.b16 %v5674, %v5668
    %v5945 = vpack.c.b16 %v5675, %v5669
    %v5946 = vpack.c.b16 %v5676, %v5670
    %v5947 = vpack.c.b16 %v5683, %v5677
    %v5948 = vpack.c.b16 %v5684, %v5678
    %v5949 = vpack.c.b16 %v5685, %v5679
    %v5950 = vpack.c.b16 %v5686, %v5680
    %v5951 = vpack.c.b16 %v5687, %v5681
    %v5952 = vpack.c.b16 %v5688, %v5682
    %v5953 = vpack.c.b16 %v5695, %v5689
    %v5954 = vpack.c.b16 %v5696, %v5690
    %v5955 = vpack.c.b16 %v5697, %v5691
    %v5956 = vpack.c.b16 %v5698, %v5692
    %v5957 = vpack.c.b16 %v5699, %v5693
    %v5958 = vpack.c.b16 %v5700, %v5694
    %v5959 = vpack.c.b16 %v5707, %v5701
    %v5960 = vpack.c.b16 %v5708, %v5702
    %v5961 = vpack.c.b16 %v5709, %v5703
    %v5962 = vpack.c.b16 %v5710, %v5704
    %v5963 = vpack.c.b16 %v5711, %v5705
    %v5964 = vpack.c.b16 %v5712, %v5706
    %v5965 = vpack.c.b16 %v5719, %v5713
    %v5966 = vpack.c.b16 %v5720, %v5714
    %v5967 = vpack.c.b16 %v5721, %v5715
    %v5968 = vpack.c.b16 %v5722, %v5716
    %v5969 = vpack.c.b16 %v5723, %v5717
    %v5970 = vpack.c.b16 %v5724, %v5718
    %v5971 = vpack.c.b16 %v5731, %v5725
    %v5972 = vpack.c.b16 %v5732, %v5726
    %v5973 = vpack.c.b16 %v5733, %v5727
    %v5974 = vpack.c.b16 %v5734, %v5728
    %v5975 = vpack.c.b16 %v5735, %v5729
    %v5976 = vpack.c.b16 %v5736, %v5730
    %v5977 = vpack.c.b16 %v5743, %v5737
    %v5978 = vpack.c.b16 %v5744, %v5738
    %v5979 = vpack.c.b16 %v5745, %v5739
    %v5980 = vpack.c.b16 %v5746, %v5740
    %v5981 = vpack.c.b16 %v5747, %v5741
    %v5982 = vpack.c.b16 %v5748, %v5742
    %v5983 = vpack.c.b16 %v5755, %v5749
    %v5984 = vpack.c.b16 %v5756, %v5750
    %v5985 = vpack.c.b16 %v5757, %v5751
    %v5986 = vpack.c.b16 %v5758, %v5752
    %v5987 = vpack.c.b16 %v5759, %v5753
    %v5988 = vpack.c.b16 %v5760, %v5754
    %v5989 = vpack.c.b16 %v5767, %v5761
    %v5990 = vpack.c.b16 %v5768, %v5762
    %v5991 = vpack.c.b16 %v5769, %v5763
    %v5992 = vpack.c.b16 %v5770, %v5764
    %v5993 = vpack.c.b16 %v5771, %v5765
    %v5994 = vpack.c.b16 %v5772, %v5766
    %v5995 = vpack.c.b16 %v5779, %v5773
    %v5996 = vpack.c.b16 %v5780, %v5774
    %v5997 = vpack.c.b16 %v5781, %v5775
    %v5998 = vpack.c.b16 %v5782, %v5776
    %v5999 = vpack.c.b16 %v5783, %v5777
    %v6000 = vpack.c.b16 %v5784, %v5778
    %v6001 = vpack.c.b16 %v5791, %v5785
    %v6002 = vpack.c.b16 %v5792, %v5786
    %v6003 = vpack.c.b16 %v5793, %v5787
    %v6004 = vpack.c.b16 %v5794, %v5788
    %v6005 = vpack.c.b16 %v5795, %v5789
    %v6006 = vpack.c.b16 %v5796, %v5790
    %v6007 = vpack.c.b16 %v5803, %v5797
    %v6008 = vpack.c.b16 %v5804, %v5798
    %v6009 = vpack.c.b16 %v5805, %v5799
    %v6010 = vpack.c.b16 %v5806, %v5800
    %v6011 = vpack.c.b16 %v5807, %v5801
    %v6012 = vpack.c.b16 %v5808, %v5802
    %v6013 = vpack.c.b16 %v5815, %v5809
    %v6014 = vpack.c.b16 %v5816, %v5810
    %v6015 = vpack.c.b16 %v5817, %v5811
    %v6016 = vpack.c.b16 %v5818, %v5812
    %v6017 = vpack.c.b16 %v5819, %v5813
    %v6018 = vpack.c.b16 %v5820, %v5814
    %v6019 = vpack.c.b16 %v5827, %v5821
    %v6020 = vpack.c.b16 %v5828, %v5822
    %v6021 = vpack.c.b16 %v5829, %v5823
    %v6022 = vpack.c.b16 %v5830, %v5824
    %v6023 = vpack.c.b16 %v5831, %v5825
    %v6024 = vpack.c.b16 %v5832, %v5826
    %6217 = vmatprep.subr.bf16.mxu0 %v5834
    %6218 = vmatpush1.bf16.msra.mxu0 %v5833
    %6219 = vmatprep.subr.bf16.mxu0 %v5840
    %6220 = vmatpush1.bf16.msra.mxu0 %v5839
    %6221 = vmatprep.subr.bf16.mxu0 %v5846
    %6222 = vmatpush1.bf16.msra.mxu0 %v5845
    %6223 = vmatprep.subr.bf16.mxu0 %v5852
    %6224 = vmatpush1.bf16.msra.mxu0 %v5851
    %6225 = vmatprep.subr.bf16.mxu0 %v5858
    %6226 = vmatpush1.bf16.msra.mxu0 %v5857
    %6227 = vmatprep.subr.bf16.mxu0 %v5864
    %6228 = vmatpush1.bf16.msra.mxu0 %v5863
    %6229 = vmatprep.subr.bf16.mxu0 %v5870
    %6230 = vmatpush1.bf16.msra.mxu0 %v5869
    %6231 = vmatprep.subr.bf16.mxu0 %v5876
    %6232 = vmatpush1.bf16.msra.mxu0 %v5875
    %6233 = vmatprep.subr.bf16.mxu0 %v5882
    %6234 = vmatpush1.bf16.msra.mxu0 %v5881
    %6235 = vmatprep.subr.bf16.mxu0 %v5888
    %6236 = vmatpush1.bf16.msra.mxu0 %v5887
    %6237 = vmatprep.subr.bf16.mxu0 %v5894
    %6238 = vmatpush1.bf16.msra.mxu0 %v5893
    %6239 = vmatprep.subr.bf16.mxu0 %v5900
    %6240 = vmatpush1.bf16.msra.mxu0 %v5899
    %6241 = vmatprep.subr.bf16.mxu0 %v5906
    %6242 = vmatpush1.bf16.msra.mxu0 %v5905
    %6243 = vmatprep.subr.bf16.mxu0 %v5912
    %6244 = vmatpush1.bf16.msra.mxu0 %v5911
    %6245 = vmatprep.subr.bf16.mxu0 %v5918
    %6246 = vmatpush1.bf16.msra.mxu0 %v5917
    %6247 = vmatprep.subr.bf16.mxu0 %v5924
    %6248 = vmatpush1.bf16.msra.mxu0 %v5923
    %6249 = vmatprep.mubr.bf16.mxu0 %v1780
    %6250 = vmatmul.mubr.bf16.gmra.mrb[0].mxu0 %v1779
    %v6251 = vpop.f32.mrb[0].mxu0
    %v6252 = vadd.f32 %v4877, %v6251
    %v6253 = vpop.f32.mrb[0].mxu0
    %v6254 = vadd.f32 %v4879, %v6253
    %v6255 = vpop.f32.mrb[0].mxu0
    %v6256 = vadd.f32 %v4881, %v6255
    %v6257 = vpop.f32.mrb[0].mxu0
    %v6258 = vadd.f32 %v4883, %v6257
    %6259 = vmatprep.mubr.bf16.mxu0 %v1784
    %6260 = vmatmul.mubr.bf16.gmra.mrb[0].mxu0 %v1783
    %v6261 = vpop.f32.mrb[0].mxu0
    %v6262 = vadd.f32 %v4887, %v6261
    %v6263 = vpop.f32.mrb[0].mxu0
    %v6264 = vadd.f32 %v4889, %v6263
    %v6265 = vpop.f32.mrb[0].mxu0
    %v6266 = vadd.f32 %v4891, %v6265
    %v6267 = vpop.f32.mrb[0].mxu0
    %v6268 = vadd.f32 %v4893, %v6267
    %6269 = vmatprep.mubr.bf16.mxu0 %v1788
    %6270 = vmatmul.mubr.bf16.gmra.mrb[0].mxu0 %v1787
    %v6271 = vpop.f32.mrb[0].mxu0
    %v6272 = vadd.f32 %v4897, %v6271
    %v6273 = vpop.f32.mrb[0].mxu0
    %v6274 = vadd.f32 %v4899, %v6273
    %v6275 = vpop.f32.mrb[0].mxu0
    %v6276 = vadd.f32 %v4901, %v6275
    %v6277 = vpop.f32.mrb[0].mxu0
    %v6278 = vadd.f32 %v4903, %v6277
    %6279 = vmatprep.mubr.bf16.mxu0 %v1792
    %6280 = vmatmul.mubr.bf16.gmra.mrb[0].mxu0 %v1791
    %v6281 = vpop.f32.mrb[0].mxu0
    %v6282 = vadd.f32 %v4907, %v6281
    %v6283 = vpop.f32.mrb[0].mxu0
    %v6284 = vadd.f32 %v4909, %v6283
    %v6285 = vpop.f32.mrb[0].mxu0
    %v6286 = vadd.f32 %v4911, %v6285
    %v6287 = vpop.f32.mrb[0].mxu0
    %v6288 = vadd.f32 %v4913, %v6287
    %6289 = vmatprep.mubr.bf16.mxu0 %v1796
    %6290 = vmatmul.mubr.bf16.gmra.mrb[0].mxu0 %v1795
    %v6291 = vpop.f32.mrb[0].mxu0
    %v6292 = vadd.f32 %v4917, %v6291
    %v6293 = vpop.f32.mrb[0].mxu0
    %v6294 = vadd.f32 %v4919, %v6293
    %v6295 = vpop.f32.mrb[0].mxu0
    %v6296 = vadd.f32 %v4921, %v6295
    %v6297 = vpop.f32.mrb[0].mxu0
    %v6298 = vadd.f32 %v4923, %v6297
    %6299 = vdwg.mxu0
    %6300 = vmatprep.subr.bf16.mxu0 %v5930
    %6301 = vmatpush1.bf16.msra.mxu0 %v5929
    %6302 = vmatprep.subr.bf16.mxu0 %v5936
    %6303 = vmatpush1.bf16.msra.mxu0 %v5935
    %6304 = vmatprep.subr.bf16.mxu0 %v5942
    %6305 = vmatpush1.bf16.msra.mxu0 %v5941
    %6306 = vmatprep.subr.bf16.mxu0 %v5948
    %6307 = vmatpush1.bf16.msra.mxu0 %v5947
    %6308 = vmatprep.subr.bf16.mxu0 %v5954
    %6309 = vmatpush1.bf16.msra.mxu0 %v5953
    %6310 = vmatprep.subr.bf16.mxu0 %v5960
    %6311 = vmatpush1.bf16.msra.mxu0 %v5959
    %6312 = vmatprep.subr.bf16.mxu0 %v5966
    %6313 = vmatpush1.bf16.msra.mxu0 %v5965
    %6314 = vmatprep.subr.bf16.mxu0 %v5972
    %6315 = vmatpush1.bf16.msra.mxu0 %v5971
    %6316 = vmatprep.subr.bf16.mxu0 %v5978
    %6317 = vmatpush1.bf16.msra.mxu0 %v5977
    %6318 = vmatprep.subr.bf16.mxu0 %v5984
    %6319 = vmatpush1.bf16.msra.mxu0 %v5983
    %6320 = vmatprep.subr.bf16.mxu0 %v5990
    %6321 = vmatpush1.bf16.msra.mxu0 %v5989
    %6322 = vmatprep.subr.bf16.mxu0 %v5996
    %6323 = vmatpush1.bf16.msra.mxu0 %v5995
    %6324 = vmatprep.subr.bf16.mxu0 %v6002
    %6325 = vmatpush1.bf16.msra.mxu0 %v6001
    %6326 = vmatprep.subr.bf16.mxu0 %v6008
    %6327 = vmatpush1.bf16.msra.mxu0 %v6007
    %6328 = vmatprep.subr.bf16.mxu0 %v6014
    %6329 = vmatpush1.bf16.msra.mxu0 %v6013
    %6330 = vmatprep.subr.bf16.mxu0 %v6020
    %6331 = vmatpush1.bf16.msra.mxu0 %v6019
    %6332 = vmatprep.mubr.bf16.mxu0 %v1782
    %6333 = vmatmul.mubr.bf16.gmra.mrb[0].mxu0 %v1781
    %v6334 = vpop.f32.mrb[0].mxu0
    %v6335 = vadd.f32 %v6252, %v6334
    %v6336 = vpop.f32.mrb[0].mxu0
    %v6337 = vadd.f32 %v6254, %v6336
    %v6338 = vpop.f32.mrb[0].mxu0
    %v6339 = vadd.f32 %v6256, %v6338
    %v6340 = vpop.f32.mrb[0].mxu0
    %v6341 = vadd.f32 %v6258, %v6340
    %6342 = vmatprep.mubr.bf16.mxu0 %v1786
    %6343 = vmatmul.mubr.bf16.gmra.mrb[0].mxu0 %v1785
    %v6344 = vpop.f32.mrb[0].mxu0
    %v6345 = vadd.f32 %v6262, %v6344
    %v6346 = vpop.f32.mrb[0].mxu0
    %v6347 = vadd.f32 %v6264, %v6346
    %v6348 = vpop.f32.mrb[0].mxu0
    %v6349 = vadd.f32 %v6266, %v6348
    %v6350 = vpop.f32.mrb[0].mxu0
    %v6351 = vadd.f32 %v6268, %v6350
    %6352 = vmatprep.mubr.bf16.mxu0 %v1790
    %6353 = vmatmul.mubr.bf16.gmra.mrb[0].mxu0 %v1789
    %v6354 = vpop.f32.mrb[0].mxu0
    %v6355 = vadd.f32 %v6272, %v6354
    %v6356 = vpop.f32.mrb[0].mxu0
    %v6357 = vadd.f32 %v6274, %v6356
    %v6358 = vpop.f32.mrb[0].mxu0
    %v6359 = vadd.f32 %v6276, %v6358
    %v6360 = vpop.f32.mrb[0].mxu0
    %v6361 = vadd.f32 %v6278, %v6360
    %6362 = vmatprep.mubr.bf16.mxu0 %v1794
    %6363 = vmatmul.mubr.bf16.gmra.mrb[0].mxu0 %v1793
    %v6364 = vpop.f32.mrb[0].mxu0
    %v6365 = vadd.f32 %v6282, %v6364
    %v6366 = vpop.f32.mrb[0].mxu0
    %v6367 = vadd.f32 %v6284, %v6366
    %v6368 = vpop.f32.mrb[0].mxu0
    %v6369 = vadd.f32 %v6286, %v6368
    %v6370 = vpop.f32.mrb[0].mxu0
    %v6371 = vadd.f32 %v6288, %v6370
    %6372 = vmatprep.mubr.bf16.mxu0 %v1798
    %6373 = vmatmul.mubr.bf16.gmra.mrb[0].mxu0 %v1797
    %v6374 = vpop.f32.mrb[0].mxu0
    %v6375 = vadd.f32 %v6292, %v6374
    %v6376 = vpop.f32.mrb[0].mxu0
    %v6377 = vadd.f32 %v6294, %v6376
    %v6378 = vpop.f32.mrb[0].mxu0
    %v6379 = vadd.f32 %v6296, %v6378
    %v6380 = vpop.f32.mrb[0].mxu0
    %v6381 = vadd.f32 %v6298, %v6380
    %6382 = vdwg.mxu0
    %6383 = vmatprep.subr.bf16.mxu0 %v5836
    %6384 = vmatpush1.bf16.msra.mxu0 %v5835
    %6385 = vmatprep.subr.bf16.mxu0 %v5842
    %6386 = vmatpush1.bf16.msra.mxu0 %v5841
    %6387 = vmatprep.subr.bf16.mxu0 %v5848
    %6388 = vmatpush1.bf16.msra.mxu0 %v5847
    %6389 = vmatprep.subr.bf16.mxu0 %v5854
    %6390 = vmatpush1.bf16.msra.mxu0 %v5853
    %6391 = vmatprep.subr.bf16.mxu0 %v5860
    %6392 = vmatpush1.bf16.msra.mxu0 %v5859
    %6393 = vmatprep.subr.bf16.mxu0 %v5866
    %6394 = vmatpush1.bf16.msra.mxu0 %v5865
    %6395 = vmatprep.subr.bf16.mxu0 %v5872
    %6396 = vmatpush1.bf16.msra.mxu0 %v5871
    %6397 = vmatprep.subr.bf16.mxu0 %v5878
    %6398 = vmatpush1.bf16.msra.mxu0 %v5877
    %6399 = vmatprep.subr.bf16.mxu0 %v5884
    %6400 = vmatpush1.bf16.msra.mxu0 %v5883
    %6401 = vmatprep.subr.bf16.mxu0 %v5890
    %6402 = vmatpush1.bf16.msra.mxu0 %v5889
    %6403 = vmatprep.subr.bf16.mxu0 %v5896
    %6404 = vmatpush1.bf16.msra.mxu0 %v5895
    %6405 = vmatprep.subr.bf16.mxu0 %v5902
    %6406 = vmatpush1.bf16.msra.mxu0 %v5901
    %6407 = vmatprep.subr.bf16.mxu0 %v5908
    %6408 = vmatpush1.bf16.msra.mxu0 %v5907
    %6409 = vmatprep.subr.bf16.mxu0 %v5914
    %6410 = vmatpush1.bf16.msra.mxu0 %v5913
    %6411 = vmatprep.subr.bf16.mxu0 %v5920
    %6412 = vmatpush1.bf16.msra.mxu0 %v5919
    %6413 = vmatprep.subr.bf16.mxu0 %v5926
    %6414 = vmatpush1.bf16.msra.mxu0 %v5925
    %6415 = vmatprep.mubr.bf16.mxu0 %v1780
    %6416 = vmatmul.mubr.bf16.gmra.mrb[0].mxu0 %v1779
    %v6417 = vpop.f32.mrb[0].mxu0
    %v6418 = vadd.f32 %v5043, %v6417
    %v6419 = vpop.f32.mrb[0].mxu0
    %v6420 = vadd.f32 %v5045, %v6419
    %v6421 = vpop.f32.mrb[0].mxu0
    %v6422 = vadd.f32 %v5047, %v6421
    %v6423 = vpop.f32.mrb[0].mxu0
    %v6424 = vadd.f32 %v5049, %v6423
    %6425 = vmatprep.mubr.bf16.mxu0 %v1784
    %6426 = vmatmul.mubr.bf16.gmra.mrb[0].mxu0 %v1783
    %v6427 = vpop.f32.mrb[0].mxu0
    %v6428 = vadd.f32 %v5053, %v6427
    %v6429 = vpop.f32.mrb[0].mxu0
    %v6430 = vadd.f32 %v5055, %v6429
    %v6431 = vpop.f32.mrb[0].mxu0
    %v6432 = vadd.f32 %v5057, %v6431
    %v6433 = vpop.f32.mrb[0].mxu0
    %v6434 = vadd.f32 %v5059, %v6433
    %6435 = vmatprep.mubr.bf16.mxu0 %v1788
    %6436 = vmatmul.mubr.bf16.gmra.mrb[0].mxu0 %v1787
    %v6437 = vpop.f32.mrb[0].mxu0
    %v6438 = vadd.f32 %v5063, %v6437
    %v6439 = vpop.f32.mrb[0].mxu0
    %v6440 = vadd.f32 %v5065, %v6439
    %v6441 = vpop.f32.mrb[0].mxu0
    %v6442 = vadd.f32 %v5067, %v6441
    %v6443 = vpop.f32.mrb[0].mxu0
    %v6444 = vadd.f32 %v5069, %v6443
    %6445 = vmatprep.mubr.bf16.mxu0 %v1792
    %6446 = vmatmul.mubr.bf16.gmra.mrb[0].mxu0 %v1791
    %v6447 = vpop.f32.mrb[0].mxu0
    %v6448 = vadd.f32 %v5073, %v6447
    %v6449 = vpop.f32.mrb[0].mxu0
    %v6450 = vadd.f32 %v5075, %v6449
    %v6451 = vpop.f32.mrb[0].mxu0
    %v6452 = vadd.f32 %v5077, %v6451
    %v6453 = vpop.f32.mrb[0].mxu0
    %v6454 = vadd.f32 %v5079, %v6453
    %6455 = vmatprep.mubr.bf16.mxu0 %v1796
    %6456 = vmatmul.mubr.bf16.gmra.mrb[0].mxu0 %v1795
    %v6457 = vpop.f32.mrb[0].mxu0
    %v6458 = vadd.f32 %v5083, %v6457
    %v6459 = vpop.f32.mrb[0].mxu0
    %v6460 = vadd.f32 %v5085, %v6459
    %v6461 = vpop.f32.mrb[0].mxu0
    %v6462 = vadd.f32 %v5087, %v6461
    %v6463 = vpop.f32.mrb[0].mxu0
    %v6464 = vadd.f32 %v5089, %v6463
    %6465 = vdwg.mxu0
    %6466 = vmatprep.subr.bf16.mxu0 %v5932
    %6467 = vmatpush1.bf16.msra.mxu0 %v5931
    %6468 = vmatprep.subr.bf16.mxu0 %v5938
    %6469 = vmatpush1.bf16.msra.mxu0 %v5937
    %6470 = vmatprep.subr.bf16.mxu0 %v5944
    %6471 = vmatpush1.bf16.msra.mxu0 %v5943
    %6472 = vmatprep.subr.bf16.mxu0 %v5950
    %6473 = vmatpush1.bf16.msra.mxu0 %v5949
    %6474 = vmatprep.subr.bf16.mxu0 %v5956
    %6475 = vmatpush1.bf16.msra.mxu0 %v5955
    %6476 = vmatprep.subr.bf16.mxu0 %v5962
    %6477 = vmatpush1.bf16.msra.mxu0 %v5961
    %6478 = vmatprep.subr.bf16.mxu0 %v5968
    %6479 = vmatpush1.bf16.msra.mxu0 %v5967
    %6480 = vmatprep.subr.bf16.mxu0 %v5974
    %6481 = vmatpush1.bf16.msra.mxu0 %v5973
    %6482 = vmatprep.subr.bf16.mxu0 %v5980
    %6483 = vmatpush1.bf16.msra.mxu0 %v5979
    %6484 = vmatprep.subr.bf16.mxu0 %v5986
    %6485 = vmatpush1.bf16.msra.mxu0 %v5985
    %6486 = vmatprep.subr.bf16.mxu0 %v5992
    %6487 = vmatpush1.bf16.msra.mxu0 %v5991
    %6488 = vmatprep.subr.bf16.mxu0 %v5998
    %6489 = vmatpush1.bf16.msra.mxu0 %v5997
    %6490 = vmatprep.subr.bf16.mxu0 %v6004
    %6491 = vmatpush1.bf16.msra.mxu0 %v6003
    %6492 = vmatprep.subr.bf16.mxu0 %v6010
    %6493 = vmatpush1.bf16.msra.mxu0 %v6009
    %6494 = vmatprep.subr.bf16.mxu0 %v6016
    %6495 = vmatpush1.bf16.msra.mxu0 %v6015
    %6496 = vmatprep.subr.bf16.mxu0 %v6022
    %6497 = vmatpush1.bf16.msra.mxu0 %v6021
    %6498 = vmatprep.mubr.bf16.mxu0 %v1782
    %6499 = vmatmul.mubr.bf16.gmra.mrb[0].mxu0 %v1781
    %v6500 = vpop.f32.mrb[0].mxu0
    %v6501 = vadd.f32 %v6418, %v6500
    %v6502 = vpop.f32.mrb[0].mxu0
    %v6503 = vadd.f32 %v6420, %v6502
    %v6504 = vpop.f32.mrb[0].mxu0
    %v6505 = vadd.f32 %v6422, %v6504
    %v6506 = vpop.f32.mrb[0].mxu0
    %v6507 = vadd.f32 %v6424, %v6506
    %6508 = vmatprep.mubr.bf16.mxu0 %v1786
    %6509 = vmatmul.mubr.bf16.gmra.mrb[0].mxu0 %v1785
    %v6510 = vpop.f32.mrb[0].mxu0
    %v6511 = vadd.f32 %v6428, %v6510
    %v6512 = vpop.f32.mrb[0].mxu0
    %v6513 = vadd.f32 %v6430, %v6512
    %v6514 = vpop.f32.mrb[0].mxu0
    %v6515 = vadd.f32 %v6432, %v6514
    %v6516 = vpop.f32.mrb[0].mxu0
    %v6517 = vadd.f32 %v6434, %v6516
    %6518 = vmatprep.mubr.bf16.mxu0 %v1790
    %6519 = vmatmul.mubr.bf16.gmra.mrb[0].mxu0 %v1789
    %v6520 = vpop.f32.mrb[0].mxu0
    %v6521 = vadd.f32 %v6438, %v6520
    %v6522 = vpop.f32.mrb[0].mxu0
    %v6523 = vadd.f32 %v6440, %v6522
    %v6524 = vpop.f32.mrb[0].mxu0
    %v6525 = vadd.f32 %v6442, %v6524
    %v6526 = vpop.f32.mrb[0].mxu0
    %v6527 = vadd.f32 %v6444, %v6526
    %6528 = vmatprep.mubr.bf16.mxu0 %v1794
    %6529 = vmatmul.mubr.bf16.gmra.mrb[0].mxu0 %v1793
    %v6530 = vpop.f32.mrb[0].mxu0
    %v6531 = vadd.f32 %v6448, %v6530
    %v6532 = vpop.f32.mrb[0].mxu0
    %v6533 = vadd.f32 %v6450, %v6532
    %v6534 = vpop.f32.mrb[0].mxu0
    %v6535 = vadd.f32 %v6452, %v6534
    %v6536 = vpop.f32.mrb[0].mxu0
    %v6537 = vadd.f32 %v6454, %v6536
    %6538 = vmatprep.mubr.bf16.mxu0 %v1798
    %6539 = vmatmul.mubr.bf16.gmra.mrb[0].mxu0 %v1797
    %v6540 = vpop.f32.mrb[0].mxu0
    %v6541 = vadd.f32 %v6458, %v6540
    %v6542 = vpop.f32.mrb[0].mxu0
    %v6543 = vadd.f32 %v6460, %v6542
    %v6544 = vpop.f32.mrb[0].mxu0
    %v6545 = vadd.f32 %v6462, %v6544
    %v6546 = vpop.f32.mrb[0].mxu0
    %v6547 = vadd.f32 %v6464, %v6546
    %6548 = vdwg.mxu0
    %6549 = vmatprep.subr.bf16.mxu0 %v5838
    %6550 = vmatpush1.bf16.msra.mxu0 %v5837
    %6551 = vmatprep.subr.bf16.mxu0 %v5844
    %6552 = vmatpush1.bf16.msra.mxu0 %v5843
    %6553 = vmatprep.subr.bf16.mxu0 %v5850
    %6554 = vmatpush1.bf16.msra.mxu0 %v5849
    %6555 = vmatprep.subr.bf16.mxu0 %v5856
    %6556 = vmatpush1.bf16.msra.mxu0 %v5855
    %6557 = vmatprep.subr.bf16.mxu0 %v5862
    %6558 = vmatpush1.bf16.msra.mxu0 %v5861
    %6559 = vmatprep.subr.bf16.mxu0 %v5868
    %6560 = vmatpush1.bf16.msra.mxu0 %v5867
    %6561 = vmatprep.subr.bf16.mxu0 %v5874
    %6562 = vmatpush1.bf16.msra.mxu0 %v5873
    %6563 = vmatprep.subr.bf16.mxu0 %v5880
    %6564 = vmatpush1.bf16.msra.mxu0 %v5879
    %6565 = vmatprep.subr.bf16.mxu0 %v5886
    %6566 = vmatpush1.bf16.msra.mxu0 %v5885
    %6567 = vmatprep.subr.bf16.mxu0 %v5892
    %6568 = vmatpush1.bf16.msra.mxu0 %v5891
    %6569 = vmatprep.subr.bf16.mxu0 %v5898
    %6570 = vmatpush1.bf16.msra.mxu0 %v5897
    %6571 = vmatprep.subr.bf16.mxu0 %v5904
    %6572 = vmatpush1.bf16.msra.mxu0 %v5903
    %6573 = vmatprep.subr.bf16.mxu0 %v5910
    %6574 = vmatpush1.bf16.msra.mxu0 %v5909
    %6575 = vmatprep.subr.bf16.mxu0 %v5916
    %6576 = vmatpush1.bf16.msra.mxu0 %v5915
    %6577 = vmatprep.subr.bf16.mxu0 %v5922
    %6578 = vmatpush1.bf16.msra.mxu0 %v5921
    %6579 = vmatprep.subr.bf16.mxu0 %v5928
    %6580 = vmatpush1.bf16.msra.mxu0 %v5927
    %6581 = vmatprep.mubr.bf16.mxu0 %v1780
    %6582 = vmatmul.mubr.bf16.gmra.mrb[0].mxu0 %v1779
    %v6583 = vpop.f32.mrb[0].mxu0
    %v6584 = vadd.f32 %v5209, %v6583
    %v6585 = vpop.f32.mrb[0].mxu0
    %v6586 = vadd.f32 %v5211, %v6585
    %v6587 = vpop.f32.mrb[0].mxu0
    %v6588 = vadd.f32 %v5213, %v6587
    %v6589 = vpop.f32.mrb[0].mxu0
    %v6590 = vadd.f32 %v5215, %v6589
    %6591 = vmatprep.mubr.bf16.mxu0 %v1784
    %6592 = vmatmul.mubr.bf16.gmra.mrb[0].mxu0 %v1783
    %v6593 = vpop.f32.mrb[0].mxu0
    %v6594 = vadd.f32 %v5219, %v6593
    %v6595 = vpop.f32.mrb[0].mxu0
    %v6596 = vadd.f32 %v5221, %v6595
    %v6597 = vpop.f32.mrb[0].mxu0
    %v6598 = vadd.f32 %v5223, %v6597
    %v6599 = vpop.f32.mrb[0].mxu0
    %v6600 = vadd.f32 %v5225, %v6599
    %6601 = vmatprep.mubr.bf16.mxu0 %v1788
    %6602 = vmatmul.mubr.bf16.gmra.mrb[0].mxu0 %v1787
    %v6603 = vpop.f32.mrb[0].mxu0
    %v6604 = vadd.f32 %v5229, %v6603
    %v6605 = vpop.f32.mrb[0].mxu0
    %v6606 = vadd.f32 %v5231, %v6605
    %v6607 = vpop.f32.mrb[0].mxu0
    %v6608 = vadd.f32 %v5233, %v6607
    %v6609 = vpop.f32.mrb[0].mxu0
    %v6610 = vadd.f32 %v5235, %v6609
    %6611 = vmatprep.mubr.bf16.mxu0 %v1792
    %6612 = vmatmul.mubr.bf16.gmra.mrb[0].mxu0 %v1791
    %v6613 = vpop.f32.mrb[0].mxu0
    %v6614 = vadd.f32 %v5239, %v6613
    %v6615 = vpop.f32.mrb[0].mxu0
    %v6616 = vadd.f32 %v5241, %v6615
    %v6617 = vpop.f32.mrb[0].mxu0
    %v6618 = vadd.f32 %v5243, %v6617
    %v6619 = vpop.f32.mrb[0].mxu0
    %v6620 = vadd.f32 %v5245, %v6619
    %6621 = vmatprep.mubr.bf16.mxu0 %v1796
    %6622 = vmatmul.mubr.bf16.gmra.mrb[0].mxu0 %v1795
    %v6623 = vpop.f32.mrb[0].mxu0
    %v6624 = vadd.f32 %v5249, %v6623
    %v6625 = vpop.f32.mrb[0].mxu0
    %v6626 = vadd.f32 %v5251, %v6625
    %v6627 = vpop.f32.mrb[0].mxu0
    %v6628 = vadd.f32 %v5253, %v6627
    %v6629 = vpop.f32.mrb[0].mxu0
    %v6630 = vadd.f32 %v5255, %v6629
    %6631 = vdwg.mxu0
    %6632 = vmatprep.subr.bf16.mxu0 %v5934
    %6633 = vmatpush1.bf16.msra.mxu0 %v5933
    %6634 = vmatprep.subr.bf16.mxu0 %v5940
    %6635 = vmatpush1.bf16.msra.mxu0 %v5939
    %6636 = vmatprep.subr.bf16.mxu0 %v5946
    %6637 = vmatpush1.bf16.msra.mxu0 %v5945
    %6638 = vmatprep.subr.bf16.mxu0 %v5952
    %6639 = vmatpush1.bf16.msra.mxu0 %v5951
    %6640 = vmatprep.subr.bf16.mxu0 %v5958
    %6641 = vmatpush1.bf16.msra.mxu0 %v5957
    %6642 = vmatprep.subr.bf16.mxu0 %v5964
    %6643 = vmatpush1.bf16.msra.mxu0 %v5963
    %6644 = vmatprep.subr.bf16.mxu0 %v5970
    %6645 = vmatpush1.bf16.msra.mxu0 %v5969
    %6646 = vmatprep.subr.bf16.mxu0 %v5976
    %6647 = vmatpush1.bf16.msra.mxu0 %v5975
    %6648 = vmatprep.subr.bf16.mxu0 %v5982
    %6649 = vmatpush1.bf16.msra.mxu0 %v5981
    %6650 = vmatprep.subr.bf16.mxu0 %v5988
    %6651 = vmatpush1.bf16.msra.mxu0 %v5987
    %6652 = vmatprep.subr.bf16.mxu0 %v5994
    %6653 = vmatpush1.bf16.msra.mxu0 %v5993
    %6654 = vmatprep.subr.bf16.mxu0 %v6000
    %6655 = vmatpush1.bf16.msra.mxu0 %v5999
    %6656 = vmatprep.subr.bf16.mxu0 %v6006
    %6657 = vmatpush1.bf16.msra.mxu0 %v6005
    %6658 = vmatprep.subr.bf16.mxu0 %v6012
    %6659 = vmatpush1.bf16.msra.mxu0 %v6011
    %6660 = vmatprep.subr.bf16.mxu0 %v6018
    %6661 = vmatpush1.bf16.msra.mxu0 %v6017
    %6662 = vmatprep.subr.bf16.mxu0 %v6024
    %6663 = vmatpush1.bf16.msra.mxu0 %v6023
    %6664 = vmatprep.mubr.bf16.mxu0 %v1782
    %6665 = vmatmul.mubr.bf16.gmra.mrb[0].mxu0 %v1781
    %v6666 = vpop.f32.mrb[0].mxu0
    %v6667 = vadd.f32 %v6584, %v6666
    %v6668 = vpop.f32.mrb[0].mxu0
    %v6669 = vadd.f32 %v6586, %v6668
    %v6670 = vpop.f32.mrb[0].mxu0
    %v6671 = vadd.f32 %v6588, %v6670
    %v6672 = vpop.f32.mrb[0].mxu0
    %v6673 = vadd.f32 %v6590, %v6672
    %6674 = vmatprep.mubr.bf16.mxu0 %v1786
    %6675 = vmatmul.mubr.bf16.gmra.mrb[0].mxu0 %v1785
    %v6676 = vpop.f32.mrb[0].mxu0
    %v6677 = vadd.f32 %v6594, %v6676
    %v6678 = vpop.f32.mrb[0].mxu0
    %v6679 = vadd.f32 %v6596, %v6678
    %v6680 = vpop.f32.mrb[0].mxu0
    %v6681 = vadd.f32 %v6598, %v6680
    %v6682 = vpop.f32.mrb[0].mxu0
    %v6683 = vadd.f32 %v6600, %v6682
    %6684 = vmatprep.mubr.bf16.mxu0 %v1790
    %6685 = vmatmul.mubr.bf16.gmra.mrb[0].mxu0 %v1789
    %v6686 = vpop.f32.mrb[0].mxu0
    %v6687 = vadd.f32 %v6604, %v6686
    %v6688 = vpop.f32.mrb[0].mxu0
    %v6689 = vadd.f32 %v6606, %v6688
    %v6690 = vpop.f32.mrb[0].mxu0
    %v6691 = vadd.f32 %v6608, %v6690
    %v6692 = vpop.f32.mrb[0].mxu0
    %v6693 = vadd.f32 %v6610, %v6692
    %6694 = vmatprep.mubr.bf16.mxu0 %v1794
    %6695 = vmatmul.mubr.bf16.gmra.mrb[0].mxu0 %v1793
    %v6696 = vpop.f32.mrb[0].mxu0
    %v6697 = vadd.f32 %v6614, %v6696
    %v6698 = vpop.f32.mrb[0].mxu0
    %v6699 = vadd.f32 %v6616, %v6698
    %v6700 = vpop.f32.mrb[0].mxu0
    %v6701 = vadd.f32 %v6618, %v6700
    %v6702 = vpop.f32.mrb[0].mxu0
    %v6703 = vadd.f32 %v6620, %v6702
    %6704 = vmatprep.mubr.bf16.mxu0 %v1798
    %6705 = vmatmul.mubr.bf16.gmra.mrb[0].mxu0 %v1797
    %v6706 = vpop.f32.mrb[0].mxu0
    %v6707 = vadd.f32 %v6624, %v6706
    %v6708 = vpop.f32.mrb[0].mxu0
    %v6709 = vadd.f32 %v6626, %v6708
    %v6710 = vpop.f32.mrb[0].mxu0
    %v6711 = vadd.f32 %v6628, %v6710
    %v6712 = vpop.f32.mrb[0].mxu0
    %v6713 = vadd.f32 %v6630, %v6712
    %6714 = vdwg.mxu0
    %v6907 = vunpack.c.l.b16 %v3607
    %v6908 = vunpack.c.h.b16 %v3607
    %v6909 = vunpack.c.l.b16 %v3608
    %v6910 = vunpack.c.h.b16 %v3608
    %v6911 = vunpack.c.l.b16 %v3609
    %v6912 = vunpack.c.h.b16 %v3609
    %v6913 = vunpack.c.l.b16 %v3610
    %v6914 = vunpack.c.h.b16 %v3610
    %v6915 = vunpack.c.l.b16 %v3611
    %v6916 = vunpack.c.h.b16 %v3611
    %v6917 = vunpack.c.l.b16 %v3612
    %v6918 = vunpack.c.h.b16 %v3612
    %v6919 = vunpack.c.l.b16 %v3613
    %v6920 = vunpack.c.h.b16 %v3613
    %v6921 = vunpack.c.l.b16 %v3614
    %v6922 = vunpack.c.h.b16 %v3614
    %v6923 = vunpack.c.l.b16 %v3615
    %v6924 = vunpack.c.h.b16 %v3615
    %v6925 = vunpack.c.l.b16 %v3616
    %v6926 = vunpack.c.h.b16 %v3616
    %v6927 = vunpack.c.l.b16 %v3617
    %v6928 = vunpack.c.h.b16 %v3617
    %v6929 = vunpack.c.l.b16 %v3618
    %v6930 = vunpack.c.h.b16 %v3618
    %v6931 = vunpack.c.l.b16 %v3619
    %v6932 = vunpack.c.h.b16 %v3619
    %v6933 = vunpack.c.l.b16 %v3620
    %v6934 = vunpack.c.h.b16 %v3620
    %v6935 = vunpack.c.l.b16 %v3621
    %v6936 = vunpack.c.h.b16 %v3621
    %v6937 = vunpack.c.l.b16 %v3622
    %v6938 = vunpack.c.h.b16 %v3622
    %v6939 = vunpack.c.l.b16 %v3623
    %v6940 = vunpack.c.h.b16 %v3623
    %v6941 = vunpack.c.l.b16 %v3624
    %v6942 = vunpack.c.h.b16 %v3624
    %v6943 = vunpack.c.l.b16 %v3625
    %v6944 = vunpack.c.h.b16 %v3625
    %v6945 = vunpack.c.l.b16 %v3626
    %v6946 = vunpack.c.h.b16 %v3626
    %v6947 = vunpack.c.l.b16 %v3627
    %v6948 = vunpack.c.h.b16 %v3627
    %v6949 = vunpack.c.l.b16 %v3628
    %v6950 = vunpack.c.h.b16 %v3628
    %v6951 = vunpack.c.l.b16 %v3629
    %v6952 = vunpack.c.h.b16 %v3629
    %v6953 = vunpack.c.l.b16 %v3630
    %v6954 = vunpack.c.h.b16 %v3630
    %v6955 = vunpack.c.l.b16 %v3631
    %v6956 = vunpack.c.h.b16 %v3631
    %v6957 = vunpack.c.l.b16 %v3632
    %v6958 = vunpack.c.h.b16 %v3632
    %v6959 = vunpack.c.l.b16 %v3633
    %v6960 = vunpack.c.h.b16 %v3633
    %v6961 = vunpack.c.l.b16 %v3634
    %v6962 = vunpack.c.h.b16 %v3634
    %v6963 = vunpack.c.l.b16 %v3635
    %v6964 = vunpack.c.h.b16 %v3635
    %v6965 = vunpack.c.l.b16 %v3636
    %v6966 = vunpack.c.h.b16 %v3636
    %v6967 = vunpack.c.l.b16 %v3637
    %v6968 = vunpack.c.h.b16 %v3637
    %v6969 = vunpack.c.l.b16 %v3638
    %v6970 = vunpack.c.h.b16 %v3638
    %v6971 = vunpack.c.l.b16 %v3639
    %v6972 = vunpack.c.h.b16 %v3639
    %v6973 = vunpack.c.l.b16 %v3640
    %v6974 = vunpack.c.h.b16 %v3640
    %v6975 = vunpack.c.l.b16 %v3641
    %v6976 = vunpack.c.h.b16 %v3641
    %v6977 = vunpack.c.l.b16 %v3642
    %v6978 = vunpack.c.h.b16 %v3642
    %v6979 = vunpack.c.l.b16 %v3643
    %v6980 = vunpack.c.h.b16 %v3643
    %v6981 = vunpack.c.l.b16 %v3644
    %v6982 = vunpack.c.h.b16 %v3644
    %v6983 = vunpack.c.l.b16 %v3645
    %v6984 = vunpack.c.h.b16 %v3645
    %v6985 = vunpack.c.l.b16 %v3646
    %v6986 = vunpack.c.h.b16 %v3646
    %v6987 = vunpack.c.l.b16 %v3647
    %v6988 = vunpack.c.h.b16 %v3647
    %v6989 = vunpack.c.l.b16 %v3648
    %v6990 = vunpack.c.h.b16 %v3648
    %v6991 = vunpack.c.l.b16 %v3649
    %v6992 = vunpack.c.h.b16 %v3649
    %v6993 = vunpack.c.l.b16 %v3650
    %v6994 = vunpack.c.h.b16 %v3650
    %v6995 = vunpack.c.l.b16 %v3651
    %v6996 = vunpack.c.h.b16 %v3651
    %v6997 = vunpack.c.l.b16 %v3652
    %v6998 = vunpack.c.h.b16 %v3652
    %v6999 = vunpack.c.l.b16 %v3653
    %v7000 = vunpack.c.h.b16 %v3653
    %v7001 = vunpack.c.l.b16 %v3654
    %v7002 = vunpack.c.h.b16 %v3654
    %v7003 = vunpack.c.l.b16 %v3655
    %v7004 = vunpack.c.h.b16 %v3655
    %v7005 = vunpack.c.l.b16 %v3656
    %v7006 = vunpack.c.h.b16 %v3656
    %v7007 = vunpack.c.l.b16 %v3657
    %v7008 = vunpack.c.h.b16 %v3657
    %v7009 = vunpack.c.l.b16 %v3658
    %v7010 = vunpack.c.h.b16 %v3658
    %v7011 = vunpack.c.l.b16 %v3659
    %v7012 = vunpack.c.h.b16 %v3659
    %v7013 = vunpack.c.l.b16 %v3660
    %v7014 = vunpack.c.h.b16 %v3660
    %v7015 = vunpack.c.l.b16 %v3661
    %v7016 = vunpack.c.h.b16 %v3661
    %v7017 = vunpack.c.l.b16 %v3662
    %v7018 = vunpack.c.h.b16 %v3662
    %v7019 = vunpack.c.l.b16 %v3663
    %v7020 = vunpack.c.h.b16 %v3663
    %v7021 = vunpack.c.l.b16 %v3664
    %v7022 = vunpack.c.h.b16 %v3664
    %v7023 = vunpack.c.l.b16 %v3665
    %v7024 = vunpack.c.h.b16 %v3665
    %v7025 = vunpack.c.l.b16 %v3666
    %v7026 = vunpack.c.h.b16 %v3666
    %v7027 = vunpack.c.l.b16 %v3667
    %v7028 = vunpack.c.h.b16 %v3667
    %v7029 = vunpack.c.l.b16 %v3668
    %v7030 = vunpack.c.h.b16 %v3668
    %v7031 = vunpack.c.l.b16 %v3669
    %v7032 = vunpack.c.h.b16 %v3669
    %v7033 = vunpack.c.l.b16 %v3670
    %v7034 = vunpack.c.h.b16 %v3670
    %v7035 = vunpack.c.l.b16 %v3671
    %v7036 = vunpack.c.h.b16 %v3671
    %v7037 = vunpack.c.l.b16 %v3672
    %v7038 = vunpack.c.h.b16 %v3672
    %v7039 = vunpack.c.l.b16 %v3673
    %v7040 = vunpack.c.h.b16 %v3673
    %v7041 = vunpack.c.l.b16 %v3674
    %v7042 = vunpack.c.h.b16 %v3674
    %v7043 = vunpack.c.l.b16 %v3675
    %v7044 = vunpack.c.h.b16 %v3675
    %v7045 = vunpack.c.l.b16 %v3676
    %v7046 = vunpack.c.h.b16 %v3676
    %v7047 = vunpack.c.l.b16 %v3677
    %v7048 = vunpack.c.h.b16 %v3677
    %v7049 = vunpack.c.l.b16 %v3678
    %v7050 = vunpack.c.h.b16 %v3678
    %v7051 = vunpack.c.l.b16 %v3679
    %v7052 = vunpack.c.h.b16 %v3679
    %v7053 = vunpack.c.l.b16 %v3680
    %v7054 = vunpack.c.h.b16 %v3680
    %v7055 = vunpack.c.l.b16 %v3681
    %v7056 = vunpack.c.h.b16 %v3681
    %v7057 = vunpack.c.l.b16 %v3682
    %v7058 = vunpack.c.h.b16 %v3682
    %v7059 = vunpack.c.l.b16 %v3683
    %v7060 = vunpack.c.h.b16 %v3683
    %v7061 = vunpack.c.l.b16 %v3684
    %v7062 = vunpack.c.h.b16 %v3684
    %v7063 = vunpack.c.l.b16 %v3685
    %v7064 = vunpack.c.h.b16 %v3685
    %v7065 = vunpack.c.l.b16 %v3686
    %v7066 = vunpack.c.h.b16 %v3686
    %v7067 = vunpack.c.l.b16 %v3687
    %v7068 = vunpack.c.h.b16 %v3687
    %v7069 = vunpack.c.l.b16 %v3688
    %v7070 = vunpack.c.h.b16 %v3688
    %v7071 = vunpack.c.l.b16 %v3689
    %v7072 = vunpack.c.h.b16 %v3689
    %v7073 = vunpack.c.l.b16 %v3690
    %v7074 = vunpack.c.h.b16 %v3690
    %v7075 = vunpack.c.l.b16 %v3691
    %v7076 = vunpack.c.h.b16 %v3691
    %v7077 = vunpack.c.l.b16 %v3692
    %v7078 = vunpack.c.h.b16 %v3692
    %v7079 = vunpack.c.l.b16 %v3693
    %v7080 = vunpack.c.h.b16 %v3693
    %v7081 = vunpack.c.l.b16 %v3694
    %v7082 = vunpack.c.h.b16 %v3694
    %v7083 = vunpack.c.l.b16 %v3695
    %v7084 = vunpack.c.h.b16 %v3695
    %v7085 = vunpack.c.l.b16 %v3696
    %v7086 = vunpack.c.h.b16 %v3696
    %v7087 = vunpack.c.l.b16 %v3697
    %v7088 = vunpack.c.h.b16 %v3697
    %v7089 = vunpack.c.l.b16 %v3698
    %v7090 = vunpack.c.h.b16 %v3698
    %v7091 = vunpack.c.l.b16 %v3699
    %v7092 = vunpack.c.h.b16 %v3699
    %v7093 = vunpack.c.l.b16 %v3700
    %v7094 = vunpack.c.h.b16 %v3700
    %v7095 = vunpack.c.l.b16 %v3701
    %v7096 = vunpack.c.h.b16 %v3701
    %v7097 = vunpack.c.l.b16 %v3702
    %v7098 = vunpack.c.h.b16 %v3702
    %v7099 = vunpack.c.l.b16 %v3703
    %v7100 = vunpack.c.h.b16 %v3703
    %v7101 = vunpack.c.l.b16 %v3704
    %v7102 = vunpack.c.h.b16 %v3704
    %v7103 = vunpack.c.l.b16 %v3705
    %v7104 = vunpack.c.h.b16 %v3705
    %v7105 = vunpack.c.l.b16 %v3706
    %v7106 = vunpack.c.h.b16 %v3706
    %v7107 = vunpack.c.l.b16 %v3707
    %v7108 = vunpack.c.h.b16 %v3707
    %v7109 = vunpack.c.l.b16 %v3708
    %v7110 = vunpack.c.h.b16 %v3708
    %v7111 = vunpack.c.l.b16 %v3709
    %v7112 = vunpack.c.h.b16 %v3709
    %v7113 = vunpack.c.l.b16 %v3710
    %v7114 = vunpack.c.h.b16 %v3710
    %v7115 = vunpack.c.l.b16 %v3711
    %v7116 = vunpack.c.h.b16 %v3711
    %v7117 = vunpack.c.l.b16 %v3712
    %v7118 = vunpack.c.h.b16 %v3712
    %v7119 = vunpack.c.l.b16 %v3713
    %v7120 = vunpack.c.h.b16 %v3713
    %v7121 = vunpack.c.l.b16 %v3714
    %v7122 = vunpack.c.h.b16 %v3714
    %v7123 = vunpack.c.l.b16 %v3715
    %v7124 = vunpack.c.h.b16 %v3715
    %v7125 = vunpack.c.l.b16 %v3716
    %v7126 = vunpack.c.h.b16 %v3716
    %v7127 = vunpack.c.l.b16 %v3717
    %v7128 = vunpack.c.h.b16 %v3717
    %v7129 = vunpack.c.l.b16 %v3718
    %v7130 = vunpack.c.h.b16 %v3718
    %v7131 = vunpack.c.l.b16 %v3719
    %v7132 = vunpack.c.h.b16 %v3719
    %v7133 = vunpack.c.l.b16 %v3720
    %v7134 = vunpack.c.h.b16 %v3720
    %v7135 = vunpack.c.l.b16 %v3721
    %v7136 = vunpack.c.h.b16 %v3721
    %v7137 = vunpack.c.l.b16 %v3722
    %v7138 = vunpack.c.h.b16 %v3722
    %v7139 = vunpack.c.l.b16 %v3723
    %v7140 = vunpack.c.h.b16 %v3723
    %v7141 = vunpack.c.l.b16 %v3724
    %v7142 = vunpack.c.h.b16 %v3724
    %v7143 = vunpack.c.l.b16 %v3725
    %v7144 = vunpack.c.h.b16 %v3725
    %v7145 = vunpack.c.l.b16 %v3726
    %v7146 = vunpack.c.h.b16 %v3726
    %v7147 = vunpack.c.l.b16 %v3727
    %v7148 = vunpack.c.h.b16 %v3727
    %v7149 = vunpack.c.l.b16 %v3728
    %v7150 = vunpack.c.h.b16 %v3728
    %v7151 = vunpack.c.l.b16 %v3729
    %v7152 = vunpack.c.h.b16 %v3729
    %v7153 = vunpack.c.l.b16 %v3730
    %v7154 = vunpack.c.h.b16 %v3730
    %v7155 = vunpack.c.l.b16 %v3731
    %v7156 = vunpack.c.h.b16 %v3731
    %v7157 = vunpack.c.l.b16 %v3732
    %v7158 = vunpack.c.h.b16 %v3732
    %v7159 = vunpack.c.l.b16 %v3733
    %v7160 = vunpack.c.h.b16 %v3733
    %v7161 = vunpack.c.l.b16 %v3734
    %v7162 = vunpack.c.h.b16 %v3734
    %v7163 = vunpack.c.l.b16 %v3735
    %v7164 = vunpack.c.h.b16 %v3735
    %v7165 = vunpack.c.l.b16 %v3736
    %v7166 = vunpack.c.h.b16 %v3736
    %v7167 = vunpack.c.l.b16 %v3737
    %v7168 = vunpack.c.h.b16 %v3737
    %v7169 = vunpack.c.l.b16 %v3738
    %v7170 = vunpack.c.h.b16 %v3738
    %v7171 = vunpack.c.l.b16 %v3739
    %v7172 = vunpack.c.h.b16 %v3739
    %v7173 = vunpack.c.l.b16 %v3740
    %v7174 = vunpack.c.h.b16 %v3740
    %v7175 = vunpack.c.l.b16 %v3741
    %v7176 = vunpack.c.h.b16 %v3741
    %v7177 = vunpack.c.l.b16 %v3742
    %v7178 = vunpack.c.h.b16 %v3742
    %v7179 = vunpack.c.l.b16 %v3743
    %v7180 = vunpack.c.h.b16 %v3743
    %v7181 = vunpack.c.l.b16 %v3744
    %v7182 = vunpack.c.h.b16 %v3744
    %v7183 = vunpack.c.l.b16 %v3745
    %v7184 = vunpack.c.h.b16 %v3745
    %v7185 = vunpack.c.l.b16 %v3746
    %v7186 = vunpack.c.h.b16 %v3746
    %v7187 = vunpack.c.l.b16 %v3747
    %v7188 = vunpack.c.h.b16 %v3747
    %v7189 = vunpack.c.l.b16 %v3748
    %v7190 = vunpack.c.h.b16 %v3748
    %v7191 = vunpack.c.l.b16 %v3749
    %v7192 = vunpack.c.h.b16 %v3749
    %v7193 = vunpack.c.l.b16 %v3750
    %v7194 = vunpack.c.h.b16 %v3750
    %v7195 = vunpack.c.l.b16 %v3751
    %v7196 = vunpack.c.h.b16 %v3751
    %v7197 = vunpack.c.l.b16 %v3752
    %v7198 = vunpack.c.h.b16 %v3752
    %v7199 = vunpack.c.l.b16 %v3753
    %v7200 = vunpack.c.h.b16 %v3753
    %v7201 = vunpack.c.l.b16 %v3754
    %v7202 = vunpack.c.h.b16 %v3754
    %v7203 = vunpack.c.l.b16 %v3755
    %v7204 = vunpack.c.h.b16 %v3755
    %v7205 = vunpack.c.l.b16 %v3756
    %v7206 = vunpack.c.h.b16 %v3756
    %v7207 = vunpack.c.l.b16 %v3757
    %v7208 = vunpack.c.h.b16 %v3757
    %v7209 = vunpack.c.l.b16 %v3758
    %v7210 = vunpack.c.h.b16 %v3758
    %v7211 = vunpack.c.l.b16 %v3759
    %v7212 = vunpack.c.h.b16 %v3759
    %v7213 = vunpack.c.l.b16 %v3760
    %v7214 = vunpack.c.h.b16 %v3760
    %v7215 = vunpack.c.l.b16 %v3761
    %v7216 = vunpack.c.h.b16 %v3761
    %v7217 = vunpack.c.l.b16 %v3762
    %v7218 = vunpack.c.h.b16 %v3762
    %v7219 = vunpack.c.l.b16 %v3763
    %v7220 = vunpack.c.h.b16 %v3763
    %v7221 = vunpack.c.l.b16 %v3764
    %v7222 = vunpack.c.h.b16 %v3764
    %v7223 = vunpack.c.l.b16 %v3765
    %v7224 = vunpack.c.h.b16 %v3765
    %v7225 = vunpack.c.l.b16 %v3766
    %v7226 = vunpack.c.h.b16 %v3766
    %v7227 = vunpack.c.l.b16 %v3767
    %v7228 = vunpack.c.h.b16 %v3767
    %v7229 = vunpack.c.l.b16 %v3768
    %v7230 = vunpack.c.h.b16 %v3768
    %v7231 = vunpack.c.l.b16 %v3769
    %v7232 = vunpack.c.h.b16 %v3769
    %v7233 = vunpack.c.l.b16 %v3770
    %v7234 = vunpack.c.h.b16 %v3770
    %v7235 = vunpack.c.l.b16 %v3771
    %v7236 = vunpack.c.h.b16 %v3771
    %v7237 = vunpack.c.l.b16 %v3772
    %v7238 = vunpack.c.h.b16 %v3772
    %v7239 = vunpack.c.l.b16 %v3773
    %v7240 = vunpack.c.h.b16 %v3773
    %v7241 = vunpack.c.l.b16 %v3774
    %v7242 = vunpack.c.h.b16 %v3774
    %v7243 = vunpack.c.l.b16 %v3775
    %v7244 = vunpack.c.h.b16 %v3775
    %v7245 = vunpack.c.l.b16 %v3776
    %v7246 = vunpack.c.h.b16 %v3776
    %v7247 = vunpack.c.l.b16 %v3777
    %v7248 = vunpack.c.h.b16 %v3777
    %v7249 = vunpack.c.l.b16 %v3778
    %v7250 = vunpack.c.h.b16 %v3778
    %v7251 = vunpack.c.l.b16 %v3779
    %v7252 = vunpack.c.h.b16 %v3779
    %v7253 = vunpack.c.l.b16 %v3780
    %v7254 = vunpack.c.h.b16 %v3780
    %v7255 = vunpack.c.l.b16 %v3781
    %v7256 = vunpack.c.h.b16 %v3781
    %v7257 = vunpack.c.l.b16 %v3782
    %v7258 = vunpack.c.h.b16 %v3782
    %v7259 = vunpack.c.l.b16 %v3783
    %v7260 = vunpack.c.h.b16 %v3783
    %v7261 = vunpack.c.l.b16 %v3784
    %v7262 = vunpack.c.h.b16 %v3784
    %v7263 = vunpack.c.l.b16 %v3785
    %v7264 = vunpack.c.h.b16 %v3785
    %v7265 = vunpack.c.l.b16 %v3786
    %v7266 = vunpack.c.h.b16 %v3786
    %v7267 = vunpack.c.l.b16 %v3787
    %v7268 = vunpack.c.h.b16 %v3787
    %v7269 = vunpack.c.l.b16 %v3788
    %v7270 = vunpack.c.h.b16 %v3788
    %v7271 = vunpack.c.l.b16 %v3789
    %v7272 = vunpack.c.h.b16 %v3789
    %v7273 = vunpack.c.l.b16 %v3790
    %v7274 = vunpack.c.h.b16 %v3790
    %v7275 = vunpack.c.l.b16 %v3791
    %v7276 = vunpack.c.h.b16 %v3791
    %v7277 = vunpack.c.l.b16 %v3792
    %v7278 = vunpack.c.h.b16 %v3792
    %v7279 = vunpack.c.l.b16 %v3793
    %v7280 = vunpack.c.h.b16 %v3793
    %v7281 = vunpack.c.l.b16 %v3794
    %v7282 = vunpack.c.h.b16 %v3794
    %v7283 = vunpack.c.l.b16 %v3795
    %v7284 = vunpack.c.h.b16 %v3795
    %v7285 = vunpack.c.l.b16 %v3796
    %v7286 = vunpack.c.h.b16 %v3796
    %v7287 = vunpack.c.l.b16 %v3797
    %v7288 = vunpack.c.h.b16 %v3797
    %v7289 = vunpack.c.l.b16 %v3798
    %v7290 = vunpack.c.h.b16 %v3798
    %v7291 = vpack.c.b16 %v6913, %v6907
    %v7292 = vpack.c.b16 %v6914, %v6908
    %v7293 = vpack.c.b16 %v6915, %v6909
    %v7294 = vpack.c.b16 %v6916, %v6910
    %v7295 = vpack.c.b16 %v6917, %v6911
    %v7296 = vpack.c.b16 %v6918, %v6912
    %v7297 = vpack.c.b16 %v6925, %v6919
    %v7298 = vpack.c.b16 %v6926, %v6920
    %v7299 = vpack.c.b16 %v6927, %v6921
    %v7300 = vpack.c.b16 %v6928, %v6922
    %v7301 = vpack.c.b16 %v6929, %v6923
    %v7302 = vpack.c.b16 %v6930, %v6924
    %v7303 = vpack.c.b16 %v6937, %v6931
    %v7304 = vpack.c.b16 %v6938, %v6932
    %v7305 = vpack.c.b16 %v6939, %v6933
    %v7306 = vpack.c.b16 %v6940, %v6934
    %v7307 = vpack.c.b16 %v6941, %v6935
    %v7308 = vpack.c.b16 %v6942, %v6936
    %v7309 = vpack.c.b16 %v6949, %v6943
    %v7310 = vpack.c.b16 %v6950, %v6944
    %v7311 = vpack.c.b16 %v6951, %v6945
    %v7312 = vpack.c.b16 %v6952, %v6946
    %v7313 = vpack.c.b16 %v6953, %v6947
    %v7314 = vpack.c.b16 %v6954, %v6948
    %v7315 = vpack.c.b16 %v6961, %v6955
    %v7316 = vpack.c.b16 %v6962, %v6956
    %v7317 = vpack.c.b16 %v6963, %v6957
    %v7318 = vpack.c.b16 %v6964, %v6958
    %v7319 = vpack.c.b16 %v6965, %v6959
    %v7320 = vpack.c.b16 %v6966, %v6960
    %v7321 = vpack.c.b16 %v6973, %v6967
    %v7322 = vpack.c.b16 %v6974, %v6968
    %v7323 = vpack.c.b16 %v6975, %v6969
    %v7324 = vpack.c.b16 %v6976, %v6970
    %v7325 = vpack.c.b16 %v6977, %v6971
    %v7326 = vpack.c.b16 %v6978, %v6972
    %v7327 = vpack.c.b16 %v6985, %v6979
    %v7328 = vpack.c.b16 %v6986, %v6980
    %v7329 = vpack.c.b16 %v6987, %v6981
    %v7330 = vpack.c.b16 %v6988, %v6982
    %v7331 = vpack.c.b16 %v6989, %v6983
    %v7332 = vpack.c.b16 %v6990, %v6984
    %v7333 = vpack.c.b16 %v6997, %v6991
    %v7334 = vpack.c.b16 %v6998, %v6992
    %v7335 = vpack.c.b16 %v6999, %v6993
    %v7336 = vpack.c.b16 %v7000, %v6994
    %v7337 = vpack.c.b16 %v7001, %v6995
    %v7338 = vpack.c.b16 %v7002, %v6996
    %v7339 = vpack.c.b16 %v7009, %v7003
    %v7340 = vpack.c.b16 %v7010, %v7004
    %v7341 = vpack.c.b16 %v7011, %v7005
    %v7342 = vpack.c.b16 %v7012, %v7006
    %v7343 = vpack.c.b16 %v7013, %v7007
    %v7344 = vpack.c.b16 %v7014, %v7008
    %v7345 = vpack.c.b16 %v7021, %v7015
    %v7346 = vpack.c.b16 %v7022, %v7016
    %v7347 = vpack.c.b16 %v7023, %v7017
    %v7348 = vpack.c.b16 %v7024, %v7018
    %v7349 = vpack.c.b16 %v7025, %v7019
    %v7350 = vpack.c.b16 %v7026, %v7020
    %v7351 = vpack.c.b16 %v7033, %v7027
    %v7352 = vpack.c.b16 %v7034, %v7028
    %v7353 = vpack.c.b16 %v7035, %v7029
    %v7354 = vpack.c.b16 %v7036, %v7030
    %v7355 = vpack.c.b16 %v7037, %v7031
    %v7356 = vpack.c.b16 %v7038, %v7032
    %v7357 = vpack.c.b16 %v7045, %v7039
    %v7358 = vpack.c.b16 %v7046, %v7040
    %v7359 = vpack.c.b16 %v7047, %v7041
    %v7360 = vpack.c.b16 %v7048, %v7042
    %v7361 = vpack.c.b16 %v7049, %v7043
    %v7362 = vpack.c.b16 %v7050, %v7044
    %v7363 = vpack.c.b16 %v7057, %v7051
    %v7364 = vpack.c.b16 %v7058, %v7052
    %v7365 = vpack.c.b16 %v7059, %v7053
    %v7366 = vpack.c.b16 %v7060, %v7054
    %v7367 = vpack.c.b16 %v7061, %v7055
    %v7368 = vpack.c.b16 %v7062, %v7056
    %v7369 = vpack.c.b16 %v7069, %v7063
    %v7370 = vpack.c.b16 %v7070, %v7064
    %v7371 = vpack.c.b16 %v7071, %v7065
    %v7372 = vpack.c.b16 %v7072, %v7066
    %v7373 = vpack.c.b16 %v7073, %v7067
    %v7374 = vpack.c.b16 %v7074, %v7068
    %v7375 = vpack.c.b16 %v7081, %v7075
    %v7376 = vpack.c.b16 %v7082, %v7076
    %v7377 = vpack.c.b16 %v7083, %v7077
    %v7378 = vpack.c.b16 %v7084, %v7078
    %v7379 = vpack.c.b16 %v7085, %v7079
    %v7380 = vpack.c.b16 %v7086, %v7080
    %v7381 = vpack.c.b16 %v7093, %v7087
    %v7382 = vpack.c.b16 %v7094, %v7088
    %v7383 = vpack.c.b16 %v7095, %v7089
    %v7384 = vpack.c.b16 %v7096, %v7090
    %v7385 = vpack.c.b16 %v7097, %v7091
    %v7386 = vpack.c.b16 %v7098, %v7092
    %v7387 = vpack.c.b16 %v7105, %v7099
    %v7388 = vpack.c.b16 %v7106, %v7100
    %v7389 = vpack.c.b16 %v7107, %v7101
    %v7390 = vpack.c.b16 %v7108, %v7102
    %v7391 = vpack.c.b16 %v7109, %v7103
    %v7392 = vpack.c.b16 %v7110, %v7104
    %v7393 = vpack.c.b16 %v7117, %v7111
    %v7394 = vpack.c.b16 %v7118, %v7112
    %v7395 = vpack.c.b16 %v7119, %v7113
    %v7396 = vpack.c.b16 %v7120, %v7114
    %v7397 = vpack.c.b16 %v7121, %v7115
    %v7398 = vpack.c.b16 %v7122, %v7116
    %v7399 = vpack.c.b16 %v7129, %v7123
    %v7400 = vpack.c.b16 %v7130, %v7124
    %v7401 = vpack.c.b16 %v7131, %v7125
    %v7402 = vpack.c.b16 %v7132, %v7126
    %v7403 = vpack.c.b16 %v7133, %v7127
    %v7404 = vpack.c.b16 %v7134, %v7128
    %v7405 = vpack.c.b16 %v7141, %v7135
    %v7406 = vpack.c.b16 %v7142, %v7136
    %v7407 = vpack.c.b16 %v7143, %v7137
    %v7408 = vpack.c.b16 %v7144, %v7138
    %v7409 = vpack.c.b16 %v7145, %v7139
    %v7410 = vpack.c.b16 %v7146, %v7140
    %v7411 = vpack.c.b16 %v7153, %v7147
    %v7412 = vpack.c.b16 %v7154, %v7148
    %v7413 = vpack.c.b16 %v7155, %v7149
    %v7414 = vpack.c.b16 %v7156, %v7150
    %v7415 = vpack.c.b16 %v7157, %v7151
    %v7416 = vpack.c.b16 %v7158, %v7152
    %v7417 = vpack.c.b16 %v7165, %v7159
    %v7418 = vpack.c.b16 %v7166, %v7160
    %v7419 = vpack.c.b16 %v7167, %v7161
    %v7420 = vpack.c.b16 %v7168, %v7162
    %v7421 = vpack.c.b16 %v7169, %v7163
    %v7422 = vpack.c.b16 %v7170, %v7164
    %v7423 = vpack.c.b16 %v7177, %v7171
    %v7424 = vpack.c.b16 %v7178, %v7172
    %v7425 = vpack.c.b16 %v7179, %v7173
    %v7426 = vpack.c.b16 %v7180, %v7174
    %v7427 = vpack.c.b16 %v7181, %v7175
    %v7428 = vpack.c.b16 %v7182, %v7176
    %v7429 = vpack.c.b16 %v7189, %v7183
    %v7430 = vpack.c.b16 %v7190, %v7184
    %v7431 = vpack.c.b16 %v7191, %v7185
    %v7432 = vpack.c.b16 %v7192, %v7186
    %v7433 = vpack.c.b16 %v7193, %v7187
    %v7434 = vpack.c.b16 %v7194, %v7188
    %v7435 = vpack.c.b16 %v7201, %v7195
    %v7436 = vpack.c.b16 %v7202, %v7196
    %v7437 = vpack.c.b16 %v7203, %v7197
    %v7438 = vpack.c.b16 %v7204, %v7198
    %v7439 = vpack.c.b16 %v7205, %v7199
    %v7440 = vpack.c.b16 %v7206, %v7200
    %v7441 = vpack.c.b16 %v7213, %v7207
    %v7442 = vpack.c.b16 %v7214, %v7208
    %v7443 = vpack.c.b16 %v7215, %v7209
    %v7444 = vpack.c.b16 %v7216, %v7210
    %v7445 = vpack.c.b16 %v7217, %v7211
    %v7446 = vpack.c.b16 %v7218, %v7212
    %v7447 = vpack.c.b16 %v7225, %v7219
    %v7448 = vpack.c.b16 %v7226, %v7220
    %v7449 = vpack.c.b16 %v7227, %v7221
    %v7450 = vpack.c.b16 %v7228, %v7222
    %v7451 = vpack.c.b16 %v7229, %v7223
    %v7452 = vpack.c.b16 %v7230, %v7224
    %v7453 = vpack.c.b16 %v7237, %v7231
    %v7454 = vpack.c.b16 %v7238, %v7232
    %v7455 = vpack.c.b16 %v7239, %v7233
    %v7456 = vpack.c.b16 %v7240, %v7234
    %v7457 = vpack.c.b16 %v7241, %v7235
    %v7458 = vpack.c.b16 %v7242, %v7236
    %v7459 = vpack.c.b16 %v7249, %v7243
    %v7460 = vpack.c.b16 %v7250, %v7244
    %v7461 = vpack.c.b16 %v7251, %v7245
    %v7462 = vpack.c.b16 %v7252, %v7246
    %v7463 = vpack.c.b16 %v7253, %v7247
    %v7464 = vpack.c.b16 %v7254, %v7248
    %v7465 = vpack.c.b16 %v7261, %v7255
    %v7466 = vpack.c.b16 %v7262, %v7256
    %v7467 = vpack.c.b16 %v7263, %v7257
    %v7468 = vpack.c.b16 %v7264, %v7258
    %v7469 = vpack.c.b16 %v7265, %v7259
    %v7470 = vpack.c.b16 %v7266, %v7260
    %v7471 = vpack.c.b16 %v7273, %v7267
    %v7472 = vpack.c.b16 %v7274, %v7268
    %v7473 = vpack.c.b16 %v7275, %v7269
    %v7474 = vpack.c.b16 %v7276, %v7270
    %v7475 = vpack.c.b16 %v7277, %v7271
    %v7476 = vpack.c.b16 %v7278, %v7272
    %v7477 = vpack.c.b16 %v7285, %v7279
    %v7478 = vpack.c.b16 %v7286, %v7280
    %v7479 = vpack.c.b16 %v7287, %v7281
    %v7480 = vpack.c.b16 %v7288, %v7282
    %v7481 = vpack.c.b16 %v7289, %v7283
    %v7482 = vpack.c.b16 %v7290, %v7284
    %7675 = vmatprep.subr.bf16.mxu0 %v7292
    %7676 = vmatpush1.bf16.msra.mxu0 %v7291
    %7677 = vmatprep.subr.bf16.mxu0 %v7298
    %7678 = vmatpush1.bf16.msra.mxu0 %v7297
    %7679 = vmatprep.subr.bf16.mxu0 %v7304
    %7680 = vmatpush1.bf16.msra.mxu0 %v7303
    %7681 = vmatprep.subr.bf16.mxu0 %v7310
    %7682 = vmatpush1.bf16.msra.mxu0 %v7309
    %7683 = vmatprep.subr.bf16.mxu0 %v7316
    %7684 = vmatpush1.bf16.msra.mxu0 %v7315
    %7685 = vmatprep.subr.bf16.mxu0 %v7322
    %7686 = vmatpush1.bf16.msra.mxu0 %v7321
    %7687 = vmatprep.subr.bf16.mxu0 %v7328
    %7688 = vmatpush1.bf16.msra.mxu0 %v7327
    %7689 = vmatprep.subr.bf16.mxu0 %v7334
    %7690 = vmatpush1.bf16.msra.mxu0 %v7333
    %7691 = vmatprep.subr.bf16.mxu0 %v7340
    %7692 = vmatpush1.bf16.msra.mxu0 %v7339
    %7693 = vmatprep.subr.bf16.mxu0 %v7346
    %7694 = vmatpush1.bf16.msra.mxu0 %v7345
    %7695 = vmatprep.subr.bf16.mxu0 %v7352
    %7696 = vmatpush1.bf16.msra.mxu0 %v7351
    %7697 = vmatprep.subr.bf16.mxu0 %v7358
    %7698 = vmatpush1.bf16.msra.mxu0 %v7357
    %7699 = vmatprep.subr.bf16.mxu0 %v7364
    %7700 = vmatpush1.bf16.msra.mxu0 %v7363
    %7701 = vmatprep.subr.bf16.mxu0 %v7370
    %7702 = vmatpush1.bf16.msra.mxu0 %v7369
    %7703 = vmatprep.subr.bf16.mxu0 %v7376
    %7704 = vmatpush1.bf16.msra.mxu0 %v7375
    %7705 = vmatprep.subr.bf16.mxu0 %v7382
    %7706 = vmatpush1.bf16.msra.mxu0 %v7381
    %7707 = vmatprep.mubr.bf16.mxu0 %v1784
    %7708 = vmatmul.mubr.bf16.gmra.mrb[0].mxu0 %v1783
    %v7709 = vpop.f32.mrb[0].mxu0
    %v7710 = vadd.f32 0.0, %v7709
    %v7711 = vpop.f32.mrb[0].mxu0
    %v7712 = vadd.f32 0.0, %v7711
    %v7713 = vpop.f32.mrb[0].mxu0
    %v7714 = vadd.f32 0.0, %v7713
    %v7715 = vpop.f32.mrb[0].mxu0
    %v7716 = vadd.f32 0.0, %v7715
    %7717 = vmatprep.mubr.bf16.mxu0 %v1788
    %7718 = vmatmul.mubr.bf16.gmra.mrb[0].mxu0 %v1787
    %v7719 = vpop.f32.mrb[0].mxu0
    %v7720 = vadd.f32 0.0, %v7719
    %v7721 = vpop.f32.mrb[0].mxu0
    %v7722 = vadd.f32 0.0, %v7721
    %v7723 = vpop.f32.mrb[0].mxu0
    %v7724 = vadd.f32 0.0, %v7723
    %v7725 = vpop.f32.mrb[0].mxu0
    %v7726 = vadd.f32 0.0, %v7725
    %7727 = vmatprep.mubr.bf16.mxu0 %v1792
    %7728 = vmatmul.mubr.bf16.gmra.mrb[0].mxu0 %v1791
    %v7729 = vpop.f32.mrb[0].mxu0
    %v7730 = vadd.f32 0.0, %v7729
    %v7731 = vpop.f32.mrb[0].mxu0
    %v7732 = vadd.f32 0.0, %v7731
    %v7733 = vpop.f32.mrb[0].mxu0
    %v7734 = vadd.f32 0.0, %v7733
    %v7735 = vpop.f32.mrb[0].mxu0
    %v7736 = vadd.f32 0.0, %v7735
    %7737 = vmatprep.mubr.bf16.mxu0 %v1796
    %7738 = vmatmul.mubr.bf16.gmra.mrb[0].mxu0 %v1795
    %v7739 = vpop.f32.mrb[0].mxu0
    %v7740 = vadd.f32 0.0, %v7739
    %v7741 = vpop.f32.mrb[0].mxu0
    %v7742 = vadd.f32 0.0, %v7741
    %v7743 = vpop.f32.mrb[0].mxu0
    %v7744 = vadd.f32 0.0, %v7743
    %v7745 = vpop.f32.mrb[0].mxu0
    %v7746 = vadd.f32 0.0, %v7745
    %7747 = vmatprep.mubr.bf16.mxu0 %v1800
    %7748 = vmatmul.mubr.bf16.gmra.mrb[0].mxu0 %v1799
    %v7749 = vpop.f32.mrb[0].mxu0
    %v7750 = vadd.f32 0.0, %v7749
    %v7751 = vpop.f32.mrb[0].mxu0
    %v7752 = vadd.f32 0.0, %v7751
    %v7753 = vpop.f32.mrb[0].mxu0
    %v7754 = vadd.f32 0.0, %v7753
    %v7755 = vpop.f32.mrb[0].mxu0
    %v7756 = vadd.f32 0.0, %v7755
    %7757 = vdwg.mxu0
    %7758 = vmatprep.subr.bf16.mxu0 %v7388
    %7759 = vmatpush1.bf16.msra.mxu0 %v7387
    %7760 = vmatprep.subr.bf16.mxu0 %v7394
    %7761 = vmatpush1.bf16.msra.mxu0 %v7393
    %7762 = vmatprep.subr.bf16.mxu0 %v7400
    %7763 = vmatpush1.bf16.msra.mxu0 %v7399
    %7764 = vmatprep.subr.bf16.mxu0 %v7406
    %7765 = vmatpush1.bf16.msra.mxu0 %v7405
    %7766 = vmatprep.subr.bf16.mxu0 %v7412
    %7767 = vmatpush1.bf16.msra.mxu0 %v7411
    %7768 = vmatprep.subr.bf16.mxu0 %v7418
    %7769 = vmatpush1.bf16.msra.mxu0 %v7417
    %7770 = vmatprep.subr.bf16.mxu0 %v7424
    %7771 = vmatpush1.bf16.msra.mxu0 %v7423
    %7772 = vmatprep.subr.bf16.mxu0 %v7430
    %7773 = vmatpush1.bf16.msra.mxu0 %v7429
    %7774 = vmatprep.subr.bf16.mxu0 %v7436
    %7775 = vmatpush1.bf16.msra.mxu0 %v7435
    %7776 = vmatprep.subr.bf16.mxu0 %v7442
    %7777 = vmatpush1.bf16.msra.mxu0 %v7441
    %7778 = vmatprep.subr.bf16.mxu0 %v7448
    %7779 = vmatpush1.bf16.msra.mxu0 %v7447
    %7780 = vmatprep.subr.bf16.mxu0 %v7454
    %7781 = vmatpush1.bf16.msra.mxu0 %v7453
    %7782 = vmatprep.subr.bf16.mxu0 %v7460
    %7783 = vmatpush1.bf16.msra.mxu0 %v7459
    %7784 = vmatprep.subr.bf16.mxu0 %v7466
    %7785 = vmatpush1.bf16.msra.mxu0 %v7465
    %7786 = vmatprep.subr.bf16.mxu0 %v7472
    %7787 = vmatpush1.bf16.msra.mxu0 %v7471
    %7788 = vmatprep.subr.bf16.mxu0 %v7478
    %7789 = vmatpush1.bf16.msra.mxu0 %v7477
    %7790 = vmatprep.mubr.bf16.mxu0 %v1786
    %7791 = vmatmul.mubr.bf16.gmra.mrb[0].mxu0 %v1785
    %v7792 = vpop.f32.mrb[0].mxu0
    %v7793 = vadd.f32 %v7710, %v7792
    %v7794 = vpop.f32.mrb[0].mxu0
    %v7795 = vadd.f32 %v7712, %v7794
    %v7796 = vpop.f32.mrb[0].mxu0
    %v7797 = vadd.f32 %v7714, %v7796
    %v7798 = vpop.f32.mrb[0].mxu0
    %v7799 = vadd.f32 %v7716, %v7798
    %7800 = vmatprep.mubr.bf16.mxu0 %v1790
    %7801 = vmatmul.mubr.bf16.gmra.mrb[0].mxu0 %v1789
    %v7802 = vpop.f32.mrb[0].mxu0
    %v7803 = vadd.f32 %v7720, %v7802
    %v7804 = vpop.f32.mrb[0].mxu0
    %v7805 = vadd.f32 %v7722, %v7804
    %v7806 = vpop.f32.mrb[0].mxu0
    %v7807 = vadd.f32 %v7724, %v7806
    %v7808 = vpop.f32.mrb[0].mxu0
    %v7809 = vadd.f32 %v7726, %v7808
    %7810 = vmatprep.mubr.bf16.mxu0 %v1794
    %7811 = vmatmul.mubr.bf16.gmra.mrb[0].mxu0 %v1793
    %v7812 = vpop.f32.mrb[0].mxu0
    %v7813 = vadd.f32 %v7730, %v7812
    %v7814 = vpop.f32.mrb[0].mxu0
    %v7815 = vadd.f32 %v7732, %v7814
    %v7816 = vpop.f32.mrb[0].mxu0
    %v7817 = vadd.f32 %v7734, %v7816
    %v7818 = vpop.f32.mrb[0].mxu0
    %v7819 = vadd.f32 %v7736, %v7818
    %7820 = vmatprep.mubr.bf16.mxu0 %v1798
    %7821 = vmatmul.mubr.bf16.gmra.mrb[0].mxu0 %v1797
    %v7822 = vpop.f32.mrb[0].mxu0
    %v7823 = vadd.f32 %v7740, %v7822
    %v7824 = vpop.f32.mrb[0].mxu0
    %v7825 = vadd.f32 %v7742, %v7824
    %v7826 = vpop.f32.mrb[0].mxu0
    %v7827 = vadd.f32 %v7744, %v7826
    %v7828 = vpop.f32.mrb[0].mxu0
    %v7829 = vadd.f32 %v7746, %v7828
    %7830 = vmatprep.mubr.bf16.mxu0 %v1802
    %7831 = vmatmul.mubr.bf16.gmra.mrb[0].mxu0 %v1801
    %v7832 = vpop.f32.mrb[0].mxu0
    %v7833 = vadd.f32 %v7750, %v7832
    %v7834 = vpop.f32.mrb[0].mxu0
    %v7835 = vadd.f32 %v7752, %v7834
    %v7836 = vpop.f32.mrb[0].mxu0
    %v7837 = vadd.f32 %v7754, %v7836
    %v7838 = vpop.f32.mrb[0].mxu0
    %v7839 = vadd.f32 %v7756, %v7838
    %7840 = vdwg.mxu0
    %7841 = vmatprep.subr.bf16.mxu0 %v7294
    %7842 = vmatpush1.bf16.msra.mxu0 %v7293
    %7843 = vmatprep.subr.bf16.mxu0 %v7300
    %7844 = vmatpush1.bf16.msra.mxu0 %v7299
    %7845 = vmatprep.subr.bf16.mxu0 %v7306
    %7846 = vmatpush1.bf16.msra.mxu0 %v7305
    %7847 = vmatprep.subr.bf16.mxu0 %v7312
    %7848 = vmatpush1.bf16.msra.mxu0 %v7311
    %7849 = vmatprep.subr.bf16.mxu0 %v7318
    %7850 = vmatpush1.bf16.msra.mxu0 %v7317
    %7851 = vmatprep.subr.bf16.mxu0 %v7324
    %7852 = vmatpush1.bf16.msra.mxu0 %v7323
    %7853 = vmatprep.subr.bf16.mxu0 %v7330
    %7854 = vmatpush1.bf16.msra.mxu0 %v7329
    %7855 = vmatprep.subr.bf16.mxu0 %v7336
    %7856 = vmatpush1.bf16.msra.mxu0 %v7335
    %7857 = vmatprep.subr.bf16.mxu0 %v7342
    %7858 = vmatpush1.bf16.msra.mxu0 %v7341
    %7859 = vmatprep.subr.bf16.mxu0 %v7348
    %7860 = vmatpush1.bf16.msra.mxu0 %v7347
    %7861 = vmatprep.subr.bf16.mxu0 %v7354
    %7862 = vmatpush1.bf16.msra.mxu0 %v7353
    %7863 = vmatprep.subr.bf16.mxu0 %v7360
    %7864 = vmatpush1.bf16.msra.mxu0 %v7359
    %7865 = vmatprep.subr.bf16.mxu0 %v7366
    %7866 = vmatpush1.bf16.msra.mxu0 %v7365
    %7867 = vmatprep.subr.bf16.mxu0 %v7372
    %7868 = vmatpush1.bf16.msra.mxu0 %v7371
    %7869 = vmatprep.subr.bf16.mxu0 %v7378
    %7870 = vmatpush1.bf16.msra.mxu0 %v7377
    %7871 = vmatprep.subr.bf16.mxu0 %v7384
    %7872 = vmatpush1.bf16.msra.mxu0 %v7383
    %7873 = vmatprep.mubr.bf16.mxu0 %v1784
    %7874 = vmatmul.mubr.bf16.gmra.mrb[0].mxu0 %v1783
    %v7875 = vpop.f32.mrb[0].mxu0
    %v7876 = vadd.f32 0.0, %v7875
    %v7877 = vpop.f32.mrb[0].mxu0
    %v7878 = vadd.f32 0.0, %v7877
    %v7879 = vpop.f32.mrb[0].mxu0
    %v7880 = vadd.f32 0.0, %v7879
    %v7881 = vpop.f32.mrb[0].mxu0
    %v7882 = vadd.f32 0.0, %v7881
    %7883 = vmatprep.mubr.bf16.mxu0 %v1788
    %7884 = vmatmul.mubr.bf16.gmra.mrb[0].mxu0 %v1787
    %v7885 = vpop.f32.mrb[0].mxu0
    %v7886 = vadd.f32 0.0, %v7885
    %v7887 = vpop.f32.mrb[0].mxu0
    %v7888 = vadd.f32 0.0, %v7887
    %v7889 = vpop.f32.mrb[0].mxu0
    %v7890 = vadd.f32 0.0, %v7889
    %v7891 = vpop.f32.mrb[0].mxu0
    %v7892 = vadd.f32 0.0, %v7891
    %7893 = vmatprep.mubr.bf16.mxu0 %v1792
    %7894 = vmatmul.mubr.bf16.gmra.mrb[0].mxu0 %v1791
    %v7895 = vpop.f32.mrb[0].mxu0
    %v7896 = vadd.f32 0.0, %v7895
    %v7897 = vpop.f32.mrb[0].mxu0
    %v7898 = vadd.f32 0.0, %v7897
    %v7899 = vpop.f32.mrb[0].mxu0
    %v7900 = vadd.f32 0.0, %v7899
    %v7901 = vpop.f32.mrb[0].mxu0
    %v7902 = vadd.f32 0.0, %v7901
    %7903 = vmatprep.mubr.bf16.mxu0 %v1796
    %7904 = vmatmul.mubr.bf16.gmra.mrb[0].mxu0 %v1795
    %v7905 = vpop.f32.mrb[0].mxu0
    %v7906 = vadd.f32 0.0, %v7905
    %v7907 = vpop.f32.mrb[0].mxu0
    %v7908 = vadd.f32 0.0, %v7907
    %v7909 = vpop.f32.mrb[0].mxu0
    %v7910 = vadd.f32 0.0, %v7909
    %v7911 = vpop.f32.mrb[0].mxu0
    %v7912 = vadd.f32 0.0, %v7911
    %7913 = vmatprep.mubr.bf16.mxu0 %v1800
    %7914 = vmatmul.mubr.bf16.gmra.mrb[0].mxu0 %v1799
    %v7915 = vpop.f32.mrb[0].mxu0
    %v7916 = vadd.f32 0.0, %v7915
    %v7917 = vpop.f32.mrb[0].mxu0
    %v7918 = vadd.f32 0.0, %v7917
    %v7919 = vpop.f32.mrb[0].mxu0
    %v7920 = vadd.f32 0.0, %v7919
    %v7921 = vpop.f32.mrb[0].mxu0
    %v7922 = vadd.f32 0.0, %v7921
    %7923 = vdwg.mxu0
    %7924 = vmatprep.subr.bf16.mxu0 %v7390
    %7925 = vmatpush1.bf16.msra.mxu0 %v7389
    %7926 = vmatprep.subr.bf16.mxu0 %v7396
    %7927 = vmatpush1.bf16.msra.mxu0 %v7395
    %7928 = vmatprep.subr.bf16.mxu0 %v7402
    %7929 = vmatpush1.bf16.msra.mxu0 %v7401
    %7930 = vmatprep.subr.bf16.mxu0 %v7408
    %7931 = vmatpush1.bf16.msra.mxu0 %v7407
    %7932 = vmatprep.subr.bf16.mxu0 %v7414
    %7933 = vmatpush1.bf16.msra.mxu0 %v7413
    %7934 = vmatprep.subr.bf16.mxu0 %v7420
    %7935 = vmatpush1.bf16.msra.mxu0 %v7419
    %7936 = vmatprep.subr.bf16.mxu0 %v7426
    %7937 = vmatpush1.bf16.msra.mxu0 %v7425
    %7938 = vmatprep.subr.bf16.mxu0 %v7432
    %7939 = vmatpush1.bf16.msra.mxu0 %v7431
    %7940 = vmatprep.subr.bf16.mxu0 %v7438
    %7941 = vmatpush1.bf16.msra.mxu0 %v7437
    %7942 = vmatprep.subr.bf16.mxu0 %v7444
    %7943 = vmatpush1.bf16.msra.mxu0 %v7443
    %7944 = vmatprep.subr.bf16.mxu0 %v7450
    %7945 = vmatpush1.bf16.msra.mxu0 %v7449
    %7946 = vmatprep.subr.bf16.mxu0 %v7456
    %7947 = vmatpush1.bf16.msra.mxu0 %v7455
    %7948 = vmatprep.subr.bf16.mxu0 %v7462
    %7949 = vmatpush1.bf16.msra.mxu0 %v7461
    %7950 = vmatprep.subr.bf16.mxu0 %v7468
    %7951 = vmatpush1.bf16.msra.mxu0 %v7467
    %7952 = vmatprep.subr.bf16.mxu0 %v7474
    %7953 = vmatpush1.bf16.msra.mxu0 %v7473
    %7954 = vmatprep.subr.bf16.mxu0 %v7480
    %7955 = vmatpush1.bf16.msra.mxu0 %v7479
    %7956 = vmatprep.mubr.bf16.mxu0 %v1786
    %7957 = vmatmul.mubr.bf16.gmra.mrb[0].mxu0 %v1785
    %v7958 = vpop.f32.mrb[0].mxu0
    %v7959 = vadd.f32 %v7876, %v7958
    %v7960 = vpop.f32.mrb[0].mxu0
    %v7961 = vadd.f32 %v7878, %v7960
    %v7962 = vpop.f32.mrb[0].mxu0
    %v7963 = vadd.f32 %v7880, %v7962
    %v7964 = vpop.f32.mrb[0].mxu0
    %v7965 = vadd.f32 %v7882, %v7964
    %7966 = vmatprep.mubr.bf16.mxu0 %v1790
    %7967 = vmatmul.mubr.bf16.gmra.mrb[0].mxu0 %v1789
    %v7968 = vpop.f32.mrb[0].mxu0
    %v7969 = vadd.f32 %v7886, %v7968
    %v7970 = vpop.f32.mrb[0].mxu0
    %v7971 = vadd.f32 %v7888, %v7970
    %v7972 = vpop.f32.mrb[0].mxu0
    %v7973 = vadd.f32 %v7890, %v7972
    %v7974 = vpop.f32.mrb[0].mxu0
    %v7975 = vadd.f32 %v7892, %v7974
    %7976 = vmatprep.mubr.bf16.mxu0 %v1794
    %7977 = vmatmul.mubr.bf16.gmra.mrb[0].mxu0 %v1793
    %v7978 = vpop.f32.mrb[0].mxu0
    %v7979 = vadd.f32 %v7896, %v7978
    %v7980 = vpop.f32.mrb[0].mxu0
    %v7981 = vadd.f32 %v7898, %v7980
    %v7982 = vpop.f32.mrb[0].mxu0
    %v7983 = vadd.f32 %v7900, %v7982
    %v7984 = vpop.f32.mrb[0].mxu0
    %v7985 = vadd.f32 %v7902, %v7984
    %7986 = vmatprep.mubr.bf16.mxu0 %v1798
    %7987 = vmatmul.mubr.bf16.gmra.mrb[0].mxu0 %v1797
    %v7988 = vpop.f32.mrb[0].mxu0
    %v7989 = vadd.f32 %v7906, %v7988
    %v7990 = vpop.f32.mrb[0].mxu0
    %v7991 = vadd.f32 %v7908, %v7990
    %v7992 = vpop.f32.mrb[0].mxu0
    %v7993 = vadd.f32 %v7910, %v7992
    %v7994 = vpop.f32.mrb[0].mxu0
    %v7995 = vadd.f32 %v7912, %v7994
    %7996 = vmatprep.mubr.bf16.mxu0 %v1802
    %7997 = vmatmul.mubr.bf16.gmra.mrb[0].mxu0 %v1801
    %v7998 = vpop.f32.mrb[0].mxu0
    %v7999 = vadd.f32 %v7916, %v7998
    %v8000 = vpop.f32.mrb[0].mxu0
    %v8001 = vadd.f32 %v7918, %v8000
    %v8002 = vpop.f32.mrb[0].mxu0
    %v8003 = vadd.f32 %v7920, %v8002
    %v8004 = vpop.f32.mrb[0].mxu0
    %v8005 = vadd.f32 %v7922, %v8004
    %8006 = vdwg.mxu0
    %8007 = vmatprep.subr.bf16.mxu0 %v7296
    %8008 = vmatpush1.bf16.msra.mxu0 %v7295
    %8009 = vmatprep.subr.bf16.mxu0 %v7302
    %8010 = vmatpush1.bf16.msra.mxu0 %v7301
    %8011 = vmatprep.subr.bf16.mxu0 %v7308
    %8012 = vmatpush1.bf16.msra.mxu0 %v7307
    %8013 = vmatprep.subr.bf16.mxu0 %v7314
    %8014 = vmatpush1.bf16.msra.mxu0 %v7313
    %8015 = vmatprep.subr.bf16.mxu0 %v7320
    %8016 = vmatpush1.bf16.msra.mxu0 %v7319
    %8017 = vmatprep.subr.bf16.mxu0 %v7326
    %8018 = vmatpush1.bf16.msra.mxu0 %v7325
    %8019 = vmatprep.subr.bf16.mxu0 %v7332
    %8020 = vmatpush1.bf16.msra.mxu0 %v7331
    %8021 = vmatprep.subr.bf16.mxu0 %v7338
    %8022 = vmatpush1.bf16.msra.mxu0 %v7337
    %8023 = vmatprep.subr.bf16.mxu0 %v7344
    %8024 = vmatpush1.bf16.msra.mxu0 %v7343
    %8025 = vmatprep.subr.bf16.mxu0 %v7350
    %8026 = vmatpush1.bf16.msra.mxu0 %v7349
    %8027 = vmatprep.subr.bf16.mxu0 %v7356
    %8028 = vmatpush1.bf16.msra.mxu0 %v7355
    %8029 = vmatprep.subr.bf16.mxu0 %v7362
    %8030 = vmatpush1.bf16.msra.mxu0 %v7361
    %8031 = vmatprep.subr.bf16.mxu0 %v7368
    %8032 = vmatpush1.bf16.msra.mxu0 %v7367
    %8033 = vmatprep.subr.bf16.mxu0 %v7374
    %8034 = vmatpush1.bf16.msra.mxu0 %v7373
    %8035 = vmatprep.subr.bf16.mxu0 %v7380
    %8036 = vmatpush1.bf16.msra.mxu0 %v7379
    %8037 = vmatprep.subr.bf16.mxu0 %v7386
    %8038 = vmatpush1.bf16.msra.mxu0 %v7385
    %8039 = vmatprep.mubr.bf16.mxu0 %v1784
    %8040 = vmatmul.mubr.bf16.gmra.mrb[0].mxu0 %v1783
    %v8041 = vpop.f32.mrb[0].mxu0
    %v8042 = vadd.f32 0.0, %v8041
    %v8043 = vpop.f32.mrb[0].mxu0
    %v8044 = vadd.f32 0.0, %v8043
    %v8045 = vpop.f32.mrb[0].mxu0
    %v8046 = vadd.f32 0.0, %v8045
    %v8047 = vpop.f32.mrb[0].mxu0
    %v8048 = vadd.f32 0.0, %v8047
    %8049 = vmatprep.mubr.bf16.mxu0 %v1788
    %8050 = vmatmul.mubr.bf16.gmra.mrb[0].mxu0 %v1787
    %v8051 = vpop.f32.mrb[0].mxu0
    %v8052 = vadd.f32 0.0, %v8051
    %v8053 = vpop.f32.mrb[0].mxu0
    %v8054 = vadd.f32 0.0, %v8053
    %v8055 = vpop.f32.mrb[0].mxu0
    %v8056 = vadd.f32 0.0, %v8055
    %v8057 = vpop.f32.mrb[0].mxu0
    %v8058 = vadd.f32 0.0, %v8057
    %8059 = vmatprep.mubr.bf16.mxu0 %v1792
    %8060 = vmatmul.mubr.bf16.gmra.mrb[0].mxu0 %v1791
    %v8061 = vpop.f32.mrb[0].mxu0
    %v8062 = vadd.f32 0.0, %v8061
    %v8063 = vpop.f32.mrb[0].mxu0
    %v8064 = vadd.f32 0.0, %v8063
    %v8065 = vpop.f32.mrb[0].mxu0
    %v8066 = vadd.f32 0.0, %v8065
    %v8067 = vpop.f32.mrb[0].mxu0
    %v8068 = vadd.f32 0.0, %v8067
    %8069 = vmatprep.mubr.bf16.mxu0 %v1796
    %8070 = vmatmul.mubr.bf16.gmra.mrb[0].mxu0 %v1795
    %v8071 = vpop.f32.mrb[0].mxu0
    %v8072 = vadd.f32 0.0, %v8071
    %v8073 = vpop.f32.mrb[0].mxu0
    %v8074 = vadd.f32 0.0, %v8073
    %v8075 = vpop.f32.mrb[0].mxu0
    %v8076 = vadd.f32 0.0, %v8075
    %v8077 = vpop.f32.mrb[0].mxu0
    %v8078 = vadd.f32 0.0, %v8077
    %8079 = vmatprep.mubr.bf16.mxu0 %v1800
    %8080 = vmatmul.mubr.bf16.gmra.mrb[0].mxu0 %v1799
    %v8081 = vpop.f32.mrb[0].mxu0
    %v8082 = vadd.f32 0.0, %v8081
    %v8083 = vpop.f32.mrb[0].mxu0
    %v8084 = vadd.f32 0.0, %v8083
    %v8085 = vpop.f32.mrb[0].mxu0
    %v8086 = vadd.f32 0.0, %v8085
    %v8087 = vpop.f32.mrb[0].mxu0
    %v8088 = vadd.f32 0.0, %v8087
    %8089 = vdwg.mxu0
    %8090 = vmatprep.subr.bf16.mxu0 %v7392
    %8091 = vmatpush1.bf16.msra.mxu0 %v7391
    %8092 = vmatprep.subr.bf16.mxu0 %v7398
    %8093 = vmatpush1.bf16.msra.mxu0 %v7397
    %8094 = vmatprep.subr.bf16.mxu0 %v7404
    %8095 = vmatpush1.bf16.msra.mxu0 %v7403
    %8096 = vmatprep.subr.bf16.mxu0 %v7410
    %8097 = vmatpush1.bf16.msra.mxu0 %v7409
    %8098 = vmatprep.subr.bf16.mxu0 %v7416
    %8099 = vmatpush1.bf16.msra.mxu0 %v7415
    %8100 = vmatprep.subr.bf16.mxu0 %v7422
    %8101 = vmatpush1.bf16.msra.mxu0 %v7421
    %8102 = vmatprep.subr.bf16.mxu0 %v7428
    %8103 = vmatpush1.bf16.msra.mxu0 %v7427
    %8104 = vmatprep.subr.bf16.mxu0 %v7434
    %8105 = vmatpush1.bf16.msra.mxu0 %v7433
    %8106 = vmatprep.subr.bf16.mxu0 %v7440
    %8107 = vmatpush1.bf16.msra.mxu0 %v7439
    %8108 = vmatprep.subr.bf16.mxu0 %v7446
    %8109 = vmatpush1.bf16.msra.mxu0 %v7445
    %8110 = vmatprep.subr.bf16.mxu0 %v7452
    %8111 = vmatpush1.bf16.msra.mxu0 %v7451
    %8112 = vmatprep.subr.bf16.mxu0 %v7458
    %8113 = vmatpush1.bf16.msra.mxu0 %v7457
    %8114 = vmatprep.subr.bf16.mxu0 %v7464
    %8115 = vmatpush1.bf16.msra.mxu0 %v7463
    %8116 = vmatprep.subr.bf16.mxu0 %v7470
    %8117 = vmatpush1.bf16.msra.mxu0 %v7469
    %8118 = vmatprep.subr.bf16.mxu0 %v7476
    %8119 = vmatpush1.bf16.msra.mxu0 %v7475
    %8120 = vmatprep.subr.bf16.mxu0 %v7482
    %8121 = vmatpush1.bf16.msra.mxu0 %v7481
    %8122 = vmatprep.mubr.bf16.mxu0 %v1786
    %8123 = vmatmul.mubr.bf16.gmra.mrb[0].mxu0 %v1785
    %v8124 = vpop.f32.mrb[0].mxu0
    %v8125 = vadd.f32 %v8042, %v8124
    %v8126 = vpop.f32.mrb[0].mxu0
    %v8127 = vadd.f32 %v8044, %v8126
    %v8128 = vpop.f32.mrb[0].mxu0
    %v8129 = vadd.f32 %v8046, %v8128
    %v8130 = vpop.f32.mrb[0].mxu0
    %v8131 = vadd.f32 %v8048, %v8130
    %8132 = vmatprep.mubr.bf16.mxu0 %v1790
    %8133 = vmatmul.mubr.bf16.gmra.mrb[0].mxu0 %v1789
    %v8134 = vpop.f32.mrb[0].mxu0
    %v8135 = vadd.f32 %v8052, %v8134
    %v8136 = vpop.f32.mrb[0].mxu0
    %v8137 = vadd.f32 %v8054, %v8136
    %v8138 = vpop.f32.mrb[0].mxu0
    %v8139 = vadd.f32 %v8056, %v8138
    %v8140 = vpop.f32.mrb[0].mxu0
    %v8141 = vadd.f32 %v8058, %v8140
    %8142 = vmatprep.mubr.bf16.mxu0 %v1794
    %8143 = vmatmul.mubr.bf16.gmra.mrb[0].mxu0 %v1793
    %v8144 = vpop.f32.mrb[0].mxu0
    %v8145 = vadd.f32 %v8062, %v8144
    %v8146 = vpop.f32.mrb[0].mxu0
    %v8147 = vadd.f32 %v8064, %v8146
    %v8148 = vpop.f32.mrb[0].mxu0
    %v8149 = vadd.f32 %v8066, %v8148
    %v8150 = vpop.f32.mrb[0].mxu0
    %v8151 = vadd.f32 %v8068, %v8150
    %8152 = vmatprep.mubr.bf16.mxu0 %v1798
    %8153 = vmatmul.mubr.bf16.gmra.mrb[0].mxu0 %v1797
    %v8154 = vpop.f32.mrb[0].mxu0
    %v8155 = vadd.f32 %v8072, %v8154
    %v8156 = vpop.f32.mrb[0].mxu0
    %v8157 = vadd.f32 %v8074, %v8156
    %v8158 = vpop.f32.mrb[0].mxu0
    %v8159 = vadd.f32 %v8076, %v8158
    %v8160 = vpop.f32.mrb[0].mxu0
    %v8161 = vadd.f32 %v8078, %v8160
    %8162 = vmatprep.mubr.bf16.mxu0 %v1802
    %8163 = vmatmul.mubr.bf16.gmra.mrb[0].mxu0 %v1801
    %v8164 = vpop.f32.mrb[0].mxu0
    %v8165 = vadd.f32 %v8082, %v8164
    %v8166 = vpop.f32.mrb[0].mxu0
    %v8167 = vadd.f32 %v8084, %v8166
    %v8168 = vpop.f32.mrb[0].mxu0
    %v8169 = vadd.f32 %v8086, %v8168
    %v8170 = vpop.f32.mrb[0].mxu0
    %v8171 = vadd.f32 %v8088, %v8170
    %8172 = vdwg.mxu0
    %v8173 = vadd.f32 %v6335, %v7793
    %v8174 = vadd.f32 %v6337, %v7795
    %v8175 = vadd.f32 %v6501, %v7959
    %v8176 = vadd.f32 %v6503, %v7961
    %v8177 = vadd.f32 %v6667, %v8125
    %v8178 = vadd.f32 %v6669, %v8127
    %v8179 = vadd.f32 %v6339, %v7797
    %v8180 = vadd.f32 %v6341, %v7799
    %v8181 = vadd.f32 %v6505, %v7963
    %v8182 = vadd.f32 %v6507, %v7965
    %v8183 = vadd.f32 %v6671, %v8129
    %v8184 = vadd.f32 %v6673, %v8131
    %v8185 = vadd.f32 %v6345, %v7803
    %v8186 = vadd.f32 %v6347, %v7805
    %v8187 = vadd.f32 %v6511, %v7969
    %v8188 = vadd.f32 %v6513, %v7971
    %v8189 = vadd.f32 %v6677, %v8135
    %v8190 = vadd.f32 %v6679, %v8137
    %v8191 = vadd.f32 %v6349, %v7807
    %v8192 = vadd.f32 %v6351, %v7809
    %v8193 = vadd.f32 %v6515, %v7973
    %v8194 = vadd.f32 %v6517, %v7975
    %v8195 = vadd.f32 %v6681, %v8139
    %v8196 = vadd.f32 %v6683, %v8141
    %v8197 = vadd.f32 %v6355, %v7813
    %v8198 = vadd.f32 %v6357, %v7815
    %v8199 = vadd.f32 %v6521, %v7979
    %v8200 = vadd.f32 %v6523, %v7981
    %v8201 = vadd.f32 %v6687, %v8145
    %v8202 = vadd.f32 %v6689, %v8147
    %v8203 = vadd.f32 %v6359, %v7817
    %v8204 = vadd.f32 %v6361, %v7819
    %v8205 = vadd.f32 %v6525, %v7983
    %v8206 = vadd.f32 %v6527, %v7985
    %v8207 = vadd.f32 %v6691, %v8149
    %v8208 = vadd.f32 %v6693, %v8151
    %v8209 = vadd.f32 %v6365, %v7823
    %v8210 = vadd.f32 %v6367, %v7825
    %v8211 = vadd.f32 %v6531, %v7989
    %v8212 = vadd.f32 %v6533, %v7991
    %v8213 = vadd.f32 %v6697, %v8155
    %v8214 = vadd.f32 %v6699, %v8157
    %v8215 = vadd.f32 %v6369, %v7827
    %v8216 = vadd.f32 %v6371, %v7829
    %v8217 = vadd.f32 %v6535, %v7993
    %v8218 = vadd.f32 %v6537, %v7995
    %v8219 = vadd.f32 %v6701, %v8159
    %v8220 = vadd.f32 %v6703, %v8161
    %v8221 = vadd.f32 %v6375, %v7833
    %v8222 = vadd.f32 %v6377, %v7835
    %v8223 = vadd.f32 %v6541, %v7999
    %v8224 = vadd.f32 %v6543, %v8001
    %v8225 = vadd.f32 %v6707, %v8165
    %v8226 = vadd.f32 %v6709, %v8167
    %v8227 = vadd.f32 %v6379, %v7837
    %v8228 = vadd.f32 %v6381, %v7839
    %v8229 = vadd.f32 %v6545, %v8003
    %v8230 = vadd.f32 %v6547, %v8005
    %v8231 = vadd.f32 %v6711, %v8169
    %v8232 = vadd.f32 %v6713, %v8171
    %8233 = vmatprep.subr.bf16.mxu0 %v4376
    %8234 = vmatpush1.bf16.msra.mxu0 %v4375
    %8235 = vmatprep.subr.bf16.mxu0 %v4382
    %8236 = vmatpush1.bf16.msra.mxu0 %v4381
    %8237 = vmatprep.subr.bf16.mxu0 %v4388
    %8238 = vmatpush1.bf16.msra.mxu0 %v4387
    %8239 = vmatprep.subr.bf16.mxu0 %v4394
    %8240 = vmatpush1.bf16.msra.mxu0 %v4393
    %8241 = vmatprep.subr.bf16.mxu0 %v4400
    %8242 = vmatpush1.bf16.msra.mxu0 %v4399
    %8243 = vmatprep.subr.bf16.mxu0 %v4406
    %8244 = vmatpush1.bf16.msra.mxu0 %v4405
    %8245 = vmatprep.subr.bf16.mxu0 %v4412
    %8246 = vmatpush1.bf16.msra.mxu0 %v4411
    %8247 = vmatprep.subr.bf16.mxu0 %v4418
    %8248 = vmatpush1.bf16.msra.mxu0 %v4417
    %8249 = vmatprep.subr.bf16.mxu0 %v4424
    %8250 = vmatpush1.bf16.msra.mxu0 %v4423
    %8251 = vmatprep.subr.bf16.mxu0 %v4430
    %8252 = vmatpush1.bf16.msra.mxu0 %v4429
    %8253 = vmatprep.subr.bf16.mxu0 %v4436
    %8254 = vmatpush1.bf16.msra.mxu0 %v4435
    %8255 = vmatprep.subr.bf16.mxu0 %v4442
    %8256 = vmatpush1.bf16.msra.mxu0 %v4441
    %8257 = vmatprep.subr.bf16.mxu0 %v4448
    %8258 = vmatpush1.bf16.msra.mxu0 %v4447
    %8259 = vmatprep.subr.bf16.mxu0 %v4454
    %8260 = vmatpush1.bf16.msra.mxu0 %v4453
    %8261 = vmatprep.subr.bf16.mxu0 %v4460
    %8262 = vmatpush1.bf16.msra.mxu0 %v4459
    %8263 = vmatprep.subr.bf16.mxu0 %v4466
    %8264 = vmatpush1.bf16.msra.mxu0 %v4465
    %8265 = vmatprep.mubr.bf16.mxu0 %v1784
    %8266 = vmatmul.mubr.bf16.gmra.mrb[0].mxu0 %v1783
    %v8267 = vpop.f32.mrb[0].mxu0
    %v8268 = vadd.f32 0.0, %v8267
    %v8269 = vpop.f32.mrb[0].mxu0
    %v8270 = vadd.f32 0.0, %v8269
    %v8271 = vpop.f32.mrb[0].mxu0
    %v8272 = vadd.f32 0.0, %v8271
    %v8273 = vpop.f32.mrb[0].mxu0
    %v8274 = vadd.f32 0.0, %v8273
    %8275 = vmatprep.mubr.bf16.mxu0 %v1788
    %8276 = vmatmul.mubr.bf16.gmra.mrb[0].mxu0 %v1787
    %v8277 = vpop.f32.mrb[0].mxu0
    %v8278 = vadd.f32 0.0, %v8277
    %v8279 = vpop.f32.mrb[0].mxu0
    %v8280 = vadd.f32 0.0, %v8279
    %v8281 = vpop.f32.mrb[0].mxu0
    %v8282 = vadd.f32 0.0, %v8281
    %v8283 = vpop.f32.mrb[0].mxu0
    %v8284 = vadd.f32 0.0, %v8283
    %8285 = vmatprep.mubr.bf16.mxu0 %v1792
    %8286 = vmatmul.mubr.bf16.gmra.mrb[0].mxu0 %v1791
    %v8287 = vpop.f32.mrb[0].mxu0
    %v8288 = vadd.f32 0.0, %v8287
    %v8289 = vpop.f32.mrb[0].mxu0
    %v8290 = vadd.f32 0.0, %v8289
    %v8291 = vpop.f32.mrb[0].mxu0
    %v8292 = vadd.f32 0.0, %v8291
    %v8293 = vpop.f32.mrb[0].mxu0
    %v8294 = vadd.f32 0.0, %v8293
    %8295 = vmatprep.mubr.bf16.mxu0 %v1796
    %8296 = vmatmul.mubr.bf16.gmra.mrb[0].mxu0 %v1795
    %v8297 = vpop.f32.mrb[0].mxu0
    %v8298 = vadd.f32 0.0, %v8297
    %v8299 = vpop.f32.mrb[0].mxu0
    %v8300 = vadd.f32 0.0, %v8299
    %v8301 = vpop.f32.mrb[0].mxu0
    %v8302 = vadd.f32 0.0, %v8301
    %v8303 = vpop.f32.mrb[0].mxu0
    %v8304 = vadd.f32 0.0, %v8303
    %8305 = vmatprep.mubr.bf16.mxu0 %v1800
    %8306 = vmatmul.mubr.bf16.gmra.mrb[0].mxu0 %v1799
    %v8307 = vpop.f32.mrb[0].mxu0
    %v8308 = vadd.f32 0.0, %v8307
    %v8309 = vpop.f32.mrb[0].mxu0
    %v8310 = vadd.f32 0.0, %v8309
    %v8311 = vpop.f32.mrb[0].mxu0
    %v8312 = vadd.f32 0.0, %v8311
    %v8313 = vpop.f32.mrb[0].mxu0
    %v8314 = vadd.f32 0.0, %v8313
    %8315 = vdwg.mxu0
    %8316 = vmatprep.subr.bf16.mxu0 %v4472
    %8317 = vmatpush1.bf16.msra.mxu0 %v4471
    %8318 = vmatprep.subr.bf16.mxu0 %v4478
    %8319 = vmatpush1.bf16.msra.mxu0 %v4477
    %8320 = vmatprep.subr.bf16.mxu0 %v4484
    %8321 = vmatpush1.bf16.msra.mxu0 %v4483
    %8322 = vmatprep.subr.bf16.mxu0 %v4490
    %8323 = vmatpush1.bf16.msra.mxu0 %v4489
    %8324 = vmatprep.subr.bf16.mxu0 %v4496
    %8325 = vmatpush1.bf16.msra.mxu0 %v4495
    %8326 = vmatprep.subr.bf16.mxu0 %v4502
    %8327 = vmatpush1.bf16.msra.mxu0 %v4501
    %8328 = vmatprep.subr.bf16.mxu0 %v4508
    %8329 = vmatpush1.bf16.msra.mxu0 %v4507
    %8330 = vmatprep.subr.bf16.mxu0 %v4514
    %8331 = vmatpush1.bf16.msra.mxu0 %v4513
    %8332 = vmatprep.subr.bf16.mxu0 %v4520
    %8333 = vmatpush1.bf16.msra.mxu0 %v4519
    %8334 = vmatprep.subr.bf16.mxu0 %v4526
    %8335 = vmatpush1.bf16.msra.mxu0 %v4525
    %8336 = vmatprep.subr.bf16.mxu0 %v4532
    %8337 = vmatpush1.bf16.msra.mxu0 %v4531
    %8338 = vmatprep.subr.bf16.mxu0 %v4538
    %8339 = vmatpush1.bf16.msra.mxu0 %v4537
    %8340 = vmatprep.subr.bf16.mxu0 %v4544
    %8341 = vmatpush1.bf16.msra.mxu0 %v4543
    %8342 = vmatprep.subr.bf16.mxu0 %v4550
    %8343 = vmatpush1.bf16.msra.mxu0 %v4549
    %8344 = vmatprep.subr.bf16.mxu0 %v4556
    %8345 = vmatpush1.bf16.msra.mxu0 %v4555
    %8346 = vmatprep.subr.bf16.mxu0 %v4562
    %8347 = vmatpush1.bf16.msra.mxu0 %v4561
    %8348 = vmatprep.mubr.bf16.mxu0 %v1786
    %8349 = vmatmul.mubr.bf16.gmra.mrb[0].mxu0 %v1785
    %v8350 = vpop.f32.mrb[0].mxu0
    %v8351 = vadd.f32 %v8268, %v8350
    %v8352 = vpop.f32.mrb[0].mxu0
    %v8353 = vadd.f32 %v8270, %v8352
    %v8354 = vpop.f32.mrb[0].mxu0
    %v8355 = vadd.f32 %v8272, %v8354
    %v8356 = vpop.f32.mrb[0].mxu0
    %v8357 = vadd.f32 %v8274, %v8356
    %8358 = vmatprep.mubr.bf16.mxu0 %v1790
    %8359 = vmatmul.mubr.bf16.gmra.mrb[0].mxu0 %v1789
    %v8360 = vpop.f32.mrb[0].mxu0
    %v8361 = vadd.f32 %v8278, %v8360
    %v8362 = vpop.f32.mrb[0].mxu0
    %v8363 = vadd.f32 %v8280, %v8362
    %v8364 = vpop.f32.mrb[0].mxu0
    %v8365 = vadd.f32 %v8282, %v8364
    %v8366 = vpop.f32.mrb[0].mxu0
    %v8367 = vadd.f32 %v8284, %v8366
    %8368 = vmatprep.mubr.bf16.mxu0 %v1794
    %8369 = vmatmul.mubr.bf16.gmra.mrb[0].mxu0 %v1793
    %v8370 = vpop.f32.mrb[0].mxu0
    %v8371 = vadd.f32 %v8288, %v8370
    %v8372 = vpop.f32.mrb[0].mxu0
    %v8373 = vadd.f32 %v8290, %v8372
    %v8374 = vpop.f32.mrb[0].mxu0
    %v8375 = vadd.f32 %v8292, %v8374
    %v8376 = vpop.f32.mrb[0].mxu0
    %v8377 = vadd.f32 %v8294, %v8376
    %8378 = vmatprep.mubr.bf16.mxu0 %v1798
    %8379 = vmatmul.mubr.bf16.gmra.mrb[0].mxu0 %v1797
    %v8380 = vpop.f32.mrb[0].mxu0
    %v8381 = vadd.f32 %v8298, %v8380
    %v8382 = vpop.f32.mrb[0].mxu0
    %v8383 = vadd.f32 %v8300, %v8382
    %v8384 = vpop.f32.mrb[0].mxu0
    %v8385 = vadd.f32 %v8302, %v8384
    %v8386 = vpop.f32.mrb[0].mxu0
    %v8387 = vadd.f32 %v8304, %v8386
    %8388 = vmatprep.mubr.bf16.mxu0 %v1802
    %8389 = vmatmul.mubr.bf16.gmra.mrb[0].mxu0 %v1801
    %v8390 = vpop.f32.mrb[0].mxu0
    %v8391 = vadd.f32 %v8308, %v8390
    %v8392 = vpop.f32.mrb[0].mxu0
    %v8393 = vadd.f32 %v8310, %v8392
    %v8394 = vpop.f32.mrb[0].mxu0
    %v8395 = vadd.f32 %v8312, %v8394
    %v8396 = vpop.f32.mrb[0].mxu0
    %v8397 = vadd.f32 %v8314, %v8396
    %8398 = vdwg.mxu0
    %8399 = vmatprep.subr.bf16.mxu0 %v4378
    %8400 = vmatpush1.bf16.msra.mxu0 %v4377
    %8401 = vmatprep.subr.bf16.mxu0 %v4384
    %8402 = vmatpush1.bf16.msra.mxu0 %v4383
    %8403 = vmatprep.subr.bf16.mxu0 %v4390
    %8404 = vmatpush1.bf16.msra.mxu0 %v4389
    %8405 = vmatprep.subr.bf16.mxu0 %v4396
    %8406 = vmatpush1.bf16.msra.mxu0 %v4395
    %8407 = vmatprep.subr.bf16.mxu0 %v4402
    %8408 = vmatpush1.bf16.msra.mxu0 %v4401
    %8409 = vmatprep.subr.bf16.mxu0 %v4408
    %8410 = vmatpush1.bf16.msra.mxu0 %v4407
    %8411 = vmatprep.subr.bf16.mxu0 %v4414
    %8412 = vmatpush1.bf16.msra.mxu0 %v4413
    %8413 = vmatprep.subr.bf16.mxu0 %v4420
    %8414 = vmatpush1.bf16.msra.mxu0 %v4419
    %8415 = vmatprep.subr.bf16.mxu0 %v4426
    %8416 = vmatpush1.bf16.msra.mxu0 %v4425
    %8417 = vmatprep.subr.bf16.mxu0 %v4432
    %8418 = vmatpush1.bf16.msra.mxu0 %v4431
    %8419 = vmatprep.subr.bf16.mxu0 %v4438
    %8420 = vmatpush1.bf16.msra.mxu0 %v4437
    %8421 = vmatprep.subr.bf16.mxu0 %v4444
    %8422 = vmatpush1.bf16.msra.mxu0 %v4443
    %8423 = vmatprep.subr.bf16.mxu0 %v4450
    %8424 = vmatpush1.bf16.msra.mxu0 %v4449
    %8425 = vmatprep.subr.bf16.mxu0 %v4456
    %8426 = vmatpush1.bf16.msra.mxu0 %v4455
    %8427 = vmatprep.subr.bf16.mxu0 %v4462
    %8428 = vmatpush1.bf16.msra.mxu0 %v4461
    %8429 = vmatprep.subr.bf16.mxu0 %v4468
    %8430 = vmatpush1.bf16.msra.mxu0 %v4467
    %8431 = vmatprep.mubr.bf16.mxu0 %v1784
    %8432 = vmatmul.mubr.bf16.gmra.mrb[0].mxu0 %v1783
    %v8433 = vpop.f32.mrb[0].mxu0
    %v8434 = vadd.f32 0.0, %v8433
    %v8435 = vpop.f32.mrb[0].mxu0
    %v8436 = vadd.f32 0.0, %v8435
    %v8437 = vpop.f32.mrb[0].mxu0
    %v8438 = vadd.f32 0.0, %v8437
    %v8439 = vpop.f32.mrb[0].mxu0
    %v8440 = vadd.f32 0.0, %v8439
    %8441 = vmatprep.mubr.bf16.mxu0 %v1788
    %8442 = vmatmul.mubr.bf16.gmra.mrb[0].mxu0 %v1787
    %v8443 = vpop.f32.mrb[0].mxu0
    %v8444 = vadd.f32 0.0, %v8443
    %v8445 = vpop.f32.mrb[0].mxu0
    %v8446 = vadd.f32 0.0, %v8445
    %v8447 = vpop.f32.mrb[0].mxu0
    %v8448 = vadd.f32 0.0, %v8447
    %v8449 = vpop.f32.mrb[0].mxu0
    %v8450 = vadd.f32 0.0, %v8449
    %8451 = vmatprep.mubr.bf16.mxu0 %v1792
    %8452 = vmatmul.mubr.bf16.gmra.mrb[0].mxu0 %v1791
    %v8453 = vpop.f32.mrb[0].mxu0
    %v8454 = vadd.f32 0.0, %v8453
    %v8455 = vpop.f32.mrb[0].mxu0
    %v8456 = vadd.f32 0.0, %v8455
    %v8457 = vpop.f32.mrb[0].mxu0
    %v8458 = vadd.f32 0.0, %v8457
    %v8459 = vpop.f32.mrb[0].mxu0
    %v8460 = vadd.f32 0.0, %v8459
    %8461 = vmatprep.mubr.bf16.mxu0 %v1796
    %8462 = vmatmul.mubr.bf16.gmra.mrb[0].mxu0 %v1795
    %v8463 = vpop.f32.mrb[0].mxu0
    %v8464 = vadd.f32 0.0, %v8463
    %v8465 = vpop.f32.mrb[0].mxu0
    %v8466 = vadd.f32 0.0, %v8465
    %v8467 = vpop.f32.mrb[0].mxu0
    %v8468 = vadd.f32 0.0, %v8467
    %v8469 = vpop.f32.mrb[0].mxu0
    %v8470 = vadd.f32 0.0, %v8469
    %8471 = vmatprep.mubr.bf16.mxu0 %v1800
    %8472 = vmatmul.mubr.bf16.gmra.mrb[0].mxu0 %v1799
    %v8473 = vpop.f32.mrb[0].mxu0
    %v8474 = vadd.f32 0.0, %v8473
    %v8475 = vpop.f32.mrb[0].mxu0
    %v8476 = vadd.f32 0.0, %v8475
    %v8477 = vpop.f32.mrb[0].mxu0
    %v8478 = vadd.f32 0.0, %v8477
    %v8479 = vpop.f32.mrb[0].mxu0
    %v8480 = vadd.f32 0.0, %v8479
    %8481 = vdwg.mxu0
    %8482 = vmatprep.subr.bf16.mxu0 %v4474
    %8483 = vmatpush1.bf16.msra.mxu0 %v4473
    %8484 = vmatprep.subr.bf16.mxu0 %v4480
    %8485 = vmatpush1.bf16.msra.mxu0 %v4479
    %8486 = vmatprep.subr.bf16.mxu0 %v4486
    %8487 = vmatpush1.bf16.msra.mxu0 %v4485
    %8488 = vmatprep.subr.bf16.mxu0 %v4492
    %8489 = vmatpush1.bf16.msra.mxu0 %v4491
    %8490 = vmatprep.subr.bf16.mxu0 %v4498
    %8491 = vmatpush1.bf16.msra.mxu0 %v4497
    %8492 = vmatprep.subr.bf16.mxu0 %v4504
    %8493 = vmatpush1.bf16.msra.mxu0 %v4503
    %8494 = vmatprep.subr.bf16.mxu0 %v4510
    %8495 = vmatpush1.bf16.msra.mxu0 %v4509
    %8496 = vmatprep.subr.bf16.mxu0 %v4516
    %8497 = vmatpush1.bf16.msra.mxu0 %v4515
    %8498 = vmatprep.subr.bf16.mxu0 %v4522
    %8499 = vmatpush1.bf16.msra.mxu0 %v4521
    %8500 = vmatprep.subr.bf16.mxu0 %v4528
    %8501 = vmatpush1.bf16.msra.mxu0 %v4527
    %8502 = vmatprep.subr.bf16.mxu0 %v4534
    %8503 = vmatpush1.bf16.msra.mxu0 %v4533
    %8504 = vmatprep.subr.bf16.mxu0 %v4540
    %8505 = vmatpush1.bf16.msra.mxu0 %v4539
    %8506 = vmatprep.subr.bf16.mxu0 %v4546
    %8507 = vmatpush1.bf16.msra.mxu0 %v4545
    %8508 = vmatprep.subr.bf16.mxu0 %v4552
    %8509 = vmatpush1.bf16.msra.mxu0 %v4551
    %8510 = vmatprep.subr.bf16.mxu0 %v4558
    %8511 = vmatpush1.bf16.msra.mxu0 %v4557
    %8512 = vmatprep.subr.bf16.mxu0 %v4564
    %8513 = vmatpush1.bf16.msra.mxu0 %v4563
    %8514 = vmatprep.mubr.bf16.mxu0 %v1786
    %8515 = vmatmul.mubr.bf16.gmra.mrb[0].mxu0 %v1785
    %v8516 = vpop.f32.mrb[0].mxu0
    %v8517 = vadd.f32 %v8434, %v8516
    %v8518 = vpop.f32.mrb[0].mxu0
    %v8519 = vadd.f32 %v8436, %v8518
    %v8520 = vpop.f32.mrb[0].mxu0
    %v8521 = vadd.f32 %v8438, %v8520
    %v8522 = vpop.f32.mrb[0].mxu0
    %v8523 = vadd.f32 %v8440, %v8522
    %8524 = vmatprep.mubr.bf16.mxu0 %v1790
    %8525 = vmatmul.mubr.bf16.gmra.mrb[0].mxu0 %v1789
    %v8526 = vpop.f32.mrb[0].mxu0
    %v8527 = vadd.f32 %v8444, %v8526
    %v8528 = vpop.f32.mrb[0].mxu0
    %v8529 = vadd.f32 %v8446, %v8528
    %v8530 = vpop.f32.mrb[0].mxu0
    %v8531 = vadd.f32 %v8448, %v8530
    %v8532 = vpop.f32.mrb[0].mxu0
    %v8533 = vadd.f32 %v8450, %v8532
    %8534 = vmatprep.mubr.bf16.mxu0 %v1794
    %8535 = vmatmul.mubr.bf16.gmra.mrb[0].mxu0 %v1793
    %v8536 = vpop.f32.mrb[0].mxu0
    %v8537 = vadd.f32 %v8454, %v8536
    %v8538 = vpop.f32.mrb[0].mxu0
    %v8539 = vadd.f32 %v8456, %v8538
    %v8540 = vpop.f32.mrb[0].mxu0
    %v8541 = vadd.f32 %v8458, %v8540
    %v8542 = vpop.f32.mrb[0].mxu0
    %v8543 = vadd.f32 %v8460, %v8542
    %8544 = vmatprep.mubr.bf16.mxu0 %v1798
    %8545 = vmatmul.mubr.bf16.gmra.mrb[0].mxu0 %v1797
    %v8546 = vpop.f32.mrb[0].mxu0
    %v8547 = vadd.f32 %v8464, %v8546
    %v8548 = vpop.f32.mrb[0].mxu0
    %v8549 = vadd.f32 %v8466, %v8548
    %v8550 = vpop.f32.mrb[0].mxu0
    %v8551 = vadd.f32 %v8468, %v8550
    %v8552 = vpop.f32.mrb[0].mxu0
    %v8553 = vadd.f32 %v8470, %v8552
    %8554 = vmatprep.mubr.bf16.mxu0 %v1802
    %8555 = vmatmul.mubr.bf16.gmra.mrb[0].mxu0 %v1801
    %v8556 = vpop.f32.mrb[0].mxu0
    %v8557 = vadd.f32 %v8474, %v8556
    %v8558 = vpop.f32.mrb[0].mxu0
    %v8559 = vadd.f32 %v8476, %v8558
    %v8560 = vpop.f32.mrb[0].mxu0
    %v8561 = vadd.f32 %v8478, %v8560
    %v8562 = vpop.f32.mrb[0].mxu0
    %v8563 = vadd.f32 %v8480, %v8562
    %8564 = vdwg.mxu0
    %8565 = vmatprep.subr.bf16.mxu0 %v4380
    %8566 = vmatpush1.bf16.msra.mxu0 %v4379
    %8567 = vmatprep.subr.bf16.mxu0 %v4386
    %8568 = vmatpush1.bf16.msra.mxu0 %v4385
    %8569 = vmatprep.subr.bf16.mxu0 %v4392
    %8570 = vmatpush1.bf16.msra.mxu0 %v4391
    %8571 = vmatprep.subr.bf16.mxu0 %v4398
    %8572 = vmatpush1.bf16.msra.mxu0 %v4397
    %8573 = vmatprep.subr.bf16.mxu0 %v4404
    %8574 = vmatpush1.bf16.msra.mxu0 %v4403
    %8575 = vmatprep.subr.bf16.mxu0 %v4410
    %8576 = vmatpush1.bf16.msra.mxu0 %v4409
    %8577 = vmatprep.subr.bf16.mxu0 %v4416
    %8578 = vmatpush1.bf16.msra.mxu0 %v4415
    %8579 = vmatprep.subr.bf16.mxu0 %v4422
    %8580 = vmatpush1.bf16.msra.mxu0 %v4421
    %8581 = vmatprep.subr.bf16.mxu0 %v4428
    %8582 = vmatpush1.bf16.msra.mxu0 %v4427
    %8583 = vmatprep.subr.bf16.mxu0 %v4434
    %8584 = vmatpush1.bf16.msra.mxu0 %v4433
    %8585 = vmatprep.subr.bf16.mxu0 %v4440
    %8586 = vmatpush1.bf16.msra.mxu0 %v4439
    %8587 = vmatprep.subr.bf16.mxu0 %v4446
    %8588 = vmatpush1.bf16.msra.mxu0 %v4445
    %8589 = vmatprep.subr.bf16.mxu0 %v4452
    %8590 = vmatpush1.bf16.msra.mxu0 %v4451
    %8591 = vmatprep.subr.bf16.mxu0 %v4458
    %8592 = vmatpush1.bf16.msra.mxu0 %v4457
    %8593 = vmatprep.subr.bf16.mxu0 %v4464
    %8594 = vmatpush1.bf16.msra.mxu0 %v4463
    %8595 = vmatprep.subr.bf16.mxu0 %v4470
    %8596 = vmatpush1.bf16.msra.mxu0 %v4469
    %8597 = vmatprep.mubr.bf16.mxu0 %v1784
    %8598 = vmatmul.mubr.bf16.gmra.mrb[0].mxu0 %v1783
    %v8599 = vpop.f32.mrb[0].mxu0
    %v8600 = vadd.f32 0.0, %v8599
    %v8601 = vpop.f32.mrb[0].mxu0
    %v8602 = vadd.f32 0.0, %v8601
    %v8603 = vpop.f32.mrb[0].mxu0
    %v8604 = vadd.f32 0.0, %v8603
    %v8605 = vpop.f32.mrb[0].mxu0
    %v8606 = vadd.f32 0.0, %v8605
    %8607 = vmatprep.mubr.bf16.mxu0 %v1788
    %8608 = vmatmul.mubr.bf16.gmra.mrb[0].mxu0 %v1787
    %v8609 = vpop.f32.mrb[0].mxu0
    %v8610 = vadd.f32 0.0, %v8609
    %v8611 = vpop.f32.mrb[0].mxu0
    %v8612 = vadd.f32 0.0, %v8611
    %v8613 = vpop.f32.mrb[0].mxu0
    %v8614 = vadd.f32 0.0, %v8613
    %v8615 = vpop.f32.mrb[0].mxu0
    %v8616 = vadd.f32 0.0, %v8615
    %8617 = vmatprep.mubr.bf16.mxu0 %v1792
    %8618 = vmatmul.mubr.bf16.gmra.mrb[0].mxu0 %v1791
    %v8619 = vpop.f32.mrb[0].mxu0
    %v8620 = vadd.f32 0.0, %v8619
    %v8621 = vpop.f32.mrb[0].mxu0
    %v8622 = vadd.f32 0.0, %v8621
    %v8623 = vpop.f32.mrb[0].mxu0
    %v8624 = vadd.f32 0.0, %v8623
    %v8625 = vpop.f32.mrb[0].mxu0
    %v8626 = vadd.f32 0.0, %v8625
    %8627 = vmatprep.mubr.bf16.mxu0 %v1796
    %8628 = vmatmul.mubr.bf16.gmra.mrb[0].mxu0 %v1795
    %v8629 = vpop.f32.mrb[0].mxu0
    %v8630 = vadd.f32 0.0, %v8629
    %v8631 = vpop.f32.mrb[0].mxu0
    %v8632 = vadd.f32 0.0, %v8631
    %v8633 = vpop.f32.mrb[0].mxu0
    %v8634 = vadd.f32 0.0, %v8633
    %v8635 = vpop.f32.mrb[0].mxu0
    %v8636 = vadd.f32 0.0, %v8635
    %8637 = vmatprep.mubr.bf16.mxu0 %v1800
    %8638 = vmatmul.mubr.bf16.gmra.mrb[0].mxu0 %v1799
    %v8639 = vpop.f32.mrb[0].mxu0
    %v8640 = vadd.f32 0.0, %v8639
    %v8641 = vpop.f32.mrb[0].mxu0
    %v8642 = vadd.f32 0.0, %v8641
    %v8643 = vpop.f32.mrb[0].mxu0
    %v8644 = vadd.f32 0.0, %v8643
    %v8645 = vpop.f32.mrb[0].mxu0
    %v8646 = vadd.f32 0.0, %v8645
    %8647 = vdwg.mxu0
    %8648 = vmatprep.subr.bf16.mxu0 %v4476
    %8649 = vmatpush1.bf16.msra.mxu0 %v4475
    %8650 = vmatprep.subr.bf16.mxu0 %v4482
    %8651 = vmatpush1.bf16.msra.mxu0 %v4481
    %8652 = vmatprep.subr.bf16.mxu0 %v4488
    %8653 = vmatpush1.bf16.msra.mxu0 %v4487
    %8654 = vmatprep.subr.bf16.mxu0 %v4494
    %8655 = vmatpush1.bf16.msra.mxu0 %v4493
    %8656 = vmatprep.subr.bf16.mxu0 %v4500
    %8657 = vmatpush1.bf16.msra.mxu0 %v4499
    %8658 = vmatprep.subr.bf16.mxu0 %v4506
    %8659 = vmatpush1.bf16.msra.mxu0 %v4505
    %8660 = vmatprep.subr.bf16.mxu0 %v4512
    %8661 = vmatpush1.bf16.msra.mxu0 %v4511
    %8662 = vmatprep.subr.bf16.mxu0 %v4518
    %8663 = vmatpush1.bf16.msra.mxu0 %v4517
    %8664 = vmatprep.subr.bf16.mxu0 %v4524
    %8665 = vmatpush1.bf16.msra.mxu0 %v4523
    %8666 = vmatprep.subr.bf16.mxu0 %v4530
    %8667 = vmatpush1.bf16.msra.mxu0 %v4529
    %8668 = vmatprep.subr.bf16.mxu0 %v4536
    %8669 = vmatpush1.bf16.msra.mxu0 %v4535
    %8670 = vmatprep.subr.bf16.mxu0 %v4542
    %8671 = vmatpush1.bf16.msra.mxu0 %v4541
    %8672 = vmatprep.subr.bf16.mxu0 %v4548
    %8673 = vmatpush1.bf16.msra.mxu0 %v4547
    %8674 = vmatprep.subr.bf16.mxu0 %v4554
    %8675 = vmatpush1.bf16.msra.mxu0 %v4553
    %8676 = vmatprep.subr.bf16.mxu0 %v4560
    %8677 = vmatpush1.bf16.msra.mxu0 %v4559
    %8678 = vmatprep.subr.bf16.mxu0 %v4566
    %8679 = vmatpush1.bf16.msra.mxu0 %v4565
    %8680 = vmatprep.mubr.bf16.mxu0 %v1786
    %8681 = vmatmul.mubr.bf16.gmra.mrb[0].mxu0 %v1785
    %v8682 = vpop.f32.mrb[0].mxu0
    %v8683 = vadd.f32 %v8600, %v8682
    %v8684 = vpop.f32.mrb[0].mxu0
    %v8685 = vadd.f32 %v8602, %v8684
    %v8686 = vpop.f32.mrb[0].mxu0
    %v8687 = vadd.f32 %v8604, %v8686
    %v8688 = vpop.f32.mrb[0].mxu0
    %v8689 = vadd.f32 %v8606, %v8688
    %8690 = vmatprep.mubr.bf16.mxu0 %v1790
    %8691 = vmatmul.mubr.bf16.gmra.mrb[0].mxu0 %v1789
    %v8692 = vpop.f32.mrb[0].mxu0
    %v8693 = vadd.f32 %v8610, %v8692
    %v8694 = vpop.f32.mrb[0].mxu0
    %v8695 = vadd.f32 %v8612, %v8694
    %v8696 = vpop.f32.mrb[0].mxu0
    %v8697 = vadd.f32 %v8614, %v8696
    %v8698 = vpop.f32.mrb[0].mxu0
    %v8699 = vadd.f32 %v8616, %v8698
    %8700 = vmatprep.mubr.bf16.mxu0 %v1794
    %8701 = vmatmul.mubr.bf16.gmra.mrb[0].mxu0 %v1793
    %v8702 = vpop.f32.mrb[0].mxu0
    %v8703 = vadd.f32 %v8620, %v8702
    %v8704 = vpop.f32.mrb[0].mxu0
    %v8705 = vadd.f32 %v8622, %v8704
    %v8706 = vpop.f32.mrb[0].mxu0
    %v8707 = vadd.f32 %v8624, %v8706
    %v8708 = vpop.f32.mrb[0].mxu0
    %v8709 = vadd.f32 %v8626, %v8708
    %8710 = vmatprep.mubr.bf16.mxu0 %v1798
    %8711 = vmatmul.mubr.bf16.gmra.mrb[0].mxu0 %v1797
    %v8712 = vpop.f32.mrb[0].mxu0
    %v8713 = vadd.f32 %v8630, %v8712
    %v8714 = vpop.f32.mrb[0].mxu0
    %v8715 = vadd.f32 %v8632, %v8714
    %v8716 = vpop.f32.mrb[0].mxu0
    %v8717 = vadd.f32 %v8634, %v8716
    %v8718 = vpop.f32.mrb[0].mxu0
    %v8719 = vadd.f32 %v8636, %v8718
    %8720 = vmatprep.mubr.bf16.mxu0 %v1802
    %8721 = vmatmul.mubr.bf16.gmra.mrb[0].mxu0 %v1801
    %v8722 = vpop.f32.mrb[0].mxu0
    %v8723 = vadd.f32 %v8640, %v8722
    %v8724 = vpop.f32.mrb[0].mxu0
    %v8725 = vadd.f32 %v8642, %v8724
    %v8726 = vpop.f32.mrb[0].mxu0
    %v8727 = vadd.f32 %v8644, %v8726
    %v8728 = vpop.f32.mrb[0].mxu0
    %v8729 = vadd.f32 %v8646, %v8728
    %8730 = vdwg.mxu0
    %8731 = vmatprep.subr.bf16.mxu0 %v5834
    %8732 = vmatpush1.bf16.msra.mxu0 %v5833
    %8733 = vmatprep.subr.bf16.mxu0 %v5840
    %8734 = vmatpush1.bf16.msra.mxu0 %v5839
    %8735 = vmatprep.subr.bf16.mxu0 %v5846
    %8736 = vmatpush1.bf16.msra.mxu0 %v5845
    %8737 = vmatprep.subr.bf16.mxu0 %v5852
    %8738 = vmatpush1.bf16.msra.mxu0 %v5851
    %8739 = vmatprep.subr.bf16.mxu0 %v5858
    %8740 = vmatpush1.bf16.msra.mxu0 %v5857
    %8741 = vmatprep.subr.bf16.mxu0 %v5864
    %8742 = vmatpush1.bf16.msra.mxu0 %v5863
    %8743 = vmatprep.subr.bf16.mxu0 %v5870
    %8744 = vmatpush1.bf16.msra.mxu0 %v5869
    %8745 = vmatprep.subr.bf16.mxu0 %v5876
    %8746 = vmatpush1.bf16.msra.mxu0 %v5875
    %8747 = vmatprep.subr.bf16.mxu0 %v5882
    %8748 = vmatpush1.bf16.msra.mxu0 %v5881
    %8749 = vmatprep.subr.bf16.mxu0 %v5888
    %8750 = vmatpush1.bf16.msra.mxu0 %v5887
    %8751 = vmatprep.subr.bf16.mxu0 %v5894
    %8752 = vmatpush1.bf16.msra.mxu0 %v5893
    %8753 = vmatprep.subr.bf16.mxu0 %v5900
    %8754 = vmatpush1.bf16.msra.mxu0 %v5899
    %8755 = vmatprep.subr.bf16.mxu0 %v5906
    %8756 = vmatpush1.bf16.msra.mxu0 %v5905
    %8757 = vmatprep.subr.bf16.mxu0 %v5912
    %8758 = vmatpush1.bf16.msra.mxu0 %v5911
    %8759 = vmatprep.subr.bf16.mxu0 %v5918
    %8760 = vmatpush1.bf16.msra.mxu0 %v5917
    %8761 = vmatprep.subr.bf16.mxu0 %v5924
    %8762 = vmatpush1.bf16.msra.mxu0 %v5923
    %8763 = vmatprep.mubr.bf16.mxu0 %v3198
    %8764 = vmatmul.mubr.bf16.gmra.mrb[0].mxu0 %v3197
    %v8765 = vpop.f32.mrb[0].mxu0
    %v8766 = vadd.f32 %v8351, %v8765
    %v8767 = vpop.f32.mrb[0].mxu0
    %v8768 = vadd.f32 %v8353, %v8767
    %v8769 = vpop.f32.mrb[0].mxu0
    %v8770 = vadd.f32 %v8355, %v8769
    %v8771 = vpop.f32.mrb[0].mxu0
    %v8772 = vadd.f32 %v8357, %v8771
    %8773 = vmatprep.mubr.bf16.mxu0 %v3202
    %8774 = vmatmul.mubr.bf16.gmra.mrb[0].mxu0 %v3201
    %v8775 = vpop.f32.mrb[0].mxu0
    %v8776 = vadd.f32 %v8361, %v8775
    %v8777 = vpop.f32.mrb[0].mxu0
    %v8778 = vadd.f32 %v8363, %v8777
    %v8779 = vpop.f32.mrb[0].mxu0
    %v8780 = vadd.f32 %v8365, %v8779
    %v8781 = vpop.f32.mrb[0].mxu0
    %v8782 = vadd.f32 %v8367, %v8781
    %8783 = vmatprep.mubr.bf16.mxu0 %v3206
    %8784 = vmatmul.mubr.bf16.gmra.mrb[0].mxu0 %v3205
    %v8785 = vpop.f32.mrb[0].mxu0
    %v8786 = vadd.f32 %v8371, %v8785
    %v8787 = vpop.f32.mrb[0].mxu0
    %v8788 = vadd.f32 %v8373, %v8787
    %v8789 = vpop.f32.mrb[0].mxu0
    %v8790 = vadd.f32 %v8375, %v8789
    %v8791 = vpop.f32.mrb[0].mxu0
    %v8792 = vadd.f32 %v8377, %v8791
    %8793 = vmatprep.mubr.bf16.mxu0 %v3210
    %8794 = vmatmul.mubr.bf16.gmra.mrb[0].mxu0 %v3209
    %v8795 = vpop.f32.mrb[0].mxu0
    %v8796 = vadd.f32 %v8381, %v8795
    %v8797 = vpop.f32.mrb[0].mxu0
    %v8798 = vadd.f32 %v8383, %v8797
    %v8799 = vpop.f32.mrb[0].mxu0
    %v8800 = vadd.f32 %v8385, %v8799
    %v8801 = vpop.f32.mrb[0].mxu0
    %v8802 = vadd.f32 %v8387, %v8801
    %8803 = vmatprep.mubr.bf16.mxu0 %v3214
    %8804 = vmatmul.mubr.bf16.gmra.mrb[0].mxu0 %v3213
    %v8805 = vpop.f32.mrb[0].mxu0
    %v8806 = vadd.f32 %v8391, %v8805
    %v8807 = vpop.f32.mrb[0].mxu0
    %v8808 = vadd.f32 %v8393, %v8807
    %v8809 = vpop.f32.mrb[0].mxu0
    %v8810 = vadd.f32 %v8395, %v8809
    %v8811 = vpop.f32.mrb[0].mxu0
    %v8812 = vadd.f32 %v8397, %v8811
    %8813 = vdwg.mxu0
    %8814 = vmatprep.subr.bf16.mxu0 %v5930
    %8815 = vmatpush1.bf16.msra.mxu0 %v5929
    %8816 = vmatprep.subr.bf16.mxu0 %v5936
    %8817 = vmatpush1.bf16.msra.mxu0 %v5935
    %8818 = vmatprep.subr.bf16.mxu0 %v5942
    %8819 = vmatpush1.bf16.msra.mxu0 %v5941
    %8820 = vmatprep.subr.bf16.mxu0 %v5948
    %8821 = vmatpush1.bf16.msra.mxu0 %v5947
    %8822 = vmatprep.subr.bf16.mxu0 %v5954
    %8823 = vmatpush1.bf16.msra.mxu0 %v5953
    %8824 = vmatprep.subr.bf16.mxu0 %v5960
    %8825 = vmatpush1.bf16.msra.mxu0 %v5959
    %8826 = vmatprep.subr.bf16.mxu0 %v5966
    %8827 = vmatpush1.bf16.msra.mxu0 %v5965
    %8828 = vmatprep.subr.bf16.mxu0 %v5972
    %8829 = vmatpush1.bf16.msra.mxu0 %v5971
    %8830 = vmatprep.subr.bf16.mxu0 %v5978
    %8831 = vmatpush1.bf16.msra.mxu0 %v5977
    %8832 = vmatprep.subr.bf16.mxu0 %v5984
    %8833 = vmatpush1.bf16.msra.mxu0 %v5983
    %8834 = vmatprep.subr.bf16.mxu0 %v5990
    %8835 = vmatpush1.bf16.msra.mxu0 %v5989
    %8836 = vmatprep.subr.bf16.mxu0 %v5996
    %8837 = vmatpush1.bf16.msra.mxu0 %v5995
    %8838 = vmatprep.subr.bf16.mxu0 %v6002
    %8839 = vmatpush1.bf16.msra.mxu0 %v6001
    %8840 = vmatprep.subr.bf16.mxu0 %v6008
    %8841 = vmatpush1.bf16.msra.mxu0 %v6007
    %8842 = vmatprep.subr.bf16.mxu0 %v6014
    %8843 = vmatpush1.bf16.msra.mxu0 %v6013
    %8844 = vmatprep.subr.bf16.mxu0 %v6020
    %8845 = vmatpush1.bf16.msra.mxu0 %v6019
    %8846 = vmatprep.mubr.bf16.mxu0 %v3200
    %8847 = vmatmul.mubr.bf16.gmra.mrb[0].mxu0 %v3199
    %v8848 = vpop.f32.mrb[0].mxu0
    %v8849 = vadd.f32 %v8766, %v8848
    %v8850 = vpop.f32.mrb[0].mxu0
    %v8851 = vadd.f32 %v8768, %v8850
    %v8852 = vpop.f32.mrb[0].mxu0
    %v8853 = vadd.f32 %v8770, %v8852
    %v8854 = vpop.f32.mrb[0].mxu0
    %v8855 = vadd.f32 %v8772, %v8854
    %8856 = vmatprep.mubr.bf16.mxu0 %v3204
    %8857 = vmatmul.mubr.bf16.gmra.mrb[0].mxu0 %v3203
    %v8858 = vpop.f32.mrb[0].mxu0
    %v8859 = vadd.f32 %v8776, %v8858
    %v8860 = vpop.f32.mrb[0].mxu0
    %v8861 = vadd.f32 %v8778, %v8860
    %v8862 = vpop.f32.mrb[0].mxu0
    %v8863 = vadd.f32 %v8780, %v8862
    %v8864 = vpop.f32.mrb[0].mxu0
    %v8865 = vadd.f32 %v8782, %v8864
    %8866 = vmatprep.mubr.bf16.mxu0 %v3208
    %8867 = vmatmul.mubr.bf16.gmra.mrb[0].mxu0 %v3207
    %v8868 = vpop.f32.mrb[0].mxu0
    %v8869 = vadd.f32 %v8786, %v8868
    %v8870 = vpop.f32.mrb[0].mxu0
    %v8871 = vadd.f32 %v8788, %v8870
    %v8872 = vpop.f32.mrb[0].mxu0
    %v8873 = vadd.f32 %v8790, %v8872
    %v8874 = vpop.f32.mrb[0].mxu0
    %v8875 = vadd.f32 %v8792, %v8874
    %8876 = vmatprep.mubr.bf16.mxu0 %v3212
    %8877 = vmatmul.mubr.bf16.gmra.mrb[0].mxu0 %v3211
    %v8878 = vpop.f32.mrb[0].mxu0
    %v8879 = vadd.f32 %v8796, %v8878
    %v8880 = vpop.f32.mrb[0].mxu0
    %v8881 = vadd.f32 %v8798, %v8880
    %v8882 = vpop.f32.mrb[0].mxu0
    %v8883 = vadd.f32 %v8800, %v8882
    %v8884 = vpop.f32.mrb[0].mxu0
    %v8885 = vadd.f32 %v8802, %v8884
    %8886 = vmatprep.mubr.bf16.mxu0 %v3216
    %8887 = vmatmul.mubr.bf16.gmra.mrb[0].mxu0 %v3215
    %v8888 = vpop.f32.mrb[0].mxu0
    %v8889 = vadd.f32 %v8806, %v8888
    %v8890 = vpop.f32.mrb[0].mxu0
    %v8891 = vadd.f32 %v8808, %v8890
    %v8892 = vpop.f32.mrb[0].mxu0
    %v8893 = vadd.f32 %v8810, %v8892
    %v8894 = vpop.f32.mrb[0].mxu0
    %v8895 = vadd.f32 %v8812, %v8894
    %8896 = vdwg.mxu0
    %8897 = vmatprep.subr.bf16.mxu0 %v5836
    %8898 = vmatpush1.bf16.msra.mxu0 %v5835
    %8899 = vmatprep.subr.bf16.mxu0 %v5842
    %8900 = vmatpush1.bf16.msra.mxu0 %v5841
    %8901 = vmatprep.subr.bf16.mxu0 %v5848
    %8902 = vmatpush1.bf16.msra.mxu0 %v5847
    %8903 = vmatprep.subr.bf16.mxu0 %v5854
    %8904 = vmatpush1.bf16.msra.mxu0 %v5853
    %8905 = vmatprep.subr.bf16.mxu0 %v5860
    %8906 = vmatpush1.bf16.msra.mxu0 %v5859
    %8907 = vmatprep.subr.bf16.mxu0 %v5866
    %8908 = vmatpush1.bf16.msra.mxu0 %v5865
    %8909 = vmatprep.subr.bf16.mxu0 %v5872
    %8910 = vmatpush1.bf16.msra.mxu0 %v5871
    %8911 = vmatprep.subr.bf16.mxu0 %v5878
    %8912 = vmatpush1.bf16.msra.mxu0 %v5877
    %8913 = vmatprep.subr.bf16.mxu0 %v5884
    %8914 = vmatpush1.bf16.msra.mxu0 %v5883
    %8915 = vmatprep.subr.bf16.mxu0 %v5890
    %8916 = vmatpush1.bf16.msra.mxu0 %v5889
    %8917 = vmatprep.subr.bf16.mxu0 %v5896
    %8918 = vmatpush1.bf16.msra.mxu0 %v5895
    %8919 = vmatprep.subr.bf16.mxu0 %v5902
    %8920 = vmatpush1.bf16.msra.mxu0 %v5901
    %8921 = vmatprep.subr.bf16.mxu0 %v5908
    %8922 = vmatpush1.bf16.msra.mxu0 %v5907
    %8923 = vmatprep.subr.bf16.mxu0 %v5914
    %8924 = vmatpush1.bf16.msra.mxu0 %v5913
    %8925 = vmatprep.subr.bf16.mxu0 %v5920
    %8926 = vmatpush1.bf16.msra.mxu0 %v5919
    %8927 = vmatprep.subr.bf16.mxu0 %v5926
    %8928 = vmatpush1.bf16.msra.mxu0 %v5925
    %8929 = vmatprep.mubr.bf16.mxu0 %v3198
    %8930 = vmatmul.mubr.bf16.gmra.mrb[0].mxu0 %v3197
    %v8931 = vpop.f32.mrb[0].mxu0
    %v8932 = vadd.f32 %v8517, %v8931
    %v8933 = vpop.f32.mrb[0].mxu0
    %v8934 = vadd.f32 %v8519, %v8933
    %v8935 = vpop.f32.mrb[0].mxu0
    %v8936 = vadd.f32 %v8521, %v8935
    %v8937 = vpop.f32.mrb[0].mxu0
    %v8938 = vadd.f32 %v8523, %v8937
    %8939 = vmatprep.mubr.bf16.mxu0 %v3202
    %8940 = vmatmul.mubr.bf16.gmra.mrb[0].mxu0 %v3201
    %v8941 = vpop.f32.mrb[0].mxu0
    %v8942 = vadd.f32 %v8527, %v8941
    %v8943 = vpop.f32.mrb[0].mxu0
    %v8944 = vadd.f32 %v8529, %v8943
    %v8945 = vpop.f32.mrb[0].mxu0
    %v8946 = vadd.f32 %v8531, %v8945
    %v8947 = vpop.f32.mrb[0].mxu0
    %v8948 = vadd.f32 %v8533, %v8947
    %8949 = vmatprep.mubr.bf16.mxu0 %v3206
    %8950 = vmatmul.mubr.bf16.gmra.mrb[0].mxu0 %v3205
    %v8951 = vpop.f32.mrb[0].mxu0
    %v8952 = vadd.f32 %v8537, %v8951
    %v8953 = vpop.f32.mrb[0].mxu0
    %v8954 = vadd.f32 %v8539, %v8953
    %v8955 = vpop.f32.mrb[0].mxu0
    %v8956 = vadd.f32 %v8541, %v8955
    %v8957 = vpop.f32.mrb[0].mxu0
    %v8958 = vadd.f32 %v8543, %v8957
    %8959 = vmatprep.mubr.bf16.mxu0 %v3210
    %8960 = vmatmul.mubr.bf16.gmra.mrb[0].mxu0 %v3209
    %v8961 = vpop.f32.mrb[0].mxu0
    %v8962 = vadd.f32 %v8547, %v8961
    %v8963 = vpop.f32.mrb[0].mxu0
    %v8964 = vadd.f32 %v8549, %v8963
    %v8965 = vpop.f32.mrb[0].mxu0
    %v8966 = vadd.f32 %v8551, %v8965
    %v8967 = vpop.f32.mrb[0].mxu0
    %v8968 = vadd.f32 %v8553, %v8967
    %8969 = vmatprep.mubr.bf16.mxu0 %v3214
    %8970 = vmatmul.mubr.bf16.gmra.mrb[0].mxu0 %v3213
    %v8971 = vpop.f32.mrb[0].mxu0
    %v8972 = vadd.f32 %v8557, %v8971
    %v8973 = vpop.f32.mrb[0].mxu0
    %v8974 = vadd.f32 %v8559, %v8973
    %v8975 = vpop.f32.mrb[0].mxu0
    %v8976 = vadd.f32 %v8561, %v8975
    %v8977 = vpop.f32.mrb[0].mxu0
    %v8978 = vadd.f32 %v8563, %v8977
    %8979 = vdwg.mxu0
    %8980 = vmatprep.subr.bf16.mxu0 %v5932
    %8981 = vmatpush1.bf16.msra.mxu0 %v5931
    %8982 = vmatprep.subr.bf16.mxu0 %v5938
    %8983 = vmatpush1.bf16.msra.mxu0 %v5937
    %8984 = vmatprep.subr.bf16.mxu0 %v5944
    %8985 = vmatpush1.bf16.msra.mxu0 %v5943
    %8986 = vmatprep.subr.bf16.mxu0 %v5950
    %8987 = vmatpush1.bf16.msra.mxu0 %v5949
    %8988 = vmatprep.subr.bf16.mxu0 %v5956
    %8989 = vmatpush1.bf16.msra.mxu0 %v5955
    %8990 = vmatprep.subr.bf16.mxu0 %v5962
    %8991 = vmatpush1.bf16.msra.mxu0 %v5961
    %8992 = vmatprep.subr.bf16.mxu0 %v5968
    %8993 = vmatpush1.bf16.msra.mxu0 %v5967
    %8994 = vmatprep.subr.bf16.mxu0 %v5974
    %8995 = vmatpush1.bf16.msra.mxu0 %v5973
    %8996 = vmatprep.subr.bf16.mxu0 %v5980
    %8997 = vmatpush1.bf16.msra.mxu0 %v5979
    %8998 = vmatprep.subr.bf16.mxu0 %v5986
    %8999 = vmatpush1.bf16.msra.mxu0 %v5985
    %9000 = vmatprep.subr.bf16.mxu0 %v5992
    %9001 = vmatpush1.bf16.msra.mxu0 %v5991
    %9002 = vmatprep.subr.bf16.mxu0 %v5998
    %9003 = vmatpush1.bf16.msra.mxu0 %v5997
    %9004 = vmatprep.subr.bf16.mxu0 %v6004
    %9005 = vmatpush1.bf16.msra.mxu0 %v6003
    %9006 = vmatprep.subr.bf16.mxu0 %v6010
    %9007 = vmatpush1.bf16.msra.mxu0 %v6009
    %9008 = vmatprep.subr.bf16.mxu0 %v6016
    %9009 = vmatpush1.bf16.msra.mxu0 %v6015
    %9010 = vmatprep.subr.bf16.mxu0 %v6022
    %9011 = vmatpush1.bf16.msra.mxu0 %v6021
    %9012 = vmatprep.mubr.bf16.mxu0 %v3200
    %9013 = vmatmul.mubr.bf16.gmra.mrb[0].mxu0 %v3199
    %v9014 = vpop.f32.mrb[0].mxu0
    %v9015 = vadd.f32 %v8932, %v9014
    %v9016 = vpop.f32.mrb[0].mxu0
    %v9017 = vadd.f32 %v8934, %v9016
    %v9018 = vpop.f32.mrb[0].mxu0
    %v9019 = vadd.f32 %v8936, %v9018
    %v9020 = vpop.f32.mrb[0].mxu0
    %v9021 = vadd.f32 %v8938, %v9020
    %9022 = vmatprep.mubr.bf16.mxu0 %v3204
    %9023 = vmatmul.mubr.bf16.gmra.mrb[0].mxu0 %v3203
    %v9024 = vpop.f32.mrb[0].mxu0
    %v9025 = vadd.f32 %v8942, %v9024
    %v9026 = vpop.f32.mrb[0].mxu0
    %v9027 = vadd.f32 %v8944, %v9026
    %v9028 = vpop.f32.mrb[0].mxu0
    %v9029 = vadd.f32 %v8946, %v9028
    %v9030 = vpop.f32.mrb[0].mxu0
    %v9031 = vadd.f32 %v8948, %v9030
    %9032 = vmatprep.mubr.bf16.mxu0 %v3208
    %9033 = vmatmul.mubr.bf16.gmra.mrb[0].mxu0 %v3207
    %v9034 = vpop.f32.mrb[0].mxu0
    %v9035 = vadd.f32 %v8952, %v9034
    %v9036 = vpop.f32.mrb[0].mxu0
    %v9037 = vadd.f32 %v8954, %v9036
    %v9038 = vpop.f32.mrb[0].mxu0
    %v9039 = vadd.f32 %v8956, %v9038
    %v9040 = vpop.f32.mrb[0].mxu0
    %v9041 = vadd.f32 %v8958, %v9040
    %9042 = vmatprep.mubr.bf16.mxu0 %v3212
    %9043 = vmatmul.mubr.bf16.gmra.mrb[0].mxu0 %v3211
    %v9044 = vpop.f32.mrb[0].mxu0
    %v9045 = vadd.f32 %v8962, %v9044
    %v9046 = vpop.f32.mrb[0].mxu0
    %v9047 = vadd.f32 %v8964, %v9046
    %v9048 = vpop.f32.mrb[0].mxu0
    %v9049 = vadd.f32 %v8966, %v9048
    %v9050 = vpop.f32.mrb[0].mxu0
    %v9051 = vadd.f32 %v8968, %v9050
    %9052 = vmatprep.mubr.bf16.mxu0 %v3216
    %9053 = vmatmul.mubr.bf16.gmra.mrb[0].mxu0 %v3215
    %v9054 = vpop.f32.mrb[0].mxu0
    %v9055 = vadd.f32 %v8972, %v9054
    %v9056 = vpop.f32.mrb[0].mxu0
    %v9057 = vadd.f32 %v8974, %v9056
    %v9058 = vpop.f32.mrb[0].mxu0
    %v9059 = vadd.f32 %v8976, %v9058
    %v9060 = vpop.f32.mrb[0].mxu0
    %v9061 = vadd.f32 %v8978, %v9060
    %9062 = vdwg.mxu0
    %9063 = vmatprep.subr.bf16.mxu0 %v5838
    %9064 = vmatpush1.bf16.msra.mxu0 %v5837
    %9065 = vmatprep.subr.bf16.mxu0 %v5844
    %9066 = vmatpush1.bf16.msra.mxu0 %v5843
    %9067 = vmatprep.subr.bf16.mxu0 %v5850
    %9068 = vmatpush1.bf16.msra.mxu0 %v5849
    %9069 = vmatprep.subr.bf16.mxu0 %v5856
    %9070 = vmatpush1.bf16.msra.mxu0 %v5855
    %9071 = vmatprep.subr.bf16.mxu0 %v5862
    %9072 = vmatpush1.bf16.msra.mxu0 %v5861
    %9073 = vmatprep.subr.bf16.mxu0 %v5868
    %9074 = vmatpush1.bf16.msra.mxu0 %v5867
    %9075 = vmatprep.subr.bf16.mxu0 %v5874
    %9076 = vmatpush1.bf16.msra.mxu0 %v5873
    %9077 = vmatprep.subr.bf16.mxu0 %v5880
    %9078 = vmatpush1.bf16.msra.mxu0 %v5879
    %9079 = vmatprep.subr.bf16.mxu0 %v5886
    %9080 = vmatpush1.bf16.msra.mxu0 %v5885
    %9081 = vmatprep.subr.bf16.mxu0 %v5892
    %9082 = vmatpush1.bf16.msra.mxu0 %v5891
    %9083 = vmatprep.subr.bf16.mxu0 %v5898
    %9084 = vmatpush1.bf16.msra.mxu0 %v5897
    %9085 = vmatprep.subr.bf16.mxu0 %v5904
    %9086 = vmatpush1.bf16.msra.mxu0 %v5903
    %9087 = vmatprep.subr.bf16.mxu0 %v5910
    %9088 = vmatpush1.bf16.msra.mxu0 %v5909
    %9089 = vmatprep.subr.bf16.mxu0 %v5916
    %9090 = vmatpush1.bf16.msra.mxu0 %v5915
    %9091 = vmatprep.subr.bf16.mxu0 %v5922
    %9092 = vmatpush1.bf16.msra.mxu0 %v5921
    %9093 = vmatprep.subr.bf16.mxu0 %v5928
    %9094 = vmatpush1.bf16.msra.mxu0 %v5927
    %9095 = vmatprep.mubr.bf16.mxu0 %v3198
    %9096 = vmatmul.mubr.bf16.gmra.mrb[0].mxu0 %v3197
    %v9097 = vpop.f32.mrb[0].mxu0
    %v9098 = vadd.f32 %v8683, %v9097
    %v9099 = vpop.f32.mrb[0].mxu0
    %v9100 = vadd.f32 %v8685, %v9099
    %v9101 = vpop.f32.mrb[0].mxu0
    %v9102 = vadd.f32 %v8687, %v9101
    %v9103 = vpop.f32.mrb[0].mxu0
    %v9104 = vadd.f32 %v8689, %v9103
    %9105 = vmatprep.mubr.bf16.mxu0 %v3202
    %9106 = vmatmul.mubr.bf16.gmra.mrb[0].mxu0 %v3201
    %v9107 = vpop.f32.mrb[0].mxu0
    %v9108 = vadd.f32 %v8693, %v9107
    %v9109 = vpop.f32.mrb[0].mxu0
    %v9110 = vadd.f32 %v8695, %v9109
    %v9111 = vpop.f32.mrb[0].mxu0
    %v9112 = vadd.f32 %v8697, %v9111
    %v9113 = vpop.f32.mrb[0].mxu0
    %v9114 = vadd.f32 %v8699, %v9113
    %9115 = vmatprep.mubr.bf16.mxu0 %v3206
    %9116 = vmatmul.mubr.bf16.gmra.mrb[0].mxu0 %v3205
    %v9117 = vpop.f32.mrb[0].mxu0
    %v9118 = vadd.f32 %v8703, %v9117
    %v9119 = vpop.f32.mrb[0].mxu0
    %v9120 = vadd.f32 %v8705, %v9119
    %v9121 = vpop.f32.mrb[0].mxu0
    %v9122 = vadd.f32 %v8707, %v9121
    %v9123 = vpop.f32.mrb[0].mxu0
    %v9124 = vadd.f32 %v8709, %v9123
    %9125 = vmatprep.mubr.bf16.mxu0 %v3210
    %9126 = vmatmul.mubr.bf16.gmra.mrb[0].mxu0 %v3209
    %v9127 = vpop.f32.mrb[0].mxu0
    %v9128 = vadd.f32 %v8713, %v9127
    %v9129 = vpop.f32.mrb[0].mxu0
    %v9130 = vadd.f32 %v8715, %v9129
    %v9131 = vpop.f32.mrb[0].mxu0
    %v9132 = vadd.f32 %v8717, %v9131
    %v9133 = vpop.f32.mrb[0].mxu0
    %v9134 = vadd.f32 %v8719, %v9133
    %9135 = vmatprep.mubr.bf16.mxu0 %v3214
    %9136 = vmatmul.mubr.bf16.gmra.mrb[0].mxu0 %v3213
    %v9137 = vpop.f32.mrb[0].mxu0
    %v9138 = vadd.f32 %v8723, %v9137
    %v9139 = vpop.f32.mrb[0].mxu0
    %v9140 = vadd.f32 %v8725, %v9139
    %v9141 = vpop.f32.mrb[0].mxu0
    %v9142 = vadd.f32 %v8727, %v9141
    %v9143 = vpop.f32.mrb[0].mxu0
    %v9144 = vadd.f32 %v8729, %v9143
    %9145 = vdwg.mxu0
    %9146 = vmatprep.subr.bf16.mxu0 %v5934
    %9147 = vmatpush1.bf16.msra.mxu0 %v5933
    %9148 = vmatprep.subr.bf16.mxu0 %v5940
    %9149 = vmatpush1.bf16.msra.mxu0 %v5939
    %9150 = vmatprep.subr.bf16.mxu0 %v5946
    %9151 = vmatpush1.bf16.msra.mxu0 %v5945
    %9152 = vmatprep.subr.bf16.mxu0 %v5952
    %9153 = vmatpush1.bf16.msra.mxu0 %v5951
    %9154 = vmatprep.subr.bf16.mxu0 %v5958
    %9155 = vmatpush1.bf16.msra.mxu0 %v5957
    %9156 = vmatprep.subr.bf16.mxu0 %v5964
    %9157 = vmatpush1.bf16.msra.mxu0 %v5963
    %9158 = vmatprep.subr.bf16.mxu0 %v5970
    %9159 = vmatpush1.bf16.msra.mxu0 %v5969
    %9160 = vmatprep.subr.bf16.mxu0 %v5976
    %9161 = vmatpush1.bf16.msra.mxu0 %v5975
    %9162 = vmatprep.subr.bf16.mxu0 %v5982
    %9163 = vmatpush1.bf16.msra.mxu0 %v5981
    %9164 = vmatprep.subr.bf16.mxu0 %v5988
    %9165 = vmatpush1.bf16.msra.mxu0 %v5987
    %9166 = vmatprep.subr.bf16.mxu0 %v5994
    %9167 = vmatpush1.bf16.msra.mxu0 %v5993
    %9168 = vmatprep.subr.bf16.mxu0 %v6000
    %9169 = vmatpush1.bf16.msra.mxu0 %v5999
    %9170 = vmatprep.subr.bf16.mxu0 %v6006
    %9171 = vmatpush1.bf16.msra.mxu0 %v6005
    %9172 = vmatprep.subr.bf16.mxu0 %v6012
    %9173 = vmatpush1.bf16.msra.mxu0 %v6011
    %9174 = vmatprep.subr.bf16.mxu0 %v6018
    %9175 = vmatpush1.bf16.msra.mxu0 %v6017
    %9176 = vmatprep.subr.bf16.mxu0 %v6024
    %9177 = vmatpush1.bf16.msra.mxu0 %v6023
    %9178 = vmatprep.mubr.bf16.mxu0 %v3200
    %9179 = vmatmul.mubr.bf16.gmra.mrb[0].mxu0 %v3199
    %v9180 = vpop.f32.mrb[0].mxu0
    %v9181 = vadd.f32 %v9098, %v9180
    %v9182 = vpop.f32.mrb[0].mxu0
    %v9183 = vadd.f32 %v9100, %v9182
    %v9184 = vpop.f32.mrb[0].mxu0
    %v9185 = vadd.f32 %v9102, %v9184
    %v9186 = vpop.f32.mrb[0].mxu0
    %v9187 = vadd.f32 %v9104, %v9186
    %9188 = vmatprep.mubr.bf16.mxu0 %v3204
    %9189 = vmatmul.mubr.bf16.gmra.mrb[0].mxu0 %v3203
    %v9190 = vpop.f32.mrb[0].mxu0
    %v9191 = vadd.f32 %v9108, %v9190
    %v9192 = vpop.f32.mrb[0].mxu0
    %v9193 = vadd.f32 %v9110, %v9192
    %v9194 = vpop.f32.mrb[0].mxu0
    %v9195 = vadd.f32 %v9112, %v9194
    %v9196 = vpop.f32.mrb[0].mxu0
    %v9197 = vadd.f32 %v9114, %v9196
    %9198 = vmatprep.mubr.bf16.mxu0 %v3208
    %9199 = vmatmul.mubr.bf16.gmra.mrb[0].mxu0 %v3207
    %v9200 = vpop.f32.mrb[0].mxu0
    %v9201 = vadd.f32 %v9118, %v9200
    %v9202 = vpop.f32.mrb[0].mxu0
    %v9203 = vadd.f32 %v9120, %v9202
    %v9204 = vpop.f32.mrb[0].mxu0
    %v9205 = vadd.f32 %v9122, %v9204
    %v9206 = vpop.f32.mrb[0].mxu0
    %v9207 = vadd.f32 %v9124, %v9206
    %9208 = vmatprep.mubr.bf16.mxu0 %v3212
    %9209 = vmatmul.mubr.bf16.gmra.mrb[0].mxu0 %v3211
    %v9210 = vpop.f32.mrb[0].mxu0
    %v9211 = vadd.f32 %v9128, %v9210
    %v9212 = vpop.f32.mrb[0].mxu0
    %v9213 = vadd.f32 %v9130, %v9212
    %v9214 = vpop.f32.mrb[0].mxu0
    %v9215 = vadd.f32 %v9132, %v9214
    %v9216 = vpop.f32.mrb[0].mxu0
    %v9217 = vadd.f32 %v9134, %v9216
    %9218 = vmatprep.mubr.bf16.mxu0 %v3216
    %9219 = vmatmul.mubr.bf16.gmra.mrb[0].mxu0 %v3215
    %v9220 = vpop.f32.mrb[0].mxu0
    %v9221 = vadd.f32 %v9138, %v9220
    %v9222 = vpop.f32.mrb[0].mxu0
    %v9223 = vadd.f32 %v9140, %v9222
    %v9224 = vpop.f32.mrb[0].mxu0
    %v9225 = vadd.f32 %v9142, %v9224
    %v9226 = vpop.f32.mrb[0].mxu0
    %v9227 = vadd.f32 %v9144, %v9226
    %9228 = vdwg.mxu0
    %9229 = vmatprep.subr.bf16.mxu0 %v7292
    %9230 = vmatpush1.bf16.msra.mxu0 %v7291
    %9231 = vmatprep.subr.bf16.mxu0 %v7298
    %9232 = vmatpush1.bf16.msra.mxu0 %v7297
    %9233 = vmatprep.subr.bf16.mxu0 %v7304
    %9234 = vmatpush1.bf16.msra.mxu0 %v7303
    %9235 = vmatprep.subr.bf16.mxu0 %v7310
    %9236 = vmatpush1.bf16.msra.mxu0 %v7309
    %9237 = vmatprep.subr.bf16.mxu0 %v7316
    %9238 = vmatpush1.bf16.msra.mxu0 %v7315
    %9239 = vmatprep.subr.bf16.mxu0 %v7322
    %9240 = vmatpush1.bf16.msra.mxu0 %v7321
    %9241 = vmatprep.subr.bf16.mxu0 %v7328
    %9242 = vmatpush1.bf16.msra.mxu0 %v7327
    %9243 = vmatprep.subr.bf16.mxu0 %v7334
    %9244 = vmatpush1.bf16.msra.mxu0 %v7333
    %9245 = vmatprep.subr.bf16.mxu0 %v7340
    %9246 = vmatpush1.bf16.msra.mxu0 %v7339
    %9247 = vmatprep.subr.bf16.mxu0 %v7346
    %9248 = vmatpush1.bf16.msra.mxu0 %v7345
    %9249 = vmatprep.subr.bf16.mxu0 %v7352
    %9250 = vmatpush1.bf16.msra.mxu0 %v7351
    %9251 = vmatprep.subr.bf16.mxu0 %v7358
    %9252 = vmatpush1.bf16.msra.mxu0 %v7357
    %9253 = vmatprep.subr.bf16.mxu0 %v7364
    %9254 = vmatpush1.bf16.msra.mxu0 %v7363
    %9255 = vmatprep.subr.bf16.mxu0 %v7370
    %9256 = vmatpush1.bf16.msra.mxu0 %v7369
    %9257 = vmatprep.subr.bf16.mxu0 %v7376
    %9258 = vmatpush1.bf16.msra.mxu0 %v7375
    %9259 = vmatprep.subr.bf16.mxu0 %v7382
    %9260 = vmatpush1.bf16.msra.mxu0 %v7381
    %9261 = vmatprep.mubr.bf16.mxu0 %v3202
    %9262 = vmatmul.mubr.bf16.gmra.mrb[0].mxu0 %v3201
    %v9263 = vpop.f32.mrb[0].mxu0
    %v9264 = vadd.f32 0.0, %v9263
    %v9265 = vpop.f32.mrb[0].mxu0
    %v9266 = vadd.f32 0.0, %v9265
    %v9267 = vpop.f32.mrb[0].mxu0
    %v9268 = vadd.f32 0.0, %v9267
    %v9269 = vpop.f32.mrb[0].mxu0
    %v9270 = vadd.f32 0.0, %v9269
    %9271 = vmatprep.mubr.bf16.mxu0 %v3206
    %9272 = vmatmul.mubr.bf16.gmra.mrb[0].mxu0 %v3205
    %v9273 = vpop.f32.mrb[0].mxu0
    %v9274 = vadd.f32 0.0, %v9273
    %v9275 = vpop.f32.mrb[0].mxu0
    %v9276 = vadd.f32 0.0, %v9275
    %v9277 = vpop.f32.mrb[0].mxu0
    %v9278 = vadd.f32 0.0, %v9277
    %v9279 = vpop.f32.mrb[0].mxu0
    %v9280 = vadd.f32 0.0, %v9279
    %9281 = vmatprep.mubr.bf16.mxu0 %v3210
    %9282 = vmatmul.mubr.bf16.gmra.mrb[0].mxu0 %v3209
    %v9283 = vpop.f32.mrb[0].mxu0
    %v9284 = vadd.f32 0.0, %v9283
    %v9285 = vpop.f32.mrb[0].mxu0
    %v9286 = vadd.f32 0.0, %v9285
    %v9287 = vpop.f32.mrb[0].mxu0
    %v9288 = vadd.f32 0.0, %v9287
    %v9289 = vpop.f32.mrb[0].mxu0
    %v9290 = vadd.f32 0.0, %v9289
    %9291 = vmatprep.mubr.bf16.mxu0 %v3214
    %9292 = vmatmul.mubr.bf16.gmra.mrb[0].mxu0 %v3213
    %v9293 = vpop.f32.mrb[0].mxu0
    %v9294 = vadd.f32 0.0, %v9293
    %v9295 = vpop.f32.mrb[0].mxu0
    %v9296 = vadd.f32 0.0, %v9295
    %v9297 = vpop.f32.mrb[0].mxu0
    %v9298 = vadd.f32 0.0, %v9297
    %v9299 = vpop.f32.mrb[0].mxu0
    %v9300 = vadd.f32 0.0, %v9299
    %9301 = vmatprep.mubr.bf16.mxu0 %v3218
    %9302 = vmatmul.mubr.bf16.gmra.mrb[0].mxu0 %v3217
    %v9303 = vpop.f32.mrb[0].mxu0
    %v9304 = vadd.f32 0.0, %v9303
    %v9305 = vpop.f32.mrb[0].mxu0
    %v9306 = vadd.f32 0.0, %v9305
    %v9307 = vpop.f32.mrb[0].mxu0
    %v9308 = vadd.f32 0.0, %v9307
    %v9309 = vpop.f32.mrb[0].mxu0
    %v9310 = vadd.f32 0.0, %v9309
    %9311 = vdwg.mxu0
    %9312 = vmatprep.subr.bf16.mxu0 %v7388
    %9313 = vmatpush1.bf16.msra.mxu0 %v7387
    %9314 = vmatprep.subr.bf16.mxu0 %v7394
    %9315 = vmatpush1.bf16.msra.mxu0 %v7393
    %9316 = vmatprep.subr.bf16.mxu0 %v7400
    %9317 = vmatpush1.bf16.msra.mxu0 %v7399
    %9318 = vmatprep.subr.bf16.mxu0 %v7406
    %9319 = vmatpush1.bf16.msra.mxu0 %v7405
    %9320 = vmatprep.subr.bf16.mxu0 %v7412
    %9321 = vmatpush1.bf16.msra.mxu0 %v7411
    %9322 = vmatprep.subr.bf16.mxu0 %v7418
    %9323 = vmatpush1.bf16.msra.mxu0 %v7417
    %9324 = vmatprep.subr.bf16.mxu0 %v7424
    %9325 = vmatpush1.bf16.msra.mxu0 %v7423
    %9326 = vmatprep.subr.bf16.mxu0 %v7430
    %9327 = vmatpush1.bf16.msra.mxu0 %v7429
    %9328 = vmatprep.subr.bf16.mxu0 %v7436
    %9329 = vmatpush1.bf16.msra.mxu0 %v7435
    %9330 = vmatprep.subr.bf16.mxu0 %v7442
    %9331 = vmatpush1.bf16.msra.mxu0 %v7441
    %9332 = vmatprep.subr.bf16.mxu0 %v7448
    %9333 = vmatpush1.bf16.msra.mxu0 %v7447
    %9334 = vmatprep.subr.bf16.mxu0 %v7454
    %9335 = vmatpush1.bf16.msra.mxu0 %v7453
    %9336 = vmatprep.subr.bf16.mxu0 %v7460
    %9337 = vmatpush1.bf16.msra.mxu0 %v7459
    %9338 = vmatprep.subr.bf16.mxu0 %v7466
    %9339 = vmatpush1.bf16.msra.mxu0 %v7465
    %9340 = vmatprep.subr.bf16.mxu0 %v7472
    %9341 = vmatpush1.bf16.msra.mxu0 %v7471
    %9342 = vmatprep.subr.bf16.mxu0 %v7478
    %9343 = vmatpush1.bf16.msra.mxu0 %v7477
    %9344 = vmatprep.mubr.bf16.mxu0 %v3204
    %9345 = vmatmul.mubr.bf16.gmra.mrb[0].mxu0 %v3203
    %v9346 = vpop.f32.mrb[0].mxu0
    %v9347 = vadd.f32 %v9264, %v9346
    %v9348 = vpop.f32.mrb[0].mxu0
    %v9349 = vadd.f32 %v9266, %v9348
    %v9350 = vpop.f32.mrb[0].mxu0
    %v9351 = vadd.f32 %v9268, %v9350
    %v9352 = vpop.f32.mrb[0].mxu0
    %v9353 = vadd.f32 %v9270, %v9352
    %9354 = vmatprep.mubr.bf16.mxu0 %v3208
    %9355 = vmatmul.mubr.bf16.gmra.mrb[0].mxu0 %v3207
    %v9356 = vpop.f32.mrb[0].mxu0
    %v9357 = vadd.f32 %v9274, %v9356
    %v9358 = vpop.f32.mrb[0].mxu0
    %v9359 = vadd.f32 %v9276, %v9358
    %v9360 = vpop.f32.mrb[0].mxu0
    %v9361 = vadd.f32 %v9278, %v9360
    %v9362 = vpop.f32.mrb[0].mxu0
    %v9363 = vadd.f32 %v9280, %v9362
    %9364 = vmatprep.mubr.bf16.mxu0 %v3212
    %9365 = vmatmul.mubr.bf16.gmra.mrb[0].mxu0 %v3211
    %v9366 = vpop.f32.mrb[0].mxu0
    %v9367 = vadd.f32 %v9284, %v9366
    %v9368 = vpop.f32.mrb[0].mxu0
    %v9369 = vadd.f32 %v9286, %v9368
    %v9370 = vpop.f32.mrb[0].mxu0
    %v9371 = vadd.f32 %v9288, %v9370
    %v9372 = vpop.f32.mrb[0].mxu0
    %v9373 = vadd.f32 %v9290, %v9372
    %9374 = vmatprep.mubr.bf16.mxu0 %v3216
    %9375 = vmatmul.mubr.bf16.gmra.mrb[0].mxu0 %v3215
    %v9376 = vpop.f32.mrb[0].mxu0
    %v9377 = vadd.f32 %v9294, %v9376
    %v9378 = vpop.f32.mrb[0].mxu0
    %v9379 = vadd.f32 %v9296, %v9378
    %v9380 = vpop.f32.mrb[0].mxu0
    %v9381 = vadd.f32 %v9298, %v9380
    %v9382 = vpop.f32.mrb[0].mxu0
    %v9383 = vadd.f32 %v9300, %v9382
    %9384 = vmatprep.mubr.bf16.mxu0 %v3220
    %9385 = vmatmul.mubr.bf16.gmra.mrb[0].mxu0 %v3219
    %v9386 = vpop.f32.mrb[0].mxu0
    %v9387 = vadd.f32 %v9304, %v9386
    %v9388 = vpop.f32.mrb[0].mxu0
    %v9389 = vadd.f32 %v9306, %v9388
    %v9390 = vpop.f32.mrb[0].mxu0
    %v9391 = vadd.f32 %v9308, %v9390
    %v9392 = vpop.f32.mrb[0].mxu0
    %v9393 = vadd.f32 %v9310, %v9392
    %9394 = vdwg.mxu0
    %9395 = vmatprep.subr.bf16.mxu0 %v7294
    %9396 = vmatpush1.bf16.msra.mxu0 %v7293
    %9397 = vmatprep.subr.bf16.mxu0 %v7300
    %9398 = vmatpush1.bf16.msra.mxu0 %v7299
    %9399 = vmatprep.subr.bf16.mxu0 %v7306
    %9400 = vmatpush1.bf16.msra.mxu0 %v7305
    %9401 = vmatprep.subr.bf16.mxu0 %v7312
    %9402 = vmatpush1.bf16.msra.mxu0 %v7311
    %9403 = vmatprep.subr.bf16.mxu0 %v7318
    %9404 = vmatpush1.bf16.msra.mxu0 %v7317
    %9405 = vmatprep.subr.bf16.mxu0 %v7324
    %9406 = vmatpush1.bf16.msra.mxu0 %v7323
    %9407 = vmatprep.subr.bf16.mxu0 %v7330
    %9408 = vmatpush1.bf16.msra.mxu0 %v7329
    %9409 = vmatprep.subr.bf16.mxu0 %v7336
    %9410 = vmatpush1.bf16.msra.mxu0 %v7335
    %9411 = vmatprep.subr.bf16.mxu0 %v7342
    %9412 = vmatpush1.bf16.msra.mxu0 %v7341
    %9413 = vmatprep.subr.bf16.mxu0 %v7348
    %9414 = vmatpush1.bf16.msra.mxu0 %v7347
    %9415 = vmatprep.subr.bf16.mxu0 %v7354
    %9416 = vmatpush1.bf16.msra.mxu0 %v7353
    %9417 = vmatprep.subr.bf16.mxu0 %v7360
    %9418 = vmatpush1.bf16.msra.mxu0 %v7359
    %9419 = vmatprep.subr.bf16.mxu0 %v7366
    %9420 = vmatpush1.bf16.msra.mxu0 %v7365
    %9421 = vmatprep.subr.bf16.mxu0 %v7372
    %9422 = vmatpush1.bf16.msra.mxu0 %v7371
    %9423 = vmatprep.subr.bf16.mxu0 %v7378
    %9424 = vmatpush1.bf16.msra.mxu0 %v7377
    %9425 = vmatprep.subr.bf16.mxu0 %v7384
    %9426 = vmatpush1.bf16.msra.mxu0 %v7383
    %9427 = vmatprep.mubr.bf16.mxu0 %v3202
    %9428 = vmatmul.mubr.bf16.gmra.mrb[0].mxu0 %v3201
    %v9429 = vpop.f32.mrb[0].mxu0
    %v9430 = vadd.f32 0.0, %v9429
    %v9431 = vpop.f32.mrb[0].mxu0
    %v9432 = vadd.f32 0.0, %v9431
    %v9433 = vpop.f32.mrb[0].mxu0
    %v9434 = vadd.f32 0.0, %v9433
    %v9435 = vpop.f32.mrb[0].mxu0
    %v9436 = vadd.f32 0.0, %v9435
    %9437 = vmatprep.mubr.bf16.mxu0 %v3206
    %9438 = vmatmul.mubr.bf16.gmra.mrb[0].mxu0 %v3205
    %v9439 = vpop.f32.mrb[0].mxu0
    %v9440 = vadd.f32 0.0, %v9439
    %v9441 = vpop.f32.mrb[0].mxu0
    %v9442 = vadd.f32 0.0, %v9441
    %v9443 = vpop.f32.mrb[0].mxu0
    %v9444 = vadd.f32 0.0, %v9443
    %v9445 = vpop.f32.mrb[0].mxu0
    %v9446 = vadd.f32 0.0, %v9445
    %9447 = vmatprep.mubr.bf16.mxu0 %v3210
    %9448 = vmatmul.mubr.bf16.gmra.mrb[0].mxu0 %v3209
    %v9449 = vpop.f32.mrb[0].mxu0
    %v9450 = vadd.f32 0.0, %v9449
    %v9451 = vpop.f32.mrb[0].mxu0
    %v9452 = vadd.f32 0.0, %v9451
    %v9453 = vpop.f32.mrb[0].mxu0
    %v9454 = vadd.f32 0.0, %v9453
    %v9455 = vpop.f32.mrb[0].mxu0
    %v9456 = vadd.f32 0.0, %v9455
    %9457 = vmatprep.mubr.bf16.mxu0 %v3214
    %9458 = vmatmul.mubr.bf16.gmra.mrb[0].mxu0 %v3213
    %v9459 = vpop.f32.mrb[0].mxu0
    %v9460 = vadd.f32 0.0, %v9459
    %v9461 = vpop.f32.mrb[0].mxu0
    %v9462 = vadd.f32 0.0, %v9461
    %v9463 = vpop.f32.mrb[0].mxu0
    %v9464 = vadd.f32 0.0, %v9463
    %v9465 = vpop.f32.mrb[0].mxu0
    %v9466 = vadd.f32 0.0, %v9465
    %9467 = vmatprep.mubr.bf16.mxu0 %v3218
    %9468 = vmatmul.mubr.bf16.gmra.mrb[0].mxu0 %v3217
    %v9469 = vpop.f32.mrb[0].mxu0
    %v9470 = vadd.f32 0.0, %v9469
    %v9471 = vpop.f32.mrb[0].mxu0
    %v9472 = vadd.f32 0.0, %v9471
    %v9473 = vpop.f32.mrb[0].mxu0
    %v9474 = vadd.f32 0.0, %v9473
    %v9475 = vpop.f32.mrb[0].mxu0
    %v9476 = vadd.f32 0.0, %v9475
    %9477 = vdwg.mxu0
    %9478 = vmatprep.subr.bf16.mxu0 %v7390
    %9479 = vmatpush1.bf16.msra.mxu0 %v7389
    %9480 = vmatprep.subr.bf16.mxu0 %v7396
    %9481 = vmatpush1.bf16.msra.mxu0 %v7395
    %9482 = vmatprep.subr.bf16.mxu0 %v7402
    %9483 = vmatpush1.bf16.msra.mxu0 %v7401
    %9484 = vmatprep.subr.bf16.mxu0 %v7408
    %9485 = vmatpush1.bf16.msra.mxu0 %v7407
    %9486 = vmatprep.subr.bf16.mxu0 %v7414
    %9487 = vmatpush1.bf16.msra.mxu0 %v7413
    %9488 = vmatprep.subr.bf16.mxu0 %v7420
    %9489 = vmatpush1.bf16.msra.mxu0 %v7419
    %9490 = vmatprep.subr.bf16.mxu0 %v7426
    %9491 = vmatpush1.bf16.msra.mxu0 %v7425
    %9492 = vmatprep.subr.bf16.mxu0 %v7432
    %9493 = vmatpush1.bf16.msra.mxu0 %v7431
    %9494 = vmatprep.subr.bf16.mxu0 %v7438
    %9495 = vmatpush1.bf16.msra.mxu0 %v7437
    %9496 = vmatprep.subr.bf16.mxu0 %v7444
    %9497 = vmatpush1.bf16.msra.mxu0 %v7443
    %9498 = vmatprep.subr.bf16.mxu0 %v7450
    %9499 = vmatpush1.bf16.msra.mxu0 %v7449
    %9500 = vmatprep.subr.bf16.mxu0 %v7456
    %9501 = vmatpush1.bf16.msra.mxu0 %v7455
    %9502 = vmatprep.subr.bf16.mxu0 %v7462
    %9503 = vmatpush1.bf16.msra.mxu0 %v7461
    %9504 = vmatprep.subr.bf16.mxu0 %v7468
    %9505 = vmatpush1.bf16.msra.mxu0 %v7467
    %9506 = vmatprep.subr.bf16.mxu0 %v7474
    %9507 = vmatpush1.bf16.msra.mxu0 %v7473
    %9508 = vmatprep.subr.bf16.mxu0 %v7480
    %9509 = vmatpush1.bf16.msra.mxu0 %v7479
    %9510 = vmatprep.mubr.bf16.mxu0 %v3204
    %9511 = vmatmul.mubr.bf16.gmra.mrb[0].mxu0 %v3203
    %v9512 = vpop.f32.mrb[0].mxu0
    %v9513 = vadd.f32 %v9430, %v9512
    %v9514 = vpop.f32.mrb[0].mxu0
    %v9515 = vadd.f32 %v9432, %v9514
    %v9516 = vpop.f32.mrb[0].mxu0
    %v9517 = vadd.f32 %v9434, %v9516
    %v9518 = vpop.f32.mrb[0].mxu0
    %v9519 = vadd.f32 %v9436, %v9518
    %9520 = vmatprep.mubr.bf16.mxu0 %v3208
    %9521 = vmatmul.mubr.bf16.gmra.mrb[0].mxu0 %v3207
    %v9522 = vpop.f32.mrb[0].mxu0
    %v9523 = vadd.f32 %v9440, %v9522
    %v9524 = vpop.f32.mrb[0].mxu0
    %v9525 = vadd.f32 %v9442, %v9524
    %v9526 = vpop.f32.mrb[0].mxu0
    %v9527 = vadd.f32 %v9444, %v9526
    %v9528 = vpop.f32.mrb[0].mxu0
    %v9529 = vadd.f32 %v9446, %v9528
    %9530 = vmatprep.mubr.bf16.mxu0 %v3212
    %9531 = vmatmul.mubr.bf16.gmra.mrb[0].mxu0 %v3211
    %v9532 = vpop.f32.mrb[0].mxu0
    %v9533 = vadd.f32 %v9450, %v9532
    %v9534 = vpop.f32.mrb[0].mxu0
    %v9535 = vadd.f32 %v9452, %v9534
    %v9536 = vpop.f32.mrb[0].mxu0
    %v9537 = vadd.f32 %v9454, %v9536
    %v9538 = vpop.f32.mrb[0].mxu0
    %v9539 = vadd.f32 %v9456, %v9538
    %9540 = vmatprep.mubr.bf16.mxu0 %v3216
    %9541 = vmatmul.mubr.bf16.gmra.mrb[0].mxu0 %v3215
    %v9542 = vpop.f32.mrb[0].mxu0
    %v9543 = vadd.f32 %v9460, %v9542
    %v9544 = vpop.f32.mrb[0].mxu0
    %v9545 = vadd.f32 %v9462, %v9544
    %v9546 = vpop.f32.mrb[0].mxu0
    %v9547 = vadd.f32 %v9464, %v9546
    %v9548 = vpop.f32.mrb[0].mxu0
    %v9549 = vadd.f32 %v9466, %v9548
    %9550 = vmatprep.mubr.bf16.mxu0 %v3220
    %9551 = vmatmul.mubr.bf16.gmra.mrb[0].mxu0 %v3219
    %v9552 = vpop.f32.mrb[0].mxu0
    %v9553 = vadd.f32 %v9470, %v9552
    %v9554 = vpop.f32.mrb[0].mxu0
    %v9555 = vadd.f32 %v9472, %v9554
    %v9556 = vpop.f32.mrb[0].mxu0
    %v9557 = vadd.f32 %v9474, %v9556
    %v9558 = vpop.f32.mrb[0].mxu0
    %v9559 = vadd.f32 %v9476, %v9558
    %9560 = vdwg.mxu0
    %9561 = vmatprep.subr.bf16.mxu0 %v7296
    %9562 = vmatpush1.bf16.msra.mxu0 %v7295
    %9563 = vmatprep.subr.bf16.mxu0 %v7302
    %9564 = vmatpush1.bf16.msra.mxu0 %v7301
    %9565 = vmatprep.subr.bf16.mxu0 %v7308
    %9566 = vmatpush1.bf16.msra.mxu0 %v7307
    %9567 = vmatprep.subr.bf16.mxu0 %v7314
    %9568 = vmatpush1.bf16.msra.mxu0 %v7313
    %9569 = vmatprep.subr.bf16.mxu0 %v7320
    %9570 = vmatpush1.bf16.msra.mxu0 %v7319
    %9571 = vmatprep.subr.bf16.mxu0 %v7326
    %9572 = vmatpush1.bf16.msra.mxu0 %v7325
    %9573 = vmatprep.subr.bf16.mxu0 %v7332
    %9574 = vmatpush1.bf16.msra.mxu0 %v7331
    %9575 = vmatprep.subr.bf16.mxu0 %v7338
    %9576 = vmatpush1.bf16.msra.mxu0 %v7337
    %9577 = vmatprep.subr.bf16.mxu0 %v7344
    %9578 = vmatpush1.bf16.msra.mxu0 %v7343
    %9579 = vmatprep.subr.bf16.mxu0 %v7350
    %9580 = vmatpush1.bf16.msra.mxu0 %v7349
    %9581 = vmatprep.subr.bf16.mxu0 %v7356
    %9582 = vmatpush1.bf16.msra.mxu0 %v7355
    %9583 = vmatprep.subr.bf16.mxu0 %v7362
    %9584 = vmatpush1.bf16.msra.mxu0 %v7361
    %9585 = vmatprep.subr.bf16.mxu0 %v7368
    %9586 = vmatpush1.bf16.msra.mxu0 %v7367
    %9587 = vmatprep.subr.bf16.mxu0 %v7374
    %9588 = vmatpush1.bf16.msra.mxu0 %v7373
    %9589 = vmatprep.subr.bf16.mxu0 %v7380
    %9590 = vmatpush1.bf16.msra.mxu0 %v7379
    %9591 = vmatprep.subr.bf16.mxu0 %v7386
    %9592 = vmatpush1.bf16.msra.mxu0 %v7385
    %9593 = vmatprep.mubr.bf16.mxu0 %v3202
    %9594 = vmatmul.mubr.bf16.gmra.mrb[0].mxu0 %v3201
    %v9595 = vpop.f32.mrb[0].mxu0
    %v9596 = vadd.f32 0.0, %v9595
    %v9597 = vpop.f32.mrb[0].mxu0
    %v9598 = vadd.f32 0.0, %v9597
    %v9599 = vpop.f32.mrb[0].mxu0
    %v9600 = vadd.f32 0.0, %v9599
    %v9601 = vpop.f32.mrb[0].mxu0
    %v9602 = vadd.f32 0.0, %v9601
    %9603 = vmatprep.mubr.bf16.mxu0 %v3206
    %9604 = vmatmul.mubr.bf16.gmra.mrb[0].mxu0 %v3205
    %v9605 = vpop.f32.mrb[0].mxu0
    %v9606 = vadd.f32 0.0, %v9605
    %v9607 = vpop.f32.mrb[0].mxu0
    %v9608 = vadd.f32 0.0, %v9607
    %v9609 = vpop.f32.mrb[0].mxu0
    %v9610 = vadd.f32 0.0, %v9609
    %v9611 = vpop.f32.mrb[0].mxu0
    %v9612 = vadd.f32 0.0, %v9611
    %9613 = vmatprep.mubr.bf16.mxu0 %v3210
    %9614 = vmatmul.mubr.bf16.gmra.mrb[0].mxu0 %v3209
    %v9615 = vpop.f32.mrb[0].mxu0
    %v9616 = vadd.f32 0.0, %v9615
    %v9617 = vpop.f32.mrb[0].mxu0
    %v9618 = vadd.f32 0.0, %v9617
    %v9619 = vpop.f32.mrb[0].mxu0
    %v9620 = vadd.f32 0.0, %v9619
    %v9621 = vpop.f32.mrb[0].mxu0
    %v9622 = vadd.f32 0.0, %v9621
    %9623 = vmatprep.mubr.bf16.mxu0 %v3214
    %9624 = vmatmul.mubr.bf16.gmra.mrb[0].mxu0 %v3213
    %v9625 = vpop.f32.mrb[0].mxu0
    %v9626 = vadd.f32 0.0, %v9625
    %v9627 = vpop.f32.mrb[0].mxu0
    %v9628 = vadd.f32 0.0, %v9627
    %v9629 = vpop.f32.mrb[0].mxu0
    %v9630 = vadd.f32 0.0, %v9629
    %v9631 = vpop.f32.mrb[0].mxu0
    %v9632 = vadd.f32 0.0, %v9631
    %9633 = vmatprep.mubr.bf16.mxu0 %v3218
    %9634 = vmatmul.mubr.bf16.gmra.mrb[0].mxu0 %v3217
    %v9635 = vpop.f32.mrb[0].mxu0
    %v9636 = vadd.f32 0.0, %v9635
    %v9637 = vpop.f32.mrb[0].mxu0
    %v9638 = vadd.f32 0.0, %v9637
    %v9639 = vpop.f32.mrb[0].mxu0
    %v9640 = vadd.f32 0.0, %v9639
    %v9641 = vpop.f32.mrb[0].mxu0
    %v9642 = vadd.f32 0.0, %v9641
    %9643 = vdwg.mxu0
    %9644 = vmatprep.subr.bf16.mxu0 %v7392
    %9645 = vmatpush1.bf16.msra.mxu0 %v7391
    %9646 = vmatprep.subr.bf16.mxu0 %v7398
    %9647 = vmatpush1.bf16.msra.mxu0 %v7397
    %9648 = vmatprep.subr.bf16.mxu0 %v7404
    %9649 = vmatpush1.bf16.msra.mxu0 %v7403
    %9650 = vmatprep.subr.bf16.mxu0 %v7410
    %9651 = vmatpush1.bf16.msra.mxu0 %v7409
    %9652 = vmatprep.subr.bf16.mxu0 %v7416
    %9653 = vmatpush1.bf16.msra.mxu0 %v7415
    %9654 = vmatprep.subr.bf16.mxu0 %v7422
    %9655 = vmatpush1.bf16.msra.mxu0 %v7421
    %9656 = vmatprep.subr.bf16.mxu0 %v7428
    %9657 = vmatpush1.bf16.msra.mxu0 %v7427
    %9658 = vmatprep.subr.bf16.mxu0 %v7434
    %9659 = vmatpush1.bf16.msra.mxu0 %v7433
    %9660 = vmatprep.subr.bf16.mxu0 %v7440
    %9661 = vmatpush1.bf16.msra.mxu0 %v7439
    %9662 = vmatprep.subr.bf16.mxu0 %v7446
    %9663 = vmatpush1.bf16.msra.mxu0 %v7445
    %9664 = vmatprep.subr.bf16.mxu0 %v7452
    %9665 = vmatpush1.bf16.msra.mxu0 %v7451
    %9666 = vmatprep.subr.bf16.mxu0 %v7458
    %9667 = vmatpush1.bf16.msra.mxu0 %v7457
    %9668 = vmatprep.subr.bf16.mxu0 %v7464
    %9669 = vmatpush1.bf16.msra.mxu0 %v7463
    %9670 = vmatprep.subr.bf16.mxu0 %v7470
    %9671 = vmatpush1.bf16.msra.mxu0 %v7469
    %9672 = vmatprep.subr.bf16.mxu0 %v7476
    %9673 = vmatpush1.bf16.msra.mxu0 %v7475
    %9674 = vmatprep.subr.bf16.mxu0 %v7482
    %9675 = vmatpush1.bf16.msra.mxu0 %v7481
    %9676 = vmatprep.mubr.bf16.mxu0 %v3204
    %9677 = vmatmul.mubr.bf16.gmra.mrb[0].mxu0 %v3203
    %v9678 = vpop.f32.mrb[0].mxu0
    %v9679 = vadd.f32 %v9596, %v9678
    %v9680 = vpop.f32.mrb[0].mxu0
    %v9681 = vadd.f32 %v9598, %v9680
    %v9682 = vpop.f32.mrb[0].mxu0
    %v9683 = vadd.f32 %v9600, %v9682
    %v9684 = vpop.f32.mrb[0].mxu0
    %v9685 = vadd.f32 %v9602, %v9684
    %9686 = vmatprep.mubr.bf16.mxu0 %v3208
    %9687 = vmatmul.mubr.bf16.gmra.mrb[0].mxu0 %v3207
    %v9688 = vpop.f32.mrb[0].mxu0
    %v9689 = vadd.f32 %v9606, %v9688
    %v9690 = vpop.f32.mrb[0].mxu0
    %v9691 = vadd.f32 %v9608, %v9690
    %v9692 = vpop.f32.mrb[0].mxu0
    %v9693 = vadd.f32 %v9610, %v9692
    %v9694 = vpop.f32.mrb[0].mxu0
    %v9695 = vadd.f32 %v9612, %v9694
    %9696 = vmatprep.mubr.bf16.mxu0 %v3212
    %9697 = vmatmul.mubr.bf16.gmra.mrb[0].mxu0 %v3211
    %v9698 = vpop.f32.mrb[0].mxu0
    %v9699 = vadd.f32 %v9616, %v9698
    %v9700 = vpop.f32.mrb[0].mxu0
    %v9701 = vadd.f32 %v9618, %v9700
    %v9702 = vpop.f32.mrb[0].mxu0
    %v9703 = vadd.f32 %v9620, %v9702
    %v9704 = vpop.f32.mrb[0].mxu0
    %v9705 = vadd.f32 %v9622, %v9704
    %9706 = vmatprep.mubr.bf16.mxu0 %v3216
    %9707 = vmatmul.mubr.bf16.gmra.mrb[0].mxu0 %v3215
    %v9708 = vpop.f32.mrb[0].mxu0
    %v9709 = vadd.f32 %v9626, %v9708
    %v9710 = vpop.f32.mrb[0].mxu0
    %v9711 = vadd.f32 %v9628, %v9710
    %v9712 = vpop.f32.mrb[0].mxu0
    %v9713 = vadd.f32 %v9630, %v9712
    %v9714 = vpop.f32.mrb[0].mxu0
    %v9715 = vadd.f32 %v9632, %v9714
    %9716 = vmatprep.mubr.bf16.mxu0 %v3220
    %9717 = vmatmul.mubr.bf16.gmra.mrb[0].mxu0 %v3219
    %v9718 = vpop.f32.mrb[0].mxu0
    %v9719 = vadd.f32 %v9636, %v9718
    %v9720 = vpop.f32.mrb[0].mxu0
    %v9721 = vadd.f32 %v9638, %v9720
    %v9722 = vpop.f32.mrb[0].mxu0
    %v9723 = vadd.f32 %v9640, %v9722
    %v9724 = vpop.f32.mrb[0].mxu0
    %v9725 = vadd.f32 %v9642, %v9724
    %9726 = vdwg.mxu0
    %v9727 = vadd.f32 %v8849, %v9347
    %v9728 = vadd.f32 %v8851, %v9349
    %v9729 = vadd.f32 %v9015, %v9513
    %v9730 = vadd.f32 %v9017, %v9515
    %v9731 = vadd.f32 %v9181, %v9679
    %v9732 = vadd.f32 %v9183, %v9681
    %v9733 = vadd.f32 %v8853, %v9351
    %v9734 = vadd.f32 %v8855, %v9353
    %v9735 = vadd.f32 %v9019, %v9517
    %v9736 = vadd.f32 %v9021, %v9519
    %v9737 = vadd.f32 %v9185, %v9683
    %v9738 = vadd.f32 %v9187, %v9685
    %v9739 = vadd.f32 %v8859, %v9357
    %v9740 = vadd.f32 %v8861, %v9359
    %v9741 = vadd.f32 %v9025, %v9523
    %v9742 = vadd.f32 %v9027, %v9525
    %v9743 = vadd.f32 %v9191, %v9689
    %v9744 = vadd.f32 %v9193, %v9691
    %v9745 = vadd.f32 %v8863, %v9361
    %v9746 = vadd.f32 %v8865, %v9363
    %v9747 = vadd.f32 %v9029, %v9527
    %v9748 = vadd.f32 %v9031, %v9529
    %v9749 = vadd.f32 %v9195, %v9693
    %v9750 = vadd.f32 %v9197, %v9695
    %v9751 = vadd.f32 %v8869, %v9367
    %v9752 = vadd.f32 %v8871, %v9369
    %v9753 = vadd.f32 %v9035, %v9533
    %v9754 = vadd.f32 %v9037, %v9535
    %v9755 = vadd.f32 %v9201, %v9699
    %v9756 = vadd.f32 %v9203, %v9701
    %v9757 = vadd.f32 %v8873, %v9371
    %v9758 = vadd.f32 %v8875, %v9373
    %v9759 = vadd.f32 %v9039, %v9537
    %v9760 = vadd.f32 %v9041, %v9539
    %v9761 = vadd.f32 %v9205, %v9703
    %v9762 = vadd.f32 %v9207, %v9705
    %v9763 = vadd.f32 %v8879, %v9377
    %v9764 = vadd.f32 %v8881, %v9379
    %v9765 = vadd.f32 %v9045, %v9543
    %v9766 = vadd.f32 %v9047, %v9545
    %v9767 = vadd.f32 %v9211, %v9709
    %v9768 = vadd.f32 %v9213, %v9711
    %v9769 = vadd.f32 %v8883, %v9381
    %v9770 = vadd.f32 %v8885, %v9383
    %v9771 = vadd.f32 %v9049, %v9547
    %v9772 = vadd.f32 %v9051, %v9549
    %v9773 = vadd.f32 %v9215, %v9713
    %v9774 = vadd.f32 %v9217, %v9715
    %v9775 = vadd.f32 %v8889, %v9387
    %v9776 = vadd.f32 %v8891, %v9389
    %v9777 = vadd.f32 %v9055, %v9553
    %v9778 = vadd.f32 %v9057, %v9555
    %v9779 = vadd.f32 %v9221, %v9719
    %v9780 = vadd.f32 %v9223, %v9721
    %v9781 = vadd.f32 %v8893, %v9391
    %v9782 = vadd.f32 %v8895, %v9393
    %v9783 = vadd.f32 %v9059, %v9557
    %v9784 = vadd.f32 %v9061, %v9559
    %v9785 = vadd.f32 %v9225, %v9723
    %v9786 = vadd.f32 %v9227, %v9725
    %v9787 = vmax.f32 %v8173, %v9727
    %v9788 = vmax.f32 %v8174, %v9728
    %v9789 = vmax.f32 %v8175, %v9729
    %v9790 = vmax.f32 %v8176, %v9730
    %v9791 = vmax.f32 %v8177, %v9731
    %v9792 = vmax.f32 %v8178, %v9732
    %v9793 = vmax.f32 %v8179, %v9733
    %v9794 = vmax.f32 %v8180, %v9734
    %v9795 = vmax.f32 %v8181, %v9735
    %v9796 = vmax.f32 %v8182, %v9736
    %v9797 = vmax.f32 %v8183, %v9737
    %v9798 = vmax.f32 %v8184, %v9738
    %v9799 = vmax.f32 %v8185, %v9739
    %v9800 = vmax.f32 %v8186, %v9740
    %v9801 = vmax.f32 %v8187, %v9741
    %v9802 = vmax.f32 %v8188, %v9742
    %v9803 = vmax.f32 %v8189, %v9743
    %v9804 = vmax.f32 %v8190, %v9744
    %v9805 = vmax.f32 %v8191, %v9745
    %v9806 = vmax.f32 %v8192, %v9746
    %v9807 = vmax.f32 %v8193, %v9747
    %v9808 = vmax.f32 %v8194, %v9748
    %v9809 = vmax.f32 %v8195, %v9749
    %v9810 = vmax.f32 %v8196, %v9750
    %v9811 = vmax.f32 %v8197, %v9751
    %v9812 = vmax.f32 %v8198, %v9752
    %v9813 = vmax.f32 %v8199, %v9753
    %v9814 = vmax.f32 %v8200, %v9754
    %v9815 = vmax.f32 %v8201, %v9755
    %v9816 = vmax.f32 %v8202, %v9756
    %v9817 = vmax.f32 %v8203, %v9757
    %v9818 = vmax.f32 %v8204, %v9758
    %v9819 = vmax.f32 %v8205, %v9759
    %v9820 = vmax.f32 %v8206, %v9760
    %v9821 = vmax.f32 %v8207, %v9761
    %v9822 = vmax.f32 %v8208, %v9762
    %v9823 = vmax.f32 %v8209, %v9763
    %v9824 = vmax.f32 %v8210, %v9764
    %v9825 = vmax.f32 %v8211, %v9765
    %v9826 = vmax.f32 %v8212, %v9766
    %v9827 = vmax.f32 %v8213, %v9767
    %v9828 = vmax.f32 %v8214, %v9768
    %v9829 = vmax.f32 %v8215, %v9769
    %v9830 = vmax.f32 %v8216, %v9770
    %v9831 = vmax.f32 %v8217, %v9771
    %v9832 = vmax.f32 %v8218, %v9772
    %v9833 = vmax.f32 %v8219, %v9773
    %v9834 = vmax.f32 %v8220, %v9774
    %v9835 = vmax.f32 %v8221, %v9775
    %v9836 = vmax.f32 %v8222, %v9776
    %v9837 = vmax.f32 %v8223, %v9777
    %v9838 = vmax.f32 %v8224, %v9778
    %v9839 = vmax.f32 %v8225, %v9779
    %v9840 = vmax.f32 %v8226, %v9780
    %v9841 = vmax.f32 %v8227, %v9781
    %v9842 = vmax.f32 %v8228, %v9782
    %v9843 = vmax.f32 %v8229, %v9783
    %v9844 = vmax.f32 %v8230, %v9784
    %v9845 = vmax.f32 %v8231, %v9785
    %v9846 = vmax.f32 %v8232, %v9786
    %v9847 = vmax.f32 %v9787, %v9790
    %v9848 = vmax.f32 %v9788, %v9791
    %v9849 = vmax.f32 %v9789, %v9792
    %v9850 = vmax.f32 %v9793, %v9796
    %v9851 = vmax.f32 %v9794, %v9797
    %v9852 = vmax.f32 %v9795, %v9798
    %v9853 = vmax.f32 %v9799, %v9802
    %v9854 = vmax.f32 %v9800, %v9803
    %v9855 = vmax.f32 %v9801, %v9804
    %v9856 = vmax.f32 %v9805, %v9808
    %v9857 = vmax.f32 %v9806, %v9809
    %v9858 = vmax.f32 %v9807, %v9810
    %v9859 = vmax.f32 %v9811, %v9814
    %v9860 = vmax.f32 %v9812, %v9815
    %v9861 = vmax.f32 %v9813, %v9816
    %v9862 = vmax.f32 %v9817, %v9820
    %v9863 = vmax.f32 %v9818, %v9821
    %v9864 = vmax.f32 %v9819, %v9822
    %v9865 = vmax.f32 %v9823, %v9826
    %v9866 = vmax.f32 %v9824, %v9827
    %v9867 = vmax.f32 %v9825, %v9828
    %v9868 = vmax.f32 %v9829, %v9832
    %v9869 = vmax.f32 %v9830, %v9833
    %v9870 = vmax.f32 %v9831, %v9834
    %v9871 = vmax.f32 %v9835, %v9838
    %v9872 = vmax.f32 %v9836, %v9839
    %v9873 = vmax.f32 %v9837, %v9840
    %v9874 = vmax.f32 %v9841, %v9844
    %v9875 = vmax.f32 %v9842, %v9845
    %v9876 = vmax.f32 %v9843, %v9846
    %v9877 = vld [vmem:[%s5] sm:$0x7]
    %v9879 = vlaneseq
    %v9880 = vshrl.u32 %v9879, 7
    %v9881 = vsub.s32 0, %v9880
    %v9882 = vrot.slane %v9877, %v9881
    %v9883 = vlaneseq
    %v9884 = vshrl.u32 %v9883, 7
    %v9885 = vsub.s32 1, %v9884
    %v9886 = vrot.slane %v9877, %v9885
    %v9887 = vlaneseq
    %v9888 = vshrl.u32 %v9887, 7
    %v9889 = vsub.s32 2, %v9888
    %v9890 = vrot.slane %v9877, %v9889
    %v9894 = vmul.f32 %v9847, %v9882
    %v9895 = vmul.f32 %v9848, %v9886
    %v9896 = vmul.f32 %v9849, %v9890
    %v9897 = vmul.f32 %v9850, %v9882
    %v9898 = vmul.f32 %v9851, %v9886
    %v9899 = vmul.f32 %v9852, %v9890
    %v9900 = vmul.f32 %v9853, %v9882
    %v9901 = vmul.f32 %v9854, %v9886
    %v9902 = vmul.f32 %v9855, %v9890
    %v9903 = vmul.f32 %v9856, %v9882
    %v9904 = vmul.f32 %v9857, %v9886
    %v9905 = vmul.f32 %v9858, %v9890
    %v9906 = vmul.f32 %v9859, %v9882
    %v9907 = vmul.f32 %v9860, %v9886
    %v9908 = vmul.f32 %v9861, %v9890
    %v9909 = vmul.f32 %v9862, %v9882
    %v9910 = vmul.f32 %v9863, %v9886
    %v9911 = vmul.f32 %v9864, %v9890
    %v9912 = vmul.f32 %v9865, %v9882
    %v9913 = vmul.f32 %v9866, %v9886
    %v9914 = vmul.f32 %v9867, %v9890
    %v9915 = vmul.f32 %v9868, %v9882
    %v9916 = vmul.f32 %v9869, %v9886
    %v9917 = vmul.f32 %v9870, %v9890
    %v9918 = vmul.f32 %v9871, %v9882
    %v9919 = vmul.f32 %v9872, %v9886
    %v9920 = vmul.f32 %v9873, %v9890
    %v9921 = vmul.f32 %v9874, %v9882
    %v9922 = vmul.f32 %v9875, %v9886
    %v9923 = vmul.f32 %v9876, %v9890
    %v9924 = vld [vmem:[%s6] sm:$0x7]
    %v9926 = vlaneseq
    %v9927 = vshrl.u32 %v9926, 7
    %v9928 = vsub.s32 0, %v9927
    %v9929 = vrot.slane %v9924, %v9928
    %v9930 = vlaneseq
    %v9931 = vshrl.u32 %v9930, 7
    %v9932 = vsub.s32 1, %v9931
    %v9933 = vrot.slane %v9924, %v9932
    %v9934 = vlaneseq
    %v9935 = vshrl.u32 %v9934, 7
    %v9936 = vsub.s32 2, %v9935
    %v9937 = vrot.slane %v9924, %v9936
    %v9941 = vadd.f32 %v9894, %v9929
    %v9942 = vadd.f32 %v9895, %v9933
    %v9943 = vadd.f32 %v9896, %v9937
    %v9944 = vadd.f32 %v9897, %v9929
    %v9945 = vadd.f32 %v9898, %v9933
    %v9946 = vadd.f32 %v9899, %v9937
    %v9947 = vadd.f32 %v9900, %v9929
    %v9948 = vadd.f32 %v9901, %v9933
    %v9949 = vadd.f32 %v9902, %v9937
    %v9950 = vadd.f32 %v9903, %v9929
    %v9951 = vadd.f32 %v9904, %v9933
    %v9952 = vadd.f32 %v9905, %v9937
    %v9953 = vadd.f32 %v9906, %v9929
    %v9954 = vadd.f32 %v9907, %v9933
    %v9955 = vadd.f32 %v9908, %v9937
    %v9956 = vadd.f32 %v9909, %v9929
    %v9957 = vadd.f32 %v9910, %v9933
    %v9958 = vadd.f32 %v9911, %v9937
    %v9959 = vadd.f32 %v9912, %v9929
    %v9960 = vadd.f32 %v9913, %v9933
    %v9961 = vadd.f32 %v9914, %v9937
    %v9962 = vadd.f32 %v9915, %v9929
    %v9963 = vadd.f32 %v9916, %v9933
    %v9964 = vadd.f32 %v9917, %v9937
    %v9965 = vadd.f32 %v9918, %v9929
    %v9966 = vadd.f32 %v9919, %v9933
    %v9967 = vadd.f32 %v9920, %v9937
    %v9968 = vadd.f32 %v9921, %v9929
    %v9969 = vadd.f32 %v9922, %v9933
    %v9970 = vadd.f32 %v9923, %v9937
    %v9971 = vsub.f32 0.0, %v9941
    %v9972 = vsub.f32 0.0, %v9942
    %v9973 = vsub.f32 0.0, %v9943
    %v9974 = vsub.f32 0.0, %v9944
    %v9975 = vsub.f32 0.0, %v9945
    %v9976 = vsub.f32 0.0, %v9946
    %v9977 = vsub.f32 0.0, %v9947
    %v9978 = vsub.f32 0.0, %v9948
    %v9979 = vsub.f32 0.0, %v9949
    %v9980 = vsub.f32 0.0, %v9950
    %v9981 = vsub.f32 0.0, %v9951
    %v9982 = vsub.f32 0.0, %v9952
    %v9983 = vsub.f32 0.0, %v9953
    %v9984 = vsub.f32 0.0, %v9954
    %v9985 = vsub.f32 0.0, %v9955
    %v9986 = vsub.f32 0.0, %v9956
    %v9987 = vsub.f32 0.0, %v9957
    %v9988 = vsub.f32 0.0, %v9958
    %v9989 = vsub.f32 0.0, %v9959
    %v9990 = vsub.f32 0.0, %v9960
    %v9991 = vsub.f32 0.0, %v9961
    %v9992 = vsub.f32 0.0, %v9962
    %v9993 = vsub.f32 0.0, %v9963
    %v9994 = vsub.f32 0.0, %v9964
    %v9995 = vsub.f32 0.0, %v9965
    %v9996 = vsub.f32 0.0, %v9966
    %v9997 = vsub.f32 0.0, %v9967
    %v9998 = vsub.f32 0.0, %v9968
    %v9999 = vsub.f32 0.0, %v9969
    %v10000 = vsub.f32 0.0, %v9970
    %v10001 = vmul.f32 %v9971, 1.442695
    %v10002 = vpow.pop %v10001
    %v10003 = vmul.f32 %v9972, 1.442695
    %v10004 = vpow.pop %v10003
    %v10005 = vmul.f32 %v9973, 1.442695
    %v10006 = vpow.pop %v10005
    %v10007 = vmul.f32 %v9974, 1.442695
    %v10008 = vpow.pop %v10007
    %v10009 = vmul.f32 %v9975, 1.442695
    %v10010 = vpow.pop %v10009
    %v10011 = vmul.f32 %v9976, 1.442695
    %v10012 = vpow.pop %v10011
    %v10013 = vmul.f32 %v9977, 1.442695
    %v10014 = vpow.pop %v10013
    %v10015 = vmul.f32 %v9978, 1.442695
    %v10016 = vpow.pop %v10015
    %v10017 = vmul.f32 %v9979, 1.442695
    %v10018 = vpow.pop %v10017
    %v10019 = vmul.f32 %v9980, 1.442695
    %v10020 = vpow.pop %v10019
    %v10021 = vmul.f32 %v9981, 1.442695
    %v10022 = vpow.pop %v10021
    %v10023 = vmul.f32 %v9982, 1.442695
    %v10024 = vpow.pop %v10023
    %v10025 = vmul.f32 %v9983, 1.442695
    %v10026 = vpow.pop %v10025
    %v10027 = vmul.f32 %v9984, 1.442695
    %v10028 = vpow.pop %v10027
    %v10029 = vmul.f32 %v9985, 1.442695
    %v10030 = vpow.pop %v10029
    %v10031 = vmul.f32 %v9986, 1.442695
    %v10032 = vpow.pop %v10031
    %v10033 = vmul.f32 %v9987, 1.442695
    %v10034 = vpow.pop %v10033
    %v10035 = vmul.f32 %v9988, 1.442695
    %v10036 = vpow.pop %v10035
    %v10037 = vmul.f32 %v9989, 1.442695
    %v10038 = vpow.pop %v10037
    %v10039 = vmul.f32 %v9990, 1.442695
    %v10040 = vpow.pop %v10039
    %v10041 = vmul.f32 %v9991, 1.442695
    %v10042 = vpow.pop %v10041
    %v10043 = vmul.f32 %v9992, 1.442695
    %v10044 = vpow.pop %v10043
    %v10045 = vmul.f32 %v9993, 1.442695
    %v10046 = vpow.pop %v10045
    %v10047 = vmul.f32 %v9994, 1.442695
    %v10048 = vpow.pop %v10047
    %v10049 = vmul.f32 %v9995, 1.442695
    %v10050 = vpow.pop %v10049
    %v10051 = vmul.f32 %v9996, 1.442695
    %v10052 = vpow.pop %v10051
    %v10053 = vmul.f32 %v9997, 1.442695
    %v10054 = vpow.pop %v10053
    %v10055 = vmul.f32 %v9998, 1.442695
    %v10056 = vpow.pop %v10055
    %v10057 = vmul.f32 %v9999, 1.442695
    %v10058 = vpow.pop %v10057
    %v10059 = vmul.f32 %v10000, 1.442695
    %v10060 = vpow.pop %v10059
    %v10061 = vadd.f32 %v10002, 1.0
    %v10062 = vadd.f32 %v10004, 1.0
    %v10063 = vadd.f32 %v10006, 1.0
    %v10064 = vadd.f32 %v10008, 1.0
    %v10065 = vadd.f32 %v10010, 1.0
    %v10066 = vadd.f32 %v10012, 1.0
    %v10067 = vadd.f32 %v10014, 1.0
    %v10068 = vadd.f32 %v10016, 1.0
    %v10069 = vadd.f32 %v10018, 1.0
    %v10070 = vadd.f32 %v10020, 1.0
    %v10071 = vadd.f32 %v10022, 1.0
    %v10072 = vadd.f32 %v10024, 1.0
    %v10073 = vadd.f32 %v10026, 1.0
    %v10074 = vadd.f32 %v10028, 1.0
    %v10075 = vadd.f32 %v10030, 1.0
    %v10076 = vadd.f32 %v10032, 1.0
    %v10077 = vadd.f32 %v10034, 1.0
    %v10078 = vadd.f32 %v10036, 1.0
    %v10079 = vadd.f32 %v10038, 1.0
    %v10080 = vadd.f32 %v10040, 1.0
    %v10081 = vadd.f32 %v10042, 1.0
    %v10082 = vadd.f32 %v10044, 1.0
    %v10083 = vadd.f32 %v10046, 1.0
    %v10084 = vadd.f32 %v10048, 1.0
    %v10085 = vadd.f32 %v10050, 1.0
    %v10086 = vadd.f32 %v10052, 1.0
    %v10087 = vadd.f32 %v10054, 1.0
    %v10088 = vadd.f32 %v10056, 1.0
    %v10089 = vadd.f32 %v10058, 1.0
    %v10090 = vadd.f32 %v10060, 1.0
    %v10091 = vrcp.pop %v10061
    %v10092 = vrcp.pop %v10062
    %v10093 = vrcp.pop %v10063
    %v10094 = vrcp.pop %v10064
    %v10095 = vrcp.pop %v10065
    %v10096 = vrcp.pop %v10066
    %v10097 = vrcp.pop %v10067
    %v10098 = vrcp.pop %v10068
    %v10099 = vrcp.pop %v10069
    %v10100 = vrcp.pop %v10070
    %v10101 = vrcp.pop %v10071
    %v10102 = vrcp.pop %v10072
    %v10103 = vrcp.pop %v10073
    %v10104 = vrcp.pop %v10074
    %v10105 = vrcp.pop %v10075
    %v10106 = vrcp.pop %v10076
    %v10107 = vrcp.pop %v10077
    %v10108 = vrcp.pop %v10078
    %v10109 = vrcp.pop %v10079
    %v10110 = vrcp.pop %v10080
    %v10111 = vrcp.pop %v10081
    %v10112 = vrcp.pop %v10082
    %v10113 = vrcp.pop %v10083
    %v10114 = vrcp.pop %v10084
    %v10115 = vrcp.pop %v10085
    %v10116 = vrcp.pop %v10086
    %v10117 = vrcp.pop %v10087
    %v10118 = vrcp.pop %v10088
    %v10119 = vrcp.pop %v10089
    %v10120 = vrcp.pop %v10090
    %v10121 = vmul.f32 %v9941, %v10091
    %v10122 = vmul.f32 %v9942, %v10092
    %v10123 = vmul.f32 %v9943, %v10093
    %v10124 = vmul.f32 %v9944, %v10094
    %v10125 = vmul.f32 %v9945, %v10095
    %v10126 = vmul.f32 %v9946, %v10096
    %v10127 = vmul.f32 %v9947, %v10097
    %v10128 = vmul.f32 %v9948, %v10098
    %v10129 = vmul.f32 %v9949, %v10099
    %v10130 = vmul.f32 %v9950, %v10100
    %v10131 = vmul.f32 %v9951, %v10101
    %v10132 = vmul.f32 %v9952, %v10102
    %v10133 = vmul.f32 %v9953, %v10103
    %v10134 = vmul.f32 %v9954, %v10104
    %v10135 = vmul.f32 %v9955, %v10105
    %v10136 = vmul.f32 %v9956, %v10106
    %v10137 = vmul.f32 %v9957, %v10107
    %v10138 = vmul.f32 %v9958, %v10108
    %v10139 = vmul.f32 %v9959, %v10109
    %v10140 = vmul.f32 %v9960, %v10110
    %v10141 = vmul.f32 %v9961, %v10111
    %v10142 = vmul.f32 %v9962, %v10112
    %v10143 = vmul.f32 %v9963, %v10113
    %v10144 = vmul.f32 %v9964, %v10114
    %v10145 = vmul.f32 %v9965, %v10115
    %v10146 = vmul.f32 %v9966, %v10116
    %v10147 = vmul.f32 %v9967, %v10117
    %v10148 = vmul.f32 %v9968, %v10118
    %v10149 = vmul.f32 %v9969, %v10119
    %v10150 = vmul.f32 %v9970, %v10120
    %v10151 = vpack.c.bf16 %v10124, %v10121
    %v10152 = vpack.c.bf16 %v10125, %v10122
    %v10153 = vpack.c.bf16 %v10126, %v10123
    %v10154 = vpack.c.bf16 %v10130, %v10127
    %v10155 = vpack.c.bf16 %v10131, %v10128
    %v10156 = vpack.c.bf16 %v10132, %v10129
    %v10157 = vpack.c.bf16 %v10136, %v10133
    %v10158 = vpack.c.bf16 %v10137, %v10134
    %v10159 = vpack.c.bf16 %v10138, %v10135
    %v10160 = vpack.c.bf16 %v10142, %v10139
    %v10161 = vpack.c.bf16 %v10143, %v10140
    %v10162 = vpack.c.bf16 %v10144, %v10141
    %v10163 = vpack.c.bf16 %v10148, %v10145
    %v10164 = vpack.c.bf16 %v10149, %v10146
    %v10165 = vpack.c.bf16 %v10150, %v10147
    %v10166 = vld [vmem:[%s7] sm:$0xf]
    %v10167 = vld [vmem:[%s7 + $0x4] sm:$0xf]
    %v10168 = vld [vmem:[%s7 + $0x8] sm:$0xf]
    %v10169 = vld [vmem:[%s7 + $0xc] sm:$0xf]
    %v10170 = vld [vmem:[%s7 + $0x10] sm:$0xf]
    %v10171 = vld [vmem:[%s7 + $0x14] sm:$0xf]
    %v10172 = vld [vmem:[%s7 + $0x18] sm:$0xf]
    %v10173 = vld [vmem:[%s7 + $0x1c] sm:$0xf]
    %v10174 = vld [vmem:[%s7 + $0x20] sm:$0xf]
    %v10175 = vld [vmem:[%s7 + $0x24] sm:$0xf]
    %v10176 = vld [vmem:[%s7 + $0x28] sm:$0xf]
    %v10177 = vld [vmem:[%s7 + $0x2c] sm:$0xf]
    %v10178 = vld [vmem:[%s7 + $0x30] sm:$0xf]
    %v10179 = vld [vmem:[%s7 + $0x34] sm:$0xf]
    %v10180 = vld [vmem:[%s7 + $0x38] sm:$0xf]
    %v10181 = vld [vmem:[%s7 + $0x3c] sm:$0xf]
    %v10182 = vld [vmem:[%s7 + $0x40] sm:$0xf]
    %v10183 = vld [vmem:[%s7 + $0x44] sm:$0xf]
    %v10184 = vld [vmem:[%s7 + $0x48] sm:$0xf]
    %v10185 = vld [vmem:[%s7 + $0x4c] sm:$0xf]
    %v10186 = vld [vmem:[%s7 + $0x50] sm:$0xf]
    %v10187 = vld [vmem:[%s7 + $0x54] sm:$0xf]
    %v10188 = vld [vmem:[%s7 + $0x58] sm:$0xf]
    %v10189 = vld [vmem:[%s7 + $0x5c] sm:$0xf]
    %v10190 = vld [vmem:[%s7 + $0x60] sm:$0xf]
    %v10191 = vld [vmem:[%s7 + $0x64] sm:$0xf]
    %v10192 = vld [vmem:[%s7 + $0x68] sm:$0xf]
    %v10193 = vld [vmem:[%s7 + $0x6c] sm:$0xf]
    %v10194 = vld [vmem:[%s7 + $0x70] sm:$0xf]
    %v10195 = vld [vmem:[%s7 + $0x74] sm:$0xf]
    %v10196 = vld [vmem:[%s7 + $0x78] sm:$0xf]
    %v10197 = vld [vmem:[%s7 + $0x7c] sm:$0xf]
    %v10198 = vld [vmem:[%s7 + $0x80] sm:$0xf]
    %v10199 = vld [vmem:[%s7 + $0x84] sm:$0xf]
    %v10200 = vld [vmem:[%s7 + $0x88] sm:$0xf]
    %v10201 = vld [vmem:[%s7 + $0x8c] sm:$0xf]
    %v10202 = vld [vmem:[%s7 + $0x90] sm:$0xf]
    %v10203 = vld [vmem:[%s7 + $0x94] sm:$0xf]
    %v10204 = vld [vmem:[%s7 + $0x98] sm:$0xf]
    %v10205 = vld [vmem:[%s7 + $0x9c] sm:$0xf]
    %v10206 = vld [vmem:[%s7 + $0xa0] sm:$0xf]
    %v10207 = vld [vmem:[%s7 + $0xa4] sm:$0xf]
    %v10208 = vld [vmem:[%s7 + $0xa8] sm:$0xf]
    %v10209 = vld [vmem:[%s7 + $0xac] sm:$0xf]
    %v10210 = vld [vmem:[%s7 + $0xb0] sm:$0xf]
    %v10211 = vld [vmem:[%s7 + $0xb4] sm:$0xf]
    %v10212 = vld [vmem:[%s7 + $0xb8] sm:$0xf]
    %v10213 = vld [vmem:[%s7 + $0xbc] sm:$0xf]
    %s10214 = scalar_lea.vmem %s7, 192
    %v10215 = vld [vmem:[%s10214] sm:$0xf]
    %v10216 = vld [vmem:[%s10214 + $0x4] sm:$0xf]
    %v10217 = vld [vmem:[%s10214 + $0x8] sm:$0xf]
    %v10218 = vld [vmem:[%s10214 + $0xc] sm:$0xf]
    %v10219 = vld [vmem:[%s10214 + $0x10] sm:$0xf]
    %v10220 = vld [vmem:[%s10214 + $0x14] sm:$0xf]
    %v10221 = vld [vmem:[%s10214 + $0x18] sm:$0xf]
    %v10222 = vld [vmem:[%s10214 + $0x1c] sm:$0xf]
    %v10223 = vld [vmem:[%s10214 + $0x20] sm:$0xf]
    %v10224 = vld [vmem:[%s10214 + $0x24] sm:$0xf]
    %v10225 = vld [vmem:[%s10214 + $0x28] sm:$0xf]
    %v10226 = vld [vmem:[%s10214 + $0x2c] sm:$0xf]
    %v10227 = vld [vmem:[%s10214 + $0x30] sm:$0xf]
    %v10228 = vld [vmem:[%s10214 + $0x34] sm:$0xf]
    %v10229 = vld [vmem:[%s10214 + $0x38] sm:$0xf]
    %v10230 = vld [vmem:[%s10214 + $0x3c] sm:$0xf]
    %v10231 = vld [vmem:[%s10214 + $0x40] sm:$0xf]
    %v10232 = vld [vmem:[%s10214 + $0x44] sm:$0xf]
    %v10233 = vld [vmem:[%s10214 + $0x48] sm:$0xf]
    %v10234 = vld [vmem:[%s10214 + $0x4c] sm:$0xf]
    %v10235 = vld [vmem:[%s10214 + $0x50] sm:$0xf]
    %v10236 = vld [vmem:[%s10214 + $0x54] sm:$0xf]
    %v10237 = vld [vmem:[%s10214 + $0x58] sm:$0xf]
    %v10238 = vld [vmem:[%s10214 + $0x5c] sm:$0xf]
    %v10239 = vld [vmem:[%s10214 + $0x60] sm:$0xf]
    %v10240 = vld [vmem:[%s10214 + $0x64] sm:$0xf]
    %v10241 = vld [vmem:[%s10214 + $0x68] sm:$0xf]
    %v10242 = vld [vmem:[%s10214 + $0x6c] sm:$0xf]
    %v10243 = vld [vmem:[%s10214 + $0x70] sm:$0xf]
    %v10244 = vld [vmem:[%s10214 + $0x74] sm:$0xf]
    %v10245 = vld [vmem:[%s10214 + $0x78] sm:$0xf]
    %v10246 = vld [vmem:[%s10214 + $0x7c] sm:$0xf]
    %v10247 = vld [vmem:[%s10214 + $0x80] sm:$0xf]
    %v10248 = vld [vmem:[%s10214 + $0x84] sm:$0xf]
    %v10249 = vld [vmem:[%s10214 + $0x88] sm:$0xf]
    %v10250 = vld [vmem:[%s10214 + $0x8c] sm:$0xf]
    %v10251 = vld [vmem:[%s10214 + $0x90] sm:$0xf]
    %v10252 = vld [vmem:[%s10214 + $0x94] sm:$0xf]
    %v10253 = vld [vmem:[%s10214 + $0x98] sm:$0xf]
    %v10254 = vld [vmem:[%s10214 + $0x9c] sm:$0xf]
    %v10255 = vld [vmem:[%s10214 + $0xa0] sm:$0xf]
    %v10256 = vld [vmem:[%s10214 + $0xa4] sm:$0xf]
    %v10257 = vld [vmem:[%s10214 + $0xa8] sm:$0xf]
    %v10258 = vld [vmem:[%s10214 + $0xac] sm:$0xf]
    %v10259 = vld [vmem:[%s10214 + $0xb0] sm:$0xf]
    %v10260 = vld [vmem:[%s10214 + $0xb4] sm:$0xf]
    %v10261 = vld [vmem:[%s10214 + $0xb8] sm:$0xf]
    %v10262 = vld [vmem:[%s10214 + $0xbc] sm:$0xf]
    %v10311 = vunpack.c.l.b16 %v10215
    %v10312 = vunpack.c.l.b16 %v10216
    %v10313 = vunpack.c.l.b16 %v10217
    %v10314 = vunpack.c.l.b16 %v10218
    %v10315 = vunpack.c.l.b16 %v10219
    %v10316 = vunpack.c.l.b16 %v10220
    %v10317 = vunpack.c.l.b16 %v10221
    %v10318 = vunpack.c.l.b16 %v10222
    %v10319 = vunpack.c.l.b16 %v10223
    %v10320 = vunpack.c.l.b16 %v10224
    %v10321 = vunpack.c.l.b16 %v10225
    %v10322 = vunpack.c.l.b16 %v10226
    %v10323 = vunpack.c.l.b16 %v10227
    %v10324 = vunpack.c.l.b16 %v10228
    %v10325 = vunpack.c.l.b16 %v10229
    %v10326 = vunpack.c.l.b16 %v10230
    %v10327 = vunpack.c.l.b16 %v10231
    %v10328 = vunpack.c.l.b16 %v10232
    %v10329 = vunpack.c.l.b16 %v10233
    %v10330 = vunpack.c.l.b16 %v10234
    %v10331 = vunpack.c.l.b16 %v10235
    %v10332 = vunpack.c.l.b16 %v10236
    %v10333 = vunpack.c.l.b16 %v10237
    %v10334 = vunpack.c.l.b16 %v10238
    %v10335 = vunpack.c.l.b16 %v10239
    %v10336 = vunpack.c.l.b16 %v10240
    %v10337 = vunpack.c.l.b16 %v10241
    %v10338 = vunpack.c.l.b16 %v10242
    %v10339 = vunpack.c.l.b16 %v10243
    %v10340 = vunpack.c.l.b16 %v10244
    %v10341 = vunpack.c.l.b16 %v10245
    %v10342 = vunpack.c.l.b16 %v10246
    %v10343 = vunpack.c.l.b16 %v10247
    %v10344 = vunpack.c.l.b16 %v10248
    %v10345 = vunpack.c.l.b16 %v10249
    %v10346 = vunpack.c.l.b16 %v10250
    %v10347 = vunpack.c.l.b16 %v10251
    %v10348 = vunpack.c.l.b16 %v10252
    %v10349 = vunpack.c.l.b16 %v10253
    %v10350 = vunpack.c.l.b16 %v10254
    %v10351 = vunpack.c.l.b16 %v10255
    %v10352 = vunpack.c.l.b16 %v10256
    %v10353 = vunpack.c.l.b16 %v10257
    %v10354 = vunpack.c.l.b16 %v10258
    %v10355 = vunpack.c.l.b16 %v10259
    %v10356 = vunpack.c.l.b16 %v10260
    %v10357 = vunpack.c.l.b16 %v10261
    %v10358 = vunpack.c.l.b16 %v10262
    %v10359 = vpack.c.b16 %v10312, %v10311
    %v10360 = vpack.c.b16 %v10314, %v10313
    %v10361 = vpack.c.b16 %v10316, %v10315
    %v10362 = vpack.c.b16 %v10318, %v10317
    %v10363 = vpack.c.b16 %v10320, %v10319
    %v10364 = vpack.c.b16 %v10322, %v10321
    %v10365 = vpack.c.b16 %v10324, %v10323
    %v10366 = vpack.c.b16 %v10326, %v10325
    %v10367 = vpack.c.b16 %v10328, %v10327
    %v10368 = vpack.c.b16 %v10330, %v10329
    %v10369 = vpack.c.b16 %v10332, %v10331
    %v10370 = vpack.c.b16 %v10334, %v10333
    %v10371 = vpack.c.b16 %v10336, %v10335
    %v10372 = vpack.c.b16 %v10338, %v10337
    %v10373 = vpack.c.b16 %v10340, %v10339
    %v10374 = vpack.c.b16 %v10342, %v10341
    %v10375 = vpack.c.b16 %v10344, %v10343
    %v10376 = vpack.c.b16 %v10346, %v10345
    %v10377 = vpack.c.b16 %v10348, %v10347
    %v10378 = vpack.c.b16 %v10350, %v10349
    %v10379 = vpack.c.b16 %v10352, %v10351
    %v10380 = vpack.c.b16 %v10354, %v10353
    %v10381 = vpack.c.b16 %v10356, %v10355
    %v10382 = vpack.c.b16 %v10358, %v10357
    %10407 = vmatprep.subr.bf16.mxu0 0
    %10408 = vmatpush1.bf16.msra.mxu0 %v10359
    %10409 = vmatprep.subr.bf16.mxu0 0
    %10410 = vmatpush1.bf16.msra.mxu0 %v10360
    %10411 = vmatprep.subr.bf16.mxu0 0
    %10412 = vmatpush1.bf16.msra.mxu0 %v10361
    %10413 = vmatprep.subr.bf16.mxu0 0
    %10414 = vmatpush1.bf16.msra.mxu0 %v10362
    %10415 = vmatprep.subr.bf16.mxu0 0
    %10416 = vmatpush1.bf16.msra.mxu0 %v10363
    %10417 = vmatprep.subr.bf16.mxu0 0
    %10418 = vmatpush1.bf16.msra.mxu0 %v10364
    %10419 = vmatprep.subr.bf16.mxu0 0
    %10420 = vmatpush1.bf16.msra.mxu0 %v10365
    %10421 = vmatprep.subr.bf16.mxu0 0
    %10422 = vmatpush1.bf16.msra.mxu0 %v10366
    %10423 = vmatprep.subr.bf16.mxu0 0
    %10424 = vmatpush1.bf16.msra.mxu0 %v10367
    %10425 = vmatprep.subr.bf16.mxu0 0
    %10426 = vmatpush1.bf16.msra.mxu0 %v10368
    %10427 = vmatprep.subr.bf16.mxu0 0
    %10428 = vmatpush1.bf16.msra.mxu0 %v10369
    %10429 = vmatprep.subr.bf16.mxu0 0
    %10430 = vmatpush1.bf16.msra.mxu0 %v10370
    %10431 = vmatprep.subr.bf16.mxu0 0
    %10432 = vmatpush1.bf16.msra.mxu0 %v10371
    %10433 = vmatprep.subr.bf16.mxu0 0
    %10434 = vmatpush1.bf16.msra.mxu0 %v10372
    %10435 = vmatprep.subr.bf16.mxu0 0
    %10436 = vmatpush1.bf16.msra.mxu0 %v10373
    %10437 = vmatprep.subr.bf16.mxu0 0
    %10438 = vmatpush1.bf16.msra.mxu0 %v10374
    %10439 = vmatprep.mubr.bf16.mxu0 %v10155
    %10440 = vmatmul.mubr.bf16.gmra.mrb[0].mxu0 %v10154
    %v10441 = vpop.f32.mrb[0].mxu0
    %v10442 = vadd.f32 0.0, %v10441
    %v10443 = vpop.f32.mrb[0].mxu0
    %v10444 = vpop.f32.mrb[0].mxu0
    %v10445 = vadd.f32 0.0, %v10444
    %v10446 = vpop.f32.mrb[0].mxu0
    %10447 = vdwg.mxu0
    %10448 = vmatprep.subr.bf16.mxu0 0
    %10449 = vmatpush1.bf16.msra.mxu0 %v10375
    %10450 = vmatprep.subr.bf16.mxu0 0
    %10451 = vmatpush1.bf16.msra.mxu0 %v10376
    %10452 = vmatprep.subr.bf16.mxu0 0
    %10453 = vmatpush1.bf16.msra.mxu0 %v10377
    %10454 = vmatprep.subr.bf16.mxu0 0
    %10455 = vmatpush1.bf16.msra.mxu0 %v10378
    %10456 = vmatprep.subr.bf16.mxu0 0
    %10457 = vmatpush1.bf16.msra.mxu0 %v10379
    %10458 = vmatprep.subr.bf16.mxu0 0
    %10459 = vmatpush1.bf16.msra.mxu0 %v10380
    %10460 = vmatprep.subr.bf16.mxu0 0
    %10461 = vmatpush1.bf16.msra.mxu0 %v10381
    %10462 = vmatprep.subr.bf16.mxu0 0
    %10463 = vmatpush1.bf16.msra.mxu0 %v10382
    %10464 = vmatprep.subr.bf16.mxu0 0
    %10465 = vmatpush1.bf16.msra.mxu0 0
    %10466 = vmatprep.subr.bf16.mxu0 0
    %10467 = vmatpush1.bf16.msra.mxu0 0
    %10468 = vmatprep.subr.bf16.mxu0 0
    %10469 = vmatpush1.bf16.msra.mxu0 0
    %10470 = vmatprep.subr.bf16.mxu0 0
    %10471 = vmatpush1.bf16.msra.mxu0 0
    %10472 = vmatprep.subr.bf16.mxu0 0
    %10473 = vmatpush1.bf16.msra.mxu0 0
    %10474 = vmatprep.subr.bf16.mxu0 0
    %10475 = vmatpush1.bf16.msra.mxu0 0
    %10476 = vmatprep.subr.bf16.mxu0 0
    %10477 = vmatpush1.bf16.msra.mxu0 0
    %10478 = vmatprep.subr.bf16.mxu0 0
    %10479 = vmatpush1.bf16.msra.mxu0 0
    %10480 = vmatprep.mubr.bf16.mxu0 0
    %10481 = vmatmul.mubr.bf16.gmra.mrb[0].mxu0 %v10156
    %v10482 = vpop.f32.mrb[0].mxu0
    %v10483 = vadd.f32 %v10442, %v10482
    %v10484 = vpop.f32.mrb[0].mxu0
    %v10485 = vpop.f32.mrb[0].mxu0
    %v10486 = vadd.f32 %v10445, %v10485
    %v10487 = vpop.f32.mrb[0].mxu0
    %10488 = vdwg.mxu0
    %v10537 = vunpack.c.l.b16 %v10166
    %v10538 = vunpack.c.l.b16 %v10167
    %v10539 = vunpack.c.l.b16 %v10168
    %v10540 = vunpack.c.l.b16 %v10169
    %v10541 = vunpack.c.l.b16 %v10170
    %v10542 = vunpack.c.l.b16 %v10171
    %v10543 = vunpack.c.l.b16 %v10172
    %v10544 = vunpack.c.l.b16 %v10173
    %v10545 = vunpack.c.l.b16 %v10174
    %v10546 = vunpack.c.l.b16 %v10175
    %v10547 = vunpack.c.l.b16 %v10176
    %v10548 = vunpack.c.l.b16 %v10177
    %v10549 = vunpack.c.l.b16 %v10178
    %v10550 = vunpack.c.l.b16 %v10179
    %v10551 = vunpack.c.l.b16 %v10180
    %v10552 = vunpack.c.l.b16 %v10181
    %v10553 = vunpack.c.l.b16 %v10182
    %v10554 = vunpack.c.l.b16 %v10183
    %v10555 = vunpack.c.l.b16 %v10184
    %v10556 = vunpack.c.l.b16 %v10185
    %v10557 = vunpack.c.l.b16 %v10186
    %v10558 = vunpack.c.l.b16 %v10187
    %v10559 = vunpack.c.l.b16 %v10188
    %v10560 = vunpack.c.l.b16 %v10189
    %v10561 = vunpack.c.l.b16 %v10190
    %v10562 = vunpack.c.l.b16 %v10191
    %v10563 = vunpack.c.l.b16 %v10192
    %v10564 = vunpack.c.l.b16 %v10193
    %v10565 = vunpack.c.l.b16 %v10194
    %v10566 = vunpack.c.l.b16 %v10195
    %v10567 = vunpack.c.l.b16 %v10196
    %v10568 = vunpack.c.l.b16 %v10197
    %v10569 = vunpack.c.l.b16 %v10198
    %v10570 = vunpack.c.l.b16 %v10199
    %v10571 = vunpack.c.l.b16 %v10200
    %v10572 = vunpack.c.l.b16 %v10201
    %v10573 = vunpack.c.l.b16 %v10202
    %v10574 = vunpack.c.l.b16 %v10203
    %v10575 = vunpack.c.l.b16 %v10204
    %v10576 = vunpack.c.l.b16 %v10205
    %v10577 = vunpack.c.l.b16 %v10206
    %v10578 = vunpack.c.l.b16 %v10207
    %v10579 = vunpack.c.l.b16 %v10208
    %v10580 = vunpack.c.l.b16 %v10209
    %v10581 = vunpack.c.l.b16 %v10210
    %v10582 = vunpack.c.l.b16 %v10211
    %v10583 = vunpack.c.l.b16 %v10212
    %v10584 = vunpack.c.l.b16 %v10213
    %v10585 = vpack.c.b16 %v10538, %v10537
    %v10586 = vpack.c.b16 %v10540, %v10539
    %v10587 = vpack.c.b16 %v10542, %v10541
    %v10588 = vpack.c.b16 %v10544, %v10543
    %v10589 = vpack.c.b16 %v10546, %v10545
    %v10590 = vpack.c.b16 %v10548, %v10547
    %v10591 = vpack.c.b16 %v10550, %v10549
    %v10592 = vpack.c.b16 %v10552, %v10551
    %v10593 = vpack.c.b16 %v10554, %v10553
    %v10594 = vpack.c.b16 %v10556, %v10555
    %v10595 = vpack.c.b16 %v10558, %v10557
    %v10596 = vpack.c.b16 %v10560, %v10559
    %v10597 = vpack.c.b16 %v10562, %v10561
    %v10598 = vpack.c.b16 %v10564, %v10563
    %v10599 = vpack.c.b16 %v10566, %v10565
    %v10600 = vpack.c.b16 %v10568, %v10567
    %v10601 = vpack.c.b16 %v10570, %v10569
    %v10602 = vpack.c.b16 %v10572, %v10571
    %v10603 = vpack.c.b16 %v10574, %v10573
    %v10604 = vpack.c.b16 %v10576, %v10575
    %v10605 = vpack.c.b16 %v10578, %v10577
    %v10606 = vpack.c.b16 %v10580, %v10579
    %v10607 = vpack.c.b16 %v10582, %v10581
    %v10608 = vpack.c.b16 %v10584, %v10583
    %10633 = vmatprep.subr.bf16.mxu0 0
    %10634 = vmatpush1.bf16.msra.mxu0 %v10585
    %10635 = vmatprep.subr.bf16.mxu0 0
    %10636 = vmatpush1.bf16.msra.mxu0 %v10586
    %10637 = vmatprep.subr.bf16.mxu0 0
    %10638 = vmatpush1.bf16.msra.mxu0 %v10587
    %10639 = vmatprep.subr.bf16.mxu0 0
    %10640 = vmatpush1.bf16.msra.mxu0 %v10588
    %10641 = vmatprep.subr.bf16.mxu0 0
    %10642 = vmatpush1.bf16.msra.mxu0 %v10589
    %10643 = vmatprep.subr.bf16.mxu0 0
    %10644 = vmatpush1.bf16.msra.mxu0 %v10590
    %10645 = vmatprep.subr.bf16.mxu0 0
    %10646 = vmatpush1.bf16.msra.mxu0 %v10591
    %10647 = vmatprep.subr.bf16.mxu0 0
    %10648 = vmatpush1.bf16.msra.mxu0 %v10592
    %10649 = vmatprep.subr.bf16.mxu0 0
    %10650 = vmatpush1.bf16.msra.mxu0 %v10593
    %10651 = vmatprep.subr.bf16.mxu0 0
    %10652 = vmatpush1.bf16.msra.mxu0 %v10594
    %10653 = vmatprep.subr.bf16.mxu0 0
    %10654 = vmatpush1.bf16.msra.mxu0 %v10595
    %10655 = vmatprep.subr.bf16.mxu0 0
    %10656 = vmatpush1.bf16.msra.mxu0 %v10596
    %10657 = vmatprep.subr.bf16.mxu0 0
    %10658 = vmatpush1.bf16.msra.mxu0 %v10597
    %10659 = vmatprep.subr.bf16.mxu0 0
    %10660 = vmatpush1.bf16.msra.mxu0 %v10598
    %10661 = vmatprep.subr.bf16.mxu0 0
    %10662 = vmatpush1.bf16.msra.mxu0 %v10599
    %10663 = vmatprep.subr.bf16.mxu0 0
    %10664 = vmatpush1.bf16.msra.mxu0 %v10600
    %10665 = vmatprep.mubr.bf16.mxu0 %v10152
    %10666 = vmatmul.mubr.bf16.gmra.mrb[0].mxu0 %v10151
    %v10667 = vpop.f32.mrb[0].mxu0
    %v10668 = vadd.f32 %v10483, %v10667
    %v10669 = vpop.f32.mrb[0].mxu0
    %v10670 = vpop.f32.mrb[0].mxu0
    %v10671 = vadd.f32 %v10486, %v10670
    %v10672 = vpop.f32.mrb[0].mxu0
    %10673 = vdwg.mxu0
    %10674 = vmatprep.subr.bf16.mxu0 0
    %10675 = vmatpush1.bf16.msra.mxu0 %v10601
    %10676 = vmatprep.subr.bf16.mxu0 0
    %10677 = vmatpush1.bf16.msra.mxu0 %v10602
    %10678 = vmatprep.subr.bf16.mxu0 0
    %10679 = vmatpush1.bf16.msra.mxu0 %v10603
    %10680 = vmatprep.subr.bf16.mxu0 0
    %10681 = vmatpush1.bf16.msra.mxu0 %v10604
    %10682 = vmatprep.subr.bf16.mxu0 0
    %10683 = vmatpush1.bf16.msra.mxu0 %v10605
    %10684 = vmatprep.subr.bf16.mxu0 0
    %10685 = vmatpush1.bf16.msra.mxu0 %v10606
    %10686 = vmatprep.subr.bf16.mxu0 0
    %10687 = vmatpush1.bf16.msra.mxu0 %v10607
    %10688 = vmatprep.subr.bf16.mxu0 0
    %10689 = vmatpush1.bf16.msra.mxu0 %v10608
    %10690 = vmatprep.subr.bf16.mxu0 0
    %10691 = vmatpush1.bf16.msra.mxu0 0
    %10692 = vmatprep.subr.bf16.mxu0 0
    %10693 = vmatpush1.bf16.msra.mxu0 0
    %10694 = vmatprep.subr.bf16.mxu0 0
    %10695 = vmatpush1.bf16.msra.mxu0 0
    %10696 = vmatprep.subr.bf16.mxu0 0
    %10697 = vmatpush1.bf16.msra.mxu0 0
    %10698 = vmatprep.subr.bf16.mxu0 0
    %10699 = vmatpush1.bf16.msra.mxu0 0
    %10700 = vmatprep.subr.bf16.mxu0 0
    %10701 = vmatpush1.bf16.msra.mxu0 0
    %10702 = vmatprep.subr.bf16.mxu0 0
    %10703 = vmatpush1.bf16.msra.mxu0 0
    %10704 = vmatprep.subr.bf16.mxu0 0
    %10705 = vmatpush1.bf16.msra.mxu0 0
    %10706 = vmatprep.mubr.bf16.mxu0 0
    %10707 = vmatmul.mubr.bf16.gmra.mrb[0].mxu0 %v10153
    %v10708 = vpop.f32.mrb[0].mxu0
    %v10709 = vadd.f32 %v10668, %v10708
    %v10710 = vpop.f32.mrb[0].mxu0
    %v10711 = vpop.f32.mrb[0].mxu0
    %v10712 = vadd.f32 %v10671, %v10711
    %v10713 = vpop.f32.mrb[0].mxu0
    %10714 = vdwg.mxu0
    %s10715 = scalar_lea.vmem %s7, 384
    %v10716 = vld [vmem:[%s10715] sm:$0xf]
    %v10717 = vld [vmem:[%s10715 + $0x4] sm:$0xf]
    %v10718 = vld [vmem:[%s10715 + $0x8] sm:$0xf]
    %v10719 = vld [vmem:[%s10715 + $0xc] sm:$0xf]
    %v10720 = vld [vmem:[%s10715 + $0x10] sm:$0xf]
    %v10721 = vld [vmem:[%s10715 + $0x14] sm:$0xf]
    %v10722 = vld [vmem:[%s10715 + $0x18] sm:$0xf]
    %v10723 = vld [vmem:[%s10715 + $0x1c] sm:$0xf]
    %v10724 = vld [vmem:[%s10715 + $0x20] sm:$0xf]
    %v10725 = vld [vmem:[%s10715 + $0x24] sm:$0xf]
    %v10726 = vld [vmem:[%s10715 + $0x28] sm:$0xf]
    %v10727 = vld [vmem:[%s10715 + $0x2c] sm:$0xf]
    %v10728 = vld [vmem:[%s10715 + $0x30] sm:$0xf]
    %v10729 = vld [vmem:[%s10715 + $0x34] sm:$0xf]
    %v10730 = vld [vmem:[%s10715 + $0x38] sm:$0xf]
    %v10731 = vld [vmem:[%s10715 + $0x3c] sm:$0xf]
    %v10732 = vld [vmem:[%s10715 + $0x40] sm:$0xf]
    %v10733 = vld [vmem:[%s10715 + $0x44] sm:$0xf]
    %v10734 = vld [vmem:[%s10715 + $0x48] sm:$0xf]
    %v10735 = vld [vmem:[%s10715 + $0x4c] sm:$0xf]
    %v10736 = vld [vmem:[%s10715 + $0x50] sm:$0xf]
    %v10737 = vld [vmem:[%s10715 + $0x54] sm:$0xf]
    %v10738 = vld [vmem:[%s10715 + $0x58] sm:$0xf]
    %v10739 = vld [vmem:[%s10715 + $0x5c] sm:$0xf]
    %v10740 = vld [vmem:[%s10715 + $0x60] sm:$0xf]
    %v10741 = vld [vmem:[%s10715 + $0x64] sm:$0xf]
    %v10742 = vld [vmem:[%s10715 + $0x68] sm:$0xf]
    %v10743 = vld [vmem:[%s10715 + $0x6c] sm:$0xf]
    %v10744 = vld [vmem:[%s10715 + $0x70] sm:$0xf]
    %v10745 = vld [vmem:[%s10715 + $0x74] sm:$0xf]
    %v10746 = vld [vmem:[%s10715 + $0x78] sm:$0xf]
    %v10747 = vld [vmem:[%s10715 + $0x7c] sm:$0xf]
    %v10748 = vld [vmem:[%s10715 + $0x80] sm:$0xf]
    %v10749 = vld [vmem:[%s10715 + $0x84] sm:$0xf]
    %v10750 = vld [vmem:[%s10715 + $0x88] sm:$0xf]
    %v10751 = vld [vmem:[%s10715 + $0x8c] sm:$0xf]
    %v10752 = vld [vmem:[%s10715 + $0x90] sm:$0xf]
    %v10753 = vld [vmem:[%s10715 + $0x94] sm:$0xf]
    %v10754 = vld [vmem:[%s10715 + $0x98] sm:$0xf]
    %v10755 = vld [vmem:[%s10715 + $0x9c] sm:$0xf]
    %v10756 = vld [vmem:[%s10715 + $0xa0] sm:$0xf]
    %v10757 = vld [vmem:[%s10715 + $0xa4] sm:$0xf]
    %v10758 = vld [vmem:[%s10715 + $0xa8] sm:$0xf]
    %v10759 = vld [vmem:[%s10715 + $0xac] sm:$0xf]
    %v10760 = vld [vmem:[%s10715 + $0xb0] sm:$0xf]
    %v10761 = vld [vmem:[%s10715 + $0xb4] sm:$0xf]
    %v10762 = vld [vmem:[%s10715 + $0xb8] sm:$0xf]
    %v10763 = vld [vmem:[%s10715 + $0xbc] sm:$0xf]
    %v10812 = vunpack.c.l.b16 %v10716
    %v10813 = vunpack.c.l.b16 %v10717
    %v10814 = vunpack.c.l.b16 %v10718
    %v10815 = vunpack.c.l.b16 %v10719
    %v10816 = vunpack.c.l.b16 %v10720
    %v10817 = vunpack.c.l.b16 %v10721
    %v10818 = vunpack.c.l.b16 %v10722
    %v10819 = vunpack.c.l.b16 %v10723
    %v10820 = vunpack.c.l.b16 %v10724
    %v10821 = vunpack.c.l.b16 %v10725
    %v10822 = vunpack.c.l.b16 %v10726
    %v10823 = vunpack.c.l.b16 %v10727
    %v10824 = vunpack.c.l.b16 %v10728
    %v10825 = vunpack.c.l.b16 %v10729
    %v10826 = vunpack.c.l.b16 %v10730
    %v10827 = vunpack.c.l.b16 %v10731
    %v10828 = vunpack.c.l.b16 %v10732
    %v10829 = vunpack.c.l.b16 %v10733
    %v10830 = vunpack.c.l.b16 %v10734
    %v10831 = vunpack.c.l.b16 %v10735
    %v10832 = vunpack.c.l.b16 %v10736
    %v10833 = vunpack.c.l.b16 %v10737
    %v10834 = vunpack.c.l.b16 %v10738
    %v10835 = vunpack.c.l.b16 %v10739
    %v10836 = vunpack.c.l.b16 %v10740
    %v10837 = vunpack.c.l.b16 %v10741
    %v10838 = vunpack.c.l.b16 %v10742
    %v10839 = vunpack.c.l.b16 %v10743
    %v10840 = vunpack.c.l.b16 %v10744
    %v10841 = vunpack.c.l.b16 %v10745
    %v10842 = vunpack.c.l.b16 %v10746
    %v10843 = vunpack.c.l.b16 %v10747
    %v10844 = vunpack.c.l.b16 %v10748
    %v10845 = vunpack.c.l.b16 %v10749
    %v10846 = vunpack.c.l.b16 %v10750
    %v10847 = vunpack.c.l.b16 %v10751
    %v10848 = vunpack.c.l.b16 %v10752
    %v10849 = vunpack.c.l.b16 %v10753
    %v10850 = vunpack.c.l.b16 %v10754
    %v10851 = vunpack.c.l.b16 %v10755
    %v10852 = vunpack.c.l.b16 %v10756
    %v10853 = vunpack.c.l.b16 %v10757
    %v10854 = vunpack.c.l.b16 %v10758
    %v10855 = vunpack.c.l.b16 %v10759
    %v10856 = vunpack.c.l.b16 %v10760
    %v10857 = vunpack.c.l.b16 %v10761
    %v10858 = vunpack.c.l.b16 %v10762
    %v10859 = vunpack.c.l.b16 %v10763
    %v10860 = vpack.c.b16 %v10813, %v10812
    %v10861 = vpack.c.b16 %v10815, %v10814
    %v10862 = vpack.c.b16 %v10817, %v10816
    %v10863 = vpack.c.b16 %v10819, %v10818
    %v10864 = vpack.c.b16 %v10821, %v10820
    %v10865 = vpack.c.b16 %v10823, %v10822
    %v10866 = vpack.c.b16 %v10825, %v10824
    %v10867 = vpack.c.b16 %v10827, %v10826
    %v10868 = vpack.c.b16 %v10829, %v10828
    %v10869 = vpack.c.b16 %v10831, %v10830
    %v10870 = vpack.c.b16 %v10833, %v10832
    %v10871 = vpack.c.b16 %v10835, %v10834
    %v10872 = vpack.c.b16 %v10837, %v10836
    %v10873 = vpack.c.b16 %v10839, %v10838
    %v10874 = vpack.c.b16 %v10841, %v10840
    %v10875 = vpack.c.b16 %v10843, %v10842
    %v10876 = vpack.c.b16 %v10845, %v10844
    %v10877 = vpack.c.b16 %v10847, %v10846
    %v10878 = vpack.c.b16 %v10849, %v10848
    %v10879 = vpack.c.b16 %v10851, %v10850
    %v10880 = vpack.c.b16 %v10853, %v10852
    %v10881 = vpack.c.b16 %v10855, %v10854
    %v10882 = vpack.c.b16 %v10857, %v10856
    %v10883 = vpack.c.b16 %v10859, %v10858
    %10908 = vmatprep.subr.bf16.mxu0 0
    %10909 = vmatpush1.bf16.msra.mxu0 %v10860
    %10910 = vmatprep.subr.bf16.mxu0 0
    %10911 = vmatpush1.bf16.msra.mxu0 %v10861
    %10912 = vmatprep.subr.bf16.mxu0 0
    %10913 = vmatpush1.bf16.msra.mxu0 %v10862
    %10914 = vmatprep.subr.bf16.mxu0 0
    %10915 = vmatpush1.bf16.msra.mxu0 %v10863
    %10916 = vmatprep.subr.bf16.mxu0 0
    %10917 = vmatpush1.bf16.msra.mxu0 %v10864
    %10918 = vmatprep.subr.bf16.mxu0 0
    %10919 = vmatpush1.bf16.msra.mxu0 %v10865
    %10920 = vmatprep.subr.bf16.mxu0 0
    %10921 = vmatpush1.bf16.msra.mxu0 %v10866
    %10922 = vmatprep.subr.bf16.mxu0 0
    %10923 = vmatpush1.bf16.msra.mxu0 %v10867
    %10924 = vmatprep.subr.bf16.mxu0 0
    %10925 = vmatpush1.bf16.msra.mxu0 %v10868
    %10926 = vmatprep.subr.bf16.mxu0 0
    %10927 = vmatpush1.bf16.msra.mxu0 %v10869
    %10928 = vmatprep.subr.bf16.mxu0 0
    %10929 = vmatpush1.bf16.msra.mxu0 %v10870
    %10930 = vmatprep.subr.bf16.mxu0 0
    %10931 = vmatpush1.bf16.msra.mxu0 %v10871
    %10932 = vmatprep.subr.bf16.mxu0 0
    %10933 = vmatpush1.bf16.msra.mxu0 %v10872
    %10934 = vmatprep.subr.bf16.mxu0 0
    %10935 = vmatpush1.bf16.msra.mxu0 %v10873
    %10936 = vmatprep.subr.bf16.mxu0 0
    %10937 = vmatpush1.bf16.msra.mxu0 %v10874
    %10938 = vmatprep.subr.bf16.mxu0 0
    %10939 = vmatpush1.bf16.msra.mxu0 %v10875
    %10940 = vmatprep.mubr.bf16.mxu0 %v10158
    %10941 = vmatmul.mubr.bf16.gmra.mrb[0].mxu0 %v10157
    %v10942 = vpop.f32.mrb[0].mxu0
    %v10943 = vadd.f32 0.0, %v10942
    %v10944 = vpop.f32.mrb[0].mxu0
    %v10945 = vpop.f32.mrb[0].mxu0
    %v10946 = vadd.f32 0.0, %v10945
    %v10947 = vpop.f32.mrb[0].mxu0
    %10948 = vdwg.mxu0
    %10949 = vmatprep.subr.bf16.mxu0 0
    %10950 = vmatpush1.bf16.msra.mxu0 %v10876
    %10951 = vmatprep.subr.bf16.mxu0 0
    %10952 = vmatpush1.bf16.msra.mxu0 %v10877
    %10953 = vmatprep.subr.bf16.mxu0 0
    %10954 = vmatpush1.bf16.msra.mxu0 %v10878
    %10955 = vmatprep.subr.bf16.mxu0 0
    %10956 = vmatpush1.bf16.msra.mxu0 %v10879
    %10957 = vmatprep.subr.bf16.mxu0 0
    %10958 = vmatpush1.bf16.msra.mxu0 %v10880
    %10959 = vmatprep.subr.bf16.mxu0 0
    %10960 = vmatpush1.bf16.msra.mxu0 %v10881
    %10961 = vmatprep.subr.bf16.mxu0 0
    %10962 = vmatpush1.bf16.msra.mxu0 %v10882
    %10963 = vmatprep.subr.bf16.mxu0 0
    %10964 = vmatpush1.bf16.msra.mxu0 %v10883
    %10965 = vmatprep.subr.bf16.mxu0 0
    %10966 = vmatpush1.bf16.msra.mxu0 0
    %10967 = vmatprep.subr.bf16.mxu0 0
    %10968 = vmatpush1.bf16.msra.mxu0 0
    %10969 = vmatprep.subr.bf16.mxu0 0
    %10970 = vmatpush1.bf16.msra.mxu0 0
    %10971 = vmatprep.subr.bf16.mxu0 0
    %10972 = vmatpush1.bf16.msra.mxu0 0
    %10973 = vmatprep.subr.bf16.mxu0 0
    %10974 = vmatpush1.bf16.msra.mxu0 0
    %10975 = vmatprep.subr.bf16.mxu0 0
    %10976 = vmatpush1.bf16.msra.mxu0 0
    %10977 = vmatprep.subr.bf16.mxu0 0
    %10978 = vmatpush1.bf16.msra.mxu0 0
    %10979 = vmatprep.subr.bf16.mxu0 0
    %10980 = vmatpush1.bf16.msra.mxu0 0
    %10981 = vmatprep.mubr.bf16.mxu0 0
    %10982 = vmatmul.mubr.bf16.gmra.mrb[0].mxu0 %v10159
    %v10983 = vpop.f32.mrb[0].mxu0
    %v10984 = vadd.f32 %v10943, %v10983
    %v10985 = vpop.f32.mrb[0].mxu0
    %v10986 = vpop.f32.mrb[0].mxu0
    %v10987 = vadd.f32 %v10946, %v10986
    %v10988 = vpop.f32.mrb[0].mxu0
    %10989 = vdwg.mxu0
    %v10990 = vadd.f32 %v10709, %v10984
    %v10991 = vadd.f32 %v10712, %v10987
    %s10992 = scalar_lea.vmem %s7, 576
    %v10993 = vld [vmem:[%s10992] sm:$0xf]
    %v10994 = vld [vmem:[%s10992 + $0x4] sm:$0xf]
    %v10995 = vld [vmem:[%s10992 + $0x8] sm:$0xf]
    %v10996 = vld [vmem:[%s10992 + $0xc] sm:$0xf]
    %v10997 = vld [vmem:[%s10992 + $0x10] sm:$0xf]
    %v10998 = vld [vmem:[%s10992 + $0x14] sm:$0xf]
    %v10999 = vld [vmem:[%s10992 + $0x18] sm:$0xf]
    %v11000 = vld [vmem:[%s10992 + $0x1c] sm:$0xf]
    %v11001 = vld [vmem:[%s10992 + $0x20] sm:$0xf]
    %v11002 = vld [vmem:[%s10992 + $0x24] sm:$0xf]
    %v11003 = vld [vmem:[%s10992 + $0x28] sm:$0xf]
    %v11004 = vld [vmem:[%s10992 + $0x2c] sm:$0xf]
    %v11005 = vld [vmem:[%s10992 + $0x30] sm:$0xf]
    %v11006 = vld [vmem:[%s10992 + $0x34] sm:$0xf]
    %v11007 = vld [vmem:[%s10992 + $0x38] sm:$0xf]
    %v11008 = vld [vmem:[%s10992 + $0x3c] sm:$0xf]
    %v11009 = vld [vmem:[%s10992 + $0x40] sm:$0xf]
    %v11010 = vld [vmem:[%s10992 + $0x44] sm:$0xf]
    %v11011 = vld [vmem:[%s10992 + $0x48] sm:$0xf]
    %v11012 = vld [vmem:[%s10992 + $0x4c] sm:$0xf]
    %v11013 = vld [vmem:[%s10992 + $0x50] sm:$0xf]
    %v11014 = vld [vmem:[%s10992 + $0x54] sm:$0xf]
    %v11015 = vld [vmem:[%s10992 + $0x58] sm:$0xf]
    %v11016 = vld [vmem:[%s10992 + $0x5c] sm:$0xf]
    %v11017 = vld [vmem:[%s10992 + $0x60] sm:$0xf]
    %v11018 = vld [vmem:[%s10992 + $0x64] sm:$0xf]
    %v11019 = vld [vmem:[%s10992 + $0x68] sm:$0xf]
    %v11020 = vld [vmem:[%s10992 + $0x6c] sm:$0xf]
    %v11021 = vld [vmem:[%s10992 + $0x70] sm:$0xf]
    %v11022 = vld [vmem:[%s10992 + $0x74] sm:$0xf]
    %v11023 = vld [vmem:[%s10992 + $0x78] sm:$0xf]
    %v11024 = vld [vmem:[%s10992 + $0x7c] sm:$0xf]
    %v11025 = vld [vmem:[%s10992 + $0x80] sm:$0xf]
    %v11026 = vld [vmem:[%s10992 + $0x84] sm:$0xf]
    %v11027 = vld [vmem:[%s10992 + $0x88] sm:$0xf]
    %v11028 = vld [vmem:[%s10992 + $0x8c] sm:$0xf]
    %v11029 = vld [vmem:[%s10992 + $0x90] sm:$0xf]
    %v11030 = vld [vmem:[%s10992 + $0x94] sm:$0xf]
    %v11031 = vld [vmem:[%s10992 + $0x98] sm:$0xf]
    %v11032 = vld [vmem:[%s10992 + $0x9c] sm:$0xf]
    %v11033 = vld [vmem:[%s10992 + $0xa0] sm:$0xf]
    %v11034 = vld [vmem:[%s10992 + $0xa4] sm:$0xf]
    %v11035 = vld [vmem:[%s10992 + $0xa8] sm:$0xf]
    %v11036 = vld [vmem:[%s10992 + $0xac] sm:$0xf]
    %v11037 = vld [vmem:[%s10992 + $0xb0] sm:$0xf]
    %v11038 = vld [vmem:[%s10992 + $0xb4] sm:$0xf]
    %v11039 = vld [vmem:[%s10992 + $0xb8] sm:$0xf]
    %v11040 = vld [vmem:[%s10992 + $0xbc] sm:$0xf]
    %v11089 = vunpack.c.l.b16 %v10993
    %v11090 = vunpack.c.l.b16 %v10994
    %v11091 = vunpack.c.l.b16 %v10995
    %v11092 = vunpack.c.l.b16 %v10996
    %v11093 = vunpack.c.l.b16 %v10997
    %v11094 = vunpack.c.l.b16 %v10998
    %v11095 = vunpack.c.l.b16 %v10999
    %v11096 = vunpack.c.l.b16 %v11000
    %v11097 = vunpack.c.l.b16 %v11001
    %v11098 = vunpack.c.l.b16 %v11002
    %v11099 = vunpack.c.l.b16 %v11003
    %v11100 = vunpack.c.l.b16 %v11004
    %v11101 = vunpack.c.l.b16 %v11005
    %v11102 = vunpack.c.l.b16 %v11006
    %v11103 = vunpack.c.l.b16 %v11007
    %v11104 = vunpack.c.l.b16 %v11008
    %v11105 = vunpack.c.l.b16 %v11009
    %v11106 = vunpack.c.l.b16 %v11010
    %v11107 = vunpack.c.l.b16 %v11011
    %v11108 = vunpack.c.l.b16 %v11012
    %v11109 = vunpack.c.l.b16 %v11013
    %v11110 = vunpack.c.l.b16 %v11014
    %v11111 = vunpack.c.l.b16 %v11015
    %v11112 = vunpack.c.l.b16 %v11016
    %v11113 = vunpack.c.l.b16 %v11017
    %v11114 = vunpack.c.l.b16 %v11018
    %v11115 = vunpack.c.l.b16 %v11019
    %v11116 = vunpack.c.l.b16 %v11020
    %v11117 = vunpack.c.l.b16 %v11021
    %v11118 = vunpack.c.l.b16 %v11022
    %v11119 = vunpack.c.l.b16 %v11023
    %v11120 = vunpack.c.l.b16 %v11024
    %v11121 = vunpack.c.l.b16 %v11025
    %v11122 = vunpack.c.l.b16 %v11026
    %v11123 = vunpack.c.l.b16 %v11027
    %v11124 = vunpack.c.l.b16 %v11028
    %v11125 = vunpack.c.l.b16 %v11029
    %v11126 = vunpack.c.l.b16 %v11030
    %v11127 = vunpack.c.l.b16 %v11031
    %v11128 = vunpack.c.l.b16 %v11032
    %v11129 = vunpack.c.l.b16 %v11033
    %v11130 = vunpack.c.l.b16 %v11034
    %v11131 = vunpack.c.l.b16 %v11035
    %v11132 = vunpack.c.l.b16 %v11036
    %v11133 = vunpack.c.l.b16 %v11037
    %v11134 = vunpack.c.l.b16 %v11038
    %v11135 = vunpack.c.l.b16 %v11039
    %v11136 = vunpack.c.l.b16 %v11040
    %v11137 = vpack.c.b16 %v11090, %v11089
    %v11138 = vpack.c.b16 %v11092, %v11091
    %v11139 = vpack.c.b16 %v11094, %v11093
    %v11140 = vpack.c.b16 %v11096, %v11095
    %v11141 = vpack.c.b16 %v11098, %v11097
    %v11142 = vpack.c.b16 %v11100, %v11099
    %v11143 = vpack.c.b16 %v11102, %v11101
    %v11144 = vpack.c.b16 %v11104, %v11103
    %v11145 = vpack.c.b16 %v11106, %v11105
    %v11146 = vpack.c.b16 %v11108, %v11107
    %v11147 = vpack.c.b16 %v11110, %v11109
    %v11148 = vpack.c.b16 %v11112, %v11111
    %v11149 = vpack.c.b16 %v11114, %v11113
    %v11150 = vpack.c.b16 %v11116, %v11115
    %v11151 = vpack.c.b16 %v11118, %v11117
    %v11152 = vpack.c.b16 %v11120, %v11119
    %v11153 = vpack.c.b16 %v11122, %v11121
    %v11154 = vpack.c.b16 %v11124, %v11123
    %v11155 = vpack.c.b16 %v11126, %v11125
    %v11156 = vpack.c.b16 %v11128, %v11127
    %v11157 = vpack.c.b16 %v11130, %v11129
    %v11158 = vpack.c.b16 %v11132, %v11131
    %v11159 = vpack.c.b16 %v11134, %v11133
    %v11160 = vpack.c.b16 %v11136, %v11135
    %11185 = vmatprep.subr.bf16.mxu0 0
    %11186 = vmatpush1.bf16.msra.mxu0 %v11137
    %11187 = vmatprep.subr.bf16.mxu0 0
    %11188 = vmatpush1.bf16.msra.mxu0 %v11138
    %11189 = vmatprep.subr.bf16.mxu0 0
    %11190 = vmatpush1.bf16.msra.mxu0 %v11139
    %11191 = vmatprep.subr.bf16.mxu0 0
    %11192 = vmatpush1.bf16.msra.mxu0 %v11140
    %11193 = vmatprep.subr.bf16.mxu0 0
    %11194 = vmatpush1.bf16.msra.mxu0 %v11141
    %11195 = vmatprep.subr.bf16.mxu0 0
    %11196 = vmatpush1.bf16.msra.mxu0 %v11142
    %11197 = vmatprep.subr.bf16.mxu0 0
    %11198 = vmatpush1.bf16.msra.mxu0 %v11143
    %11199 = vmatprep.subr.bf16.mxu0 0
    %11200 = vmatpush1.bf16.msra.mxu0 %v11144
    %11201 = vmatprep.subr.bf16.mxu0 0
    %11202 = vmatpush1.bf16.msra.mxu0 %v11145
    %11203 = vmatprep.subr.bf16.mxu0 0
    %11204 = vmatpush1.bf16.msra.mxu0 %v11146
    %11205 = vmatprep.subr.bf16.mxu0 0
    %11206 = vmatpush1.bf16.msra.mxu0 %v11147
    %11207 = vmatprep.subr.bf16.mxu0 0
    %11208 = vmatpush1.bf16.msra.mxu0 %v11148
    %11209 = vmatprep.subr.bf16.mxu0 0
    %11210 = vmatpush1.bf16.msra.mxu0 %v11149
    %11211 = vmatprep.subr.bf16.mxu0 0
    %11212 = vmatpush1.bf16.msra.mxu0 %v11150
    %11213 = vmatprep.subr.bf16.mxu0 0
    %11214 = vmatpush1.bf16.msra.mxu0 %v11151
    %11215 = vmatprep.subr.bf16.mxu0 0
    %11216 = vmatpush1.bf16.msra.mxu0 %v11152
    %11217 = vmatprep.mubr.bf16.mxu0 %v10161
    %11218 = vmatmul.mubr.bf16.gmra.mrb[0].mxu0 %v10160
    %v11219 = vpop.f32.mrb[0].mxu0
    %v11220 = vadd.f32 0.0, %v11219
    %v11221 = vpop.f32.mrb[0].mxu0
    %v11222 = vpop.f32.mrb[0].mxu0
    %v11223 = vadd.f32 0.0, %v11222
    %v11224 = vpop.f32.mrb[0].mxu0
    %11225 = vdwg.mxu0
    %11226 = vmatprep.subr.bf16.mxu0 0
    %11227 = vmatpush1.bf16.msra.mxu0 %v11153
    %11228 = vmatprep.subr.bf16.mxu0 0
    %11229 = vmatpush1.bf16.msra.mxu0 %v11154
    %11230 = vmatprep.subr.bf16.mxu0 0
    %11231 = vmatpush1.bf16.msra.mxu0 %v11155
    %11232 = vmatprep.subr.bf16.mxu0 0
    %11233 = vmatpush1.bf16.msra.mxu0 %v11156
    %11234 = vmatprep.subr.bf16.mxu0 0
    %11235 = vmatpush1.bf16.msra.mxu0 %v11157
    %11236 = vmatprep.subr.bf16.mxu0 0
    %11237 = vmatpush1.bf16.msra.mxu0 %v11158
    %11238 = vmatprep.subr.bf16.mxu0 0
    %11239 = vmatpush1.bf16.msra.mxu0 %v11159
    %11240 = vmatprep.subr.bf16.mxu0 0
    %11241 = vmatpush1.bf16.msra.mxu0 %v11160
    %11242 = vmatprep.subr.bf16.mxu0 0
    %11243 = vmatpush1.bf16.msra.mxu0 0
    %11244 = vmatprep.subr.bf16.mxu0 0
    %11245 = vmatpush1.bf16.msra.mxu0 0
    %11246 = vmatprep.subr.bf16.mxu0 0
    %11247 = vmatpush1.bf16.msra.mxu0 0
    %11248 = vmatprep.subr.bf16.mxu0 0
    %11249 = vmatpush1.bf16.msra.mxu0 0
    %11250 = vmatprep.subr.bf16.mxu0 0
    %11251 = vmatpush1.bf16.msra.mxu0 0
    %11252 = vmatprep.subr.bf16.mxu0 0
    %11253 = vmatpush1.bf16.msra.mxu0 0
    %11254 = vmatprep.subr.bf16.mxu0 0
    %11255 = vmatpush1.bf16.msra.mxu0 0
    %11256 = vmatprep.subr.bf16.mxu0 0
    %11257 = vmatpush1.bf16.msra.mxu0 0
    %11258 = vmatprep.mubr.bf16.mxu0 0
    %11259 = vmatmul.mubr.bf16.gmra.mrb[0].mxu0 %v10162
    %v11260 = vpop.f32.mrb[0].mxu0
    %v11261 = vadd.f32 %v11220, %v11260
    %v11262 = vpop.f32.mrb[0].mxu0
    %v11263 = vpop.f32.mrb[0].mxu0
    %v11264 = vadd.f32 %v11223, %v11263
    %v11265 = vpop.f32.mrb[0].mxu0
    %11266 = vdwg.mxu0
    %v11267 = vadd.f32 %v10990, %v11261
    %v11268 = vadd.f32 %v10991, %v11264
    %s11269 = scalar_lea.vmem %s7, 768
    %v11270 = vld [vmem:[%s11269] sm:$0xf]
    %v11271 = vld [vmem:[%s11269 + $0x4] sm:$0xf]
    %v11272 = vld [vmem:[%s11269 + $0x8] sm:$0xf]
    %v11273 = vld [vmem:[%s11269 + $0xc] sm:$0xf]
    %v11274 = vld [vmem:[%s11269 + $0x10] sm:$0xf]
    %v11275 = vld [vmem:[%s11269 + $0x14] sm:$0xf]
    %v11276 = vld [vmem:[%s11269 + $0x18] sm:$0xf]
    %v11277 = vld [vmem:[%s11269 + $0x1c] sm:$0xf]
    %v11278 = vld [vmem:[%s11269 + $0x20] sm:$0xf]
    %v11279 = vld [vmem:[%s11269 + $0x24] sm:$0xf]
    %v11280 = vld [vmem:[%s11269 + $0x28] sm:$0xf]
    %v11281 = vld [vmem:[%s11269 + $0x2c] sm:$0xf]
    %v11282 = vld [vmem:[%s11269 + $0x30] sm:$0xf]
    %v11283 = vld [vmem:[%s11269 + $0x34] sm:$0xf]
    %v11284 = vld [vmem:[%s11269 + $0x38] sm:$0xf]
    %v11285 = vld [vmem:[%s11269 + $0x3c] sm:$0xf]
    %v11286 = vld [vmem:[%s11269 + $0x40] sm:$0xf]
    %v11287 = vld [vmem:[%s11269 + $0x44] sm:$0xf]
    %v11288 = vld [vmem:[%s11269 + $0x48] sm:$0xf]
    %v11289 = vld [vmem:[%s11269 + $0x4c] sm:$0xf]
    %v11290 = vld [vmem:[%s11269 + $0x50] sm:$0xf]
    %v11291 = vld [vmem:[%s11269 + $0x54] sm:$0xf]
    %v11292 = vld [vmem:[%s11269 + $0x58] sm:$0xf]
    %v11293 = vld [vmem:[%s11269 + $0x5c] sm:$0xf]
    %v11294 = vld [vmem:[%s11269 + $0x60] sm:$0xf]
    %v11295 = vld [vmem:[%s11269 + $0x64] sm:$0xf]
    %v11296 = vld [vmem:[%s11269 + $0x68] sm:$0xf]
    %v11297 = vld [vmem:[%s11269 + $0x6c] sm:$0xf]
    %v11298 = vld [vmem:[%s11269 + $0x70] sm:$0xf]
    %v11299 = vld [vmem:[%s11269 + $0x74] sm:$0xf]
    %v11300 = vld [vmem:[%s11269 + $0x78] sm:$0xf]
    %v11301 = vld [vmem:[%s11269 + $0x7c] sm:$0xf]
    %v11302 = vld [vmem:[%s11269 + $0x80] sm:$0xf]
    %v11303 = vld [vmem:[%s11269 + $0x84] sm:$0xf]
    %v11304 = vld [vmem:[%s11269 + $0x88] sm:$0xf]
    %v11305 = vld [vmem:[%s11269 + $0x8c] sm:$0xf]
    %v11306 = vld [vmem:[%s11269 + $0x90] sm:$0xf]
    %v11307 = vld [vmem:[%s11269 + $0x94] sm:$0xf]
    %v11308 = vld [vmem:[%s11269 + $0x98] sm:$0xf]
    %v11309 = vld [vmem:[%s11269 + $0x9c] sm:$0xf]
    %v11310 = vld [vmem:[%s11269 + $0xa0] sm:$0xf]
    %v11311 = vld [vmem:[%s11269 + $0xa4] sm:$0xf]
    %v11312 = vld [vmem:[%s11269 + $0xa8] sm:$0xf]
    %v11313 = vld [vmem:[%s11269 + $0xac] sm:$0xf]
    %v11314 = vld [vmem:[%s11269 + $0xb0] sm:$0xf]
    %v11315 = vld [vmem:[%s11269 + $0xb4] sm:$0xf]
    %v11316 = vld [vmem:[%s11269 + $0xb8] sm:$0xf]
    %v11317 = vld [vmem:[%s11269 + $0xbc] sm:$0xf]
    %v11366 = vunpack.c.l.b16 %v11270
    %v11367 = vunpack.c.l.b16 %v11271
    %v11368 = vunpack.c.l.b16 %v11272
    %v11369 = vunpack.c.l.b16 %v11273
    %v11370 = vunpack.c.l.b16 %v11274
    %v11371 = vunpack.c.l.b16 %v11275
    %v11372 = vunpack.c.l.b16 %v11276
    %v11373 = vunpack.c.l.b16 %v11277
    %v11374 = vunpack.c.l.b16 %v11278
    %v11375 = vunpack.c.l.b16 %v11279
    %v11376 = vunpack.c.l.b16 %v11280
    %v11377 = vunpack.c.l.b16 %v11281
    %v11378 = vunpack.c.l.b16 %v11282
    %v11379 = vunpack.c.l.b16 %v11283
    %v11380 = vunpack.c.l.b16 %v11284
    %v11381 = vunpack.c.l.b16 %v11285
    %v11382 = vunpack.c.l.b16 %v11286
    %v11383 = vunpack.c.l.b16 %v11287
    %v11384 = vunpack.c.l.b16 %v11288
    %v11385 = vunpack.c.l.b16 %v11289
    %v11386 = vunpack.c.l.b16 %v11290
    %v11387 = vunpack.c.l.b16 %v11291
    %v11388 = vunpack.c.l.b16 %v11292
    %v11389 = vunpack.c.l.b16 %v11293
    %v11390 = vunpack.c.l.b16 %v11294
    %v11391 = vunpack.c.l.b16 %v11295
    %v11392 = vunpack.c.l.b16 %v11296
    %v11393 = vunpack.c.l.b16 %v11297
    %v11394 = vunpack.c.l.b16 %v11298
    %v11395 = vunpack.c.l.b16 %v11299
    %v11396 = vunpack.c.l.b16 %v11300
    %v11397 = vunpack.c.l.b16 %v11301
    %v11398 = vunpack.c.l.b16 %v11302
    %v11399 = vunpack.c.l.b16 %v11303
    %v11400 = vunpack.c.l.b16 %v11304
    %v11401 = vunpack.c.l.b16 %v11305
    %v11402 = vunpack.c.l.b16 %v11306
    %v11403 = vunpack.c.l.b16 %v11307
    %v11404 = vunpack.c.l.b16 %v11308
    %v11405 = vunpack.c.l.b16 %v11309
    %v11406 = vunpack.c.l.b16 %v11310
    %v11407 = vunpack.c.l.b16 %v11311
    %v11408 = vunpack.c.l.b16 %v11312
    %v11409 = vunpack.c.l.b16 %v11313
    %v11410 = vunpack.c.l.b16 %v11314
    %v11411 = vunpack.c.l.b16 %v11315
    %v11412 = vunpack.c.l.b16 %v11316
    %v11413 = vunpack.c.l.b16 %v11317
    %v11414 = vpack.c.b16 %v11367, %v11366
    %v11415 = vpack.c.b16 %v11369, %v11368
    %v11416 = vpack.c.b16 %v11371, %v11370
    %v11417 = vpack.c.b16 %v11373, %v11372
    %v11418 = vpack.c.b16 %v11375, %v11374
    %v11419 = vpack.c.b16 %v11377, %v11376
    %v11420 = vpack.c.b16 %v11379, %v11378
    %v11421 = vpack.c.b16 %v11381, %v11380
    %v11422 = vpack.c.b16 %v11383, %v11382
    %v11423 = vpack.c.b16 %v11385, %v11384
    %v11424 = vpack.c.b16 %v11387, %v11386
    %v11425 = vpack.c.b16 %v11389, %v11388
    %v11426 = vpack.c.b16 %v11391, %v11390
    %v11427 = vpack.c.b16 %v11393, %v11392
    %v11428 = vpack.c.b16 %v11395, %v11394
    %v11429 = vpack.c.b16 %v11397, %v11396
    %v11430 = vpack.c.b16 %v11399, %v11398
    %v11431 = vpack.c.b16 %v11401, %v11400
    %v11432 = vpack.c.b16 %v11403, %v11402
    %v11433 = vpack.c.b16 %v11405, %v11404
    %v11434 = vpack.c.b16 %v11407, %v11406
    %v11435 = vpack.c.b16 %v11409, %v11408
    %v11436 = vpack.c.b16 %v11411, %v11410
    %v11437 = vpack.c.b16 %v11413, %v11412
    %11462 = vmatprep.subr.bf16.mxu0 0
    %11463 = vmatpush1.bf16.msra.mxu0 %v11414
    %11464 = vmatprep.subr.bf16.mxu0 0
    %11465 = vmatpush1.bf16.msra.mxu0 %v11415
    %11466 = vmatprep.subr.bf16.mxu0 0
    %11467 = vmatpush1.bf16.msra.mxu0 %v11416
    %11468 = vmatprep.subr.bf16.mxu0 0
    %11469 = vmatpush1.bf16.msra.mxu0 %v11417
    %11470 = vmatprep.subr.bf16.mxu0 0
    %11471 = vmatpush1.bf16.msra.mxu0 %v11418
    %11472 = vmatprep.subr.bf16.mxu0 0
    %11473 = vmatpush1.bf16.msra.mxu0 %v11419
    %11474 = vmatprep.subr.bf16.mxu0 0
    %11475 = vmatpush1.bf16.msra.mxu0 %v11420
    %11476 = vmatprep.subr.bf16.mxu0 0
    %11477 = vmatpush1.bf16.msra.mxu0 %v11421
    %11478 = vmatprep.subr.bf16.mxu0 0
    %11479 = vmatpush1.bf16.msra.mxu0 %v11422
    %11480 = vmatprep.subr.bf16.mxu0 0
    %11481 = vmatpush1.bf16.msra.mxu0 %v11423
    %11482 = vmatprep.subr.bf16.mxu0 0
    %11483 = vmatpush1.bf16.msra.mxu0 %v11424
    %11484 = vmatprep.subr.bf16.mxu0 0
    %11485 = vmatpush1.bf16.msra.mxu0 %v11425
    %11486 = vmatprep.subr.bf16.mxu0 0
    %11487 = vmatpush1.bf16.msra.mxu0 %v11426
    %11488 = vmatprep.subr.bf16.mxu0 0
    %11489 = vmatpush1.bf16.msra.mxu0 %v11427
    %11490 = vmatprep.subr.bf16.mxu0 0
    %11491 = vmatpush1.bf16.msra.mxu0 %v11428
    %11492 = vmatprep.subr.bf16.mxu0 0
    %11493 = vmatpush1.bf16.msra.mxu0 %v11429
    %11494 = vmatprep.mubr.bf16.mxu0 %v10164
    %11495 = vmatmul.mubr.bf16.gmra.mrb[0].mxu0 %v10163
    %v11496 = vpop.f32.mrb[0].mxu0
    %v11497 = vadd.f32 0.0, %v11496
    %v11498 = vpop.f32.mrb[0].mxu0
    %v11499 = vpop.f32.mrb[0].mxu0
    %v11500 = vadd.f32 0.0, %v11499
    %v11501 = vpop.f32.mrb[0].mxu0
    %11502 = vdwg.mxu0
    %11503 = vmatprep.subr.bf16.mxu0 0
    %11504 = vmatpush1.bf16.msra.mxu0 %v11430
    %11505 = vmatprep.subr.bf16.mxu0 0
    %11506 = vmatpush1.bf16.msra.mxu0 %v11431
    %11507 = vmatprep.subr.bf16.mxu0 0
    %11508 = vmatpush1.bf16.msra.mxu0 %v11432
    %11509 = vmatprep.subr.bf16.mxu0 0
    %11510 = vmatpush1.bf16.msra.mxu0 %v11433
    %11511 = vmatprep.subr.bf16.mxu0 0
    %11512 = vmatpush1.bf16.msra.mxu0 %v11434
    %11513 = vmatprep.subr.bf16.mxu0 0
    %11514 = vmatpush1.bf16.msra.mxu0 %v11435
    %11515 = vmatprep.subr.bf16.mxu0 0
    %11516 = vmatpush1.bf16.msra.mxu0 %v11436
    %11517 = vmatprep.subr.bf16.mxu0 0
    %11518 = vmatpush1.bf16.msra.mxu0 %v11437
    %11519 = vmatprep.subr.bf16.mxu0 0
    %11520 = vmatpush1.bf16.msra.mxu0 0
    %11521 = vmatprep.subr.bf16.mxu0 0
    %11522 = vmatpush1.bf16.msra.mxu0 0
    %11523 = vmatprep.subr.bf16.mxu0 0
    %11524 = vmatpush1.bf16.msra.mxu0 0
    %11525 = vmatprep.subr.bf16.mxu0 0
    %11526 = vmatpush1.bf16.msra.mxu0 0
    %11527 = vmatprep.subr.bf16.mxu0 0
    %11528 = vmatpush1.bf16.msra.mxu0 0
    %11529 = vmatprep.subr.bf16.mxu0 0
    %11530 = vmatpush1.bf16.msra.mxu0 0
    %11531 = vmatprep.subr.bf16.mxu0 0
    %11532 = vmatpush1.bf16.msra.mxu0 0
    %11533 = vmatprep.subr.bf16.mxu0 0
    %11534 = vmatpush1.bf16.msra.mxu0 0
    %11535 = vmatprep.mubr.bf16.mxu0 0
    %11536 = vmatmul.mubr.bf16.gmra.mrb[0].mxu0 %v10165
    %v11537 = vpop.f32.mrb[0].mxu0
    %v11538 = vadd.f32 %v11497, %v11537
    %v11539 = vpop.f32.mrb[0].mxu0
    %v11540 = vpop.f32.mrb[0].mxu0
    %v11541 = vadd.f32 %v11500, %v11540
    %v11542 = vpop.f32.mrb[0].mxu0
    %11543 = vdwg.mxu0
    %v11544 = vadd.f32 %v11267, %v11538
    %v11545 = vadd.f32 %v11268, %v11541
    %v11546 = vld [vmem:[%s8] sm:$0x1]
    %v11548 = vlaneseq
    %v11549 = vshrl.u32 %v11548, 7
    %v11550 = vsub.s32 0, %v11549
    %v11551 = vrot.slane %v11546, %v11550
    %v11553 = vadd.f32 %v11544, %v11551
    %v11554 = vadd.f32 %v11545, %v11551
    %v11555 = vsub.f32 0.0, %v11553
    %v11556 = vsub.f32 0.0, %v11554
    %v11557 = vmul.f32 %v11555, 1.442695
    %v11558 = vpow.pop %v11557
    %v11559 = vmul.f32 %v11556, 1.442695
    %v11560 = vpow.pop %v11559
    %v11561 = vadd.f32 %v11558, 1.0
    %v11562 = vadd.f32 %v11560, 1.0
    %v11563 = vrcp.pop %v11561
    %v11564 = vrcp.pop %v11562
    %v11565 = vmul.f32 %v11553, %v11563
    %v11566 = vmul.f32 %v11554, %v11564
    %v11567 = vpack.c.bf16 %v11566, %v11565
    %v11568 = vld [vmem:[%s9] sm:$0xf]
    %v11569 = vld [vmem:[%s9 + $0x4] sm:$0xf]
    %v11570 = vld [vmem:[%s9 + $0x8] sm:$0xf]
    %v11571 = vld [vmem:[%s9 + $0xc] sm:$0xf]
    %v11572 = vld [vmem:[%s10] sm:$0x1]
    %v11574 = vlaneseq
    %v11575 = vshrl.u32 %v11574, 7
    %v11576 = vsub.s32 0, %v11575
    %v11577 = vrot.slane %v11572, %v11576
    %v11583 = vunpack.c.l.b16 %v11568
    %v11584 = vunpack.c.l.b16 %v11569
    %v11585 = vunpack.c.l.b16 %v11570
    %v11586 = vunpack.c.l.b16 %v11571
    %v11587 = vpack.c.b16 %v11584, %v11583
    %v11588 = vpack.c.b16 %v11586, %v11585
    %vm11591 = vcmask 261120
    %v11593 = vsel %vm11591, %v11567, 0
    %11595 = vmatprep.subr.bf16.mxu0 0
    %11596 = vmatpush1.bf16.msra.mxu0 %v11587
    %11597 = vmatprep.subr.bf16.mxu0 0
    %11598 = vmatpush1.bf16.msra.mxu0 %v11588
    %11599 = vmatprep.subr.bf16.mxu0 0
    %11600 = vmatpush1.bf16.msra.mxu0 0
    %11601 = vmatprep.subr.bf16.mxu0 0
    %11602 = vmatpush1.bf16.msra.mxu0 0
    %11603 = vmatprep.subr.bf16.mxu0 0
    %11604 = vmatpush1.bf16.msra.mxu0 0
    %11605 = vmatprep.subr.bf16.mxu0 0
    %11606 = vmatpush1.bf16.msra.mxu0 0
    %11607 = vmatprep.subr.bf16.mxu0 0
    %11608 = vmatpush1.bf16.msra.mxu0 0
    %11609 = vmatprep.subr.bf16.mxu0 0
    %11610 = vmatpush1.bf16.msra.mxu0 0
    %11611 = vmatprep.subr.bf16.mxu0 0
    %11612 = vmatpush1.bf16.msra.mxu0 0
    %11613 = vmatprep.subr.bf16.mxu0 0
    %11614 = vmatpush1.bf16.msra.mxu0 0
    %11615 = vmatprep.subr.bf16.mxu0 0
    %11616 = vmatpush1.bf16.msra.mxu0 0
    %11617 = vmatprep.subr.bf16.mxu0 0
    %11618 = vmatpush1.bf16.msra.mxu0 0
    %11619 = vmatprep.subr.bf16.mxu0 0
    %11620 = vmatpush1.bf16.msra.mxu0 0
    %11621 = vmatprep.subr.bf16.mxu0 0
    %11622 = vmatpush1.bf16.msra.mxu0 0
    %11623 = vmatprep.subr.bf16.mxu0 0
    %11624 = vmatpush1.bf16.msra.mxu0 0
    %11625 = vmatprep.subr.bf16.mxu0 0
    %11626 = vmatpush1.bf16.msra.mxu0 0
    %11627 = vmatprep.mubr.bf16.mxu0 0
    %11628 = vmatmul.mubr.bf16.gmra.mrb[0].mxu0 %v11593
    %v11629 = vpop.f32.mrb[0].mxu0
    %v11630 = vadd.f32 %v11577, %v11629
    %v11631 = vpop.f32.mrb[0].mxu0
    %v11632 = vpop.f32.mrb[0].mxu0
    %v11633 = vadd.f32 %v11577, %v11632
    %v11634 = vpop.f32.mrb[0].mxu0
    %11635 = vdwg.mxu0
    %vm11636 = vcmask 80896
    %11637 = vst.msk [vmem:[%s11] sm:$0xff] %vm11636, %v11630
    %11638 = vst.msk [vmem:[%s11 + $0x8] sm:$0xff] %vm11636, %v11633
    // Predicated region
    $region50: #{mnist_forward.1} parent=1 // pred_check
      _
    $region51: #{mnist_forward.1} parent=1 // pred_check_branch
      %11640 = sbr.rel (0) target = $region53
    $region52: #{mnist_forward.1} parent=1 // pred_region
      _
    $region53: #{mnist_forward.1} parent=1 // pred_fallthru
      _
    // Predicated region
    $region54: #{mnist_forward.1} parent=1 // pred_check
      _
    $region55: #{mnist_forward.1} parent=1 // pred_check_branch
      %11642 = sbr.rel (0) target = $region57
    $region56: #{mnist_forward.1} parent=1 // pred_region
      _
    $region57: #{mnist_forward.1} parent=1 // pred_fallthru
      _
    %11643 = vsyncpa [#allocation3], 1

</llo_original>
